<compile_context>
chip_gen: v5e
topology: v5e:2x2
jax: 0.10.0
libtpu: 0.0.40
codegen_flags: <defaults>
</compile_context>

<pallas_src>
import numpy as np
import jax
import jax.numpy as jnp
from jax.experimental import pallas as pl
from jax.experimental.pallas import tpu as pltpu


# ---------------------------------------------------------------------------
# Kernel: three back-to-back 2-D MXU matmuls + ReLUs on natural layouts
# (rows = batch on sublanes, features on lanes).  No in-kernel gathers,
# transposes or reshapes; elementwise math stays f32 (v5e-friendly), matmul
# operands use the weight dtype (bf16 by default) with f32 accumulation.
# ---------------------------------------------------------------------------
def denoise_kernel(x_ref, w1_ref, w2_ref, wo_ref, b_ref, out_ref, feat_ref):
    cdt = w1_ref.dtype            # matmul-operand dtype (bf16 or f32)
    n1 = w1_ref.shape[1]          # lane-padded conv1 width (multiple of 128)
    n2 = w2_ref.shape[1]          # feat2 * L2 (channel-major flatten width)
    op = wo_ref.shape[1]          # spike_size (narrow, unpadded output)

    x = x_ref[...].astype(cdt)                                   # (TB, S)

    # conv1 + ReLU as ONE banded matmul (bias tiled per time step host-side).
    h1 = jnp.dot(x, w1_ref[...], preferred_element_type=jnp.float32)
    h1 = jnp.maximum(h1 + b_ref[0:1, :n1], 0.0)                  # (TB, n1) f32

    # conv2 + ReLU as ONE banded matmul; columns are already in PyTorch's
    # NCL flatten order, so h2 IS the flattened feature tensor.
    h2 = jnp.dot(h1.astype(cdt), w2_ref[...],
                 preferred_element_type=jnp.float32)
    h2 = jnp.maximum(h2 + b_ref[1:2, :n2], 0.0)                  # (TB, n2) f32
    feat_ref[...] = h2.astype(feat_ref.dtype)

    # Linear: weight pre-transposed host-side, stored at true output width.
    out_ref[...] = (
        jnp.dot(h2.astype(cdt), wo_ref[...], preferred_element_type=jnp.float32)
        + b_ref[2:3, :op]
    ).astype(out_ref.dtype)


# ---------------------------------------------------------------------------
# Host-side parameter re-layout (one-time, numpy): banded conv matrices with
# lane-padded n1, pre-transposed Linear weight, packed biases.
# ---------------------------------------------------------------------------
def _round_up(x, m):
    return ((x + m - 1) // m) * m


def build_denoise_params(conv1_w, conv1_b, conv2_w, conv2_b, out_w, out_b,
                         spike_size, *, param_dtype=jnp.bfloat16):
    conv1_w = np.asarray(conv1_w, np.float32)      # (feat1, 1, size1)
    conv1_b = np.asarray(conv1_b, np.float32)      # (feat1,)
    conv2_w = np.asarray(conv2_w, np.float32)      # (feat2, feat1, size2)
    conv2_b = np.asarray(conv2_b, np.float32)      # (feat2,)
    out_w = np.asarray(out_w, np.float32)          # (spike_size, n_input_feat)
    out_b = np.asarray(out_b, np.float32)          # (spike_size,)

    feat1, _, size1 = conv1_w.shape
    feat2, _, size2 = conv2_w.shape
    S = int(spike_size)
    L1 = S - size1 + 1
    L2 = L1 - size2 + 1
    n1 = L1 * feat1                                # real time-major h1 width
    n1p = _round_up(n1, 128)                       # lane-padded (224 -> 256)
    n2 = feat2 * L2                                # channel-major flatten width
    op = out_w.shape[0]                            # spike_size (true out width)

    # conv1 Toeplitz: W1[s, t*feat1 + f] = conv1_w[f, 0, s - t]; cols >= n1 are 0.
    W1 = np.zeros((S, n1p), np.float32)
    for t in range(L1):
        for k in range(size1):
            W1[t + k, t * feat1:(t + 1) * feat1] = conv1_w[:, 0, k]

    # conv2 Toeplitz with channel-major columns:
    #   W2[(t+k)*feat1 + f, g*L2 + t] = conv2_w[g, f, k]; rows >= n1 are 0.
    W2 = np.zeros((n1p, n2), np.float32)
    cols_base = np.arange(feat2) * L2
    for t in range(L2):
        for k in range(size2):
            r0 = (t + k) * feat1
            W2[r0:r0 + feat1, cols_base + t] = conv2_w[:, :, k].T

    # Linear weight: transpose to (n2, spike_size); no lane padding (narrow
    # store cuts output HBM writeback 4x vs padding to 128).
    Wo = np.ascontiguousarray(out_w.T)

    # Pack all biases (tiled/repeated to match the fused layouts) into one op.
    bw = max(n1p, n2, op)
    b_pack = np.zeros((3, bw), np.float32)
    b_pack[0, :n1] = np.tile(conv1_b, L1)          # index t*feat1 + f -> b1[f]
    b_pack[1, :n2] = np.repeat(conv2_b, L2)        # index g*L2 + t    -> b2[g]
    b_pack[2, :op] = out_b

    return (jnp.asarray(W1, param_dtype), jnp.asarray(W2, param_dtype),
            jnp.asarray(Wo, param_dtype), jnp.asarray(b_pack, jnp.float32))


def _choose_tile(batch, block_b):
    """Pick a batch tile: large (overhead amortizing), multiple of 8, and
    dividing the 8-rounded batch when that doesn't cost >2x in tile size
    (avoids a full-copy jnp.pad of x for large batches)."""
    b8 = _round_up(max(int(batch), 1), 8)
    cap = min(_round_up(max(int(block_b), 8), 8), b8)
    tb = cap
    while tb >= max(8, cap // 2):
        if b8 % tb == 0:
            return tb, b8
        tb -= 8
    return cap, _round_up(b8, cap)


# ---------------------------------------------------------------------------
# Wrapper: batched pallas_call with a parallel grid over the batch axis.
# ---------------------------------------------------------------------------
def denoise_forward(x, params, *, spike_size, block_b=1024,
                    feat_dtype=jnp.float32):
    W1, W2, Wo, b_pack = params
    B, S = x.shape
    assert S == W1.shape[0], "input length must equal spike_size"
    n1 = W1.shape[1]
    n2 = W2.shape[1]
    OP = Wo.shape[1]
    assert OP == spike_size

    TB, Bp = _choose_tile(B, block_b)
    xp = x if Bp == B else jnp.pad(x, ((0, Bp - B), (0, 0)))

    # VMEM budget (double-buffered x/out/feat tiles + resident weights) and a
    # cost estimate so XLA schedules this tiny custom call sensibly.
    xb = x.dtype.itemsize
    fb = jnp.dtype(feat_dtype).itemsize
    wbytes = sum(int(a.size) * a.dtype.itemsize for a in (W1, W2, Wo, b_pack))
    step_bytes = 2 * TB * (S * xb + OP * 4 + n2 * fb)
    vmem_limit = int(min(64 * 2**20, max(32 * 2**20, 2 * (wbytes + step_bytes))))
    cost = pl.CostEstimate(
        flops=2 * Bp * (S * n1 + n1 * n2 + n2 * OP),
        transcendentals=0,
        bytes_accessed=int(Bp * (S * xb + OP * 4 + n2 * fb) + wbytes))

    out, feat = pl.pallas_call(
        denoise_kernel,
        out_shape=(jax.ShapeDtypeStruct((Bp, OP), jnp.float32),
                   jax.ShapeDtypeStruct((Bp, n2), feat_dtype)),
        grid=(Bp // TB,),
        in_specs=[
            pl.BlockSpec((TB, S), lambda i: (i, 0)),          # x: tiled over B
            pl.BlockSpec(W1.shape, lambda i: (0, 0)),         # weights DMA'd once
            pl.BlockSpec(W2.shape, lambda i: (0, 0)),
            pl.BlockSpec(Wo.shape, lambda i: (0, 0)),
            pl.BlockSpec(b_pack.shape, lambda i: (0, 0)),
        ],
        out_specs=(pl.BlockSpec((TB, OP), lambda i: (i, 0)),  # narrow output
                   pl.BlockSpec((TB, n2), lambda i: (i, 0))),
        compiler_params=pltpu.CompilerParams(
            dimension_semantics=("parallel",),                # megacore on v7x
            vmem_limit_bytes=vmem_limit),
        cost_estimate=cost,
    )(xp, W1, W2, Wo, b_pack)

    if Bp != B:
        out, feat = out[:B], feat[:B]
    return out, feat


# ---------------------------------------------------------------------------
# Pure-JAX reference mirroring the PyTorch forward (NCL conv layout).
# ---------------------------------------------------------------------------
def reference_forward(x, conv1_w, conv1_b, conv2_w, conv2_b, out_w, out_b):
    hp = jax.lax.Precision.HIGHEST
    xc = x[:, None, :]                                           # (B, 1, S)
    h1 = jax.lax.conv_general_dilated(
        xc, conv1_w, (1,), 'VALID',
        dimension_numbers=('NCH', 'OIH', 'NCH'), precision=hp)
    h1 = jnp.maximum(h1 + conv1_b[None, :, None], 0.0)
    h2 = jax.lax.conv_general_dilated(
        h1, conv2_w, (1,), 'VALID',
        dimension_numbers=('NCH', 'OIH', 'NCH'), precision=hp)
    h2 = jnp.maximum(h2 + conv2_b[None, :, None], 0.0)
    flat = h2.reshape(x.shape[0], -1)
    out = jnp.dot(flat, out_w.T, precision=hp) + out_b
    return out, flat


if __name__ == "__main__":
    # Module hyper-parameters (consistent with the PyTorch __init__)
    n_filters = (8, 16, 4)          # feat1, feat2, feat3 (feat3/conv3 unused)
    filter_sizes = (5, 5, 3)        # size1, size2, size3 (size3/conv3 unused)
    spike_size = 32
    feat1, feat2, _ = n_filters
    size1, size2, _ = filter_sizes
    L2 = spike_size - size1 - size2 + 2
    n_input_feat = feat2 * L2

    # TODO(synk): conv3 is initialized in the PyTorch module but never used in
    # forward(); its parameters are intentionally not created here.

    key = jax.random.PRNGKey(0)
    ks = jax.random.split(key, 7)

    def uinit(k, shape, fan_in):
        bound = 1.0 / np.sqrt(np.float32(fan_in))
        return jax.random.uniform(k, shape, jnp.float32, -bound, bound)

    # PyTorch-shaped parameters (deterministic, synthetic)
    conv1_w = uinit(ks[0], (feat1, 1, size1), 1 * size1)           # (O, I, K)
    conv1_b = uinit(ks[1], (feat1,), 1 * size1)
    conv2_w = uinit(ks[2], (feat2, feat1, size2), feat1 * size2)   # (O, I, K)
    conv2_b = uinit(ks[3], (feat2,), feat1 * size2)
    out_w = uinit(ks[4], (spike_size, n_input_feat), n_input_feat)
    out_b = uinit(ks[5], (spike_size,), n_input_feat)

    # Batched input: thousands of spikes per call so the grid tile is large.
    B = 2048
    x = jax.random.normal(ks[6], (B, spike_size), jnp.float32)

    ref_out, ref_feat = reference_forward(x, conv1_w, conv1_b, conv2_w,
                                          conv2_b, out_w, out_b)

    # float32-operand path (exact semantics check, tight tolerance).
    params_f32 = build_denoise_params(conv1_w, conv1_b, conv2_w, conv2_b,
                                      out_w, out_b, spike_size,
                                      param_dtype=jnp.float32)
    out32, feat32 = denoise_forward(x, params_f32, spike_size=spike_size,
                                    block_b=1024)
    out32 = jax.block_until_ready(out32)
    feat32 = jax.block_until_ready(feat32)
    assert out32.shape == (B, spike_size)
    assert feat32.shape == (B, n_input_feat)
    assert jnp.allclose(out32, ref_out, atol=1e-3, rtol=1e-3)
    assert jnp.allclose(feat32, ref_feat, atol=1e-3, rtol=1e-3)

    # Default bf16-matmul-operand path (faster DMA / MXU), relaxed tolerance.
    params_bf16 = build_denoise_params(conv1_w, conv1_b, conv2_w, conv2_b,
                                       out_w, out_b, spike_size)
    out16, feat16 = denoise_forward(x, params_bf16, spike_size=spike_size,
                                    block_b=1024)
    out16 = jax.block_until_ready(out16)
    feat16 = jax.block_until_ready(feat16)
    assert jnp.allclose(out16, ref_out, atol=5e-2, rtol=5e-2)
    assert jnp.allclose(feat16, ref_feat, atol=5e-2, rtol=5e-2)

    # Small / ragged batch path (exercises the batch-padding logic).
    out_s, feat_s = denoise_forward(x[:3], params_f32, spike_size=spike_size,
                                    block_b=1024)
    out_s = jax.block_until_ready(out_s)
    assert out_s.shape == (3, spike_size)
    assert feat_s.shape == (3, n_input_feat)
    assert jnp.allclose(out_s, ref_out[:3], atol=1e-3, rtol=1e-3)
    assert jnp.allclose(feat_s, ref_feat[:3], atol=1e-3, rtol=1e-3)

    print("KERNEL_OK")
</pallas_src>

<mosaic_0001>
module attributes {stable_mosaic.version = 11 : i64} {
  func.func @denoise_kernel(%arg0: i32, %arg1: memref<1024x32xf32, #tpu.memory_space<vmem>>, %arg2: memref<32x256xf32, #tpu.memory_space<vmem>>, %arg3: memref<256x384xf32, #tpu.memory_space<vmem>>, %arg4: memref<384x32xf32, #tpu.memory_space<vmem>>, %arg5: memref<3x384xf32, #tpu.memory_space<vmem>>, %arg6: memref<1024x32xf32, #tpu.memory_space<vmem>>, %arg7: memref<1024x384xf32, #tpu.memory_space<vmem>>) attributes {dimension_semantics = [#tpu.dimension_semantics<parallel>], iteration_bounds = array<i64: 2>, scalar_prefetch = 0 : i64, scratch_operands = 0 : i64, tpu.core_type = #tpu.core_type<tc>, window_params = [{transform_indices = @transform_0, window_bounds = array<i64: 1024, 32>}, {pipeline_mode = #tpu.pipeline_mode<synchronous>, transform_indices = @transform_1, window_bounds = array<i64: 32, 256>}, {pipeline_mode = #tpu.pipeline_mode<synchronous>, transform_indices = @transform_2, window_bounds = array<i64: 256, 384>}, {pipeline_mode = #tpu.pipeline_mode<synchronous>, transform_indices = @transform_3, window_bounds = array<i64: 384, 32>}, {pipeline_mode = #tpu.pipeline_mode<synchronous>, transform_indices = @transform_4, window_bounds = array<i64: 3, 384>}, {transform_indices = @transform_5, window_bounds = array<i64: 1024, 32>}, {transform_indices = @transform_6, window_bounds = array<i64: 1024, 384>}]} {
    %c0 = arith.constant 0 : index
    %c0_0 = arith.constant 0 : index
    %0 = vector.load %arg1[%c0, %c0_0] : memref<1024x32xf32, #tpu.memory_space<vmem>>, vector<1024x32xf32>
    %c0_1 = arith.constant 0 : index
    %c0_2 = arith.constant 0 : index
    %1 = vector.load %arg2[%c0_1, %c0_2] : memref<32x256xf32, #tpu.memory_space<vmem>>, vector<32x256xf32>
    %cst = arith.constant dense<0.000000e+00> : vector<1024x256xf32>
    %2 = tpu.matmul %0, %1, %cst {dimension_numbers = #tpu.dot_dimension_numbers<[1], [0], [0], [1], [0, 0, 1, 1], [], []>} : vector<1024x32xf32>, vector<32x256xf32>, vector<1024x256xf32> -> vector<1024x256xf32>
    %c0_3 = arith.constant 0 : index
    %c0_4 = arith.constant 0 : index
    %3 = vector.load %arg5[%c0_3, %c0_4] : memref<3x384xf32, #tpu.memory_space<vmem>>, vector<1x256xf32>
    %4 = vector.broadcast %3 : vector<1x256xf32> to vector<1024x256xf32>
    %5 = arith.addf %2, %4 : vector<1024x256xf32>
    %cst_5 = arith.constant 0.000000e+00 : f32
    %6 = vector.broadcast %cst_5 : f32 to vector<1024x256xf32>
    %7 = arith.maximumf %5, %6 : vector<1024x256xf32>
    %c0_6 = arith.constant 0 : index
    %c0_7 = arith.constant 0 : index
    %8 = vector.load %arg3[%c0_6, %c0_7] : memref<256x384xf32, #tpu.memory_space<vmem>>, vector<256x384xf32>
    %cst_8 = arith.constant dense<0.000000e+00> : vector<1024x384xf32>
    %9 = tpu.matmul %7, %8, %cst_8 {dimension_numbers = #tpu.dot_dimension_numbers<[1], [0], [0], [1], [0, 0, 1, 1], [], []>} : vector<1024x256xf32>, vector<256x384xf32>, vector<1024x384xf32> -> vector<1024x384xf32>
    %c1 = arith.constant 1 : index
    %c0_9 = arith.constant 0 : index
    %10 = vector.load %arg5[%c1, %c0_9] : memref<3x384xf32, #tpu.memory_space<vmem>>, vector<1x384xf32>
    %11 = vector.broadcast %10 : vector<1x384xf32> to vector<1024x384xf32>
    %12 = arith.addf %9, %11 : vector<1024x384xf32>
    %cst_10 = arith.constant 0.000000e+00 : f32
    %13 = vector.broadcast %cst_10 : f32 to vector<1024x384xf32>
    %14 = arith.maximumf %12, %13 : vector<1024x384xf32>
    %c0_11 = arith.constant 0 : index
    %c0_12 = arith.constant 0 : index
    %15 = vector.load %arg7[%c0_11, %c0_12] : memref<1024x384xf32, #tpu.memory_space<vmem>>, vector<1024x384xf32>
    tpu.vector_store %arg7[%c0_11, %c0_12], %14 {strides = array<i32>} : memref<1024x384xf32, #tpu.memory_space<vmem>>, vector<1024x384xf32>,
    %c0_13 = arith.constant 0 : index
    %c0_14 = arith.constant 0 : index
    %16 = vector.load %arg4[%c0_13, %c0_14] : memref<384x32xf32, #tpu.memory_space<vmem>>, vector<384x32xf32>
    %cst_15 = arith.constant dense<0.000000e+00> : vector<1024x32xf32>
    %17 = tpu.matmul %14, %16, %cst_15 {dimension_numbers = #tpu.dot_dimension_numbers<[1], [0], [0], [1], [0, 0, 1, 1], [], []>} : vector<1024x384xf32>, vector<384x32xf32>, vector<1024x32xf32> -> vector<1024x32xf32>
    %c2 = arith.constant 2 : index
    %c0_16 = arith.constant 0 : index
    %18 = vector.load %arg5[%c2, %c0_16] : memref<3x384xf32, #tpu.memory_space<vmem>>, vector<1x32xf32>
    %19 = vector.broadcast %18 : vector<1x32xf32> to vector<1024x32xf32>
    %20 = arith.addf %17, %19 : vector<1024x32xf32>
    %c0_17 = arith.constant 0 : index
    %c0_18 = arith.constant 0 : index
    %21 = vector.load %arg6[%c0_17, %c0_18] : memref<1024x32xf32, #tpu.memory_space<vmem>>, vector<1024x32xf32>
    tpu.vector_store %arg6[%c0_17, %c0_18], %20 {strides = array<i32>} : memref<1024x32xf32, #tpu.memory_space<vmem>>, vector<1024x32xf32>,
    return
  }
  func.func @transform_0(%arg0: i32) -> (i32, i32) {
    %c0_i32 = arith.constant 0 : i32
    %c0_i32_0 = arith.constant 0 : i32
    return %arg0, %c0_i32 : i32, i32
  }
  func.func @transform_1(%arg0: i32) -> (i32, i32) {
    %c0_i32 = arith.constant 0 : i32
    %c0_i32_0 = arith.constant 0 : i32
    %c0_i32_1 = arith.constant 0 : i32
    return %c0_i32, %c0_i32_0 : i32, i32
  }
  func.func @transform_2(%arg0: i32) -> (i32, i32) {
    %c0_i32 = arith.constant 0 : i32
    %c0_i32_0 = arith.constant 0 : i32
    %c0_i32_1 = arith.constant 0 : i32
    return %c0_i32, %c0_i32_0 : i32, i32
  }
  func.func @transform_3(%arg0: i32) -> (i32, i32) {
    %c0_i32 = arith.constant 0 : i32
    %c0_i32_0 = arith.constant 0 : i32
    %c0_i32_1 = arith.constant 0 : i32
    return %c0_i32, %c0_i32_0 : i32, i32
  }
  func.func @transform_4(%arg0: i32) -> (i32, i32) {
    %c0_i32 = arith.constant 0 : i32
    %c0_i32_0 = arith.constant 0 : i32
    %c0_i32_1 = arith.constant 0 : i32
    return %c0_i32, %c0_i32_0 : i32, i32
  }
  func.func @transform_5(%arg0: i32) -> (i32, i32) {
    %c0_i32 = arith.constant 0 : i32
    %c0_i32_0 = arith.constant 0 : i32
    return %arg0, %c0_i32 : i32, i32
  }
  func.func @transform_6(%arg0: i32) -> (i32, i32) {
    %c0_i32 = arith.constant 0 : i32
    %c0_i32_0 = arith.constant 0 : i32
    return %arg0, %c0_i32 : i32, i32
  }
}

</mosaic_0001>

<llo_original>
// kernel: tpu_custom_call.1
$region0: #{tpu_custom_call.1}
  #allocation0 [shape = 'u32[]', space=smem, size = 0x4, offset = 0x4, fixed_abs, tag = 'smem constant byte address 0x4 - core index']
  #allocation1 [shape = 'u32[72,128]{1,0:T(1,128)}', space=vmem, size = 0x9000, scoped, tag = 'internal scratch']
  %s0 = inlined_call_operand.vmem [shape: f32[2048,32], index: 0, kind: input, shape index: {}]
  %s1 = inlined_call_operand.hbm [shape: f32[32,256], index: 1, kind: input, shape index: {}]
  %s2 = inlined_call_operand.hbm [shape: f32[256,384], index: 2, kind: input, shape index: {}]
  %s3 = inlined_call_operand.vmem [shape: f32[384,32], index: 3, kind: input, shape index: {}]
  %s4 = inlined_call_operand.hbm [shape: f32[3,384], index: 4, kind: input, shape index: {}]
  %s5 = inlined_call_operand.vmem [shape: f32[2048,32], index: 5, kind: output, shape index: {0}]
  %s6 = inlined_call_operand.hbm [shape: f32[2048,384], index: 6, kind: output, shape index: {1}]
  %7 = xla_tuple %s5, %s6
  %s8 = sld [smem:[#allocation0]]
  $region73: #{tpu_custom_call.1} parent=0
    _
  %s10 = ssub.s32 1, %s8
  %s11 = scalar_select 0, %s10, %s8
  $region1: #{tpu_custom_call.1} parent=0
    #allocation2 [shape = 'u8[32768]{0}', space=vmem, size = 0x8000, scoped, tag = 'input window, operand 1, single buffered']
    #allocation3 [shape = 's32[2]{0}', space=sflag, size = 0x8, scoped, tag = 'scoped memory for tpu_custom_call.1']
    #allocation4 [shape = 's32[2]{0}', space=sflag, size = 0x8, scoped, tag = 'scoped memory for tpu_custom_call.1']
    #allocation5 [shape = 'u8[393216]{0}', space=vmem, size = 0x60000, scoped, tag = 'input window, operand 2, single buffered']
    #allocation6 [shape = 's32[1]{0}', space=sflag, size = 0x4, scoped, tag = 'scoped memory for tpu_custom_call.1']
    #allocation7 [shape = 'u8[6144]{0}', space=vmem, size = 0x1800, scoped, tag = 'input window, operand 4, single buffered']
    #allocation8 [shape = 'u8[3145728]{0}', space=vmem, size = 0x300000, scoped, tag = 'output window, operand 1']
    %12 = vsyncpa [#allocation3], 0
    %13 = vsyncpa [#allocation6], 0
    %14 = vsyncpa [#allocation4], 0
    %s15 = scalar_lea.sflag [#allocation4], 1
    %16 = vsyncpa %s15, 0
    loop: start=0, step=1, limit=4
    $region2: #{tpu_custom_call.1} parent=1 // loop_pre_header
      _
    $region3: #{tpu_custom_call.1} parent=1 // loop_header
      %s18 = sphi 0, %s22
      %p19 = scmp.ge.s32.totalorder %s18, 4
      %s28 = sphi 0, %s30
      %s31 = sphi 0, %s28
      %s32 = sphi 0, %s31
      %s48 = sphi 0, %s32
      %s52 = sphi 0, %s52
      %s54 = sphi 0, %s52
      %s55 = sphi 0, %s54
      %s69 = sphi 0, %s55
      %s73 = sphi 0, %s73
      %s75 = sphi 0, %s73
      %s76 = sphi 0, %s75
      %s90 = sphi 0, %s76
      %s94 = sphi 0, %s94
      %s96 = sphi 0, %s94
      %s97 = sphi 0, %s96
      %s111 = sphi 0, %s97
      %s115 = sphi 0, %s115
      %s117 = sphi 0, %s115
      %s118 = sphi 0, %s117
      %s132 = sphi 0, %s118
      %s138 = sphi 0, %s140
      %s141 = sphi 0, %s138
      %s142 = sphi 0, %s141
      %s158 = sphi 0, %s142
      %s164 = sphi 0, %s166
      %s167 = sphi 0, %s164
      %s168 = sphi 0, %s167
      %s184 = sphi 0, %s168
    $region4: #{tpu_custom_call.1} parent=1 // loop_header_branch
      %21 = sbr.rel (%p19) target = $region8
    $region5: #{tpu_custom_call.1} parent=1 // loop_body
      %s23 = ssub.s32 %s18, 1
      %s24 = ssub.s32 %s18, 2
      %s25 = sadd.s32 %s18, 1
      %s26 = ssub.s32 %s18, %s25
      %p27 = scmp.eq.s32.totalorder %s26, 0
      %s29 = sadd.s32 %s28, 1
      %s30 = scalar_select %p27, %s28, %s29
      %p33 = pneg %p27
      %p34 = scmp.eq.s32.totalorder %s18, 1
      %p35 = por %p33, %p34
      %p36 = scmp.ne.s32.totalorder %s28, %s31
      %p37 = scmp.eq.s32.totalorder %s18, 0
      %p38 = por %p36, %p37
      %p39 = scmp.ne.s32.totalorder %s28, %s31
      %p40 = scmp.eq.s32.totalorder %s23, 1
      %p41 = por %p39, %p40
      %p42 = scmp.ne.s32.totalorder %s31, %s32
      %p43 = scmp.eq.s32.totalorder %s23, 0
      %p44 = por %p42, %p43
      %p45 = scmp.ne.s32.totalorder %s31, %s32
      %p46 = scmp.eq.s32.totalorder %s24, 1
      %p47 = por %p45, %p46
      %p49 = scmp.ne.s32.totalorder %s32, %s48
      %p50 = scmp.eq.s32.totalorder %s24, 0
      %p51 = por %p49, %p50
      %s53 = sadd.s32 %s52, 1
      %p56 = scmp.eq.s32.totalorder %s18, 1
      %p57 = scmp.ne.s32.totalorder %s52, %s54
      %p58 = scmp.eq.s32.totalorder %s18, 0
      %p59 = por %p57, %p58
      %p60 = scmp.ne.s32.totalorder %s52, %s54
      %p61 = scmp.eq.s32.totalorder %s23, 1
      %p62 = por %p60, %p61
      %p63 = scmp.ne.s32.totalorder %s54, %s55
      %p64 = scmp.eq.s32.totalorder %s23, 0
      %p65 = por %p63, %p64
      %p66 = scmp.ne.s32.totalorder %s54, %s55
      %p67 = scmp.eq.s32.totalorder %s24, 1
      %p68 = por %p66, %p67
      %p70 = scmp.ne.s32.totalorder %s55, %s69
      %p71 = scmp.eq.s32.totalorder %s24, 0
      %p72 = por %p70, %p71
      %s74 = sadd.s32 %s73, 1
      %p77 = scmp.eq.s32.totalorder %s18, 1
      %p78 = scmp.ne.s32.totalorder %s73, %s75
      %p79 = scmp.eq.s32.totalorder %s18, 0
      %p80 = por %p78, %p79
      %p81 = scmp.ne.s32.totalorder %s73, %s75
      %p82 = scmp.eq.s32.totalorder %s23, 1
      %p83 = por %p81, %p82
      %p84 = scmp.ne.s32.totalorder %s75, %s76
      %p85 = scmp.eq.s32.totalorder %s23, 0
      %p86 = por %p84, %p85
      %p87 = scmp.ne.s32.totalorder %s75, %s76
      %p88 = scmp.eq.s32.totalorder %s24, 1
      %p89 = por %p87, %p88
      %p91 = scmp.ne.s32.totalorder %s76, %s90
      %p92 = scmp.eq.s32.totalorder %s24, 0
      %p93 = por %p91, %p92
      %s95 = sadd.s32 %s94, 1
      %p98 = scmp.eq.s32.totalorder %s18, 1
      %p99 = scmp.ne.s32.totalorder %s94, %s96
      %p100 = scmp.eq.s32.totalorder %s18, 0
      %p101 = por %p99, %p100
      %p102 = scmp.ne.s32.totalorder %s94, %s96
      %p103 = scmp.eq.s32.totalorder %s23, 1
      %p104 = por %p102, %p103
      %p105 = scmp.ne.s32.totalorder %s96, %s97
      %p106 = scmp.eq.s32.totalorder %s23, 0
      %p107 = por %p105, %p106
      %p108 = scmp.ne.s32.totalorder %s96, %s97
      %p109 = scmp.eq.s32.totalorder %s24, 1
      %p110 = por %p108, %p109
      %p112 = scmp.ne.s32.totalorder %s97, %s111
      %p113 = scmp.eq.s32.totalorder %s24, 0
      %p114 = por %p112, %p113
      %s116 = sadd.s32 %s115, 1
      %p119 = scmp.eq.s32.totalorder %s18, 1
      %p120 = scmp.ne.s32.totalorder %s115, %s117
      %p121 = scmp.eq.s32.totalorder %s18, 0
      %p122 = por %p120, %p121
      %p123 = scmp.ne.s32.totalorder %s115, %s117
      %p124 = scmp.eq.s32.totalorder %s23, 1
      %p125 = por %p123, %p124
      %p126 = scmp.ne.s32.totalorder %s117, %s118
      %p127 = scmp.eq.s32.totalorder %s23, 0
      %p128 = por %p126, %p127
      %p129 = scmp.ne.s32.totalorder %s117, %s118
      %p130 = scmp.eq.s32.totalorder %s24, 1
      %p131 = por %p129, %p130
      %p133 = scmp.ne.s32.totalorder %s118, %s132
      %p134 = scmp.eq.s32.totalorder %s24, 0
      %p135 = por %p133, %p134
      %s136 = ssub.s32 %s18, %s25
      %p137 = scmp.eq.s32.totalorder %s136, 0
      %s139 = sadd.s32 %s138, 1
      %s140 = scalar_select %p137, %s138, %s139
      %p143 = pneg %p137
      %p144 = scmp.eq.s32.totalorder %s18, 1
      %p145 = por %p143, %p144
      %p146 = scmp.ne.s32.totalorder %s138, %s141
      %p147 = scmp.eq.s32.totalorder %s18, 0
      %p148 = por %p146, %p147
      %p149 = scmp.ne.s32.totalorder %s138, %s141
      %p150 = scmp.eq.s32.totalorder %s23, 1
      %p151 = por %p149, %p150
      %p152 = scmp.ne.s32.totalorder %s141, %s142
      %p153 = scmp.eq.s32.totalorder %s23, 0
      %p154 = por %p152, %p153
      %p155 = scmp.ne.s32.totalorder %s141, %s142
      %p156 = scmp.eq.s32.totalorder %s24, 1
      %p157 = por %p155, %p156
      %p159 = scmp.ne.s32.totalorder %s142, %s158
      %p160 = scmp.eq.s32.totalorder %s24, 0
      %p161 = por %p159, %p160
      %s162 = ssub.s32 %s18, %s25
      %p163 = scmp.eq.s32.totalorder %s162, 0
      %s165 = sadd.s32 %s164, 1
      %s166 = scalar_select %p163, %s164, %s165
      %p169 = pneg %p163
      %p170 = scmp.eq.s32.totalorder %s18, 1
      %p171 = por %p169, %p170
      %p172 = scmp.ne.s32.totalorder %s164, %s167
      %p173 = scmp.eq.s32.totalorder %s18, 0
      %p174 = por %p172, %p173
      %p175 = scmp.ne.s32.totalorder %s164, %s167
      %p176 = scmp.eq.s32.totalorder %s23, 1
      %p177 = por %p175, %p176
      %p178 = scmp.ne.s32.totalorder %s167, %s168
      %p179 = scmp.eq.s32.totalorder %s23, 0
      %p180 = por %p178, %p179
      %p181 = scmp.ne.s32.totalorder %s167, %s168
      %p182 = scmp.eq.s32.totalorder %s24, 1
      %p183 = por %p181, %p182
      %p185 = scmp.ne.s32.totalorder %s168, %s184
      %p186 = scmp.eq.s32.totalorder %s24, 0
      %p187 = por %p185, %p186
      %p188 = scmp.le.s32.totalorder 1, %s18
      %p189 = scmp.lt.s32.totalorder %s18, 3
      %p190 = pnand %p188, %p189
      %p191 = pneg %p190
      // Predicated region
      $region9: #{tpu_custom_call.1} parent=5 // pred_check
        _
      $region10: #{tpu_custom_call.1} parent=5 // pred_check_branch
        %193 = sbr.rel (%p190) target = $region12
      $region11: #{tpu_custom_call.1} parent=5 // pred_region
        %s194 = ssub.s32 %s18, 1
        // Predicated region
        $region13: #{tpu_custom_call.1} parent=11 // pred_check
          %p195 = pneg %p65
        $region14: #{tpu_custom_call.1} parent=11 // pred_check_branch
          %197 = sbr.rel (%p195) target = $region16
        $region15: #{tpu_custom_call.1} parent=11 // pred_region
          %199 = vsyncadd [#allocation3], 0
          %s200 = sshll.u32 %s1, 4
          %s201 = int_to_ptr.hbm [resolvable:$true] %s200
          %s202 = sshll.u32 [#allocation2], 4
          %s203 = int_to_ptr.vmem [resolvable:$true] %s202
          %208 = dma.hbm_to_vmem [thread:$0]  %s201, 1024, %s203, [#allocation3], 256, 256, 16
        $region16: #{tpu_custom_call.1} parent=11 // pred_fallthru
          _
        // Predicated region
        $region17: #{tpu_custom_call.1} parent=11 // pred_check
          %p209 = pneg %p86
        $region18: #{tpu_custom_call.1} parent=11 // pred_check_branch
          %211 = sbr.rel (%p209) target = $region20
        $region19: #{tpu_custom_call.1} parent=11 // pred_region
          %213 = vsyncadd [#allocation6], 0
          %s214 = sshll.u32 %s2, 4
          %s215 = int_to_ptr.hbm [resolvable:$true] %s214
          %s216 = sshll.u32 [#allocation5], 4
          %s217 = int_to_ptr.vmem [resolvable:$true] %s216
          %222 = dma.hbm_to_vmem [thread:$0]  %s215, 12288, %s217, [#allocation6], 384, 384, 24
        $region20: #{tpu_custom_call.1} parent=11 // pred_fallthru
          _
        // Predicated region
        $region21: #{tpu_custom_call.1} parent=11 // pred_check
          %p223 = pneg %p107
        $region22: #{tpu_custom_call.1} parent=11 // pred_check_branch
          %225 = sbr.rel (%p223) target = $region24
        $region23: #{tpu_custom_call.1} parent=11 // pred_region
          _
        $region24: #{tpu_custom_call.1} parent=11 // pred_fallthru
          _
        // Predicated region
        $region25: #{tpu_custom_call.1} parent=11 // pred_check
          %p226 = pneg %p128
        $region26: #{tpu_custom_call.1} parent=11 // pred_check_branch
          %228 = sbr.rel (%p226) target = $region28
        $region27: #{tpu_custom_call.1} parent=11 // pred_region
          %230 = vsyncadd [#allocation6], 0
          %s232 = sshll.u32 %s4, 4
          %s233 = int_to_ptr.hbm [resolvable:$true] %s232
          %s234 = sshll.u32 [#allocation7], 4
          %s235 = int_to_ptr.vmem [resolvable:$true] %s234
          %237 = dma.hbm_to_vmem [thread:$0]  %s233, 192, %s235, [#allocation6]
        $region28: #{tpu_custom_call.1} parent=11 // pred_fallthru
          _
      $region12: #{tpu_custom_call.1} parent=5 // pred_fallthru
        _
      %p238 = scmp.lt.s32.totalorder %s18, 2
      // Predicated region
      $region29: #{tpu_custom_call.1} parent=5 // pred_check
        %p239 = pneg %p238
      $region30: #{tpu_custom_call.1} parent=5 // pred_check_branch
        %241 = sbr.rel (%p239) target = $region32
      $region31: #{tpu_custom_call.1} parent=5 // pred_region
        // Predicated region
        $region33: #{tpu_custom_call.1} parent=31 // pred_check
          %p242 = pneg %p38
        $region34: #{tpu_custom_call.1} parent=31 // pred_check_branch
          %244 = sbr.rel (%p242) target = $region36
        $region35: #{tpu_custom_call.1} parent=31 // pred_region
          %s245 = smul.u32 128, %s18
          %p246 = scmp.lt.s32.totalorder %s245, 255
          %s247 = scalar_select %p246, %s245, 255
          %s248 = smul.addr %s247, 8
          %s249 = scalar_lea.vmem %s0, %s248
          %s250 = smul.u32 128, %s18
        $region36: #{tpu_custom_call.1} parent=31 // pred_fallthru
          _
      $region32: #{tpu_custom_call.1} parent=5 // pred_fallthru
        _
      %p251 = scmp.le.s32.totalorder 1, %s18
      %p252 = scmp.lt.s32.totalorder %s18, 3
      %p253 = pnand %p251, %p252
      %p254 = pneg %p253
      // Predicated region
      $region37: #{tpu_custom_call.1} parent=5 // pred_check
        _
      $region38: #{tpu_custom_call.1} parent=5 // pred_check_branch
        %256 = sbr.rel (%p253) target = $region40
      $region39: #{tpu_custom_call.1} parent=5 // pred_region
        %s257 = ssub.s32 %s18, 1
        // Predicated region
        $region41: #{tpu_custom_call.1} parent=39 // pred_check
          %p258 = pneg %p65
        $region42: #{tpu_custom_call.1} parent=39 // pred_check_branch
          %260 = sbr.rel (%p258) target = $region44
        $region43: #{tpu_custom_call.1} parent=39 // pred_region
          %262 = dma.done [#allocation3], 1024
        $region44: #{tpu_custom_call.1} parent=39 // pred_fallthru
          _
        // Predicated region
        $region45: #{tpu_custom_call.1} parent=39 // pred_check
          %p263 = pneg %p86
        $region46: #{tpu_custom_call.1} parent=39 // pred_check_branch
          %265 = sbr.rel (%p263) target = $region48
        $region47: #{tpu_custom_call.1} parent=39 // pred_region
          %267 = dma.done [#allocation6], 12288
        $region48: #{tpu_custom_call.1} parent=39 // pred_fallthru
          _
        // Predicated region
        $region49: #{tpu_custom_call.1} parent=39 // pred_check
          %p268 = pneg %p128
        $region50: #{tpu_custom_call.1} parent=39 // pred_check_branch
          %270 = sbr.rel (%p268) target = $region52
        $region51: #{tpu_custom_call.1} parent=39 // pred_region
          %272 = dma.done [#allocation6], 192
        $region52: #{tpu_custom_call.1} parent=39 // pred_fallthru
          _
        %s273 = smul.u32 128, %s23
        %p274 = scmp.lt.s32.totalorder %s273, 255
        %s275 = scalar_select %p274, %s273, 255
        %s276 = smul.addr %s275, 8
        %s277 = scalar_lea.vmem %s0, %s276
        %p278 = pneg %p44
        %p279 = pneg %p41
        %p280 = pneg %p65
        %p281 = pneg %p62
        %p282 = pneg %p86
        %p283 = pneg %p83
        %p284 = pneg %p107
        %p285 = pneg %p104
        %p286 = pneg %p128
        %p287 = pneg %p125
        %p288 = pneg %p154
        %p289 = pneg %p151
        %s290 = smul.u32 128, %s23
        %p291 = scmp.lt.s32.totalorder %s290, 255
        %s292 = scalar_select %p291, %s290, 255
        %s293 = smul.addr %s292, 8
        %s294 = scalar_lea.vmem %s5, %s293
        %p295 = pneg %p180
        %p296 = pneg %p177
        %s297 = sand.u32 %s167, 1
        %s298 = scalar_lea.sflag [#allocation4], %s297
        %s299 = sand.u32 %s167, 1
        %s300 = smul.addr %s299, 3072
        %s301 = scalar_lea.vmem [#allocation8], %s300
        %s302 = smul.u32 128, %s23
        %p303 = scmp.lt.s32.totalorder %s302, 255
        %s304 = scalar_select %p303, %s302, 255
        %s305 = smul.addr %s304, 8
        %s306 = scalar_lea.vmem %s0, %s305
        %s307 = smul.u32 128, %s23
        %s308 = smul.u32 128, %s23
        %p309 = scmp.lt.s32.totalorder %s308, 255
        %s310 = scalar_select %p309, %s308, 255
        %s311 = smul.addr %s310, 8
        %s312 = scalar_lea.vmem %s5, %s311
        %s313 = smul.u32 128, %s23
        %s314 = smul.u32 128, %s23
        %v315 = vld [vmem:[%s306] sm:$0xff]
        %v316 = vld [vmem:[%s306 + $0x8] sm:$0xff]
        %v317 = vld [vmem:[%s306 + $0x10] sm:$0xff]
        %v318 = vld [vmem:[%s306 + $0x18] sm:$0xff]
        %v319 = vld [vmem:[%s306 + $0x20] sm:$0xff]
        %v320 = vld [vmem:[%s306 + $0x28] sm:$0xff]
        %v321 = vld [vmem:[%s306 + $0x30] sm:$0xff]
        %v322 = vld [vmem:[%s306 + $0x38] sm:$0xff]
        %v323 = vld [vmem:[%s306 + $0x40] sm:$0xff]
        %v324 = vld [vmem:[%s306 + $0x48] sm:$0xff]
        %v325 = vld [vmem:[%s306 + $0x50] sm:$0xff]
        %v326 = vld [vmem:[%s306 + $0x58] sm:$0xff]
        %v327 = vld [vmem:[%s306 + $0x60] sm:$0xff]
        %v328 = vld [vmem:[%s306 + $0x68] sm:$0xff]
        %v329 = vld [vmem:[%s306 + $0x70] sm:$0xff]
        %v330 = vld [vmem:[%s306 + $0x78] sm:$0xff]
        %v331 = vld [vmem:[%s306 + $0x80] sm:$0xff]
        %v332 = vld [vmem:[%s306 + $0x88] sm:$0xff]
        %v333 = vld [vmem:[%s306 + $0x90] sm:$0xff]
        %v334 = vld [vmem:[%s306 + $0x98] sm:$0xff]
        %v335 = vld [vmem:[%s306 + $0xa0] sm:$0xff]
        %v336 = vld [vmem:[%s306 + $0xa8] sm:$0xff]
        %v337 = vld [vmem:[%s306 + $0xb0] sm:$0xff]
        %v338 = vld [vmem:[%s306 + $0xb8] sm:$0xff]
        %v339 = vld [vmem:[%s306 + $0xc0] sm:$0xff]
        %v340 = vld [vmem:[%s306 + $0xc8] sm:$0xff]
        %v341 = vld [vmem:[%s306 + $0xd0] sm:$0xff]
        %v342 = vld [vmem:[%s306 + $0xd8] sm:$0xff]
        %v343 = vld [vmem:[%s306 + $0xe0] sm:$0xff]
        %v344 = vld [vmem:[%s306 + $0xe8] sm:$0xff]
        %v345 = vld [vmem:[%s306 + $0xf0] sm:$0xff]
        %v346 = vld [vmem:[%s306 + $0xf8] sm:$0xff]
        %v347 = vld [vmem:[%s306 + $0x100] sm:$0xff]
        %v348 = vld [vmem:[%s306 + $0x108] sm:$0xff]
        %v349 = vld [vmem:[%s306 + $0x110] sm:$0xff]
        %v350 = vld [vmem:[%s306 + $0x118] sm:$0xff]
        %v351 = vld [vmem:[%s306 + $0x120] sm:$0xff]
        %v352 = vld [vmem:[%s306 + $0x128] sm:$0xff]
        %v353 = vld [vmem:[%s306 + $0x130] sm:$0xff]
        %v354 = vld [vmem:[%s306 + $0x138] sm:$0xff]
        %v355 = vld [vmem:[%s306 + $0x140] sm:$0xff]
        %v356 = vld [vmem:[%s306 + $0x148] sm:$0xff]
        %v357 = vld [vmem:[%s306 + $0x150] sm:$0xff]
        %v358 = vld [vmem:[%s306 + $0x158] sm:$0xff]
        %v359 = vld [vmem:[%s306 + $0x160] sm:$0xff]
        %v360 = vld [vmem:[%s306 + $0x168] sm:$0xff]
        %v361 = vld [vmem:[%s306 + $0x170] sm:$0xff]
        %v362 = vld [vmem:[%s306 + $0x178] sm:$0xff]
        %v363 = vld [vmem:[%s306 + $0x180] sm:$0xff]
        %v364 = vld [vmem:[%s306 + $0x188] sm:$0xff]
        %v365 = vld [vmem:[%s306 + $0x190] sm:$0xff]
        %v366 = vld [vmem:[%s306 + $0x198] sm:$0xff]
        %v367 = vld [vmem:[%s306 + $0x1a0] sm:$0xff]
        %v368 = vld [vmem:[%s306 + $0x1a8] sm:$0xff]
        %v369 = vld [vmem:[%s306 + $0x1b0] sm:$0xff]
        %v370 = vld [vmem:[%s306 + $0x1b8] sm:$0xff]
        %v371 = vld [vmem:[%s306 + $0x1c0] sm:$0xff]
        %v372 = vld [vmem:[%s306 + $0x1c8] sm:$0xff]
        %v373 = vld [vmem:[%s306 + $0x1d0] sm:$0xff]
        %v374 = vld [vmem:[%s306 + $0x1d8] sm:$0xff]
        %v375 = vld [vmem:[%s306 + $0x1e0] sm:$0xff]
        %v376 = vld [vmem:[%s306 + $0x1e8] sm:$0xff]
        %v377 = vld [vmem:[%s306 + $0x1f0] sm:$0xff]
        %v378 = vld [vmem:[%s306 + $0x1f8] sm:$0xff]
        %v379 = vld [vmem:[%s306 + $0x200] sm:$0xff]
        %v380 = vld [vmem:[%s306 + $0x208] sm:$0xff]
        %v381 = vld [vmem:[%s306 + $0x210] sm:$0xff]
        %v382 = vld [vmem:[%s306 + $0x218] sm:$0xff]
        %v383 = vld [vmem:[%s306 + $0x220] sm:$0xff]
        %v384 = vld [vmem:[%s306 + $0x228] sm:$0xff]
        %v385 = vld [vmem:[%s306 + $0x230] sm:$0xff]
        %v386 = vld [vmem:[%s306 + $0x238] sm:$0xff]
        %v387 = vld [vmem:[%s306 + $0x240] sm:$0xff]
        %v388 = vld [vmem:[%s306 + $0x248] sm:$0xff]
        %v389 = vld [vmem:[%s306 + $0x250] sm:$0xff]
        %v390 = vld [vmem:[%s306 + $0x258] sm:$0xff]
        %v391 = vld [vmem:[%s306 + $0x260] sm:$0xff]
        %v392 = vld [vmem:[%s306 + $0x268] sm:$0xff]
        %v393 = vld [vmem:[%s306 + $0x270] sm:$0xff]
        %v394 = vld [vmem:[%s306 + $0x278] sm:$0xff]
        %v395 = vld [vmem:[%s306 + $0x280] sm:$0xff]
        %v396 = vld [vmem:[%s306 + $0x288] sm:$0xff]
        %v397 = vld [vmem:[%s306 + $0x290] sm:$0xff]
        %v398 = vld [vmem:[%s306 + $0x298] sm:$0xff]
        %v399 = vld [vmem:[%s306 + $0x2a0] sm:$0xff]
        %v400 = vld [vmem:[%s306 + $0x2a8] sm:$0xff]
        %v401 = vld [vmem:[%s306 + $0x2b0] sm:$0xff]
        %v402 = vld [vmem:[%s306 + $0x2b8] sm:$0xff]
        %v403 = vld [vmem:[%s306 + $0x2c0] sm:$0xff]
        %v404 = vld [vmem:[%s306 + $0x2c8] sm:$0xff]
        %v405 = vld [vmem:[%s306 + $0x2d0] sm:$0xff]
        %v406 = vld [vmem:[%s306 + $0x2d8] sm:$0xff]
        %v407 = vld [vmem:[%s306 + $0x2e0] sm:$0xff]
        %v408 = vld [vmem:[%s306 + $0x2e8] sm:$0xff]
        %v409 = vld [vmem:[%s306 + $0x2f0] sm:$0xff]
        %v410 = vld [vmem:[%s306 + $0x2f8] sm:$0xff]
        %v411 = vld [vmem:[%s306 + $0x300] sm:$0xff]
        %v412 = vld [vmem:[%s306 + $0x308] sm:$0xff]
        %v413 = vld [vmem:[%s306 + $0x310] sm:$0xff]
        %v414 = vld [vmem:[%s306 + $0x318] sm:$0xff]
        %v415 = vld [vmem:[%s306 + $0x320] sm:$0xff]
        %v416 = vld [vmem:[%s306 + $0x328] sm:$0xff]
        %v417 = vld [vmem:[%s306 + $0x330] sm:$0xff]
        %v418 = vld [vmem:[%s306 + $0x338] sm:$0xff]
        %v419 = vld [vmem:[%s306 + $0x340] sm:$0xff]
        %v420 = vld [vmem:[%s306 + $0x348] sm:$0xff]
        %v421 = vld [vmem:[%s306 + $0x350] sm:$0xff]
        %v422 = vld [vmem:[%s306 + $0x358] sm:$0xff]
        %v423 = vld [vmem:[%s306 + $0x360] sm:$0xff]
        %v424 = vld [vmem:[%s306 + $0x368] sm:$0xff]
        %v425 = vld [vmem:[%s306 + $0x370] sm:$0xff]
        %v426 = vld [vmem:[%s306 + $0x378] sm:$0xff]
        %v427 = vld [vmem:[%s306 + $0x380] sm:$0xff]
        %v428 = vld [vmem:[%s306 + $0x388] sm:$0xff]
        %v429 = vld [vmem:[%s306 + $0x390] sm:$0xff]
        %v430 = vld [vmem:[%s306 + $0x398] sm:$0xff]
        %v431 = vld [vmem:[%s306 + $0x3a0] sm:$0xff]
        %v432 = vld [vmem:[%s306 + $0x3a8] sm:$0xff]
        %v433 = vld [vmem:[%s306 + $0x3b0] sm:$0xff]
        %v434 = vld [vmem:[%s306 + $0x3b8] sm:$0xff]
        %v435 = vld [vmem:[%s306 + $0x3c0] sm:$0xff]
        %v436 = vld [vmem:[%s306 + $0x3c8] sm:$0xff]
        %v437 = vld [vmem:[%s306 + $0x3d0] sm:$0xff]
        %v438 = vld [vmem:[%s306 + $0x3d8] sm:$0xff]
        %v439 = vld [vmem:[%s306 + $0x3e0] sm:$0xff]
        %v440 = vld [vmem:[%s306 + $0x3e8] sm:$0xff]
        %v441 = vld [vmem:[%s306 + $0x3f0] sm:$0xff]
        %v442 = vld [vmem:[%s306 + $0x3f8] sm:$0xff]
        %v443 = vld [vmem:[#allocation2] sm:$0xff]
        %v444 = vld [vmem:[#allocation2 + $0x8] sm:$0xff]
        %v445 = vld [vmem:[#allocation2 + $0x10] sm:$0xff]
        %v446 = vld [vmem:[#allocation2 + $0x18] sm:$0xff]
        %v447 = vld [vmem:[#allocation2 + $0x20] sm:$0xff]
        %v448 = vld [vmem:[#allocation2 + $0x28] sm:$0xff]
        %v449 = vld [vmem:[#allocation2 + $0x30] sm:$0xff]
        %v450 = vld [vmem:[#allocation2 + $0x38] sm:$0xff]
        %v451 = vld [vmem:[#allocation7] ss:$4 sm:$0x3]
        %v453 = vperm.slane %v451, 0
        %v454 = vperm.slane %v451, 1
        %vm457 = vcmask 261120
        %v459 = vsel %vm457, %v315, 0
        %v462 = vsel %vm457, %v316, 0
        %v465 = vsel %vm457, %v317, 0
        %v468 = vsel %vm457, %v318, 0
        %v471 = vsel %vm457, %v319, 0
        %v474 = vsel %vm457, %v320, 0
        %v477 = vsel %vm457, %v321, 0
        %v480 = vsel %vm457, %v322, 0
        %v483 = vsel %vm457, %v323, 0
        %v486 = vsel %vm457, %v324, 0
        %v489 = vsel %vm457, %v325, 0
        %v492 = vsel %vm457, %v326, 0
        %v495 = vsel %vm457, %v327, 0
        %v498 = vsel %vm457, %v328, 0
        %v501 = vsel %vm457, %v329, 0
        %v504 = vsel %vm457, %v330, 0
        %v507 = vsel %vm457, %v331, 0
        %v510 = vsel %vm457, %v332, 0
        %v513 = vsel %vm457, %v333, 0
        %v516 = vsel %vm457, %v334, 0
        %v519 = vsel %vm457, %v335, 0
        %v522 = vsel %vm457, %v336, 0
        %v525 = vsel %vm457, %v337, 0
        %v528 = vsel %vm457, %v338, 0
        %v531 = vsel %vm457, %v339, 0
        %v534 = vsel %vm457, %v340, 0
        %v537 = vsel %vm457, %v341, 0
        %v540 = vsel %vm457, %v342, 0
        %v543 = vsel %vm457, %v343, 0
        %v546 = vsel %vm457, %v344, 0
        %v549 = vsel %vm457, %v345, 0
        %v552 = vsel %vm457, %v346, 0
        %v555 = vsel %vm457, %v347, 0
        %v558 = vsel %vm457, %v348, 0
        %v561 = vsel %vm457, %v349, 0
        %v564 = vsel %vm457, %v350, 0
        %v567 = vsel %vm457, %v351, 0
        %v570 = vsel %vm457, %v352, 0
        %v573 = vsel %vm457, %v353, 0
        %v576 = vsel %vm457, %v354, 0
        %v579 = vsel %vm457, %v355, 0
        %v582 = vsel %vm457, %v356, 0
        %v585 = vsel %vm457, %v357, 0
        %v588 = vsel %vm457, %v358, 0
        %v591 = vsel %vm457, %v359, 0
        %v594 = vsel %vm457, %v360, 0
        %v597 = vsel %vm457, %v361, 0
        %v600 = vsel %vm457, %v362, 0
        %v603 = vsel %vm457, %v363, 0
        %v606 = vsel %vm457, %v364, 0
        %v609 = vsel %vm457, %v365, 0
        %v612 = vsel %vm457, %v366, 0
        %v615 = vsel %vm457, %v367, 0
        %v618 = vsel %vm457, %v368, 0
        %v621 = vsel %vm457, %v369, 0
        %v624 = vsel %vm457, %v370, 0
        %v627 = vsel %vm457, %v371, 0
        %v630 = vsel %vm457, %v372, 0
        %v633 = vsel %vm457, %v373, 0
        %v636 = vsel %vm457, %v374, 0
        %v639 = vsel %vm457, %v375, 0
        %v642 = vsel %vm457, %v376, 0
        %v645 = vsel %vm457, %v377, 0
        %v648 = vsel %vm457, %v378, 0
        %v651 = vsel %vm457, %v379, 0
        %v654 = vsel %vm457, %v380, 0
        %v657 = vsel %vm457, %v381, 0
        %v660 = vsel %vm457, %v382, 0
        %v663 = vsel %vm457, %v383, 0
        %v666 = vsel %vm457, %v384, 0
        %v669 = vsel %vm457, %v385, 0
        %v672 = vsel %vm457, %v386, 0
        %v675 = vsel %vm457, %v387, 0
        %v678 = vsel %vm457, %v388, 0
        %v681 = vsel %vm457, %v389, 0
        %v684 = vsel %vm457, %v390, 0
        %v687 = vsel %vm457, %v391, 0
        %v690 = vsel %vm457, %v392, 0
        %v693 = vsel %vm457, %v393, 0
        %v696 = vsel %vm457, %v394, 0
        %v699 = vsel %vm457, %v395, 0
        %v702 = vsel %vm457, %v396, 0
        %v705 = vsel %vm457, %v397, 0
        %v708 = vsel %vm457, %v398, 0
        %v711 = vsel %vm457, %v399, 0
        %v714 = vsel %vm457, %v400, 0
        %v717 = vsel %vm457, %v401, 0
        %v720 = vsel %vm457, %v402, 0
        %v723 = vsel %vm457, %v403, 0
        %v726 = vsel %vm457, %v404, 0
        %v729 = vsel %vm457, %v405, 0
        %v732 = vsel %vm457, %v406, 0
        %v735 = vsel %vm457, %v407, 0
        %v738 = vsel %vm457, %v408, 0
        %v741 = vsel %vm457, %v409, 0
        %v744 = vsel %vm457, %v410, 0
        %v747 = vsel %vm457, %v411, 0
        %v750 = vsel %vm457, %v412, 0
        %v753 = vsel %vm457, %v413, 0
        %v756 = vsel %vm457, %v414, 0
        %v759 = vsel %vm457, %v415, 0
        %v762 = vsel %vm457, %v416, 0
        %v765 = vsel %vm457, %v417, 0
        %v768 = vsel %vm457, %v418, 0
        %v771 = vsel %vm457, %v419, 0
        %v774 = vsel %vm457, %v420, 0
        %v777 = vsel %vm457, %v421, 0
        %v780 = vsel %vm457, %v422, 0
        %v783 = vsel %vm457, %v423, 0
        %v786 = vsel %vm457, %v424, 0
        %v789 = vsel %vm457, %v425, 0
        %v792 = vsel %vm457, %v426, 0
        %v795 = vsel %vm457, %v427, 0
        %v798 = vsel %vm457, %v428, 0
        %v801 = vsel %vm457, %v429, 0
        %v804 = vsel %vm457, %v430, 0
        %v807 = vsel %vm457, %v431, 0
        %v810 = vsel %vm457, %v432, 0
        %v813 = vsel %vm457, %v433, 0
        %v816 = vsel %vm457, %v434, 0
        %v819 = vsel %vm457, %v435, 0
        %v822 = vsel %vm457, %v436, 0
        %v825 = vsel %vm457, %v437, 0
        %v828 = vsel %vm457, %v438, 0
        %v831 = vsel %vm457, %v439, 0
        %v834 = vsel %vm457, %v440, 0
        %v837 = vsel %vm457, %v441, 0
        %v840 = vsel %vm457, %v442, 0
        %842 = vmatpush.msra.mxu0 0.0
        %843 = vmatpush.msra.mxu0 0.0
        %844 = vmatpush.msra.mxu0 0.0
        %845 = vmatpush.msra.mxu0 0.0
        %846 = vmatpush.msra.mxu0 0.0
        %847 = vmatpush.msra.mxu0 0.0
        %848 = vmatpush.msra.mxu0 0.0
        %849 = vmatpush.msra.mxu0 0.0
        %850 = vmatpush.msra.mxu0 0.0
        %851 = vmatpush.msra.mxu0 0.0
        %852 = vmatpush.msra.mxu0 0.0
        %853 = vmatpush.msra.mxu0 0.0
        %854 = vmatpush.msra.mxu0 %v449
        %855 = vmatpush.msra.mxu0 %v447
        %856 = vmatpush.msra.mxu0 %v445
        %857 = vmatpush.msra.mxu0 %v443
        %858 = vmatmul.f32.gmra.mxu0 %v459
        %v859 = vpop.f32.mrf.mxu0
        %v860 = vadd.f32 %v453, %v859
        %861 = vmatmul.f32.gmra.mxu0 %v462
        %v862 = vpop.f32.mrf.mxu0
        %v863 = vadd.f32 %v453, %v862
        %864 = vmatmul.f32.gmra.mxu0 %v465
        %v865 = vpop.f32.mrf.mxu0
        %v866 = vadd.f32 %v453, %v865
        %867 = vmatmul.f32.gmra.mxu0 %v468
        %v868 = vpop.f32.mrf.mxu0
        %v869 = vadd.f32 %v453, %v868
        %870 = vmatmul.f32.gmra.mxu0 %v471
        %v871 = vpop.f32.mrf.mxu0
        %v872 = vadd.f32 %v453, %v871
        %873 = vmatmul.f32.gmra.mxu0 %v474
        %v874 = vpop.f32.mrf.mxu0
        %v875 = vadd.f32 %v453, %v874
        %876 = vmatmul.f32.gmra.mxu0 %v477
        %v877 = vpop.f32.mrf.mxu0
        %v878 = vadd.f32 %v453, %v877
        %879 = vmatmul.f32.gmra.mxu0 %v480
        %v880 = vpop.f32.mrf.mxu0
        %v881 = vadd.f32 %v453, %v880
        %882 = vmatmul.f32.gmra.mxu0 %v483
        %v883 = vpop.f32.mrf.mxu0
        %v884 = vadd.f32 %v453, %v883
        %885 = vmatmul.f32.gmra.mxu0 %v486
        %v886 = vpop.f32.mrf.mxu0
        %v887 = vadd.f32 %v453, %v886
        %888 = vmatmul.f32.gmra.mxu0 %v489
        %v889 = vpop.f32.mrf.mxu0
        %v890 = vadd.f32 %v453, %v889
        %891 = vmatmul.f32.gmra.mxu0 %v492
        %v892 = vpop.f32.mrf.mxu0
        %v893 = vadd.f32 %v453, %v892
        %894 = vmatmul.f32.gmra.mxu0 %v495
        %v895 = vpop.f32.mrf.mxu0
        %v896 = vadd.f32 %v453, %v895
        %897 = vmatmul.f32.gmra.mxu0 %v498
        %v898 = vpop.f32.mrf.mxu0
        %v899 = vadd.f32 %v453, %v898
        %900 = vmatmul.f32.gmra.mxu0 %v501
        %v901 = vpop.f32.mrf.mxu0
        %v902 = vadd.f32 %v453, %v901
        %903 = vmatmul.f32.gmra.mxu0 %v504
        %v904 = vpop.f32.mrf.mxu0
        %v905 = vadd.f32 %v453, %v904
        %906 = vmatmul.f32.gmra.mxu0 %v507
        %v907 = vpop.f32.mrf.mxu0
        %v908 = vadd.f32 %v453, %v907
        %909 = vmatmul.f32.gmra.mxu0 %v510
        %v910 = vpop.f32.mrf.mxu0
        %v911 = vadd.f32 %v453, %v910
        %912 = vmatmul.f32.gmra.mxu0 %v513
        %v913 = vpop.f32.mrf.mxu0
        %v914 = vadd.f32 %v453, %v913
        %915 = vmatmul.f32.gmra.mxu0 %v516
        %v916 = vpop.f32.mrf.mxu0
        %v917 = vadd.f32 %v453, %v916
        %918 = vmatmul.f32.gmra.mxu0 %v519
        %v919 = vpop.f32.mrf.mxu0
        %v920 = vadd.f32 %v453, %v919
        %921 = vmatmul.f32.gmra.mxu0 %v522
        %v922 = vpop.f32.mrf.mxu0
        %v923 = vadd.f32 %v453, %v922
        %924 = vmatmul.f32.gmra.mxu0 %v525
        %v925 = vpop.f32.mrf.mxu0
        %v926 = vadd.f32 %v453, %v925
        %927 = vmatmul.f32.gmra.mxu0 %v528
        %v928 = vpop.f32.mrf.mxu0
        %v929 = vadd.f32 %v453, %v928
        %930 = vmatmul.f32.gmra.mxu0 %v531
        %v931 = vpop.f32.mrf.mxu0
        %v932 = vadd.f32 %v453, %v931
        %933 = vmatmul.f32.gmra.mxu0 %v534
        %v934 = vpop.f32.mrf.mxu0
        %v935 = vadd.f32 %v453, %v934
        %936 = vmatmul.f32.gmra.mxu0 %v537
        %v937 = vpop.f32.mrf.mxu0
        %v938 = vadd.f32 %v453, %v937
        %939 = vmatmul.f32.gmra.mxu0 %v540
        %v940 = vpop.f32.mrf.mxu0
        %v941 = vadd.f32 %v453, %v940
        %942 = vmatmul.f32.gmra.mxu0 %v543
        %v943 = vpop.f32.mrf.mxu0
        %v944 = vadd.f32 %v453, %v943
        %945 = vmatmul.f32.gmra.mxu0 %v546
        %v946 = vpop.f32.mrf.mxu0
        %v947 = vadd.f32 %v453, %v946
        %948 = vmatmul.f32.gmra.mxu0 %v549
        %v949 = vpop.f32.mrf.mxu0
        %v950 = vadd.f32 %v453, %v949
        %951 = vmatmul.f32.gmra.mxu0 %v552
        %v952 = vpop.f32.mrf.mxu0
        %v953 = vadd.f32 %v453, %v952
        %954 = vmatmul.f32.gmra.mxu0 %v555
        %v955 = vpop.f32.mrf.mxu0
        %v956 = vadd.f32 %v453, %v955
        %957 = vmatmul.f32.gmra.mxu0 %v558
        %v958 = vpop.f32.mrf.mxu0
        %v959 = vadd.f32 %v453, %v958
        %960 = vmatmul.f32.gmra.mxu0 %v561
        %v961 = vpop.f32.mrf.mxu0
        %v962 = vadd.f32 %v453, %v961
        %963 = vmatmul.f32.gmra.mxu0 %v564
        %v964 = vpop.f32.mrf.mxu0
        %v965 = vadd.f32 %v453, %v964
        %966 = vmatmul.f32.gmra.mxu0 %v567
        %v967 = vpop.f32.mrf.mxu0
        %v968 = vadd.f32 %v453, %v967
        %969 = vmatmul.f32.gmra.mxu0 %v570
        %v970 = vpop.f32.mrf.mxu0
        %v971 = vadd.f32 %v453, %v970
        %972 = vmatmul.f32.gmra.mxu0 %v573
        %v973 = vpop.f32.mrf.mxu0
        %v974 = vadd.f32 %v453, %v973
        %975 = vmatmul.f32.gmra.mxu0 %v576
        %v976 = vpop.f32.mrf.mxu0
        %v977 = vadd.f32 %v453, %v976
        %978 = vmatmul.f32.gmra.mxu0 %v579
        %v979 = vpop.f32.mrf.mxu0
        %v980 = vadd.f32 %v453, %v979
        %981 = vmatmul.f32.gmra.mxu0 %v582
        %v982 = vpop.f32.mrf.mxu0
        %v983 = vadd.f32 %v453, %v982
        %984 = vmatmul.f32.gmra.mxu0 %v585
        %v985 = vpop.f32.mrf.mxu0
        %v986 = vadd.f32 %v453, %v985
        %987 = vmatmul.f32.gmra.mxu0 %v588
        %v988 = vpop.f32.mrf.mxu0
        %v989 = vadd.f32 %v453, %v988
        %990 = vmatmul.f32.gmra.mxu0 %v591
        %v991 = vpop.f32.mrf.mxu0
        %v992 = vadd.f32 %v453, %v991
        %993 = vmatmul.f32.gmra.mxu0 %v594
        %v994 = vpop.f32.mrf.mxu0
        %v995 = vadd.f32 %v453, %v994
        %996 = vmatmul.f32.gmra.mxu0 %v597
        %v997 = vpop.f32.mrf.mxu0
        %v998 = vadd.f32 %v453, %v997
        %999 = vmatmul.f32.gmra.mxu0 %v600
        %v1000 = vpop.f32.mrf.mxu0
        %v1001 = vadd.f32 %v453, %v1000
        %1002 = vmatmul.f32.gmra.mxu0 %v603
        %v1003 = vpop.f32.mrf.mxu0
        %v1004 = vadd.f32 %v453, %v1003
        %1005 = vmatmul.f32.gmra.mxu0 %v606
        %v1006 = vpop.f32.mrf.mxu0
        %v1007 = vadd.f32 %v453, %v1006
        %1008 = vmatmul.f32.gmra.mxu0 %v609
        %v1009 = vpop.f32.mrf.mxu0
        %v1010 = vadd.f32 %v453, %v1009
        %1011 = vmatmul.f32.gmra.mxu0 %v612
        %v1012 = vpop.f32.mrf.mxu0
        %v1013 = vadd.f32 %v453, %v1012
        %1014 = vmatmul.f32.gmra.mxu0 %v615
        %v1015 = vpop.f32.mrf.mxu0
        %v1016 = vadd.f32 %v453, %v1015
        %1017 = vmatmul.f32.gmra.mxu0 %v618
        %v1018 = vpop.f32.mrf.mxu0
        %v1019 = vadd.f32 %v453, %v1018
        %1020 = vmatmul.f32.gmra.mxu0 %v621
        %v1021 = vpop.f32.mrf.mxu0
        %v1022 = vadd.f32 %v453, %v1021
        %1023 = vmatmul.f32.gmra.mxu0 %v624
        %v1024 = vpop.f32.mrf.mxu0
        %v1025 = vadd.f32 %v453, %v1024
        %1026 = vmatmul.f32.gmra.mxu0 %v627
        %v1027 = vpop.f32.mrf.mxu0
        %v1028 = vadd.f32 %v453, %v1027
        %1029 = vmatmul.f32.gmra.mxu0 %v630
        %v1030 = vpop.f32.mrf.mxu0
        %v1031 = vadd.f32 %v453, %v1030
        %1032 = vmatmul.f32.gmra.mxu0 %v633
        %v1033 = vpop.f32.mrf.mxu0
        %v1034 = vadd.f32 %v453, %v1033
        %1035 = vmatmul.f32.gmra.mxu0 %v636
        %v1036 = vpop.f32.mrf.mxu0
        %v1037 = vadd.f32 %v453, %v1036
        %1038 = vmatmul.f32.gmra.mxu0 %v639
        %v1039 = vpop.f32.mrf.mxu0
        %v1040 = vadd.f32 %v453, %v1039
        %1041 = vmatmul.f32.gmra.mxu0 %v642
        %v1042 = vpop.f32.mrf.mxu0
        %v1043 = vadd.f32 %v453, %v1042
        %1044 = vmatmul.f32.gmra.mxu0 %v645
        %v1045 = vpop.f32.mrf.mxu0
        %v1046 = vadd.f32 %v453, %v1045
        %1047 = vmatmul.f32.gmra.mxu0 %v648
        %v1048 = vpop.f32.mrf.mxu0
        %v1049 = vadd.f32 %v453, %v1048
        %1050 = vmatmul.f32.gmra.mxu0 %v651
        %v1051 = vpop.f32.mrf.mxu0
        %v1052 = vadd.f32 %v453, %v1051
        %1053 = vmatmul.f32.gmra.mxu0 %v654
        %v1054 = vpop.f32.mrf.mxu0
        %v1055 = vadd.f32 %v453, %v1054
        %1056 = vmatmul.f32.gmra.mxu0 %v657
        %v1057 = vpop.f32.mrf.mxu0
        %v1058 = vadd.f32 %v453, %v1057
        %1059 = vmatmul.f32.gmra.mxu0 %v660
        %v1060 = vpop.f32.mrf.mxu0
        %v1061 = vadd.f32 %v453, %v1060
        %1062 = vmatmul.f32.gmra.mxu0 %v663
        %v1063 = vpop.f32.mrf.mxu0
        %v1064 = vadd.f32 %v453, %v1063
        %1065 = vmatmul.f32.gmra.mxu0 %v666
        %v1066 = vpop.f32.mrf.mxu0
        %v1067 = vadd.f32 %v453, %v1066
        %1068 = vmatmul.f32.gmra.mxu0 %v669
        %v1069 = vpop.f32.mrf.mxu0
        %v1070 = vadd.f32 %v453, %v1069
        %1071 = vmatmul.f32.gmra.mxu0 %v672
        %v1072 = vpop.f32.mrf.mxu0
        %v1073 = vadd.f32 %v453, %v1072
        %1074 = vmatmul.f32.gmra.mxu0 %v675
        %v1075 = vpop.f32.mrf.mxu0
        %v1076 = vadd.f32 %v453, %v1075
        %1077 = vmatmul.f32.gmra.mxu0 %v678
        %v1078 = vpop.f32.mrf.mxu0
        %v1079 = vadd.f32 %v453, %v1078
        %1080 = vmatmul.f32.gmra.mxu0 %v681
        %v1081 = vpop.f32.mrf.mxu0
        %v1082 = vadd.f32 %v453, %v1081
        %1083 = vmatmul.f32.gmra.mxu0 %v684
        %v1084 = vpop.f32.mrf.mxu0
        %v1085 = vadd.f32 %v453, %v1084
        %1086 = vmatmul.f32.gmra.mxu0 %v687
        %v1087 = vpop.f32.mrf.mxu0
        %v1088 = vadd.f32 %v453, %v1087
        %1089 = vmatmul.f32.gmra.mxu0 %v690
        %v1090 = vpop.f32.mrf.mxu0
        %v1091 = vadd.f32 %v453, %v1090
        %1092 = vmatmul.f32.gmra.mxu0 %v693
        %v1093 = vpop.f32.mrf.mxu0
        %v1094 = vadd.f32 %v453, %v1093
        %1095 = vmatmul.f32.gmra.mxu0 %v696
        %v1096 = vpop.f32.mrf.mxu0
        %v1097 = vadd.f32 %v453, %v1096
        %1098 = vmatmul.f32.gmra.mxu0 %v699
        %v1099 = vpop.f32.mrf.mxu0
        %v1100 = vadd.f32 %v453, %v1099
        %1101 = vmatmul.f32.gmra.mxu0 %v702
        %v1102 = vpop.f32.mrf.mxu0
        %v1103 = vadd.f32 %v453, %v1102
        %1104 = vmatmul.f32.gmra.mxu0 %v705
        %v1105 = vpop.f32.mrf.mxu0
        %v1106 = vadd.f32 %v453, %v1105
        %1107 = vmatmul.f32.gmra.mxu0 %v708
        %v1108 = vpop.f32.mrf.mxu0
        %v1109 = vadd.f32 %v453, %v1108
        %1110 = vmatmul.f32.gmra.mxu0 %v711
        %v1111 = vpop.f32.mrf.mxu0
        %v1112 = vadd.f32 %v453, %v1111
        %1113 = vmatmul.f32.gmra.mxu0 %v714
        %v1114 = vpop.f32.mrf.mxu0
        %v1115 = vadd.f32 %v453, %v1114
        %1116 = vmatmul.f32.gmra.mxu0 %v717
        %v1117 = vpop.f32.mrf.mxu0
        %v1118 = vadd.f32 %v453, %v1117
        %1119 = vmatmul.f32.gmra.mxu0 %v720
        %v1120 = vpop.f32.mrf.mxu0
        %v1121 = vadd.f32 %v453, %v1120
        %1122 = vmatmul.f32.gmra.mxu0 %v723
        %v1123 = vpop.f32.mrf.mxu0
        %v1124 = vadd.f32 %v453, %v1123
        %1125 = vmatmul.f32.gmra.mxu0 %v726
        %v1126 = vpop.f32.mrf.mxu0
        %v1127 = vadd.f32 %v453, %v1126
        %1128 = vmatmul.f32.gmra.mxu0 %v729
        %v1129 = vpop.f32.mrf.mxu0
        %v1130 = vadd.f32 %v453, %v1129
        %1131 = vmatmul.f32.gmra.mxu0 %v732
        %v1132 = vpop.f32.mrf.mxu0
        %v1133 = vadd.f32 %v453, %v1132
        %1134 = vmatmul.f32.gmra.mxu0 %v735
        %v1135 = vpop.f32.mrf.mxu0
        %v1136 = vadd.f32 %v453, %v1135
        %1137 = vmatmul.f32.gmra.mxu0 %v738
        %v1138 = vpop.f32.mrf.mxu0
        %v1139 = vadd.f32 %v453, %v1138
        %1140 = vmatmul.f32.gmra.mxu0 %v741
        %v1141 = vpop.f32.mrf.mxu0
        %v1142 = vadd.f32 %v453, %v1141
        %1143 = vmatmul.f32.gmra.mxu0 %v744
        %v1144 = vpop.f32.mrf.mxu0
        %v1145 = vadd.f32 %v453, %v1144
        %1146 = vmatmul.f32.gmra.mxu0 %v747
        %v1147 = vpop.f32.mrf.mxu0
        %v1148 = vadd.f32 %v453, %v1147
        %1149 = vmatmul.f32.gmra.mxu0 %v750
        %v1150 = vpop.f32.mrf.mxu0
        %v1151 = vadd.f32 %v453, %v1150
        %1152 = vmatmul.f32.gmra.mxu0 %v753
        %v1153 = vpop.f32.mrf.mxu0
        %v1154 = vadd.f32 %v453, %v1153
        %1155 = vmatmul.f32.gmra.mxu0 %v756
        %v1156 = vpop.f32.mrf.mxu0
        %v1157 = vadd.f32 %v453, %v1156
        %1158 = vmatmul.f32.gmra.mxu0 %v759
        %v1159 = vpop.f32.mrf.mxu0
        %v1160 = vadd.f32 %v453, %v1159
        %1161 = vmatmul.f32.gmra.mxu0 %v762
        %v1162 = vpop.f32.mrf.mxu0
        %v1163 = vadd.f32 %v453, %v1162
        %1164 = vmatmul.f32.gmra.mxu0 %v765
        %v1165 = vpop.f32.mrf.mxu0
        %v1166 = vadd.f32 %v453, %v1165
        %1167 = vmatmul.f32.gmra.mxu0 %v768
        %v1168 = vpop.f32.mrf.mxu0
        %v1169 = vadd.f32 %v453, %v1168
        %1170 = vmatmul.f32.gmra.mxu0 %v771
        %v1171 = vpop.f32.mrf.mxu0
        %v1172 = vadd.f32 %v453, %v1171
        %1173 = vmatmul.f32.gmra.mxu0 %v774
        %v1174 = vpop.f32.mrf.mxu0
        %v1175 = vadd.f32 %v453, %v1174
        %1176 = vmatmul.f32.gmra.mxu0 %v777
        %v1177 = vpop.f32.mrf.mxu0
        %v1178 = vadd.f32 %v453, %v1177
        %1179 = vmatmul.f32.gmra.mxu0 %v780
        %v1180 = vpop.f32.mrf.mxu0
        %v1181 = vadd.f32 %v453, %v1180
        %1182 = vmatmul.f32.gmra.mxu0 %v783
        %v1183 = vpop.f32.mrf.mxu0
        %v1184 = vadd.f32 %v453, %v1183
        %1185 = vmatmul.f32.gmra.mxu0 %v786
        %v1186 = vpop.f32.mrf.mxu0
        %v1187 = vadd.f32 %v453, %v1186
        %1188 = vmatmul.f32.gmra.mxu0 %v789
        %v1189 = vpop.f32.mrf.mxu0
        %v1190 = vadd.f32 %v453, %v1189
        %1191 = vmatmul.f32.gmra.mxu0 %v792
        %v1192 = vpop.f32.mrf.mxu0
        %v1193 = vadd.f32 %v453, %v1192
        %1194 = vmatmul.f32.gmra.mxu0 %v795
        %v1195 = vpop.f32.mrf.mxu0
        %v1196 = vadd.f32 %v453, %v1195
        %1197 = vmatmul.f32.gmra.mxu0 %v798
        %v1198 = vpop.f32.mrf.mxu0
        %v1199 = vadd.f32 %v453, %v1198
        %1200 = vmatmul.f32.gmra.mxu0 %v801
        %v1201 = vpop.f32.mrf.mxu0
        %v1202 = vadd.f32 %v453, %v1201
        %1203 = vmatmul.f32.gmra.mxu0 %v804
        %v1204 = vpop.f32.mrf.mxu0
        %v1205 = vadd.f32 %v453, %v1204
        %1206 = vmatmul.f32.gmra.mxu0 %v807
        %v1207 = vpop.f32.mrf.mxu0
        %v1208 = vadd.f32 %v453, %v1207
        %1209 = vmatmul.f32.gmra.mxu0 %v810
        %v1210 = vpop.f32.mrf.mxu0
        %v1211 = vadd.f32 %v453, %v1210
        %1212 = vmatmul.f32.gmra.mxu0 %v813
        %v1213 = vpop.f32.mrf.mxu0
        %v1214 = vadd.f32 %v453, %v1213
        %1215 = vmatmul.f32.gmra.mxu0 %v816
        %v1216 = vpop.f32.mrf.mxu0
        %v1217 = vadd.f32 %v453, %v1216
        %1218 = vmatmul.f32.gmra.mxu0 %v819
        %v1219 = vpop.f32.mrf.mxu0
        %v1220 = vadd.f32 %v453, %v1219
        %1221 = vmatmul.f32.gmra.mxu0 %v822
        %v1222 = vpop.f32.mrf.mxu0
        %v1223 = vadd.f32 %v453, %v1222
        %1224 = vmatmul.f32.gmra.mxu0 %v825
        %v1225 = vpop.f32.mrf.mxu0
        %v1226 = vadd.f32 %v453, %v1225
        %1227 = vmatmul.f32.gmra.mxu0 %v828
        %v1228 = vpop.f32.mrf.mxu0
        %v1229 = vadd.f32 %v453, %v1228
        %1230 = vmatmul.f32.gmra.mxu0 %v831
        %v1231 = vpop.f32.mrf.mxu0
        %v1232 = vadd.f32 %v453, %v1231
        %1233 = vmatmul.f32.gmra.mxu0 %v834
        %v1234 = vpop.f32.mrf.mxu0
        %v1235 = vadd.f32 %v453, %v1234
        %1236 = vmatmul.f32.gmra.mxu0 %v837
        %v1237 = vpop.f32.mrf.mxu0
        %v1238 = vadd.f32 %v453, %v1237
        %1239 = vmatmul.f32.gmra.mxu0 %v840
        %v1240 = vpop.f32.mrf.mxu0
        %v1241 = vadd.f32 %v453, %v1240
        %1242 = vdwg.mxu0
        %1243 = vmatpush.msra.mxu0 0.0
        %1244 = vmatpush.msra.mxu0 0.0
        %1245 = vmatpush.msra.mxu0 0.0
        %1246 = vmatpush.msra.mxu0 0.0
        %1247 = vmatpush.msra.mxu0 0.0
        %1248 = vmatpush.msra.mxu0 0.0
        %1249 = vmatpush.msra.mxu0 0.0
        %1250 = vmatpush.msra.mxu0 0.0
        %1251 = vmatpush.msra.mxu0 0.0
        %1252 = vmatpush.msra.mxu0 0.0
        %1253 = vmatpush.msra.mxu0 0.0
        %1254 = vmatpush.msra.mxu0 0.0
        %1255 = vmatpush.msra.mxu0 %v450
        %1256 = vmatpush.msra.mxu0 %v448
        %1257 = vmatpush.msra.mxu0 %v446
        %1258 = vmatpush.msra.mxu0 %v444
        %1259 = vmatmul.f32.gmra.mxu0 %v459
        %v1260 = vpop.f32.mrf.mxu0
        %v1261 = vadd.f32 %v454, %v1260
        %1262 = vmatmul.f32.gmra.mxu0 %v462
        %v1263 = vpop.f32.mrf.mxu0
        %v1264 = vadd.f32 %v454, %v1263
        %1265 = vmatmul.f32.gmra.mxu0 %v465
        %v1266 = vpop.f32.mrf.mxu0
        %v1267 = vadd.f32 %v454, %v1266
        %1268 = vmatmul.f32.gmra.mxu0 %v468
        %v1269 = vpop.f32.mrf.mxu0
        %v1270 = vadd.f32 %v454, %v1269
        %1271 = vmatmul.f32.gmra.mxu0 %v471
        %v1272 = vpop.f32.mrf.mxu0
        %v1273 = vadd.f32 %v454, %v1272
        %1274 = vmatmul.f32.gmra.mxu0 %v474
        %v1275 = vpop.f32.mrf.mxu0
        %v1276 = vadd.f32 %v454, %v1275
        %1277 = vmatmul.f32.gmra.mxu0 %v477
        %v1278 = vpop.f32.mrf.mxu0
        %v1279 = vadd.f32 %v454, %v1278
        %1280 = vmatmul.f32.gmra.mxu0 %v480
        %v1281 = vpop.f32.mrf.mxu0
        %v1282 = vadd.f32 %v454, %v1281
        %1283 = vmatmul.f32.gmra.mxu0 %v483
        %v1284 = vpop.f32.mrf.mxu0
        %v1285 = vadd.f32 %v454, %v1284
        %1286 = vmatmul.f32.gmra.mxu0 %v486
        %v1287 = vpop.f32.mrf.mxu0
        %v1288 = vadd.f32 %v454, %v1287
        %1289 = vmatmul.f32.gmra.mxu0 %v489
        %v1290 = vpop.f32.mrf.mxu0
        %v1291 = vadd.f32 %v454, %v1290
        %1292 = vmatmul.f32.gmra.mxu0 %v492
        %v1293 = vpop.f32.mrf.mxu0
        %v1294 = vadd.f32 %v454, %v1293
        %1295 = vmatmul.f32.gmra.mxu0 %v495
        %v1296 = vpop.f32.mrf.mxu0
        %v1297 = vadd.f32 %v454, %v1296
        %1298 = vmatmul.f32.gmra.mxu0 %v498
        %v1299 = vpop.f32.mrf.mxu0
        %v1300 = vadd.f32 %v454, %v1299
        %1301 = vmatmul.f32.gmra.mxu0 %v501
        %v1302 = vpop.f32.mrf.mxu0
        %v1303 = vadd.f32 %v454, %v1302
        %1304 = vmatmul.f32.gmra.mxu0 %v504
        %v1305 = vpop.f32.mrf.mxu0
        %v1306 = vadd.f32 %v454, %v1305
        %1307 = vmatmul.f32.gmra.mxu0 %v507
        %v1308 = vpop.f32.mrf.mxu0
        %v1309 = vadd.f32 %v454, %v1308
        %1310 = vmatmul.f32.gmra.mxu0 %v510
        %v1311 = vpop.f32.mrf.mxu0
        %v1312 = vadd.f32 %v454, %v1311
        %1313 = vmatmul.f32.gmra.mxu0 %v513
        %v1314 = vpop.f32.mrf.mxu0
        %v1315 = vadd.f32 %v454, %v1314
        %1316 = vmatmul.f32.gmra.mxu0 %v516
        %v1317 = vpop.f32.mrf.mxu0
        %v1318 = vadd.f32 %v454, %v1317
        %1319 = vmatmul.f32.gmra.mxu0 %v519
        %v1320 = vpop.f32.mrf.mxu0
        %v1321 = vadd.f32 %v454, %v1320
        %1322 = vmatmul.f32.gmra.mxu0 %v522
        %v1323 = vpop.f32.mrf.mxu0
        %v1324 = vadd.f32 %v454, %v1323
        %1325 = vmatmul.f32.gmra.mxu0 %v525
        %v1326 = vpop.f32.mrf.mxu0
        %v1327 = vadd.f32 %v454, %v1326
        %1328 = vmatmul.f32.gmra.mxu0 %v528
        %v1329 = vpop.f32.mrf.mxu0
        %v1330 = vadd.f32 %v454, %v1329
        %1331 = vmatmul.f32.gmra.mxu0 %v531
        %v1332 = vpop.f32.mrf.mxu0
        %v1333 = vadd.f32 %v454, %v1332
        %1334 = vmatmul.f32.gmra.mxu0 %v534
        %v1335 = vpop.f32.mrf.mxu0
        %v1336 = vadd.f32 %v454, %v1335
        %1337 = vmatmul.f32.gmra.mxu0 %v537
        %v1338 = vpop.f32.mrf.mxu0
        %v1339 = vadd.f32 %v454, %v1338
        %1340 = vmatmul.f32.gmra.mxu0 %v540
        %v1341 = vpop.f32.mrf.mxu0
        %v1342 = vadd.f32 %v454, %v1341
        %1343 = vmatmul.f32.gmra.mxu0 %v543
        %v1344 = vpop.f32.mrf.mxu0
        %v1345 = vadd.f32 %v454, %v1344
        %1346 = vmatmul.f32.gmra.mxu0 %v546
        %v1347 = vpop.f32.mrf.mxu0
        %v1348 = vadd.f32 %v454, %v1347
        %1349 = vmatmul.f32.gmra.mxu0 %v549
        %v1350 = vpop.f32.mrf.mxu0
        %v1351 = vadd.f32 %v454, %v1350
        %1352 = vmatmul.f32.gmra.mxu0 %v552
        %v1353 = vpop.f32.mrf.mxu0
        %v1354 = vadd.f32 %v454, %v1353
        %1355 = vmatmul.f32.gmra.mxu0 %v555
        %v1356 = vpop.f32.mrf.mxu0
        %v1357 = vadd.f32 %v454, %v1356
        %1358 = vmatmul.f32.gmra.mxu0 %v558
        %v1359 = vpop.f32.mrf.mxu0
        %v1360 = vadd.f32 %v454, %v1359
        %1361 = vmatmul.f32.gmra.mxu0 %v561
        %v1362 = vpop.f32.mrf.mxu0
        %v1363 = vadd.f32 %v454, %v1362
        %1364 = vmatmul.f32.gmra.mxu0 %v564
        %v1365 = vpop.f32.mrf.mxu0
        %v1366 = vadd.f32 %v454, %v1365
        %1367 = vmatmul.f32.gmra.mxu0 %v567
        %v1368 = vpop.f32.mrf.mxu0
        %v1369 = vadd.f32 %v454, %v1368
        %1370 = vmatmul.f32.gmra.mxu0 %v570
        %v1371 = vpop.f32.mrf.mxu0
        %v1372 = vadd.f32 %v454, %v1371
        %1373 = vmatmul.f32.gmra.mxu0 %v573
        %v1374 = vpop.f32.mrf.mxu0
        %v1375 = vadd.f32 %v454, %v1374
        %1376 = vmatmul.f32.gmra.mxu0 %v576
        %v1377 = vpop.f32.mrf.mxu0
        %v1378 = vadd.f32 %v454, %v1377
        %1379 = vmatmul.f32.gmra.mxu0 %v579
        %v1380 = vpop.f32.mrf.mxu0
        %v1381 = vadd.f32 %v454, %v1380
        %1382 = vmatmul.f32.gmra.mxu0 %v582
        %v1383 = vpop.f32.mrf.mxu0
        %v1384 = vadd.f32 %v454, %v1383
        %1385 = vmatmul.f32.gmra.mxu0 %v585
        %v1386 = vpop.f32.mrf.mxu0
        %v1387 = vadd.f32 %v454, %v1386
        %1388 = vmatmul.f32.gmra.mxu0 %v588
        %v1389 = vpop.f32.mrf.mxu0
        %v1390 = vadd.f32 %v454, %v1389
        %1391 = vmatmul.f32.gmra.mxu0 %v591
        %v1392 = vpop.f32.mrf.mxu0
        %v1393 = vadd.f32 %v454, %v1392
        %1394 = vmatmul.f32.gmra.mxu0 %v594
        %v1395 = vpop.f32.mrf.mxu0
        %v1396 = vadd.f32 %v454, %v1395
        %1397 = vmatmul.f32.gmra.mxu0 %v597
        %v1398 = vpop.f32.mrf.mxu0
        %v1399 = vadd.f32 %v454, %v1398
        %1400 = vmatmul.f32.gmra.mxu0 %v600
        %v1401 = vpop.f32.mrf.mxu0
        %v1402 = vadd.f32 %v454, %v1401
        %1403 = vmatmul.f32.gmra.mxu0 %v603
        %v1404 = vpop.f32.mrf.mxu0
        %v1405 = vadd.f32 %v454, %v1404
        %1406 = vmatmul.f32.gmra.mxu0 %v606
        %v1407 = vpop.f32.mrf.mxu0
        %v1408 = vadd.f32 %v454, %v1407
        %1409 = vmatmul.f32.gmra.mxu0 %v609
        %v1410 = vpop.f32.mrf.mxu0
        %v1411 = vadd.f32 %v454, %v1410
        %1412 = vmatmul.f32.gmra.mxu0 %v612
        %v1413 = vpop.f32.mrf.mxu0
        %v1414 = vadd.f32 %v454, %v1413
        %1415 = vmatmul.f32.gmra.mxu0 %v615
        %v1416 = vpop.f32.mrf.mxu0
        %v1417 = vadd.f32 %v454, %v1416
        %1418 = vmatmul.f32.gmra.mxu0 %v618
        %v1419 = vpop.f32.mrf.mxu0
        %v1420 = vadd.f32 %v454, %v1419
        %1421 = vmatmul.f32.gmra.mxu0 %v621
        %v1422 = vpop.f32.mrf.mxu0
        %v1423 = vadd.f32 %v454, %v1422
        %1424 = vmatmul.f32.gmra.mxu0 %v624
        %v1425 = vpop.f32.mrf.mxu0
        %v1426 = vadd.f32 %v454, %v1425
        %1427 = vmatmul.f32.gmra.mxu0 %v627
        %v1428 = vpop.f32.mrf.mxu0
        %v1429 = vadd.f32 %v454, %v1428
        %1430 = vmatmul.f32.gmra.mxu0 %v630
        %v1431 = vpop.f32.mrf.mxu0
        %v1432 = vadd.f32 %v454, %v1431
        %1433 = vmatmul.f32.gmra.mxu0 %v633
        %v1434 = vpop.f32.mrf.mxu0
        %v1435 = vadd.f32 %v454, %v1434
        %1436 = vmatmul.f32.gmra.mxu0 %v636
        %v1437 = vpop.f32.mrf.mxu0
        %v1438 = vadd.f32 %v454, %v1437
        %1439 = vmatmul.f32.gmra.mxu0 %v639
        %v1440 = vpop.f32.mrf.mxu0
        %v1441 = vadd.f32 %v454, %v1440
        %1442 = vmatmul.f32.gmra.mxu0 %v642
        %v1443 = vpop.f32.mrf.mxu0
        %v1444 = vadd.f32 %v454, %v1443
        %1445 = vmatmul.f32.gmra.mxu0 %v645
        %v1446 = vpop.f32.mrf.mxu0
        %v1447 = vadd.f32 %v454, %v1446
        %1448 = vmatmul.f32.gmra.mxu0 %v648
        %v1449 = vpop.f32.mrf.mxu0
        %v1450 = vadd.f32 %v454, %v1449
        %1451 = vmatmul.f32.gmra.mxu0 %v651
        %v1452 = vpop.f32.mrf.mxu0
        %v1453 = vadd.f32 %v454, %v1452
        %1454 = vmatmul.f32.gmra.mxu0 %v654
        %v1455 = vpop.f32.mrf.mxu0
        %v1456 = vadd.f32 %v454, %v1455
        %1457 = vmatmul.f32.gmra.mxu0 %v657
        %v1458 = vpop.f32.mrf.mxu0
        %v1459 = vadd.f32 %v454, %v1458
        %1460 = vmatmul.f32.gmra.mxu0 %v660
        %v1461 = vpop.f32.mrf.mxu0
        %v1462 = vadd.f32 %v454, %v1461
        %1463 = vmatmul.f32.gmra.mxu0 %v663
        %v1464 = vpop.f32.mrf.mxu0
        %v1465 = vadd.f32 %v454, %v1464
        %1466 = vmatmul.f32.gmra.mxu0 %v666
        %v1467 = vpop.f32.mrf.mxu0
        %v1468 = vadd.f32 %v454, %v1467
        %1469 = vmatmul.f32.gmra.mxu0 %v669
        %v1470 = vpop.f32.mrf.mxu0
        %v1471 = vadd.f32 %v454, %v1470
        %1472 = vmatmul.f32.gmra.mxu0 %v672
        %v1473 = vpop.f32.mrf.mxu0
        %v1474 = vadd.f32 %v454, %v1473
        %1475 = vmatmul.f32.gmra.mxu0 %v675
        %v1476 = vpop.f32.mrf.mxu0
        %v1477 = vadd.f32 %v454, %v1476
        %1478 = vmatmul.f32.gmra.mxu0 %v678
        %v1479 = vpop.f32.mrf.mxu0
        %v1480 = vadd.f32 %v454, %v1479
        %1481 = vmatmul.f32.gmra.mxu0 %v681
        %v1482 = vpop.f32.mrf.mxu0
        %v1483 = vadd.f32 %v454, %v1482
        %1484 = vmatmul.f32.gmra.mxu0 %v684
        %v1485 = vpop.f32.mrf.mxu0
        %v1486 = vadd.f32 %v454, %v1485
        %1487 = vmatmul.f32.gmra.mxu0 %v687
        %v1488 = vpop.f32.mrf.mxu0
        %v1489 = vadd.f32 %v454, %v1488
        %1490 = vmatmul.f32.gmra.mxu0 %v690
        %v1491 = vpop.f32.mrf.mxu0
        %v1492 = vadd.f32 %v454, %v1491
        %1493 = vmatmul.f32.gmra.mxu0 %v693
        %v1494 = vpop.f32.mrf.mxu0
        %v1495 = vadd.f32 %v454, %v1494
        %1496 = vmatmul.f32.gmra.mxu0 %v696
        %v1497 = vpop.f32.mrf.mxu0
        %v1498 = vadd.f32 %v454, %v1497
        %1499 = vmatmul.f32.gmra.mxu0 %v699
        %v1500 = vpop.f32.mrf.mxu0
        %v1501 = vadd.f32 %v454, %v1500
        %1502 = vmatmul.f32.gmra.mxu0 %v702
        %v1503 = vpop.f32.mrf.mxu0
        %v1504 = vadd.f32 %v454, %v1503
        %1505 = vmatmul.f32.gmra.mxu0 %v705
        %v1506 = vpop.f32.mrf.mxu0
        %v1507 = vadd.f32 %v454, %v1506
        %1508 = vmatmul.f32.gmra.mxu0 %v708
        %v1509 = vpop.f32.mrf.mxu0
        %v1510 = vadd.f32 %v454, %v1509
        %1511 = vmatmul.f32.gmra.mxu0 %v711
        %v1512 = vpop.f32.mrf.mxu0
        %v1513 = vadd.f32 %v454, %v1512
        %1514 = vmatmul.f32.gmra.mxu0 %v714
        %v1515 = vpop.f32.mrf.mxu0
        %v1516 = vadd.f32 %v454, %v1515
        %1517 = vmatmul.f32.gmra.mxu0 %v717
        %v1518 = vpop.f32.mrf.mxu0
        %v1519 = vadd.f32 %v454, %v1518
        %1520 = vmatmul.f32.gmra.mxu0 %v720
        %v1521 = vpop.f32.mrf.mxu0
        %v1522 = vadd.f32 %v454, %v1521
        %1523 = vmatmul.f32.gmra.mxu0 %v723
        %v1524 = vpop.f32.mrf.mxu0
        %v1525 = vadd.f32 %v454, %v1524
        %1526 = vmatmul.f32.gmra.mxu0 %v726
        %v1527 = vpop.f32.mrf.mxu0
        %v1528 = vadd.f32 %v454, %v1527
        %1529 = vmatmul.f32.gmra.mxu0 %v729
        %v1530 = vpop.f32.mrf.mxu0
        %v1531 = vadd.f32 %v454, %v1530
        %1532 = vmatmul.f32.gmra.mxu0 %v732
        %v1533 = vpop.f32.mrf.mxu0
        %v1534 = vadd.f32 %v454, %v1533
        %1535 = vmatmul.f32.gmra.mxu0 %v735
        %v1536 = vpop.f32.mrf.mxu0
        %v1537 = vadd.f32 %v454, %v1536
        %1538 = vmatmul.f32.gmra.mxu0 %v738
        %v1539 = vpop.f32.mrf.mxu0
        %v1540 = vadd.f32 %v454, %v1539
        %1541 = vmatmul.f32.gmra.mxu0 %v741
        %v1542 = vpop.f32.mrf.mxu0
        %v1543 = vadd.f32 %v454, %v1542
        %1544 = vmatmul.f32.gmra.mxu0 %v744
        %v1545 = vpop.f32.mrf.mxu0
        %v1546 = vadd.f32 %v454, %v1545
        %1547 = vmatmul.f32.gmra.mxu0 %v747
        %v1548 = vpop.f32.mrf.mxu0
        %v1549 = vadd.f32 %v454, %v1548
        %1550 = vmatmul.f32.gmra.mxu0 %v750
        %v1551 = vpop.f32.mrf.mxu0
        %v1552 = vadd.f32 %v454, %v1551
        %1553 = vmatmul.f32.gmra.mxu0 %v753
        %v1554 = vpop.f32.mrf.mxu0
        %v1555 = vadd.f32 %v454, %v1554
        %1556 = vmatmul.f32.gmra.mxu0 %v756
        %v1557 = vpop.f32.mrf.mxu0
        %v1558 = vadd.f32 %v454, %v1557
        %1559 = vmatmul.f32.gmra.mxu0 %v759
        %v1560 = vpop.f32.mrf.mxu0
        %v1561 = vadd.f32 %v454, %v1560
        %1562 = vmatmul.f32.gmra.mxu0 %v762
        %v1563 = vpop.f32.mrf.mxu0
        %v1564 = vadd.f32 %v454, %v1563
        %1565 = vmatmul.f32.gmra.mxu0 %v765
        %v1566 = vpop.f32.mrf.mxu0
        %v1567 = vadd.f32 %v454, %v1566
        %1568 = vmatmul.f32.gmra.mxu0 %v768
        %v1569 = vpop.f32.mrf.mxu0
        %v1570 = vadd.f32 %v454, %v1569
        %1571 = vmatmul.f32.gmra.mxu0 %v771
        %v1572 = vpop.f32.mrf.mxu0
        %v1573 = vadd.f32 %v454, %v1572
        %1574 = vmatmul.f32.gmra.mxu0 %v774
        %v1575 = vpop.f32.mrf.mxu0
        %v1576 = vadd.f32 %v454, %v1575
        %1577 = vmatmul.f32.gmra.mxu0 %v777
        %v1578 = vpop.f32.mrf.mxu0
        %v1579 = vadd.f32 %v454, %v1578
        %1580 = vmatmul.f32.gmra.mxu0 %v780
        %v1581 = vpop.f32.mrf.mxu0
        %v1582 = vadd.f32 %v454, %v1581
        %1583 = vmatmul.f32.gmra.mxu0 %v783
        %v1584 = vpop.f32.mrf.mxu0
        %v1585 = vadd.f32 %v454, %v1584
        %1586 = vmatmul.f32.gmra.mxu0 %v786
        %v1587 = vpop.f32.mrf.mxu0
        %v1588 = vadd.f32 %v454, %v1587
        %1589 = vmatmul.f32.gmra.mxu0 %v789
        %v1590 = vpop.f32.mrf.mxu0
        %v1591 = vadd.f32 %v454, %v1590
        %1592 = vmatmul.f32.gmra.mxu0 %v792
        %v1593 = vpop.f32.mrf.mxu0
        %v1594 = vadd.f32 %v454, %v1593
        %1595 = vmatmul.f32.gmra.mxu0 %v795
        %v1596 = vpop.f32.mrf.mxu0
        %v1597 = vadd.f32 %v454, %v1596
        %1598 = vmatmul.f32.gmra.mxu0 %v798
        %v1599 = vpop.f32.mrf.mxu0
        %v1600 = vadd.f32 %v454, %v1599
        %1601 = vmatmul.f32.gmra.mxu0 %v801
        %v1602 = vpop.f32.mrf.mxu0
        %v1603 = vadd.f32 %v454, %v1602
        %1604 = vmatmul.f32.gmra.mxu0 %v804
        %v1605 = vpop.f32.mrf.mxu0
        %v1606 = vadd.f32 %v454, %v1605
        %1607 = vmatmul.f32.gmra.mxu0 %v807
        %v1608 = vpop.f32.mrf.mxu0
        %v1609 = vadd.f32 %v454, %v1608
        %1610 = vmatmul.f32.gmra.mxu0 %v810
        %v1611 = vpop.f32.mrf.mxu0
        %v1612 = vadd.f32 %v454, %v1611
        %1613 = vmatmul.f32.gmra.mxu0 %v813
        %v1614 = vpop.f32.mrf.mxu0
        %v1615 = vadd.f32 %v454, %v1614
        %1616 = vmatmul.f32.gmra.mxu0 %v816
        %v1617 = vpop.f32.mrf.mxu0
        %v1618 = vadd.f32 %v454, %v1617
        %1619 = vmatmul.f32.gmra.mxu0 %v819
        %v1620 = vpop.f32.mrf.mxu0
        %v1621 = vadd.f32 %v454, %v1620
        %1622 = vmatmul.f32.gmra.mxu0 %v822
        %v1623 = vpop.f32.mrf.mxu0
        %v1624 = vadd.f32 %v454, %v1623
        %1625 = vmatmul.f32.gmra.mxu0 %v825
        %v1626 = vpop.f32.mrf.mxu0
        %v1627 = vadd.f32 %v454, %v1626
        %1628 = vmatmul.f32.gmra.mxu0 %v828
        %v1629 = vpop.f32.mrf.mxu0
        %v1630 = vadd.f32 %v454, %v1629
        %1631 = vmatmul.f32.gmra.mxu0 %v831
        %v1632 = vpop.f32.mrf.mxu0
        %v1633 = vadd.f32 %v454, %v1632
        %1634 = vmatmul.f32.gmra.mxu0 %v834
        %v1635 = vpop.f32.mrf.mxu0
        %v1636 = vadd.f32 %v454, %v1635
        %1637 = vmatmul.f32.gmra.mxu0 %v837
        %v1638 = vpop.f32.mrf.mxu0
        %v1639 = vadd.f32 %v454, %v1638
        %1640 = vmatmul.f32.gmra.mxu0 %v840
        %v1641 = vpop.f32.mrf.mxu0
        %v1642 = vadd.f32 %v454, %v1641
        %1643 = vdwg.mxu0
        %v1644 = vmax.f32 %v860, 0.0
        %v1645 = vmax.f32 %v1261, 0.0
        %v1646 = vmax.f32 %v863, 0.0
        %v1647 = vmax.f32 %v1264, 0.0
        %v1648 = vmax.f32 %v866, 0.0
        %v1649 = vmax.f32 %v1267, 0.0
        %v1650 = vmax.f32 %v869, 0.0
        %v1651 = vmax.f32 %v1270, 0.0
        %v1652 = vmax.f32 %v872, 0.0
        %v1653 = vmax.f32 %v1273, 0.0
        %v1654 = vmax.f32 %v875, 0.0
        %v1655 = vmax.f32 %v1276, 0.0
        %v1656 = vmax.f32 %v878, 0.0
        %v1657 = vmax.f32 %v1279, 0.0
        %v1658 = vmax.f32 %v881, 0.0
        %v1659 = vmax.f32 %v1282, 0.0
        %v1660 = vmax.f32 %v884, 0.0
        %v1661 = vmax.f32 %v1285, 0.0
        %v1662 = vmax.f32 %v887, 0.0
        %v1663 = vmax.f32 %v1288, 0.0
        %v1664 = vmax.f32 %v890, 0.0
        %v1665 = vmax.f32 %v1291, 0.0
        %v1666 = vmax.f32 %v893, 0.0
        %v1667 = vmax.f32 %v1294, 0.0
        %v1668 = vmax.f32 %v896, 0.0
        %v1669 = vmax.f32 %v1297, 0.0
        %v1670 = vmax.f32 %v899, 0.0
        %v1671 = vmax.f32 %v1300, 0.0
        %v1672 = vmax.f32 %v902, 0.0
        %v1673 = vmax.f32 %v1303, 0.0
        %v1674 = vmax.f32 %v905, 0.0
        %v1675 = vmax.f32 %v1306, 0.0
        %v1676 = vmax.f32 %v908, 0.0
        %v1677 = vmax.f32 %v1309, 0.0
        %v1678 = vmax.f32 %v911, 0.0
        %v1679 = vmax.f32 %v1312, 0.0
        %v1680 = vmax.f32 %v914, 0.0
        %v1681 = vmax.f32 %v1315, 0.0
        %v1682 = vmax.f32 %v917, 0.0
        %v1683 = vmax.f32 %v1318, 0.0
        %v1684 = vmax.f32 %v920, 0.0
        %v1685 = vmax.f32 %v1321, 0.0
        %v1686 = vmax.f32 %v923, 0.0
        %v1687 = vmax.f32 %v1324, 0.0
        %v1688 = vmax.f32 %v926, 0.0
        %v1689 = vmax.f32 %v1327, 0.0
        %v1690 = vmax.f32 %v929, 0.0
        %v1691 = vmax.f32 %v1330, 0.0
        %v1692 = vmax.f32 %v932, 0.0
        %v1693 = vmax.f32 %v1333, 0.0
        %v1694 = vmax.f32 %v935, 0.0
        %v1695 = vmax.f32 %v1336, 0.0
        %v1696 = vmax.f32 %v938, 0.0
        %v1697 = vmax.f32 %v1339, 0.0
        %v1698 = vmax.f32 %v941, 0.0
        %v1699 = vmax.f32 %v1342, 0.0
        %v1700 = vmax.f32 %v944, 0.0
        %v1701 = vmax.f32 %v1345, 0.0
        %v1702 = vmax.f32 %v947, 0.0
        %v1703 = vmax.f32 %v1348, 0.0
        %v1704 = vmax.f32 %v950, 0.0
        %v1705 = vmax.f32 %v1351, 0.0
        %v1706 = vmax.f32 %v953, 0.0
        %v1707 = vmax.f32 %v1354, 0.0
        %v1708 = vmax.f32 %v956, 0.0
        %v1709 = vmax.f32 %v1357, 0.0
        %v1710 = vmax.f32 %v959, 0.0
        %v1711 = vmax.f32 %v1360, 0.0
        %v1712 = vmax.f32 %v962, 0.0
        %v1713 = vmax.f32 %v1363, 0.0
        %v1714 = vmax.f32 %v965, 0.0
        %v1715 = vmax.f32 %v1366, 0.0
        %v1716 = vmax.f32 %v968, 0.0
        %v1717 = vmax.f32 %v1369, 0.0
        %v1718 = vmax.f32 %v971, 0.0
        %v1719 = vmax.f32 %v1372, 0.0
        %v1720 = vmax.f32 %v974, 0.0
        %v1721 = vmax.f32 %v1375, 0.0
        %v1722 = vmax.f32 %v977, 0.0
        %v1723 = vmax.f32 %v1378, 0.0
        %v1724 = vmax.f32 %v980, 0.0
        %v1725 = vmax.f32 %v1381, 0.0
        %v1726 = vmax.f32 %v983, 0.0
        %v1727 = vmax.f32 %v1384, 0.0
        %v1728 = vmax.f32 %v986, 0.0
        %v1729 = vmax.f32 %v1387, 0.0
        %v1730 = vmax.f32 %v989, 0.0
        %v1731 = vmax.f32 %v1390, 0.0
        %v1732 = vmax.f32 %v992, 0.0
        %v1733 = vmax.f32 %v1393, 0.0
        %v1734 = vmax.f32 %v995, 0.0
        %v1735 = vmax.f32 %v1396, 0.0
        %v1736 = vmax.f32 %v998, 0.0
        %v1737 = vmax.f32 %v1399, 0.0
        %v1738 = vmax.f32 %v1001, 0.0
        %v1739 = vmax.f32 %v1402, 0.0
        %v1740 = vmax.f32 %v1004, 0.0
        %v1741 = vmax.f32 %v1405, 0.0
        %v1742 = vmax.f32 %v1007, 0.0
        %v1743 = vmax.f32 %v1408, 0.0
        %v1744 = vmax.f32 %v1010, 0.0
        %v1745 = vmax.f32 %v1411, 0.0
        %v1746 = vmax.f32 %v1013, 0.0
        %v1747 = vmax.f32 %v1414, 0.0
        %v1748 = vmax.f32 %v1016, 0.0
        %v1749 = vmax.f32 %v1417, 0.0
        %v1750 = vmax.f32 %v1019, 0.0
        %v1751 = vmax.f32 %v1420, 0.0
        %v1752 = vmax.f32 %v1022, 0.0
        %v1753 = vmax.f32 %v1423, 0.0
        %v1754 = vmax.f32 %v1025, 0.0
        %v1755 = vmax.f32 %v1426, 0.0
        %v1756 = vmax.f32 %v1028, 0.0
        %v1757 = vmax.f32 %v1429, 0.0
        %v1758 = vmax.f32 %v1031, 0.0
        %v1759 = vmax.f32 %v1432, 0.0
        %v1760 = vmax.f32 %v1034, 0.0
        %v1761 = vmax.f32 %v1435, 0.0
        %v1762 = vmax.f32 %v1037, 0.0
        %v1763 = vmax.f32 %v1438, 0.0
        %v1764 = vmax.f32 %v1040, 0.0
        %v1765 = vmax.f32 %v1441, 0.0
        %v1766 = vmax.f32 %v1043, 0.0
        %v1767 = vmax.f32 %v1444, 0.0
        %v1768 = vmax.f32 %v1046, 0.0
        %v1769 = vmax.f32 %v1447, 0.0
        %v1770 = vmax.f32 %v1049, 0.0
        %v1771 = vmax.f32 %v1450, 0.0
        %v1772 = vmax.f32 %v1052, 0.0
        %v1773 = vmax.f32 %v1453, 0.0
        %v1774 = vmax.f32 %v1055, 0.0
        %v1775 = vmax.f32 %v1456, 0.0
        %v1776 = vmax.f32 %v1058, 0.0
        %v1777 = vmax.f32 %v1459, 0.0
        %v1778 = vmax.f32 %v1061, 0.0
        %v1779 = vmax.f32 %v1462, 0.0
        %v1780 = vmax.f32 %v1064, 0.0
        %v1781 = vmax.f32 %v1465, 0.0
        %v1782 = vmax.f32 %v1067, 0.0
        %v1783 = vmax.f32 %v1468, 0.0
        %v1784 = vmax.f32 %v1070, 0.0
        %v1785 = vmax.f32 %v1471, 0.0
        %v1786 = vmax.f32 %v1073, 0.0
        %v1787 = vmax.f32 %v1474, 0.0
        %v1788 = vmax.f32 %v1076, 0.0
        %v1789 = vmax.f32 %v1477, 0.0
        %v1790 = vmax.f32 %v1079, 0.0
        %v1791 = vmax.f32 %v1480, 0.0
        %v1792 = vmax.f32 %v1082, 0.0
        %v1793 = vmax.f32 %v1483, 0.0
        %v1794 = vmax.f32 %v1085, 0.0
        %v1795 = vmax.f32 %v1486, 0.0
        %v1796 = vmax.f32 %v1088, 0.0
        %v1797 = vmax.f32 %v1489, 0.0
        %v1798 = vmax.f32 %v1091, 0.0
        %v1799 = vmax.f32 %v1492, 0.0
        %v1800 = vmax.f32 %v1094, 0.0
        %v1801 = vmax.f32 %v1495, 0.0
        %v1802 = vmax.f32 %v1097, 0.0
        %v1803 = vmax.f32 %v1498, 0.0
        %v1804 = vmax.f32 %v1100, 0.0
        %v1805 = vmax.f32 %v1501, 0.0
        %v1806 = vmax.f32 %v1103, 0.0
        %v1807 = vmax.f32 %v1504, 0.0
        %v1808 = vmax.f32 %v1106, 0.0
        %v1809 = vmax.f32 %v1507, 0.0
        %v1810 = vmax.f32 %v1109, 0.0
        %v1811 = vmax.f32 %v1510, 0.0
        %v1812 = vmax.f32 %v1112, 0.0
        %v1813 = vmax.f32 %v1513, 0.0
        %v1814 = vmax.f32 %v1115, 0.0
        %v1815 = vmax.f32 %v1516, 0.0
        %v1816 = vmax.f32 %v1118, 0.0
        %v1817 = vmax.f32 %v1519, 0.0
        %v1818 = vmax.f32 %v1121, 0.0
        %v1819 = vmax.f32 %v1522, 0.0
        %v1820 = vmax.f32 %v1124, 0.0
        %v1821 = vmax.f32 %v1525, 0.0
        %v1822 = vmax.f32 %v1127, 0.0
        %v1823 = vmax.f32 %v1528, 0.0
        %v1824 = vmax.f32 %v1130, 0.0
        %v1825 = vmax.f32 %v1531, 0.0
        %v1826 = vmax.f32 %v1133, 0.0
        %v1827 = vmax.f32 %v1534, 0.0
        %v1828 = vmax.f32 %v1136, 0.0
        %v1829 = vmax.f32 %v1537, 0.0
        %v1830 = vmax.f32 %v1139, 0.0
        %v1831 = vmax.f32 %v1540, 0.0
        %v1832 = vmax.f32 %v1142, 0.0
        %v1833 = vmax.f32 %v1543, 0.0
        %v1834 = vmax.f32 %v1145, 0.0
        %v1835 = vmax.f32 %v1546, 0.0
        %v1836 = vmax.f32 %v1148, 0.0
        %v1837 = vmax.f32 %v1549, 0.0
        %v1838 = vmax.f32 %v1151, 0.0
        %v1839 = vmax.f32 %v1552, 0.0
        %v1840 = vmax.f32 %v1154, 0.0
        %v1841 = vmax.f32 %v1555, 0.0
        %v1842 = vmax.f32 %v1157, 0.0
        %v1843 = vmax.f32 %v1558, 0.0
        %v1844 = vmax.f32 %v1160, 0.0
        %v1845 = vmax.f32 %v1561, 0.0
        %v1846 = vmax.f32 %v1163, 0.0
        %v1847 = vmax.f32 %v1564, 0.0
        %v1848 = vmax.f32 %v1166, 0.0
        %v1849 = vmax.f32 %v1567, 0.0
        %v1850 = vmax.f32 %v1169, 0.0
        %v1851 = vmax.f32 %v1570, 0.0
        %v1852 = vmax.f32 %v1172, 0.0
        %v1853 = vmax.f32 %v1573, 0.0
        %v1854 = vmax.f32 %v1175, 0.0
        %v1855 = vmax.f32 %v1576, 0.0
        %v1856 = vmax.f32 %v1178, 0.0
        %v1857 = vmax.f32 %v1579, 0.0
        %v1858 = vmax.f32 %v1181, 0.0
        %v1859 = vmax.f32 %v1582, 0.0
        %v1860 = vmax.f32 %v1184, 0.0
        %v1861 = vmax.f32 %v1585, 0.0
        %v1862 = vmax.f32 %v1187, 0.0
        %v1863 = vmax.f32 %v1588, 0.0
        %v1864 = vmax.f32 %v1190, 0.0
        %v1865 = vmax.f32 %v1591, 0.0
        %v1866 = vmax.f32 %v1193, 0.0
        %v1867 = vmax.f32 %v1594, 0.0
        %v1868 = vmax.f32 %v1196, 0.0
        %v1869 = vmax.f32 %v1597, 0.0
        %v1870 = vmax.f32 %v1199, 0.0
        %v1871 = vmax.f32 %v1600, 0.0
        %v1872 = vmax.f32 %v1202, 0.0
        %v1873 = vmax.f32 %v1603, 0.0
        %v1874 = vmax.f32 %v1205, 0.0
        %v1875 = vmax.f32 %v1606, 0.0
        %v1876 = vmax.f32 %v1208, 0.0
        %v1877 = vmax.f32 %v1609, 0.0
        %v1878 = vmax.f32 %v1211, 0.0
        %v1879 = vmax.f32 %v1612, 0.0
        %v1880 = vmax.f32 %v1214, 0.0
        %v1881 = vmax.f32 %v1615, 0.0
        %v1882 = vmax.f32 %v1217, 0.0
        %v1883 = vmax.f32 %v1618, 0.0
        %v1884 = vmax.f32 %v1220, 0.0
        %v1885 = vmax.f32 %v1621, 0.0
        %v1886 = vmax.f32 %v1223, 0.0
        %v1887 = vmax.f32 %v1624, 0.0
        %v1888 = vmax.f32 %v1226, 0.0
        %v1889 = vmax.f32 %v1627, 0.0
        %v1890 = vmax.f32 %v1229, 0.0
        %v1891 = vmax.f32 %v1630, 0.0
        %v1892 = vmax.f32 %v1232, 0.0
        %v1893 = vmax.f32 %v1633, 0.0
        %v1894 = vmax.f32 %v1235, 0.0
        %v1895 = vmax.f32 %v1636, 0.0
        %v1896 = vmax.f32 %v1238, 0.0
        %v1897 = vmax.f32 %v1639, 0.0
        %v1898 = vmax.f32 %v1241, 0.0
        %v1899 = vmax.f32 %v1642, 0.0
        %v1900 = vld [vmem:[#allocation5] sm:$0xff]
        %v1901 = vld [vmem:[#allocation5 + $0x8] sm:$0xff]
        %v1902 = vld [vmem:[#allocation5 + $0x10] sm:$0xff]
        %v1903 = vld [vmem:[#allocation5 + $0x18] sm:$0xff]
        %v1904 = vld [vmem:[#allocation5 + $0x20] sm:$0xff]
        %v1905 = vld [vmem:[#allocation5 + $0x28] sm:$0xff]
        %v1906 = vld [vmem:[#allocation5 + $0x30] sm:$0xff]
        %v1907 = vld [vmem:[#allocation5 + $0x38] sm:$0xff]
        %v1908 = vld [vmem:[#allocation5 + $0x40] sm:$0xff]
        %v1909 = vld [vmem:[#allocation5 + $0x48] sm:$0xff]
        %v1910 = vld [vmem:[#allocation5 + $0x50] sm:$0xff]
        %v1911 = vld [vmem:[#allocation5 + $0x58] sm:$0xff]
        %v1912 = vld [vmem:[#allocation5 + $0x60] sm:$0xff]
        %v1913 = vld [vmem:[#allocation5 + $0x68] sm:$0xff]
        %v1914 = vld [vmem:[#allocation5 + $0x70] sm:$0xff]
        %v1915 = vld [vmem:[#allocation5 + $0x78] sm:$0xff]
        %v1916 = vld [vmem:[#allocation5 + $0x80] sm:$0xff]
        %v1917 = vld [vmem:[#allocation5 + $0x88] sm:$0xff]
        %v1918 = vld [vmem:[#allocation5 + $0x90] sm:$0xff]
        %v1919 = vld [vmem:[#allocation5 + $0x98] sm:$0xff]
        %v1920 = vld [vmem:[#allocation5 + $0xa0] sm:$0xff]
        %v1921 = vld [vmem:[#allocation5 + $0xa8] sm:$0xff]
        %v1922 = vld [vmem:[#allocation5 + $0xb0] sm:$0xff]
        %v1923 = vld [vmem:[#allocation5 + $0xb8] sm:$0xff]
        %v1924 = vld [vmem:[#allocation5 + $0xc0] sm:$0xff]
        %v1925 = vld [vmem:[#allocation5 + $0xc8] sm:$0xff]
        %v1926 = vld [vmem:[#allocation5 + $0xd0] sm:$0xff]
        %v1927 = vld [vmem:[#allocation5 + $0xd8] sm:$0xff]
        %v1928 = vld [vmem:[#allocation5 + $0xe0] sm:$0xff]
        %v1929 = vld [vmem:[#allocation5 + $0xe8] sm:$0xff]
        %v1930 = vld [vmem:[#allocation5 + $0xf0] sm:$0xff]
        %v1931 = vld [vmem:[#allocation5 + $0xf8] sm:$0xff]
        %v1932 = vld [vmem:[#allocation5 + $0x100] sm:$0xff]
        %v1933 = vld [vmem:[#allocation5 + $0x108] sm:$0xff]
        %v1934 = vld [vmem:[#allocation5 + $0x110] sm:$0xff]
        %v1935 = vld [vmem:[#allocation5 + $0x118] sm:$0xff]
        %v1936 = vld [vmem:[#allocation5 + $0x120] sm:$0xff]
        %v1937 = vld [vmem:[#allocation5 + $0x128] sm:$0xff]
        %v1938 = vld [vmem:[#allocation5 + $0x130] sm:$0xff]
        %v1939 = vld [vmem:[#allocation5 + $0x138] sm:$0xff]
        %v1940 = vld [vmem:[#allocation5 + $0x140] sm:$0xff]
        %v1941 = vld [vmem:[#allocation5 + $0x148] sm:$0xff]
        %v1942 = vld [vmem:[#allocation5 + $0x150] sm:$0xff]
        %v1943 = vld [vmem:[#allocation5 + $0x158] sm:$0xff]
        %v1944 = vld [vmem:[#allocation5 + $0x160] sm:$0xff]
        %v1945 = vld [vmem:[#allocation5 + $0x168] sm:$0xff]
        %v1946 = vld [vmem:[#allocation5 + $0x170] sm:$0xff]
        %v1947 = vld [vmem:[#allocation5 + $0x178] sm:$0xff]
        %v1948 = vld [vmem:[#allocation5 + $0x180] sm:$0xff]
        %v1949 = vld [vmem:[#allocation5 + $0x188] sm:$0xff]
        %v1950 = vld [vmem:[#allocation5 + $0x190] sm:$0xff]
        %v1951 = vld [vmem:[#allocation5 + $0x198] sm:$0xff]
        %v1952 = vld [vmem:[#allocation5 + $0x1a0] sm:$0xff]
        %v1953 = vld [vmem:[#allocation5 + $0x1a8] sm:$0xff]
        %v1954 = vld [vmem:[#allocation5 + $0x1b0] sm:$0xff]
        %v1955 = vld [vmem:[#allocation5 + $0x1b8] sm:$0xff]
        %v1956 = vld [vmem:[#allocation5 + $0x1c0] sm:$0xff]
        %v1957 = vld [vmem:[#allocation5 + $0x1c8] sm:$0xff]
        %v1958 = vld [vmem:[#allocation5 + $0x1d0] sm:$0xff]
        %v1959 = vld [vmem:[#allocation5 + $0x1d8] sm:$0xff]
        %v1960 = vld [vmem:[#allocation5 + $0x1e0] sm:$0xff]
        %v1961 = vld [vmem:[#allocation5 + $0x1e8] sm:$0xff]
        %v1962 = vld [vmem:[#allocation5 + $0x1f0] sm:$0xff]
        %v1963 = vld [vmem:[#allocation5 + $0x1f8] sm:$0xff]
        %v1964 = vld [vmem:[#allocation5 + $0x200] sm:$0xff]
        %v1965 = vld [vmem:[#allocation5 + $0x208] sm:$0xff]
        %v1966 = vld [vmem:[#allocation5 + $0x210] sm:$0xff]
        %v1967 = vld [vmem:[#allocation5 + $0x218] sm:$0xff]
        %v1968 = vld [vmem:[#allocation5 + $0x220] sm:$0xff]
        %v1969 = vld [vmem:[#allocation5 + $0x228] sm:$0xff]
        %v1970 = vld [vmem:[#allocation5 + $0x230] sm:$0xff]
        %v1971 = vld [vmem:[#allocation5 + $0x238] sm:$0xff]
        %v1972 = vld [vmem:[#allocation5 + $0x240] sm:$0xff]
        %v1973 = vld [vmem:[#allocation5 + $0x248] sm:$0xff]
        %v1974 = vld [vmem:[#allocation5 + $0x250] sm:$0xff]
        %v1975 = vld [vmem:[#allocation5 + $0x258] sm:$0xff]
        %v1976 = vld [vmem:[#allocation5 + $0x260] sm:$0xff]
        %v1977 = vld [vmem:[#allocation5 + $0x268] sm:$0xff]
        %v1978 = vld [vmem:[#allocation5 + $0x270] sm:$0xff]
        %v1979 = vld [vmem:[#allocation5 + $0x278] sm:$0xff]
        %v1980 = vld [vmem:[#allocation5 + $0x280] sm:$0xff]
        %v1981 = vld [vmem:[#allocation5 + $0x288] sm:$0xff]
        %v1982 = vld [vmem:[#allocation5 + $0x290] sm:$0xff]
        %v1983 = vld [vmem:[#allocation5 + $0x298] sm:$0xff]
        %v1984 = vld [vmem:[#allocation5 + $0x2a0] sm:$0xff]
        %v1985 = vld [vmem:[#allocation5 + $0x2a8] sm:$0xff]
        %v1986 = vld [vmem:[#allocation5 + $0x2b0] sm:$0xff]
        %v1987 = vld [vmem:[#allocation5 + $0x2b8] sm:$0xff]
        %v1988 = vld [vmem:[#allocation5 + $0x2c0] sm:$0xff]
        %v1989 = vld [vmem:[#allocation5 + $0x2c8] sm:$0xff]
        %v1990 = vld [vmem:[#allocation5 + $0x2d0] sm:$0xff]
        %v1991 = vld [vmem:[#allocation5 + $0x2d8] sm:$0xff]
        %v1992 = vld [vmem:[#allocation5 + $0x2e0] sm:$0xff]
        %v1993 = vld [vmem:[#allocation5 + $0x2e8] sm:$0xff]
        %v1994 = vld [vmem:[#allocation5 + $0x2f0] sm:$0xff]
        %v1995 = vld [vmem:[#allocation5 + $0x2f8] sm:$0xff]
        %s1996 = scalar_lea.vmem [#allocation7], 1
        %v1997 = vld [vmem:[%s1996] ss:$4 sm:$0x7]
        %v1999 = vperm.slane %v1997, 0
        %v2000 = vperm.slane %v1997, 1
        %v2001 = vperm.slane %v1997, 2
        %2005 = vmatpush.msra.mxu0 %v1945
        %2006 = vmatpush.msra.mxu0 %v1942
        %2007 = vmatpush.msra.mxu0 %v1939
        %2008 = vmatpush.msra.mxu0 %v1936
        %2009 = vmatpush.msra.mxu0 %v1933
        %2010 = vmatpush.msra.mxu0 %v1930
        %2011 = vmatpush.msra.mxu0 %v1927
        %2012 = vmatpush.msra.mxu0 %v1924
        %2013 = vmatpush.msra.mxu0 %v1921
        %2014 = vmatpush.msra.mxu0 %v1918
        %2015 = vmatpush.msra.mxu0 %v1915
        %2016 = vmatpush.msra.mxu0 %v1912
        %2017 = vmatpush.msra.mxu0 %v1909
        %2018 = vmatpush.msra.mxu0 %v1906
        %2019 = vmatpush.msra.mxu0 %v1903
        %2020 = vmatpush.msra.mxu0 %v1900
        %2021 = vmatmul.f32.gmra.mxu0 %v1644
        %v2022 = vpop.f32.mrf.mxu0
        %v2023 = vadd.f32 %v1999, %v2022
        %2024 = vmatmul.f32.gmra.mxu0 %v1646
        %v2025 = vpop.f32.mrf.mxu0
        %v2026 = vadd.f32 %v1999, %v2025
        %2027 = vmatmul.f32.gmra.mxu0 %v1648
        %v2028 = vpop.f32.mrf.mxu0
        %v2029 = vadd.f32 %v1999, %v2028
        %2030 = vmatmul.f32.gmra.mxu0 %v1650
        %v2031 = vpop.f32.mrf.mxu0
        %v2032 = vadd.f32 %v1999, %v2031
        %2033 = vmatmul.f32.gmra.mxu0 %v1652
        %v2034 = vpop.f32.mrf.mxu0
        %v2035 = vadd.f32 %v1999, %v2034
        %2036 = vmatmul.f32.gmra.mxu0 %v1654
        %v2037 = vpop.f32.mrf.mxu0
        %v2038 = vadd.f32 %v1999, %v2037
        %2039 = vmatmul.f32.gmra.mxu0 %v1656
        %v2040 = vpop.f32.mrf.mxu0
        %v2041 = vadd.f32 %v1999, %v2040
        %2042 = vmatmul.f32.gmra.mxu0 %v1658
        %v2043 = vpop.f32.mrf.mxu0
        %v2044 = vadd.f32 %v1999, %v2043
        %2045 = vmatmul.f32.gmra.mxu0 %v1660
        %v2046 = vpop.f32.mrf.mxu0
        %v2047 = vadd.f32 %v1999, %v2046
        %2048 = vmatmul.f32.gmra.mxu0 %v1662
        %v2049 = vpop.f32.mrf.mxu0
        %v2050 = vadd.f32 %v1999, %v2049
        %2051 = vmatmul.f32.gmra.mxu0 %v1664
        %v2052 = vpop.f32.mrf.mxu0
        %v2053 = vadd.f32 %v1999, %v2052
        %2054 = vmatmul.f32.gmra.mxu0 %v1666
        %v2055 = vpop.f32.mrf.mxu0
        %v2056 = vadd.f32 %v1999, %v2055
        %2057 = vmatmul.f32.gmra.mxu0 %v1668
        %v2058 = vpop.f32.mrf.mxu0
        %v2059 = vadd.f32 %v1999, %v2058
        %2060 = vmatmul.f32.gmra.mxu0 %v1670
        %v2061 = vpop.f32.mrf.mxu0
        %v2062 = vadd.f32 %v1999, %v2061
        %2063 = vmatmul.f32.gmra.mxu0 %v1672
        %v2064 = vpop.f32.mrf.mxu0
        %v2065 = vadd.f32 %v1999, %v2064
        %2066 = vmatmul.f32.gmra.mxu0 %v1674
        %v2067 = vpop.f32.mrf.mxu0
        %v2068 = vadd.f32 %v1999, %v2067
        %2069 = vmatmul.f32.gmra.mxu0 %v1676
        %v2070 = vpop.f32.mrf.mxu0
        %v2071 = vadd.f32 %v1999, %v2070
        %2072 = vmatmul.f32.gmra.mxu0 %v1678
        %v2073 = vpop.f32.mrf.mxu0
        %v2074 = vadd.f32 %v1999, %v2073
        %2075 = vmatmul.f32.gmra.mxu0 %v1680
        %v2076 = vpop.f32.mrf.mxu0
        %v2077 = vadd.f32 %v1999, %v2076
        %2078 = vmatmul.f32.gmra.mxu0 %v1682
        %v2079 = vpop.f32.mrf.mxu0
        %v2080 = vadd.f32 %v1999, %v2079
        %2081 = vmatmul.f32.gmra.mxu0 %v1684
        %v2082 = vpop.f32.mrf.mxu0
        %v2083 = vadd.f32 %v1999, %v2082
        %2084 = vmatmul.f32.gmra.mxu0 %v1686
        %v2085 = vpop.f32.mrf.mxu0
        %v2086 = vadd.f32 %v1999, %v2085
        %2087 = vmatmul.f32.gmra.mxu0 %v1688
        %v2088 = vpop.f32.mrf.mxu0
        %v2089 = vadd.f32 %v1999, %v2088
        %2090 = vmatmul.f32.gmra.mxu0 %v1690
        %v2091 = vpop.f32.mrf.mxu0
        %v2092 = vadd.f32 %v1999, %v2091
        %2093 = vmatmul.f32.gmra.mxu0 %v1692
        %v2094 = vpop.f32.mrf.mxu0
        %v2095 = vadd.f32 %v1999, %v2094
        %2096 = vmatmul.f32.gmra.mxu0 %v1694
        %v2097 = vpop.f32.mrf.mxu0
        %v2098 = vadd.f32 %v1999, %v2097
        %2099 = vmatmul.f32.gmra.mxu0 %v1696
        %v2100 = vpop.f32.mrf.mxu0
        %v2101 = vadd.f32 %v1999, %v2100
        %2102 = vmatmul.f32.gmra.mxu0 %v1698
        %v2103 = vpop.f32.mrf.mxu0
        %v2104 = vadd.f32 %v1999, %v2103
        %2105 = vmatmul.f32.gmra.mxu0 %v1700
        %v2106 = vpop.f32.mrf.mxu0
        %v2107 = vadd.f32 %v1999, %v2106
        %2108 = vmatmul.f32.gmra.mxu0 %v1702
        %v2109 = vpop.f32.mrf.mxu0
        %v2110 = vadd.f32 %v1999, %v2109
        %2111 = vmatmul.f32.gmra.mxu0 %v1704
        %v2112 = vpop.f32.mrf.mxu0
        %v2113 = vadd.f32 %v1999, %v2112
        %2114 = vmatmul.f32.gmra.mxu0 %v1706
        %v2115 = vpop.f32.mrf.mxu0
        %v2116 = vadd.f32 %v1999, %v2115
        %2117 = vmatmul.f32.gmra.mxu0 %v1708
        %v2118 = vpop.f32.mrf.mxu0
        %v2119 = vadd.f32 %v1999, %v2118
        %2120 = vmatmul.f32.gmra.mxu0 %v1710
        %v2121 = vpop.f32.mrf.mxu0
        %v2122 = vadd.f32 %v1999, %v2121
        %2123 = vmatmul.f32.gmra.mxu0 %v1712
        %v2124 = vpop.f32.mrf.mxu0
        %v2125 = vadd.f32 %v1999, %v2124
        %2126 = vmatmul.f32.gmra.mxu0 %v1714
        %v2127 = vpop.f32.mrf.mxu0
        %v2128 = vadd.f32 %v1999, %v2127
        %2129 = vmatmul.f32.gmra.mxu0 %v1716
        %v2130 = vpop.f32.mrf.mxu0
        %v2131 = vadd.f32 %v1999, %v2130
        %2132 = vmatmul.f32.gmra.mxu0 %v1718
        %v2133 = vpop.f32.mrf.mxu0
        %v2134 = vadd.f32 %v1999, %v2133
        %2135 = vmatmul.f32.gmra.mxu0 %v1720
        %v2136 = vpop.f32.mrf.mxu0
        %v2137 = vadd.f32 %v1999, %v2136
        %2138 = vmatmul.f32.gmra.mxu0 %v1722
        %v2139 = vpop.f32.mrf.mxu0
        %v2140 = vadd.f32 %v1999, %v2139
        %2141 = vmatmul.f32.gmra.mxu0 %v1724
        %v2142 = vpop.f32.mrf.mxu0
        %v2143 = vadd.f32 %v1999, %v2142
        %2144 = vmatmul.f32.gmra.mxu0 %v1726
        %v2145 = vpop.f32.mrf.mxu0
        %v2146 = vadd.f32 %v1999, %v2145
        %2147 = vmatmul.f32.gmra.mxu0 %v1728
        %v2148 = vpop.f32.mrf.mxu0
        %v2149 = vadd.f32 %v1999, %v2148
        %2150 = vmatmul.f32.gmra.mxu0 %v1730
        %v2151 = vpop.f32.mrf.mxu0
        %v2152 = vadd.f32 %v1999, %v2151
        %2153 = vmatmul.f32.gmra.mxu0 %v1732
        %v2154 = vpop.f32.mrf.mxu0
        %v2155 = vadd.f32 %v1999, %v2154
        %2156 = vmatmul.f32.gmra.mxu0 %v1734
        %v2157 = vpop.f32.mrf.mxu0
        %v2158 = vadd.f32 %v1999, %v2157
        %2159 = vmatmul.f32.gmra.mxu0 %v1736
        %v2160 = vpop.f32.mrf.mxu0
        %v2161 = vadd.f32 %v1999, %v2160
        %2162 = vmatmul.f32.gmra.mxu0 %v1738
        %v2163 = vpop.f32.mrf.mxu0
        %v2164 = vadd.f32 %v1999, %v2163
        %2165 = vmatmul.f32.gmra.mxu0 %v1740
        %v2166 = vpop.f32.mrf.mxu0
        %v2167 = vadd.f32 %v1999, %v2166
        %2168 = vmatmul.f32.gmra.mxu0 %v1742
        %v2169 = vpop.f32.mrf.mxu0
        %v2170 = vadd.f32 %v1999, %v2169
        %2171 = vmatmul.f32.gmra.mxu0 %v1744
        %v2172 = vpop.f32.mrf.mxu0
        %v2173 = vadd.f32 %v1999, %v2172
        %2174 = vmatmul.f32.gmra.mxu0 %v1746
        %v2175 = vpop.f32.mrf.mxu0
        %v2176 = vadd.f32 %v1999, %v2175
        %2177 = vmatmul.f32.gmra.mxu0 %v1748
        %v2178 = vpop.f32.mrf.mxu0
        %v2179 = vadd.f32 %v1999, %v2178
        %2180 = vmatmul.f32.gmra.mxu0 %v1750
        %v2181 = vpop.f32.mrf.mxu0
        %v2182 = vadd.f32 %v1999, %v2181
        %2183 = vmatmul.f32.gmra.mxu0 %v1752
        %v2184 = vpop.f32.mrf.mxu0
        %v2185 = vadd.f32 %v1999, %v2184
        %2186 = vmatmul.f32.gmra.mxu0 %v1754
        %v2187 = vpop.f32.mrf.mxu0
        %v2188 = vadd.f32 %v1999, %v2187
        %2189 = vmatmul.f32.gmra.mxu0 %v1756
        %v2190 = vpop.f32.mrf.mxu0
        %v2191 = vadd.f32 %v1999, %v2190
        %2192 = vmatmul.f32.gmra.mxu0 %v1758
        %v2193 = vpop.f32.mrf.mxu0
        %v2194 = vadd.f32 %v1999, %v2193
        %2195 = vmatmul.f32.gmra.mxu0 %v1760
        %v2196 = vpop.f32.mrf.mxu0
        %v2197 = vadd.f32 %v1999, %v2196
        %2198 = vmatmul.f32.gmra.mxu0 %v1762
        %v2199 = vpop.f32.mrf.mxu0
        %v2200 = vadd.f32 %v1999, %v2199
        %2201 = vmatmul.f32.gmra.mxu0 %v1764
        %v2202 = vpop.f32.mrf.mxu0
        %v2203 = vadd.f32 %v1999, %v2202
        %2204 = vmatmul.f32.gmra.mxu0 %v1766
        %v2205 = vpop.f32.mrf.mxu0
        %v2206 = vadd.f32 %v1999, %v2205
        %2207 = vmatmul.f32.gmra.mxu0 %v1768
        %v2208 = vpop.f32.mrf.mxu0
        %v2209 = vadd.f32 %v1999, %v2208
        %2210 = vmatmul.f32.gmra.mxu0 %v1770
        %v2211 = vpop.f32.mrf.mxu0
        %v2212 = vadd.f32 %v1999, %v2211
        %2213 = vmatmul.f32.gmra.mxu0 %v1772
        %v2214 = vpop.f32.mrf.mxu0
        %v2215 = vadd.f32 %v1999, %v2214
        %2216 = vmatmul.f32.gmra.mxu0 %v1774
        %v2217 = vpop.f32.mrf.mxu0
        %v2218 = vadd.f32 %v1999, %v2217
        %2219 = vmatmul.f32.gmra.mxu0 %v1776
        %v2220 = vpop.f32.mrf.mxu0
        %v2221 = vadd.f32 %v1999, %v2220
        %2222 = vmatmul.f32.gmra.mxu0 %v1778
        %v2223 = vpop.f32.mrf.mxu0
        %v2224 = vadd.f32 %v1999, %v2223
        %2225 = vmatmul.f32.gmra.mxu0 %v1780
        %v2226 = vpop.f32.mrf.mxu0
        %v2227 = vadd.f32 %v1999, %v2226
        %2228 = vmatmul.f32.gmra.mxu0 %v1782
        %v2229 = vpop.f32.mrf.mxu0
        %v2230 = vadd.f32 %v1999, %v2229
        %2231 = vmatmul.f32.gmra.mxu0 %v1784
        %v2232 = vpop.f32.mrf.mxu0
        %v2233 = vadd.f32 %v1999, %v2232
        %2234 = vmatmul.f32.gmra.mxu0 %v1786
        %v2235 = vpop.f32.mrf.mxu0
        %v2236 = vadd.f32 %v1999, %v2235
        %2237 = vmatmul.f32.gmra.mxu0 %v1788
        %v2238 = vpop.f32.mrf.mxu0
        %v2239 = vadd.f32 %v1999, %v2238
        %2240 = vmatmul.f32.gmra.mxu0 %v1790
        %v2241 = vpop.f32.mrf.mxu0
        %v2242 = vadd.f32 %v1999, %v2241
        %2243 = vmatmul.f32.gmra.mxu0 %v1792
        %v2244 = vpop.f32.mrf.mxu0
        %v2245 = vadd.f32 %v1999, %v2244
        %2246 = vmatmul.f32.gmra.mxu0 %v1794
        %v2247 = vpop.f32.mrf.mxu0
        %v2248 = vadd.f32 %v1999, %v2247
        %2249 = vmatmul.f32.gmra.mxu0 %v1796
        %v2250 = vpop.f32.mrf.mxu0
        %v2251 = vadd.f32 %v1999, %v2250
        %2252 = vmatmul.f32.gmra.mxu0 %v1798
        %v2253 = vpop.f32.mrf.mxu0
        %v2254 = vadd.f32 %v1999, %v2253
        %2255 = vmatmul.f32.gmra.mxu0 %v1800
        %v2256 = vpop.f32.mrf.mxu0
        %v2257 = vadd.f32 %v1999, %v2256
        %2258 = vmatmul.f32.gmra.mxu0 %v1802
        %v2259 = vpop.f32.mrf.mxu0
        %v2260 = vadd.f32 %v1999, %v2259
        %2261 = vmatmul.f32.gmra.mxu0 %v1804
        %v2262 = vpop.f32.mrf.mxu0
        %v2263 = vadd.f32 %v1999, %v2262
        %2264 = vmatmul.f32.gmra.mxu0 %v1806
        %v2265 = vpop.f32.mrf.mxu0
        %v2266 = vadd.f32 %v1999, %v2265
        %2267 = vmatmul.f32.gmra.mxu0 %v1808
        %v2268 = vpop.f32.mrf.mxu0
        %v2269 = vadd.f32 %v1999, %v2268
        %2270 = vmatmul.f32.gmra.mxu0 %v1810
        %v2271 = vpop.f32.mrf.mxu0
        %v2272 = vadd.f32 %v1999, %v2271
        %2273 = vmatmul.f32.gmra.mxu0 %v1812
        %v2274 = vpop.f32.mrf.mxu0
        %v2275 = vadd.f32 %v1999, %v2274
        %2276 = vmatmul.f32.gmra.mxu0 %v1814
        %v2277 = vpop.f32.mrf.mxu0
        %v2278 = vadd.f32 %v1999, %v2277
        %2279 = vmatmul.f32.gmra.mxu0 %v1816
        %v2280 = vpop.f32.mrf.mxu0
        %v2281 = vadd.f32 %v1999, %v2280
        %2282 = vmatmul.f32.gmra.mxu0 %v1818
        %v2283 = vpop.f32.mrf.mxu0
        %v2284 = vadd.f32 %v1999, %v2283
        %2285 = vmatmul.f32.gmra.mxu0 %v1820
        %v2286 = vpop.f32.mrf.mxu0
        %v2287 = vadd.f32 %v1999, %v2286
        %2288 = vmatmul.f32.gmra.mxu0 %v1822
        %v2289 = vpop.f32.mrf.mxu0
        %v2290 = vadd.f32 %v1999, %v2289
        %2291 = vmatmul.f32.gmra.mxu0 %v1824
        %v2292 = vpop.f32.mrf.mxu0
        %v2293 = vadd.f32 %v1999, %v2292
        %2294 = vmatmul.f32.gmra.mxu0 %v1826
        %v2295 = vpop.f32.mrf.mxu0
        %v2296 = vadd.f32 %v1999, %v2295
        %2297 = vmatmul.f32.gmra.mxu0 %v1828
        %v2298 = vpop.f32.mrf.mxu0
        %v2299 = vadd.f32 %v1999, %v2298
        %2300 = vmatmul.f32.gmra.mxu0 %v1830
        %v2301 = vpop.f32.mrf.mxu0
        %v2302 = vadd.f32 %v1999, %v2301
        %2303 = vmatmul.f32.gmra.mxu0 %v1832
        %v2304 = vpop.f32.mrf.mxu0
        %v2305 = vadd.f32 %v1999, %v2304
        %2306 = vmatmul.f32.gmra.mxu0 %v1834
        %v2307 = vpop.f32.mrf.mxu0
        %v2308 = vadd.f32 %v1999, %v2307
        %2309 = vmatmul.f32.gmra.mxu0 %v1836
        %v2310 = vpop.f32.mrf.mxu0
        %v2311 = vadd.f32 %v1999, %v2310
        %2312 = vmatmul.f32.gmra.mxu0 %v1838
        %v2313 = vpop.f32.mrf.mxu0
        %v2314 = vadd.f32 %v1999, %v2313
        %2315 = vmatmul.f32.gmra.mxu0 %v1840
        %v2316 = vpop.f32.mrf.mxu0
        %v2317 = vadd.f32 %v1999, %v2316
        %2318 = vmatmul.f32.gmra.mxu0 %v1842
        %v2319 = vpop.f32.mrf.mxu0
        %v2320 = vadd.f32 %v1999, %v2319
        %2321 = vmatmul.f32.gmra.mxu0 %v1844
        %v2322 = vpop.f32.mrf.mxu0
        %v2323 = vadd.f32 %v1999, %v2322
        %2324 = vmatmul.f32.gmra.mxu0 %v1846
        %v2325 = vpop.f32.mrf.mxu0
        %v2326 = vadd.f32 %v1999, %v2325
        %2327 = vmatmul.f32.gmra.mxu0 %v1848
        %v2328 = vpop.f32.mrf.mxu0
        %v2329 = vadd.f32 %v1999, %v2328
        %2330 = vmatmul.f32.gmra.mxu0 %v1850
        %v2331 = vpop.f32.mrf.mxu0
        %v2332 = vadd.f32 %v1999, %v2331
        %2333 = vmatmul.f32.gmra.mxu0 %v1852
        %v2334 = vpop.f32.mrf.mxu0
        %v2335 = vadd.f32 %v1999, %v2334
        %2336 = vmatmul.f32.gmra.mxu0 %v1854
        %v2337 = vpop.f32.mrf.mxu0
        %v2338 = vadd.f32 %v1999, %v2337
        %2339 = vmatmul.f32.gmra.mxu0 %v1856
        %v2340 = vpop.f32.mrf.mxu0
        %v2341 = vadd.f32 %v1999, %v2340
        %2342 = vmatmul.f32.gmra.mxu0 %v1858
        %v2343 = vpop.f32.mrf.mxu0
        %v2344 = vadd.f32 %v1999, %v2343
        %2345 = vmatmul.f32.gmra.mxu0 %v1860
        %v2346 = vpop.f32.mrf.mxu0
        %v2347 = vadd.f32 %v1999, %v2346
        %2348 = vmatmul.f32.gmra.mxu0 %v1862
        %v2349 = vpop.f32.mrf.mxu0
        %v2350 = vadd.f32 %v1999, %v2349
        %2351 = vmatmul.f32.gmra.mxu0 %v1864
        %v2352 = vpop.f32.mrf.mxu0
        %v2353 = vadd.f32 %v1999, %v2352
        %2354 = vmatmul.f32.gmra.mxu0 %v1866
        %v2355 = vpop.f32.mrf.mxu0
        %v2356 = vadd.f32 %v1999, %v2355
        %2357 = vmatmul.f32.gmra.mxu0 %v1868
        %v2358 = vpop.f32.mrf.mxu0
        %v2359 = vadd.f32 %v1999, %v2358
        %2360 = vmatmul.f32.gmra.mxu0 %v1870
        %v2361 = vpop.f32.mrf.mxu0
        %v2362 = vadd.f32 %v1999, %v2361
        %2363 = vmatmul.f32.gmra.mxu0 %v1872
        %v2364 = vpop.f32.mrf.mxu0
        %v2365 = vadd.f32 %v1999, %v2364
        %2366 = vmatmul.f32.gmra.mxu0 %v1874
        %v2367 = vpop.f32.mrf.mxu0
        %v2368 = vadd.f32 %v1999, %v2367
        %2369 = vmatmul.f32.gmra.mxu0 %v1876
        %v2370 = vpop.f32.mrf.mxu0
        %v2371 = vadd.f32 %v1999, %v2370
        %2372 = vmatmul.f32.gmra.mxu0 %v1878
        %v2373 = vpop.f32.mrf.mxu0
        %v2374 = vadd.f32 %v1999, %v2373
        %2375 = vmatmul.f32.gmra.mxu0 %v1880
        %v2376 = vpop.f32.mrf.mxu0
        %v2377 = vadd.f32 %v1999, %v2376
        %2378 = vmatmul.f32.gmra.mxu0 %v1882
        %v2379 = vpop.f32.mrf.mxu0
        %v2380 = vadd.f32 %v1999, %v2379
        %2381 = vmatmul.f32.gmra.mxu0 %v1884
        %v2382 = vpop.f32.mrf.mxu0
        %v2383 = vadd.f32 %v1999, %v2382
        %2384 = vmatmul.f32.gmra.mxu0 %v1886
        %v2385 = vpop.f32.mrf.mxu0
        %v2386 = vadd.f32 %v1999, %v2385
        %2387 = vmatmul.f32.gmra.mxu0 %v1888
        %v2388 = vpop.f32.mrf.mxu0
        %v2389 = vadd.f32 %v1999, %v2388
        %2390 = vmatmul.f32.gmra.mxu0 %v1890
        %v2391 = vpop.f32.mrf.mxu0
        %v2392 = vadd.f32 %v1999, %v2391
        %2393 = vmatmul.f32.gmra.mxu0 %v1892
        %v2394 = vpop.f32.mrf.mxu0
        %v2395 = vadd.f32 %v1999, %v2394
        %2396 = vmatmul.f32.gmra.mxu0 %v1894
        %v2397 = vpop.f32.mrf.mxu0
        %v2398 = vadd.f32 %v1999, %v2397
        %2399 = vmatmul.f32.gmra.mxu0 %v1896
        %v2400 = vpop.f32.mrf.mxu0
        %v2401 = vadd.f32 %v1999, %v2400
        %2402 = vmatmul.f32.gmra.mxu0 %v1898
        %v2403 = vpop.f32.mrf.mxu0
        %v2404 = vadd.f32 %v1999, %v2403
        %2405 = vdwg.mxu0
        %2406 = vmatpush.msra.mxu0 %v1993
        %2407 = vmatpush.msra.mxu0 %v1990
        %2408 = vmatpush.msra.mxu0 %v1987
        %2409 = vmatpush.msra.mxu0 %v1984
        %2410 = vmatpush.msra.mxu0 %v1981
        %2411 = vmatpush.msra.mxu0 %v1978
        %2412 = vmatpush.msra.mxu0 %v1975
        %2413 = vmatpush.msra.mxu0 %v1972
        %2414 = vmatpush.msra.mxu0 %v1969
        %2415 = vmatpush.msra.mxu0 %v1966
        %2416 = vmatpush.msra.mxu0 %v1963
        %2417 = vmatpush.msra.mxu0 %v1960
        %2418 = vmatpush.msra.mxu0 %v1957
        %2419 = vmatpush.msra.mxu0 %v1954
        %2420 = vmatpush.msra.mxu0 %v1951
        %2421 = vmatpush.msra.mxu0 %v1948
        %2422 = vmatmul.f32.gmra.mxu0 %v1645
        %v2423 = vpop.f32.mrf.mxu0
        %v2424 = vadd.f32 %v2023, %v2423
        %2425 = vmatmul.f32.gmra.mxu0 %v1647
        %v2426 = vpop.f32.mrf.mxu0
        %v2427 = vadd.f32 %v2026, %v2426
        %2428 = vmatmul.f32.gmra.mxu0 %v1649
        %v2429 = vpop.f32.mrf.mxu0
        %v2430 = vadd.f32 %v2029, %v2429
        %2431 = vmatmul.f32.gmra.mxu0 %v1651
        %v2432 = vpop.f32.mrf.mxu0
        %v2433 = vadd.f32 %v2032, %v2432
        %2434 = vmatmul.f32.gmra.mxu0 %v1653
        %v2435 = vpop.f32.mrf.mxu0
        %v2436 = vadd.f32 %v2035, %v2435
        %2437 = vmatmul.f32.gmra.mxu0 %v1655
        %v2438 = vpop.f32.mrf.mxu0
        %v2439 = vadd.f32 %v2038, %v2438
        %2440 = vmatmul.f32.gmra.mxu0 %v1657
        %v2441 = vpop.f32.mrf.mxu0
        %v2442 = vadd.f32 %v2041, %v2441
        %2443 = vmatmul.f32.gmra.mxu0 %v1659
        %v2444 = vpop.f32.mrf.mxu0
        %v2445 = vadd.f32 %v2044, %v2444
        %2446 = vmatmul.f32.gmra.mxu0 %v1661
        %v2447 = vpop.f32.mrf.mxu0
        %v2448 = vadd.f32 %v2047, %v2447
        %2449 = vmatmul.f32.gmra.mxu0 %v1663
        %v2450 = vpop.f32.mrf.mxu0
        %v2451 = vadd.f32 %v2050, %v2450
        %2452 = vmatmul.f32.gmra.mxu0 %v1665
        %v2453 = vpop.f32.mrf.mxu0
        %v2454 = vadd.f32 %v2053, %v2453
        %2455 = vmatmul.f32.gmra.mxu0 %v1667
        %v2456 = vpop.f32.mrf.mxu0
        %v2457 = vadd.f32 %v2056, %v2456
        %2458 = vmatmul.f32.gmra.mxu0 %v1669
        %v2459 = vpop.f32.mrf.mxu0
        %v2460 = vadd.f32 %v2059, %v2459
        %2461 = vmatmul.f32.gmra.mxu0 %v1671
        %v2462 = vpop.f32.mrf.mxu0
        %v2463 = vadd.f32 %v2062, %v2462
        %2464 = vmatmul.f32.gmra.mxu0 %v1673
        %v2465 = vpop.f32.mrf.mxu0
        %v2466 = vadd.f32 %v2065, %v2465
        %2467 = vmatmul.f32.gmra.mxu0 %v1675
        %v2468 = vpop.f32.mrf.mxu0
        %v2469 = vadd.f32 %v2068, %v2468
        %2470 = vmatmul.f32.gmra.mxu0 %v1677
        %v2471 = vpop.f32.mrf.mxu0
        %v2472 = vadd.f32 %v2071, %v2471
        %2473 = vmatmul.f32.gmra.mxu0 %v1679
        %v2474 = vpop.f32.mrf.mxu0
        %v2475 = vadd.f32 %v2074, %v2474
        %2476 = vmatmul.f32.gmra.mxu0 %v1681
        %v2477 = vpop.f32.mrf.mxu0
        %v2478 = vadd.f32 %v2077, %v2477
        %2479 = vmatmul.f32.gmra.mxu0 %v1683
        %v2480 = vpop.f32.mrf.mxu0
        %v2481 = vadd.f32 %v2080, %v2480
        %2482 = vmatmul.f32.gmra.mxu0 %v1685
        %v2483 = vpop.f32.mrf.mxu0
        %v2484 = vadd.f32 %v2083, %v2483
        %2485 = vmatmul.f32.gmra.mxu0 %v1687
        %v2486 = vpop.f32.mrf.mxu0
        %v2487 = vadd.f32 %v2086, %v2486
        %2488 = vmatmul.f32.gmra.mxu0 %v1689
        %v2489 = vpop.f32.mrf.mxu0
        %v2490 = vadd.f32 %v2089, %v2489
        %2491 = vmatmul.f32.gmra.mxu0 %v1691
        %v2492 = vpop.f32.mrf.mxu0
        %v2493 = vadd.f32 %v2092, %v2492
        %2494 = vmatmul.f32.gmra.mxu0 %v1693
        %v2495 = vpop.f32.mrf.mxu0
        %v2496 = vadd.f32 %v2095, %v2495
        %2497 = vmatmul.f32.gmra.mxu0 %v1695
        %v2498 = vpop.f32.mrf.mxu0
        %v2499 = vadd.f32 %v2098, %v2498
        %2500 = vmatmul.f32.gmra.mxu0 %v1697
        %v2501 = vpop.f32.mrf.mxu0
        %v2502 = vadd.f32 %v2101, %v2501
        %2503 = vmatmul.f32.gmra.mxu0 %v1699
        %v2504 = vpop.f32.mrf.mxu0
        %v2505 = vadd.f32 %v2104, %v2504
        %2506 = vmatmul.f32.gmra.mxu0 %v1701
        %v2507 = vpop.f32.mrf.mxu0
        %v2508 = vadd.f32 %v2107, %v2507
        %2509 = vmatmul.f32.gmra.mxu0 %v1703
        %v2510 = vpop.f32.mrf.mxu0
        %v2511 = vadd.f32 %v2110, %v2510
        %2512 = vmatmul.f32.gmra.mxu0 %v1705
        %v2513 = vpop.f32.mrf.mxu0
        %v2514 = vadd.f32 %v2113, %v2513
        %2515 = vmatmul.f32.gmra.mxu0 %v1707
        %v2516 = vpop.f32.mrf.mxu0
        %v2517 = vadd.f32 %v2116, %v2516
        %2518 = vmatmul.f32.gmra.mxu0 %v1709
        %v2519 = vpop.f32.mrf.mxu0
        %v2520 = vadd.f32 %v2119, %v2519
        %2521 = vmatmul.f32.gmra.mxu0 %v1711
        %v2522 = vpop.f32.mrf.mxu0
        %v2523 = vadd.f32 %v2122, %v2522
        %2524 = vmatmul.f32.gmra.mxu0 %v1713
        %v2525 = vpop.f32.mrf.mxu0
        %v2526 = vadd.f32 %v2125, %v2525
        %2527 = vmatmul.f32.gmra.mxu0 %v1715
        %v2528 = vpop.f32.mrf.mxu0
        %v2529 = vadd.f32 %v2128, %v2528
        %2530 = vmatmul.f32.gmra.mxu0 %v1717
        %v2531 = vpop.f32.mrf.mxu0
        %v2532 = vadd.f32 %v2131, %v2531
        %2533 = vmatmul.f32.gmra.mxu0 %v1719
        %v2534 = vpop.f32.mrf.mxu0
        %v2535 = vadd.f32 %v2134, %v2534
        %2536 = vmatmul.f32.gmra.mxu0 %v1721
        %v2537 = vpop.f32.mrf.mxu0
        %v2538 = vadd.f32 %v2137, %v2537
        %2539 = vmatmul.f32.gmra.mxu0 %v1723
        %v2540 = vpop.f32.mrf.mxu0
        %v2541 = vadd.f32 %v2140, %v2540
        %2542 = vmatmul.f32.gmra.mxu0 %v1725
        %v2543 = vpop.f32.mrf.mxu0
        %v2544 = vadd.f32 %v2143, %v2543
        %2545 = vmatmul.f32.gmra.mxu0 %v1727
        %v2546 = vpop.f32.mrf.mxu0
        %v2547 = vadd.f32 %v2146, %v2546
        %2548 = vmatmul.f32.gmra.mxu0 %v1729
        %v2549 = vpop.f32.mrf.mxu0
        %v2550 = vadd.f32 %v2149, %v2549
        %2551 = vmatmul.f32.gmra.mxu0 %v1731
        %v2552 = vpop.f32.mrf.mxu0
        %v2553 = vadd.f32 %v2152, %v2552
        %2554 = vmatmul.f32.gmra.mxu0 %v1733
        %v2555 = vpop.f32.mrf.mxu0
        %v2556 = vadd.f32 %v2155, %v2555
        %2557 = vmatmul.f32.gmra.mxu0 %v1735
        %v2558 = vpop.f32.mrf.mxu0
        %v2559 = vadd.f32 %v2158, %v2558
        %2560 = vmatmul.f32.gmra.mxu0 %v1737
        %v2561 = vpop.f32.mrf.mxu0
        %v2562 = vadd.f32 %v2161, %v2561
        %2563 = vmatmul.f32.gmra.mxu0 %v1739
        %v2564 = vpop.f32.mrf.mxu0
        %v2565 = vadd.f32 %v2164, %v2564
        %2566 = vmatmul.f32.gmra.mxu0 %v1741
        %v2567 = vpop.f32.mrf.mxu0
        %v2568 = vadd.f32 %v2167, %v2567
        %2569 = vmatmul.f32.gmra.mxu0 %v1743
        %v2570 = vpop.f32.mrf.mxu0
        %v2571 = vadd.f32 %v2170, %v2570
        %2572 = vmatmul.f32.gmra.mxu0 %v1745
        %v2573 = vpop.f32.mrf.mxu0
        %v2574 = vadd.f32 %v2173, %v2573
        %2575 = vmatmul.f32.gmra.mxu0 %v1747
        %v2576 = vpop.f32.mrf.mxu0
        %v2577 = vadd.f32 %v2176, %v2576
        %2578 = vmatmul.f32.gmra.mxu0 %v1749
        %v2579 = vpop.f32.mrf.mxu0
        %v2580 = vadd.f32 %v2179, %v2579
        %2581 = vmatmul.f32.gmra.mxu0 %v1751
        %v2582 = vpop.f32.mrf.mxu0
        %v2583 = vadd.f32 %v2182, %v2582
        %2584 = vmatmul.f32.gmra.mxu0 %v1753
        %v2585 = vpop.f32.mrf.mxu0
        %v2586 = vadd.f32 %v2185, %v2585
        %2587 = vmatmul.f32.gmra.mxu0 %v1755
        %v2588 = vpop.f32.mrf.mxu0
        %v2589 = vadd.f32 %v2188, %v2588
        %2590 = vmatmul.f32.gmra.mxu0 %v1757
        %v2591 = vpop.f32.mrf.mxu0
        %v2592 = vadd.f32 %v2191, %v2591
        %2593 = vmatmul.f32.gmra.mxu0 %v1759
        %v2594 = vpop.f32.mrf.mxu0
        %v2595 = vadd.f32 %v2194, %v2594
        %2596 = vmatmul.f32.gmra.mxu0 %v1761
        %v2597 = vpop.f32.mrf.mxu0
        %v2598 = vadd.f32 %v2197, %v2597
        %2599 = vmatmul.f32.gmra.mxu0 %v1763
        %v2600 = vpop.f32.mrf.mxu0
        %v2601 = vadd.f32 %v2200, %v2600
        %2602 = vmatmul.f32.gmra.mxu0 %v1765
        %v2603 = vpop.f32.mrf.mxu0
        %v2604 = vadd.f32 %v2203, %v2603
        %2605 = vmatmul.f32.gmra.mxu0 %v1767
        %v2606 = vpop.f32.mrf.mxu0
        %v2607 = vadd.f32 %v2206, %v2606
        %2608 = vmatmul.f32.gmra.mxu0 %v1769
        %v2609 = vpop.f32.mrf.mxu0
        %v2610 = vadd.f32 %v2209, %v2609
        %2611 = vmatmul.f32.gmra.mxu0 %v1771
        %v2612 = vpop.f32.mrf.mxu0
        %v2613 = vadd.f32 %v2212, %v2612
        %2614 = vmatmul.f32.gmra.mxu0 %v1773
        %v2615 = vpop.f32.mrf.mxu0
        %v2616 = vadd.f32 %v2215, %v2615
        %2617 = vmatmul.f32.gmra.mxu0 %v1775
        %v2618 = vpop.f32.mrf.mxu0
        %v2619 = vadd.f32 %v2218, %v2618
        %2620 = vmatmul.f32.gmra.mxu0 %v1777
        %v2621 = vpop.f32.mrf.mxu0
        %v2622 = vadd.f32 %v2221, %v2621
        %2623 = vmatmul.f32.gmra.mxu0 %v1779
        %v2624 = vpop.f32.mrf.mxu0
        %v2625 = vadd.f32 %v2224, %v2624
        %2626 = vmatmul.f32.gmra.mxu0 %v1781
        %v2627 = vpop.f32.mrf.mxu0
        %v2628 = vadd.f32 %v2227, %v2627
        %2629 = vmatmul.f32.gmra.mxu0 %v1783
        %v2630 = vpop.f32.mrf.mxu0
        %v2631 = vadd.f32 %v2230, %v2630
        %2632 = vmatmul.f32.gmra.mxu0 %v1785
        %v2633 = vpop.f32.mrf.mxu0
        %v2634 = vadd.f32 %v2233, %v2633
        %2635 = vmatmul.f32.gmra.mxu0 %v1787
        %v2636 = vpop.f32.mrf.mxu0
        %v2637 = vadd.f32 %v2236, %v2636
        %2638 = vmatmul.f32.gmra.mxu0 %v1789
        %v2639 = vpop.f32.mrf.mxu0
        %v2640 = vadd.f32 %v2239, %v2639
        %2641 = vmatmul.f32.gmra.mxu0 %v1791
        %v2642 = vpop.f32.mrf.mxu0
        %v2643 = vadd.f32 %v2242, %v2642
        %2644 = vmatmul.f32.gmra.mxu0 %v1793
        %v2645 = vpop.f32.mrf.mxu0
        %v2646 = vadd.f32 %v2245, %v2645
        %2647 = vmatmul.f32.gmra.mxu0 %v1795
        %v2648 = vpop.f32.mrf.mxu0
        %v2649 = vadd.f32 %v2248, %v2648
        %2650 = vmatmul.f32.gmra.mxu0 %v1797
        %v2651 = vpop.f32.mrf.mxu0
        %v2652 = vadd.f32 %v2251, %v2651
        %2653 = vmatmul.f32.gmra.mxu0 %v1799
        %v2654 = vpop.f32.mrf.mxu0
        %v2655 = vadd.f32 %v2254, %v2654
        %2656 = vmatmul.f32.gmra.mxu0 %v1801
        %v2657 = vpop.f32.mrf.mxu0
        %v2658 = vadd.f32 %v2257, %v2657
        %2659 = vmatmul.f32.gmra.mxu0 %v1803
        %v2660 = vpop.f32.mrf.mxu0
        %v2661 = vadd.f32 %v2260, %v2660
        %2662 = vmatmul.f32.gmra.mxu0 %v1805
        %v2663 = vpop.f32.mrf.mxu0
        %v2664 = vadd.f32 %v2263, %v2663
        %2665 = vmatmul.f32.gmra.mxu0 %v1807
        %v2666 = vpop.f32.mrf.mxu0
        %v2667 = vadd.f32 %v2266, %v2666
        %2668 = vmatmul.f32.gmra.mxu0 %v1809
        %v2669 = vpop.f32.mrf.mxu0
        %v2670 = vadd.f32 %v2269, %v2669
        %2671 = vmatmul.f32.gmra.mxu0 %v1811
        %v2672 = vpop.f32.mrf.mxu0
        %v2673 = vadd.f32 %v2272, %v2672
        %2674 = vmatmul.f32.gmra.mxu0 %v1813
        %v2675 = vpop.f32.mrf.mxu0
        %v2676 = vadd.f32 %v2275, %v2675
        %2677 = vmatmul.f32.gmra.mxu0 %v1815
        %v2678 = vpop.f32.mrf.mxu0
        %v2679 = vadd.f32 %v2278, %v2678
        %2680 = vmatmul.f32.gmra.mxu0 %v1817
        %v2681 = vpop.f32.mrf.mxu0
        %v2682 = vadd.f32 %v2281, %v2681
        %2683 = vmatmul.f32.gmra.mxu0 %v1819
        %v2684 = vpop.f32.mrf.mxu0
        %v2685 = vadd.f32 %v2284, %v2684
        %2686 = vmatmul.f32.gmra.mxu0 %v1821
        %v2687 = vpop.f32.mrf.mxu0
        %v2688 = vadd.f32 %v2287, %v2687
        %2689 = vmatmul.f32.gmra.mxu0 %v1823
        %v2690 = vpop.f32.mrf.mxu0
        %v2691 = vadd.f32 %v2290, %v2690
        %2692 = vmatmul.f32.gmra.mxu0 %v1825
        %v2693 = vpop.f32.mrf.mxu0
        %v2694 = vadd.f32 %v2293, %v2693
        %2695 = vmatmul.f32.gmra.mxu0 %v1827
        %v2696 = vpop.f32.mrf.mxu0
        %v2697 = vadd.f32 %v2296, %v2696
        %2698 = vmatmul.f32.gmra.mxu0 %v1829
        %v2699 = vpop.f32.mrf.mxu0
        %v2700 = vadd.f32 %v2299, %v2699
        %2701 = vmatmul.f32.gmra.mxu0 %v1831
        %v2702 = vpop.f32.mrf.mxu0
        %v2703 = vadd.f32 %v2302, %v2702
        %2704 = vmatmul.f32.gmra.mxu0 %v1833
        %v2705 = vpop.f32.mrf.mxu0
        %v2706 = vadd.f32 %v2305, %v2705
        %2707 = vmatmul.f32.gmra.mxu0 %v1835
        %v2708 = vpop.f32.mrf.mxu0
        %v2709 = vadd.f32 %v2308, %v2708
        %2710 = vmatmul.f32.gmra.mxu0 %v1837
        %v2711 = vpop.f32.mrf.mxu0
        %v2712 = vadd.f32 %v2311, %v2711
        %2713 = vmatmul.f32.gmra.mxu0 %v1839
        %v2714 = vpop.f32.mrf.mxu0
        %v2715 = vadd.f32 %v2314, %v2714
        %2716 = vmatmul.f32.gmra.mxu0 %v1841
        %v2717 = vpop.f32.mrf.mxu0
        %v2718 = vadd.f32 %v2317, %v2717
        %2719 = vmatmul.f32.gmra.mxu0 %v1843
        %v2720 = vpop.f32.mrf.mxu0
        %v2721 = vadd.f32 %v2320, %v2720
        %2722 = vmatmul.f32.gmra.mxu0 %v1845
        %v2723 = vpop.f32.mrf.mxu0
        %v2724 = vadd.f32 %v2323, %v2723
        %2725 = vmatmul.f32.gmra.mxu0 %v1847
        %v2726 = vpop.f32.mrf.mxu0
        %v2727 = vadd.f32 %v2326, %v2726
        %2728 = vmatmul.f32.gmra.mxu0 %v1849
        %v2729 = vpop.f32.mrf.mxu0
        %v2730 = vadd.f32 %v2329, %v2729
        %2731 = vmatmul.f32.gmra.mxu0 %v1851
        %v2732 = vpop.f32.mrf.mxu0
        %v2733 = vadd.f32 %v2332, %v2732
        %2734 = vmatmul.f32.gmra.mxu0 %v1853
        %v2735 = vpop.f32.mrf.mxu0
        %v2736 = vadd.f32 %v2335, %v2735
        %2737 = vmatmul.f32.gmra.mxu0 %v1855
        %v2738 = vpop.f32.mrf.mxu0
        %v2739 = vadd.f32 %v2338, %v2738
        %2740 = vmatmul.f32.gmra.mxu0 %v1857
        %v2741 = vpop.f32.mrf.mxu0
        %v2742 = vadd.f32 %v2341, %v2741
        %2743 = vmatmul.f32.gmra.mxu0 %v1859
        %v2744 = vpop.f32.mrf.mxu0
        %v2745 = vadd.f32 %v2344, %v2744
        %2746 = vmatmul.f32.gmra.mxu0 %v1861
        %v2747 = vpop.f32.mrf.mxu0
        %v2748 = vadd.f32 %v2347, %v2747
        %2749 = vmatmul.f32.gmra.mxu0 %v1863
        %v2750 = vpop.f32.mrf.mxu0
        %v2751 = vadd.f32 %v2350, %v2750
        %2752 = vmatmul.f32.gmra.mxu0 %v1865
        %v2753 = vpop.f32.mrf.mxu0
        %v2754 = vadd.f32 %v2353, %v2753
        %2755 = vmatmul.f32.gmra.mxu0 %v1867
        %v2756 = vpop.f32.mrf.mxu0
        %v2757 = vadd.f32 %v2356, %v2756
        %2758 = vmatmul.f32.gmra.mxu0 %v1869
        %v2759 = vpop.f32.mrf.mxu0
        %v2760 = vadd.f32 %v2359, %v2759
        %2761 = vmatmul.f32.gmra.mxu0 %v1871
        %v2762 = vpop.f32.mrf.mxu0
        %v2763 = vadd.f32 %v2362, %v2762
        %2764 = vmatmul.f32.gmra.mxu0 %v1873
        %v2765 = vpop.f32.mrf.mxu0
        %v2766 = vadd.f32 %v2365, %v2765
        %2767 = vmatmul.f32.gmra.mxu0 %v1875
        %v2768 = vpop.f32.mrf.mxu0
        %v2769 = vadd.f32 %v2368, %v2768
        %2770 = vmatmul.f32.gmra.mxu0 %v1877
        %v2771 = vpop.f32.mrf.mxu0
        %v2772 = vadd.f32 %v2371, %v2771
        %2773 = vmatmul.f32.gmra.mxu0 %v1879
        %v2774 = vpop.f32.mrf.mxu0
        %v2775 = vadd.f32 %v2374, %v2774
        %2776 = vmatmul.f32.gmra.mxu0 %v1881
        %v2777 = vpop.f32.mrf.mxu0
        %v2778 = vadd.f32 %v2377, %v2777
        %2779 = vmatmul.f32.gmra.mxu0 %v1883
        %v2780 = vpop.f32.mrf.mxu0
        %v2781 = vadd.f32 %v2380, %v2780
        %2782 = vmatmul.f32.gmra.mxu0 %v1885
        %v2783 = vpop.f32.mrf.mxu0
        %v2784 = vadd.f32 %v2383, %v2783
        %2785 = vmatmul.f32.gmra.mxu0 %v1887
        %v2786 = vpop.f32.mrf.mxu0
        %v2787 = vadd.f32 %v2386, %v2786
        %2788 = vmatmul.f32.gmra.mxu0 %v1889
        %v2789 = vpop.f32.mrf.mxu0
        %v2790 = vadd.f32 %v2389, %v2789
        %2791 = vmatmul.f32.gmra.mxu0 %v1891
        %v2792 = vpop.f32.mrf.mxu0
        %v2793 = vadd.f32 %v2392, %v2792
        %2794 = vmatmul.f32.gmra.mxu0 %v1893
        %v2795 = vpop.f32.mrf.mxu0
        %v2796 = vadd.f32 %v2395, %v2795
        %2797 = vmatmul.f32.gmra.mxu0 %v1895
        %v2798 = vpop.f32.mrf.mxu0
        %v2799 = vadd.f32 %v2398, %v2798
        %2800 = vmatmul.f32.gmra.mxu0 %v1897
        %v2801 = vpop.f32.mrf.mxu0
        %v2802 = vadd.f32 %v2401, %v2801
        %2803 = vmatmul.f32.gmra.mxu0 %v1899
        %v2804 = vpop.f32.mrf.mxu0
        %v2805 = vadd.f32 %v2404, %v2804
        %2806 = vdwg.mxu0
        %2807 = vmatpush.msra.mxu0 %v1946
        %2808 = vmatpush.msra.mxu0 %v1943
        %2809 = vmatpush.msra.mxu0 %v1940
        %2810 = vmatpush.msra.mxu0 %v1937
        %2811 = vmatpush.msra.mxu0 %v1934
        %2812 = vmatpush.msra.mxu0 %v1931
        %2813 = vmatpush.msra.mxu0 %v1928
        %2814 = vmatpush.msra.mxu0 %v1925
        %2815 = vmatpush.msra.mxu0 %v1922
        %2816 = vmatpush.msra.mxu0 %v1919
        %2817 = vmatpush.msra.mxu0 %v1916
        %2818 = vmatpush.msra.mxu0 %v1913
        %2819 = vmatpush.msra.mxu0 %v1910
        %2820 = vmatpush.msra.mxu0 %v1907
        %2821 = vmatpush.msra.mxu0 %v1904
        %2822 = vmatpush.msra.mxu0 %v1901
        %2823 = vmatmul.f32.gmra.mxu0 %v1644
        %v2824 = vpop.f32.mrf.mxu0
        %v2825 = vadd.f32 %v2000, %v2824
        %2826 = vmatmul.f32.gmra.mxu0 %v1646
        %v2827 = vpop.f32.mrf.mxu0
        %v2828 = vadd.f32 %v2000, %v2827
        %2829 = vmatmul.f32.gmra.mxu0 %v1648
        %v2830 = vpop.f32.mrf.mxu0
        %v2831 = vadd.f32 %v2000, %v2830
        %2832 = vmatmul.f32.gmra.mxu0 %v1650
        %v2833 = vpop.f32.mrf.mxu0
        %v2834 = vadd.f32 %v2000, %v2833
        %2835 = vmatmul.f32.gmra.mxu0 %v1652
        %v2836 = vpop.f32.mrf.mxu0
        %v2837 = vadd.f32 %v2000, %v2836
        %2838 = vmatmul.f32.gmra.mxu0 %v1654
        %v2839 = vpop.f32.mrf.mxu0
        %v2840 = vadd.f32 %v2000, %v2839
        %2841 = vmatmul.f32.gmra.mxu0 %v1656
        %v2842 = vpop.f32.mrf.mxu0
        %v2843 = vadd.f32 %v2000, %v2842
        %2844 = vmatmul.f32.gmra.mxu0 %v1658
        %v2845 = vpop.f32.mrf.mxu0
        %v2846 = vadd.f32 %v2000, %v2845
        %2847 = vmatmul.f32.gmra.mxu0 %v1660
        %v2848 = vpop.f32.mrf.mxu0
        %v2849 = vadd.f32 %v2000, %v2848
        %2850 = vmatmul.f32.gmra.mxu0 %v1662
        %v2851 = vpop.f32.mrf.mxu0
        %v2852 = vadd.f32 %v2000, %v2851
        %2853 = vmatmul.f32.gmra.mxu0 %v1664
        %v2854 = vpop.f32.mrf.mxu0
        %v2855 = vadd.f32 %v2000, %v2854
        %2856 = vmatmul.f32.gmra.mxu0 %v1666
        %v2857 = vpop.f32.mrf.mxu0
        %v2858 = vadd.f32 %v2000, %v2857
        %2859 = vmatmul.f32.gmra.mxu0 %v1668
        %v2860 = vpop.f32.mrf.mxu0
        %v2861 = vadd.f32 %v2000, %v2860
        %2862 = vmatmul.f32.gmra.mxu0 %v1670
        %v2863 = vpop.f32.mrf.mxu0
        %v2864 = vadd.f32 %v2000, %v2863
        %2865 = vmatmul.f32.gmra.mxu0 %v1672
        %v2866 = vpop.f32.mrf.mxu0
        %v2867 = vadd.f32 %v2000, %v2866
        %2868 = vmatmul.f32.gmra.mxu0 %v1674
        %v2869 = vpop.f32.mrf.mxu0
        %v2870 = vadd.f32 %v2000, %v2869
        %2871 = vmatmul.f32.gmra.mxu0 %v1676
        %v2872 = vpop.f32.mrf.mxu0
        %v2873 = vadd.f32 %v2000, %v2872
        %2874 = vmatmul.f32.gmra.mxu0 %v1678
        %v2875 = vpop.f32.mrf.mxu0
        %v2876 = vadd.f32 %v2000, %v2875
        %2877 = vmatmul.f32.gmra.mxu0 %v1680
        %v2878 = vpop.f32.mrf.mxu0
        %v2879 = vadd.f32 %v2000, %v2878
        %2880 = vmatmul.f32.gmra.mxu0 %v1682
        %v2881 = vpop.f32.mrf.mxu0
        %v2882 = vadd.f32 %v2000, %v2881
        %2883 = vmatmul.f32.gmra.mxu0 %v1684
        %v2884 = vpop.f32.mrf.mxu0
        %v2885 = vadd.f32 %v2000, %v2884
        %2886 = vmatmul.f32.gmra.mxu0 %v1686
        %v2887 = vpop.f32.mrf.mxu0
        %v2888 = vadd.f32 %v2000, %v2887
        %2889 = vmatmul.f32.gmra.mxu0 %v1688
        %v2890 = vpop.f32.mrf.mxu0
        %v2891 = vadd.f32 %v2000, %v2890
        %2892 = vmatmul.f32.gmra.mxu0 %v1690
        %v2893 = vpop.f32.mrf.mxu0
        %v2894 = vadd.f32 %v2000, %v2893
        %2895 = vmatmul.f32.gmra.mxu0 %v1692
        %v2896 = vpop.f32.mrf.mxu0
        %v2897 = vadd.f32 %v2000, %v2896
        %2898 = vmatmul.f32.gmra.mxu0 %v1694
        %v2899 = vpop.f32.mrf.mxu0
        %v2900 = vadd.f32 %v2000, %v2899
        %2901 = vmatmul.f32.gmra.mxu0 %v1696
        %v2902 = vpop.f32.mrf.mxu0
        %v2903 = vadd.f32 %v2000, %v2902
        %2904 = vmatmul.f32.gmra.mxu0 %v1698
        %v2905 = vpop.f32.mrf.mxu0
        %v2906 = vadd.f32 %v2000, %v2905
        %2907 = vmatmul.f32.gmra.mxu0 %v1700
        %v2908 = vpop.f32.mrf.mxu0
        %v2909 = vadd.f32 %v2000, %v2908
        %2910 = vmatmul.f32.gmra.mxu0 %v1702
        %v2911 = vpop.f32.mrf.mxu0
        %v2912 = vadd.f32 %v2000, %v2911
        %2913 = vmatmul.f32.gmra.mxu0 %v1704
        %v2914 = vpop.f32.mrf.mxu0
        %v2915 = vadd.f32 %v2000, %v2914
        %2916 = vmatmul.f32.gmra.mxu0 %v1706
        %v2917 = vpop.f32.mrf.mxu0
        %v2918 = vadd.f32 %v2000, %v2917
        %2919 = vmatmul.f32.gmra.mxu0 %v1708
        %v2920 = vpop.f32.mrf.mxu0
        %v2921 = vadd.f32 %v2000, %v2920
        %2922 = vmatmul.f32.gmra.mxu0 %v1710
        %v2923 = vpop.f32.mrf.mxu0
        %v2924 = vadd.f32 %v2000, %v2923
        %2925 = vmatmul.f32.gmra.mxu0 %v1712
        %v2926 = vpop.f32.mrf.mxu0
        %v2927 = vadd.f32 %v2000, %v2926
        %2928 = vmatmul.f32.gmra.mxu0 %v1714
        %v2929 = vpop.f32.mrf.mxu0
        %v2930 = vadd.f32 %v2000, %v2929
        %2931 = vmatmul.f32.gmra.mxu0 %v1716
        %v2932 = vpop.f32.mrf.mxu0
        %v2933 = vadd.f32 %v2000, %v2932
        %2934 = vmatmul.f32.gmra.mxu0 %v1718
        %v2935 = vpop.f32.mrf.mxu0
        %v2936 = vadd.f32 %v2000, %v2935
        %2937 = vmatmul.f32.gmra.mxu0 %v1720
        %v2938 = vpop.f32.mrf.mxu0
        %v2939 = vadd.f32 %v2000, %v2938
        %2940 = vmatmul.f32.gmra.mxu0 %v1722
        %v2941 = vpop.f32.mrf.mxu0
        %v2942 = vadd.f32 %v2000, %v2941
        %2943 = vmatmul.f32.gmra.mxu0 %v1724
        %v2944 = vpop.f32.mrf.mxu0
        %v2945 = vadd.f32 %v2000, %v2944
        %2946 = vmatmul.f32.gmra.mxu0 %v1726
        %v2947 = vpop.f32.mrf.mxu0
        %v2948 = vadd.f32 %v2000, %v2947
        %2949 = vmatmul.f32.gmra.mxu0 %v1728
        %v2950 = vpop.f32.mrf.mxu0
        %v2951 = vadd.f32 %v2000, %v2950
        %2952 = vmatmul.f32.gmra.mxu0 %v1730
        %v2953 = vpop.f32.mrf.mxu0
        %v2954 = vadd.f32 %v2000, %v2953
        %2955 = vmatmul.f32.gmra.mxu0 %v1732
        %v2956 = vpop.f32.mrf.mxu0
        %v2957 = vadd.f32 %v2000, %v2956
        %2958 = vmatmul.f32.gmra.mxu0 %v1734
        %v2959 = vpop.f32.mrf.mxu0
        %v2960 = vadd.f32 %v2000, %v2959
        %2961 = vmatmul.f32.gmra.mxu0 %v1736
        %v2962 = vpop.f32.mrf.mxu0
        %v2963 = vadd.f32 %v2000, %v2962
        %2964 = vmatmul.f32.gmra.mxu0 %v1738
        %v2965 = vpop.f32.mrf.mxu0
        %v2966 = vadd.f32 %v2000, %v2965
        %2967 = vmatmul.f32.gmra.mxu0 %v1740
        %v2968 = vpop.f32.mrf.mxu0
        %v2969 = vadd.f32 %v2000, %v2968
        %2970 = vmatmul.f32.gmra.mxu0 %v1742
        %v2971 = vpop.f32.mrf.mxu0
        %v2972 = vadd.f32 %v2000, %v2971
        %2973 = vmatmul.f32.gmra.mxu0 %v1744
        %v2974 = vpop.f32.mrf.mxu0
        %v2975 = vadd.f32 %v2000, %v2974
        %2976 = vmatmul.f32.gmra.mxu0 %v1746
        %v2977 = vpop.f32.mrf.mxu0
        %v2978 = vadd.f32 %v2000, %v2977
        %2979 = vmatmul.f32.gmra.mxu0 %v1748
        %v2980 = vpop.f32.mrf.mxu0
        %v2981 = vadd.f32 %v2000, %v2980
        %2982 = vmatmul.f32.gmra.mxu0 %v1750
        %v2983 = vpop.f32.mrf.mxu0
        %v2984 = vadd.f32 %v2000, %v2983
        %2985 = vmatmul.f32.gmra.mxu0 %v1752
        %v2986 = vpop.f32.mrf.mxu0
        %v2987 = vadd.f32 %v2000, %v2986
        %2988 = vmatmul.f32.gmra.mxu0 %v1754
        %v2989 = vpop.f32.mrf.mxu0
        %v2990 = vadd.f32 %v2000, %v2989
        %2991 = vmatmul.f32.gmra.mxu0 %v1756
        %v2992 = vpop.f32.mrf.mxu0
        %v2993 = vadd.f32 %v2000, %v2992
        %2994 = vmatmul.f32.gmra.mxu0 %v1758
        %v2995 = vpop.f32.mrf.mxu0
        %v2996 = vadd.f32 %v2000, %v2995
        %2997 = vmatmul.f32.gmra.mxu0 %v1760
        %v2998 = vpop.f32.mrf.mxu0
        %v2999 = vadd.f32 %v2000, %v2998
        %3000 = vmatmul.f32.gmra.mxu0 %v1762
        %v3001 = vpop.f32.mrf.mxu0
        %v3002 = vadd.f32 %v2000, %v3001
        %3003 = vmatmul.f32.gmra.mxu0 %v1764
        %v3004 = vpop.f32.mrf.mxu0
        %v3005 = vadd.f32 %v2000, %v3004
        %3006 = vmatmul.f32.gmra.mxu0 %v1766
        %v3007 = vpop.f32.mrf.mxu0
        %v3008 = vadd.f32 %v2000, %v3007
        %3009 = vmatmul.f32.gmra.mxu0 %v1768
        %v3010 = vpop.f32.mrf.mxu0
        %v3011 = vadd.f32 %v2000, %v3010
        %3012 = vmatmul.f32.gmra.mxu0 %v1770
        %v3013 = vpop.f32.mrf.mxu0
        %v3014 = vadd.f32 %v2000, %v3013
        %3015 = vmatmul.f32.gmra.mxu0 %v1772
        %v3016 = vpop.f32.mrf.mxu0
        %v3017 = vadd.f32 %v2000, %v3016
        %3018 = vmatmul.f32.gmra.mxu0 %v1774
        %v3019 = vpop.f32.mrf.mxu0
        %v3020 = vadd.f32 %v2000, %v3019
        %3021 = vmatmul.f32.gmra.mxu0 %v1776
        %v3022 = vpop.f32.mrf.mxu0
        %v3023 = vadd.f32 %v2000, %v3022
        %3024 = vmatmul.f32.gmra.mxu0 %v1778
        %v3025 = vpop.f32.mrf.mxu0
        %v3026 = vadd.f32 %v2000, %v3025
        %3027 = vmatmul.f32.gmra.mxu0 %v1780
        %v3028 = vpop.f32.mrf.mxu0
        %v3029 = vadd.f32 %v2000, %v3028
        %3030 = vmatmul.f32.gmra.mxu0 %v1782
        %v3031 = vpop.f32.mrf.mxu0
        %v3032 = vadd.f32 %v2000, %v3031
        %3033 = vmatmul.f32.gmra.mxu0 %v1784
        %v3034 = vpop.f32.mrf.mxu0
        %v3035 = vadd.f32 %v2000, %v3034
        %3036 = vmatmul.f32.gmra.mxu0 %v1786
        %v3037 = vpop.f32.mrf.mxu0
        %v3038 = vadd.f32 %v2000, %v3037
        %3039 = vmatmul.f32.gmra.mxu0 %v1788
        %v3040 = vpop.f32.mrf.mxu0
        %v3041 = vadd.f32 %v2000, %v3040
        %3042 = vmatmul.f32.gmra.mxu0 %v1790
        %v3043 = vpop.f32.mrf.mxu0
        %v3044 = vadd.f32 %v2000, %v3043
        %3045 = vmatmul.f32.gmra.mxu0 %v1792
        %v3046 = vpop.f32.mrf.mxu0
        %v3047 = vadd.f32 %v2000, %v3046
        %3048 = vmatmul.f32.gmra.mxu0 %v1794
        %v3049 = vpop.f32.mrf.mxu0
        %v3050 = vadd.f32 %v2000, %v3049
        %3051 = vmatmul.f32.gmra.mxu0 %v1796
        %v3052 = vpop.f32.mrf.mxu0
        %v3053 = vadd.f32 %v2000, %v3052
        %3054 = vmatmul.f32.gmra.mxu0 %v1798
        %v3055 = vpop.f32.mrf.mxu0
        %v3056 = vadd.f32 %v2000, %v3055
        %3057 = vmatmul.f32.gmra.mxu0 %v1800
        %v3058 = vpop.f32.mrf.mxu0
        %v3059 = vadd.f32 %v2000, %v3058
        %3060 = vmatmul.f32.gmra.mxu0 %v1802
        %v3061 = vpop.f32.mrf.mxu0
        %v3062 = vadd.f32 %v2000, %v3061
        %3063 = vmatmul.f32.gmra.mxu0 %v1804
        %v3064 = vpop.f32.mrf.mxu0
        %v3065 = vadd.f32 %v2000, %v3064
        %3066 = vmatmul.f32.gmra.mxu0 %v1806
        %v3067 = vpop.f32.mrf.mxu0
        %v3068 = vadd.f32 %v2000, %v3067
        %3069 = vmatmul.f32.gmra.mxu0 %v1808
        %v3070 = vpop.f32.mrf.mxu0
        %v3071 = vadd.f32 %v2000, %v3070
        %3072 = vmatmul.f32.gmra.mxu0 %v1810
        %v3073 = vpop.f32.mrf.mxu0
        %v3074 = vadd.f32 %v2000, %v3073
        %3075 = vmatmul.f32.gmra.mxu0 %v1812
        %v3076 = vpop.f32.mrf.mxu0
        %v3077 = vadd.f32 %v2000, %v3076
        %3078 = vmatmul.f32.gmra.mxu0 %v1814
        %v3079 = vpop.f32.mrf.mxu0
        %v3080 = vadd.f32 %v2000, %v3079
        %3081 = vmatmul.f32.gmra.mxu0 %v1816
        %v3082 = vpop.f32.mrf.mxu0
        %v3083 = vadd.f32 %v2000, %v3082
        %3084 = vmatmul.f32.gmra.mxu0 %v1818
        %v3085 = vpop.f32.mrf.mxu0
        %v3086 = vadd.f32 %v2000, %v3085
        %3087 = vmatmul.f32.gmra.mxu0 %v1820
        %v3088 = vpop.f32.mrf.mxu0
        %v3089 = vadd.f32 %v2000, %v3088
        %3090 = vmatmul.f32.gmra.mxu0 %v1822
        %v3091 = vpop.f32.mrf.mxu0
        %v3092 = vadd.f32 %v2000, %v3091
        %3093 = vmatmul.f32.gmra.mxu0 %v1824
        %v3094 = vpop.f32.mrf.mxu0
        %v3095 = vadd.f32 %v2000, %v3094
        %3096 = vmatmul.f32.gmra.mxu0 %v1826
        %v3097 = vpop.f32.mrf.mxu0
        %v3098 = vadd.f32 %v2000, %v3097
        %3099 = vmatmul.f32.gmra.mxu0 %v1828
        %v3100 = vpop.f32.mrf.mxu0
        %v3101 = vadd.f32 %v2000, %v3100
        %3102 = vmatmul.f32.gmra.mxu0 %v1830
        %v3103 = vpop.f32.mrf.mxu0
        %v3104 = vadd.f32 %v2000, %v3103
        %3105 = vmatmul.f32.gmra.mxu0 %v1832
        %v3106 = vpop.f32.mrf.mxu0
        %v3107 = vadd.f32 %v2000, %v3106
        %3108 = vmatmul.f32.gmra.mxu0 %v1834
        %v3109 = vpop.f32.mrf.mxu0
        %v3110 = vadd.f32 %v2000, %v3109
        %3111 = vmatmul.f32.gmra.mxu0 %v1836
        %v3112 = vpop.f32.mrf.mxu0
        %v3113 = vadd.f32 %v2000, %v3112
        %3114 = vmatmul.f32.gmra.mxu0 %v1838
        %v3115 = vpop.f32.mrf.mxu0
        %v3116 = vadd.f32 %v2000, %v3115
        %3117 = vmatmul.f32.gmra.mxu0 %v1840
        %v3118 = vpop.f32.mrf.mxu0
        %v3119 = vadd.f32 %v2000, %v3118
        %3120 = vmatmul.f32.gmra.mxu0 %v1842
        %v3121 = vpop.f32.mrf.mxu0
        %v3122 = vadd.f32 %v2000, %v3121
        %3123 = vmatmul.f32.gmra.mxu0 %v1844
        %v3124 = vpop.f32.mrf.mxu0
        %v3125 = vadd.f32 %v2000, %v3124
        %3126 = vmatmul.f32.gmra.mxu0 %v1846
        %v3127 = vpop.f32.mrf.mxu0
        %v3128 = vadd.f32 %v2000, %v3127
        %3129 = vmatmul.f32.gmra.mxu0 %v1848
        %v3130 = vpop.f32.mrf.mxu0
        %v3131 = vadd.f32 %v2000, %v3130
        %3132 = vmatmul.f32.gmra.mxu0 %v1850
        %v3133 = vpop.f32.mrf.mxu0
        %v3134 = vadd.f32 %v2000, %v3133
        %3135 = vmatmul.f32.gmra.mxu0 %v1852
        %v3136 = vpop.f32.mrf.mxu0
        %v3137 = vadd.f32 %v2000, %v3136
        %3138 = vmatmul.f32.gmra.mxu0 %v1854
        %v3139 = vpop.f32.mrf.mxu0
        %v3140 = vadd.f32 %v2000, %v3139
        %3141 = vmatmul.f32.gmra.mxu0 %v1856
        %v3142 = vpop.f32.mrf.mxu0
        %v3143 = vadd.f32 %v2000, %v3142
        %3144 = vmatmul.f32.gmra.mxu0 %v1858
        %v3145 = vpop.f32.mrf.mxu0
        %v3146 = vadd.f32 %v2000, %v3145
        %3147 = vmatmul.f32.gmra.mxu0 %v1860
        %v3148 = vpop.f32.mrf.mxu0
        %v3149 = vadd.f32 %v2000, %v3148
        %3150 = vmatmul.f32.gmra.mxu0 %v1862
        %v3151 = vpop.f32.mrf.mxu0
        %v3152 = vadd.f32 %v2000, %v3151
        %3153 = vmatmul.f32.gmra.mxu0 %v1864
        %v3154 = vpop.f32.mrf.mxu0
        %v3155 = vadd.f32 %v2000, %v3154
        %3156 = vmatmul.f32.gmra.mxu0 %v1866
        %v3157 = vpop.f32.mrf.mxu0
        %v3158 = vadd.f32 %v2000, %v3157
        %3159 = vmatmul.f32.gmra.mxu0 %v1868
        %v3160 = vpop.f32.mrf.mxu0
        %v3161 = vadd.f32 %v2000, %v3160
        %3162 = vmatmul.f32.gmra.mxu0 %v1870
        %v3163 = vpop.f32.mrf.mxu0
        %v3164 = vadd.f32 %v2000, %v3163
        %3165 = vmatmul.f32.gmra.mxu0 %v1872
        %v3166 = vpop.f32.mrf.mxu0
        %v3167 = vadd.f32 %v2000, %v3166
        %3168 = vmatmul.f32.gmra.mxu0 %v1874
        %v3169 = vpop.f32.mrf.mxu0
        %v3170 = vadd.f32 %v2000, %v3169
        %3171 = vmatmul.f32.gmra.mxu0 %v1876
        %v3172 = vpop.f32.mrf.mxu0
        %v3173 = vadd.f32 %v2000, %v3172
        %3174 = vmatmul.f32.gmra.mxu0 %v1878
        %v3175 = vpop.f32.mrf.mxu0
        %v3176 = vadd.f32 %v2000, %v3175
        %3177 = vmatmul.f32.gmra.mxu0 %v1880
        %v3178 = vpop.f32.mrf.mxu0
        %v3179 = vadd.f32 %v2000, %v3178
        %3180 = vmatmul.f32.gmra.mxu0 %v1882
        %v3181 = vpop.f32.mrf.mxu0
        %v3182 = vadd.f32 %v2000, %v3181
        %3183 = vmatmul.f32.gmra.mxu0 %v1884
        %v3184 = vpop.f32.mrf.mxu0
        %v3185 = vadd.f32 %v2000, %v3184
        %3186 = vmatmul.f32.gmra.mxu0 %v1886
        %v3187 = vpop.f32.mrf.mxu0
        %v3188 = vadd.f32 %v2000, %v3187
        %3189 = vmatmul.f32.gmra.mxu0 %v1888
        %v3190 = vpop.f32.mrf.mxu0
        %v3191 = vadd.f32 %v2000, %v3190
        %3192 = vmatmul.f32.gmra.mxu0 %v1890
        %v3193 = vpop.f32.mrf.mxu0
        %v3194 = vadd.f32 %v2000, %v3193
        %3195 = vmatmul.f32.gmra.mxu0 %v1892
        %v3196 = vpop.f32.mrf.mxu0
        %v3197 = vadd.f32 %v2000, %v3196
        %3198 = vmatmul.f32.gmra.mxu0 %v1894
        %v3199 = vpop.f32.mrf.mxu0
        %v3200 = vadd.f32 %v2000, %v3199
        %3201 = vmatmul.f32.gmra.mxu0 %v1896
        %v3202 = vpop.f32.mrf.mxu0
        %v3203 = vadd.f32 %v2000, %v3202
        %3204 = vmatmul.f32.gmra.mxu0 %v1898
        %v3205 = vpop.f32.mrf.mxu0
        %v3206 = vadd.f32 %v2000, %v3205
        %3207 = vdwg.mxu0
        %3208 = vmatpush.msra.mxu0 %v1994
        %3209 = vmatpush.msra.mxu0 %v1991
        %3210 = vmatpush.msra.mxu0 %v1988
        %3211 = vmatpush.msra.mxu0 %v1985
        %3212 = vmatpush.msra.mxu0 %v1982
        %3213 = vmatpush.msra.mxu0 %v1979
        %3214 = vmatpush.msra.mxu0 %v1976
        %3215 = vmatpush.msra.mxu0 %v1973
        %3216 = vmatpush.msra.mxu0 %v1970
        %3217 = vmatpush.msra.mxu0 %v1967
        %3218 = vmatpush.msra.mxu0 %v1964
        %3219 = vmatpush.msra.mxu0 %v1961
        %3220 = vmatpush.msra.mxu0 %v1958
        %3221 = vmatpush.msra.mxu0 %v1955
        %3222 = vmatpush.msra.mxu0 %v1952
        %3223 = vmatpush.msra.mxu0 %v1949
        %3224 = vmatmul.f32.gmra.mxu0 %v1645
        %v3225 = vpop.f32.mrf.mxu0
        %v3226 = vadd.f32 %v2825, %v3225
        %3227 = vmatmul.f32.gmra.mxu0 %v1647
        %v3228 = vpop.f32.mrf.mxu0
        %v3229 = vadd.f32 %v2828, %v3228
        %3230 = vmatmul.f32.gmra.mxu0 %v1649
        %v3231 = vpop.f32.mrf.mxu0
        %v3232 = vadd.f32 %v2831, %v3231
        %3233 = vmatmul.f32.gmra.mxu0 %v1651
        %v3234 = vpop.f32.mrf.mxu0
        %v3235 = vadd.f32 %v2834, %v3234
        %3236 = vmatmul.f32.gmra.mxu0 %v1653
        %v3237 = vpop.f32.mrf.mxu0
        %v3238 = vadd.f32 %v2837, %v3237
        %3239 = vmatmul.f32.gmra.mxu0 %v1655
        %v3240 = vpop.f32.mrf.mxu0
        %v3241 = vadd.f32 %v2840, %v3240
        %3242 = vmatmul.f32.gmra.mxu0 %v1657
        %v3243 = vpop.f32.mrf.mxu0
        %v3244 = vadd.f32 %v2843, %v3243
        %3245 = vmatmul.f32.gmra.mxu0 %v1659
        %v3246 = vpop.f32.mrf.mxu0
        %v3247 = vadd.f32 %v2846, %v3246
        %3248 = vmatmul.f32.gmra.mxu0 %v1661
        %v3249 = vpop.f32.mrf.mxu0
        %v3250 = vadd.f32 %v2849, %v3249
        %3251 = vmatmul.f32.gmra.mxu0 %v1663
        %v3252 = vpop.f32.mrf.mxu0
        %v3253 = vadd.f32 %v2852, %v3252
        %3254 = vmatmul.f32.gmra.mxu0 %v1665
        %v3255 = vpop.f32.mrf.mxu0
        %v3256 = vadd.f32 %v2855, %v3255
        %3257 = vmatmul.f32.gmra.mxu0 %v1667
        %v3258 = vpop.f32.mrf.mxu0
        %v3259 = vadd.f32 %v2858, %v3258
        %3260 = vmatmul.f32.gmra.mxu0 %v1669
        %v3261 = vpop.f32.mrf.mxu0
        %v3262 = vadd.f32 %v2861, %v3261
        %3263 = vmatmul.f32.gmra.mxu0 %v1671
        %v3264 = vpop.f32.mrf.mxu0
        %v3265 = vadd.f32 %v2864, %v3264
        %3266 = vmatmul.f32.gmra.mxu0 %v1673
        %v3267 = vpop.f32.mrf.mxu0
        %v3268 = vadd.f32 %v2867, %v3267
        %3269 = vmatmul.f32.gmra.mxu0 %v1675
        %v3270 = vpop.f32.mrf.mxu0
        %v3271 = vadd.f32 %v2870, %v3270
        %3272 = vmatmul.f32.gmra.mxu0 %v1677
        %v3273 = vpop.f32.mrf.mxu0
        %v3274 = vadd.f32 %v2873, %v3273
        %3275 = vmatmul.f32.gmra.mxu0 %v1679
        %v3276 = vpop.f32.mrf.mxu0
        %v3277 = vadd.f32 %v2876, %v3276
        %3278 = vmatmul.f32.gmra.mxu0 %v1681
        %v3279 = vpop.f32.mrf.mxu0
        %v3280 = vadd.f32 %v2879, %v3279
        %3281 = vmatmul.f32.gmra.mxu0 %v1683
        %v3282 = vpop.f32.mrf.mxu0
        %v3283 = vadd.f32 %v2882, %v3282
        %3284 = vmatmul.f32.gmra.mxu0 %v1685
        %v3285 = vpop.f32.mrf.mxu0
        %v3286 = vadd.f32 %v2885, %v3285
        %3287 = vmatmul.f32.gmra.mxu0 %v1687
        %v3288 = vpop.f32.mrf.mxu0
        %v3289 = vadd.f32 %v2888, %v3288
        %3290 = vmatmul.f32.gmra.mxu0 %v1689
        %v3291 = vpop.f32.mrf.mxu0
        %v3292 = vadd.f32 %v2891, %v3291
        %3293 = vmatmul.f32.gmra.mxu0 %v1691
        %v3294 = vpop.f32.mrf.mxu0
        %v3295 = vadd.f32 %v2894, %v3294
        %3296 = vmatmul.f32.gmra.mxu0 %v1693
        %v3297 = vpop.f32.mrf.mxu0
        %v3298 = vadd.f32 %v2897, %v3297
        %3299 = vmatmul.f32.gmra.mxu0 %v1695
        %v3300 = vpop.f32.mrf.mxu0
        %v3301 = vadd.f32 %v2900, %v3300
        %3302 = vmatmul.f32.gmra.mxu0 %v1697
        %v3303 = vpop.f32.mrf.mxu0
        %v3304 = vadd.f32 %v2903, %v3303
        %3305 = vmatmul.f32.gmra.mxu0 %v1699
        %v3306 = vpop.f32.mrf.mxu0
        %v3307 = vadd.f32 %v2906, %v3306
        %3308 = vmatmul.f32.gmra.mxu0 %v1701
        %v3309 = vpop.f32.mrf.mxu0
        %v3310 = vadd.f32 %v2909, %v3309
        %3311 = vmatmul.f32.gmra.mxu0 %v1703
        %v3312 = vpop.f32.mrf.mxu0
        %v3313 = vadd.f32 %v2912, %v3312
        %3314 = vmatmul.f32.gmra.mxu0 %v1705
        %v3315 = vpop.f32.mrf.mxu0
        %v3316 = vadd.f32 %v2915, %v3315
        %3317 = vmatmul.f32.gmra.mxu0 %v1707
        %v3318 = vpop.f32.mrf.mxu0
        %v3319 = vadd.f32 %v2918, %v3318
        %3320 = vmatmul.f32.gmra.mxu0 %v1709
        %v3321 = vpop.f32.mrf.mxu0
        %v3322 = vadd.f32 %v2921, %v3321
        %3323 = vmatmul.f32.gmra.mxu0 %v1711
        %v3324 = vpop.f32.mrf.mxu0
        %v3325 = vadd.f32 %v2924, %v3324
        %3326 = vmatmul.f32.gmra.mxu0 %v1713
        %v3327 = vpop.f32.mrf.mxu0
        %v3328 = vadd.f32 %v2927, %v3327
        %3329 = vmatmul.f32.gmra.mxu0 %v1715
        %v3330 = vpop.f32.mrf.mxu0
        %v3331 = vadd.f32 %v2930, %v3330
        %3332 = vmatmul.f32.gmra.mxu0 %v1717
        %v3333 = vpop.f32.mrf.mxu0
        %v3334 = vadd.f32 %v2933, %v3333
        %3335 = vmatmul.f32.gmra.mxu0 %v1719
        %v3336 = vpop.f32.mrf.mxu0
        %v3337 = vadd.f32 %v2936, %v3336
        %3338 = vmatmul.f32.gmra.mxu0 %v1721
        %v3339 = vpop.f32.mrf.mxu0
        %v3340 = vadd.f32 %v2939, %v3339
        %3341 = vmatmul.f32.gmra.mxu0 %v1723
        %v3342 = vpop.f32.mrf.mxu0
        %v3343 = vadd.f32 %v2942, %v3342
        %3344 = vmatmul.f32.gmra.mxu0 %v1725
        %v3345 = vpop.f32.mrf.mxu0
        %v3346 = vadd.f32 %v2945, %v3345
        %3347 = vmatmul.f32.gmra.mxu0 %v1727
        %v3348 = vpop.f32.mrf.mxu0
        %v3349 = vadd.f32 %v2948, %v3348
        %3350 = vmatmul.f32.gmra.mxu0 %v1729
        %v3351 = vpop.f32.mrf.mxu0
        %v3352 = vadd.f32 %v2951, %v3351
        %3353 = vmatmul.f32.gmra.mxu0 %v1731
        %v3354 = vpop.f32.mrf.mxu0
        %v3355 = vadd.f32 %v2954, %v3354
        %3356 = vmatmul.f32.gmra.mxu0 %v1733
        %v3357 = vpop.f32.mrf.mxu0
        %v3358 = vadd.f32 %v2957, %v3357
        %3359 = vmatmul.f32.gmra.mxu0 %v1735
        %v3360 = vpop.f32.mrf.mxu0
        %v3361 = vadd.f32 %v2960, %v3360
        %3362 = vmatmul.f32.gmra.mxu0 %v1737
        %v3363 = vpop.f32.mrf.mxu0
        %v3364 = vadd.f32 %v2963, %v3363
        %3365 = vmatmul.f32.gmra.mxu0 %v1739
        %v3366 = vpop.f32.mrf.mxu0
        %v3367 = vadd.f32 %v2966, %v3366
        %3368 = vmatmul.f32.gmra.mxu0 %v1741
        %v3369 = vpop.f32.mrf.mxu0
        %v3370 = vadd.f32 %v2969, %v3369
        %3371 = vmatmul.f32.gmra.mxu0 %v1743
        %v3372 = vpop.f32.mrf.mxu0
        %v3373 = vadd.f32 %v2972, %v3372
        %3374 = vmatmul.f32.gmra.mxu0 %v1745
        %v3375 = vpop.f32.mrf.mxu0
        %v3376 = vadd.f32 %v2975, %v3375
        %3377 = vmatmul.f32.gmra.mxu0 %v1747
        %v3378 = vpop.f32.mrf.mxu0
        %v3379 = vadd.f32 %v2978, %v3378
        %3380 = vmatmul.f32.gmra.mxu0 %v1749
        %v3381 = vpop.f32.mrf.mxu0
        %v3382 = vadd.f32 %v2981, %v3381
        %3383 = vmatmul.f32.gmra.mxu0 %v1751
        %v3384 = vpop.f32.mrf.mxu0
        %v3385 = vadd.f32 %v2984, %v3384
        %3386 = vmatmul.f32.gmra.mxu0 %v1753
        %v3387 = vpop.f32.mrf.mxu0
        %v3388 = vadd.f32 %v2987, %v3387
        %3389 = vmatmul.f32.gmra.mxu0 %v1755
        %v3390 = vpop.f32.mrf.mxu0
        %v3391 = vadd.f32 %v2990, %v3390
        %3392 = vmatmul.f32.gmra.mxu0 %v1757
        %v3393 = vpop.f32.mrf.mxu0
        %v3394 = vadd.f32 %v2993, %v3393
        %3395 = vmatmul.f32.gmra.mxu0 %v1759
        %v3396 = vpop.f32.mrf.mxu0
        %v3397 = vadd.f32 %v2996, %v3396
        %3398 = vmatmul.f32.gmra.mxu0 %v1761
        %v3399 = vpop.f32.mrf.mxu0
        %v3400 = vadd.f32 %v2999, %v3399
        %3401 = vmatmul.f32.gmra.mxu0 %v1763
        %v3402 = vpop.f32.mrf.mxu0
        %v3403 = vadd.f32 %v3002, %v3402
        %3404 = vmatmul.f32.gmra.mxu0 %v1765
        %v3405 = vpop.f32.mrf.mxu0
        %v3406 = vadd.f32 %v3005, %v3405
        %3407 = vmatmul.f32.gmra.mxu0 %v1767
        %v3408 = vpop.f32.mrf.mxu0
        %v3409 = vadd.f32 %v3008, %v3408
        %3410 = vmatmul.f32.gmra.mxu0 %v1769
        %v3411 = vpop.f32.mrf.mxu0
        %v3412 = vadd.f32 %v3011, %v3411
        %3413 = vmatmul.f32.gmra.mxu0 %v1771
        %v3414 = vpop.f32.mrf.mxu0
        %v3415 = vadd.f32 %v3014, %v3414
        %3416 = vmatmul.f32.gmra.mxu0 %v1773
        %v3417 = vpop.f32.mrf.mxu0
        %v3418 = vadd.f32 %v3017, %v3417
        %3419 = vmatmul.f32.gmra.mxu0 %v1775
        %v3420 = vpop.f32.mrf.mxu0
        %v3421 = vadd.f32 %v3020, %v3420
        %3422 = vmatmul.f32.gmra.mxu0 %v1777
        %v3423 = vpop.f32.mrf.mxu0
        %v3424 = vadd.f32 %v3023, %v3423
        %3425 = vmatmul.f32.gmra.mxu0 %v1779
        %v3426 = vpop.f32.mrf.mxu0
        %v3427 = vadd.f32 %v3026, %v3426
        %3428 = vmatmul.f32.gmra.mxu0 %v1781
        %v3429 = vpop.f32.mrf.mxu0
        %v3430 = vadd.f32 %v3029, %v3429
        %3431 = vmatmul.f32.gmra.mxu0 %v1783
        %v3432 = vpop.f32.mrf.mxu0
        %v3433 = vadd.f32 %v3032, %v3432
        %3434 = vmatmul.f32.gmra.mxu0 %v1785
        %v3435 = vpop.f32.mrf.mxu0
        %v3436 = vadd.f32 %v3035, %v3435
        %3437 = vmatmul.f32.gmra.mxu0 %v1787
        %v3438 = vpop.f32.mrf.mxu0
        %v3439 = vadd.f32 %v3038, %v3438
        %3440 = vmatmul.f32.gmra.mxu0 %v1789
        %v3441 = vpop.f32.mrf.mxu0
        %v3442 = vadd.f32 %v3041, %v3441
        %3443 = vmatmul.f32.gmra.mxu0 %v1791
        %v3444 = vpop.f32.mrf.mxu0
        %v3445 = vadd.f32 %v3044, %v3444
        %3446 = vmatmul.f32.gmra.mxu0 %v1793
        %v3447 = vpop.f32.mrf.mxu0
        %v3448 = vadd.f32 %v3047, %v3447
        %3449 = vmatmul.f32.gmra.mxu0 %v1795
        %v3450 = vpop.f32.mrf.mxu0
        %v3451 = vadd.f32 %v3050, %v3450
        %3452 = vmatmul.f32.gmra.mxu0 %v1797
        %v3453 = vpop.f32.mrf.mxu0
        %v3454 = vadd.f32 %v3053, %v3453
        %3455 = vmatmul.f32.gmra.mxu0 %v1799
        %v3456 = vpop.f32.mrf.mxu0
        %v3457 = vadd.f32 %v3056, %v3456
        %3458 = vmatmul.f32.gmra.mxu0 %v1801
        %v3459 = vpop.f32.mrf.mxu0
        %v3460 = vadd.f32 %v3059, %v3459
        %3461 = vmatmul.f32.gmra.mxu0 %v1803
        %v3462 = vpop.f32.mrf.mxu0
        %v3463 = vadd.f32 %v3062, %v3462
        %3464 = vmatmul.f32.gmra.mxu0 %v1805
        %v3465 = vpop.f32.mrf.mxu0
        %v3466 = vadd.f32 %v3065, %v3465
        %3467 = vmatmul.f32.gmra.mxu0 %v1807
        %v3468 = vpop.f32.mrf.mxu0
        %v3469 = vadd.f32 %v3068, %v3468
        %3470 = vmatmul.f32.gmra.mxu0 %v1809
        %v3471 = vpop.f32.mrf.mxu0
        %v3472 = vadd.f32 %v3071, %v3471
        %3473 = vmatmul.f32.gmra.mxu0 %v1811
        %v3474 = vpop.f32.mrf.mxu0
        %v3475 = vadd.f32 %v3074, %v3474
        %3476 = vmatmul.f32.gmra.mxu0 %v1813
        %v3477 = vpop.f32.mrf.mxu0
        %v3478 = vadd.f32 %v3077, %v3477
        %3479 = vmatmul.f32.gmra.mxu0 %v1815
        %v3480 = vpop.f32.mrf.mxu0
        %v3481 = vadd.f32 %v3080, %v3480
        %3482 = vmatmul.f32.gmra.mxu0 %v1817
        %v3483 = vpop.f32.mrf.mxu0
        %v3484 = vadd.f32 %v3083, %v3483
        %3485 = vmatmul.f32.gmra.mxu0 %v1819
        %v3486 = vpop.f32.mrf.mxu0
        %v3487 = vadd.f32 %v3086, %v3486
        %3488 = vmatmul.f32.gmra.mxu0 %v1821
        %v3489 = vpop.f32.mrf.mxu0
        %v3490 = vadd.f32 %v3089, %v3489
        %3491 = vmatmul.f32.gmra.mxu0 %v1823
        %v3492 = vpop.f32.mrf.mxu0
        %v3493 = vadd.f32 %v3092, %v3492
        %3494 = vmatmul.f32.gmra.mxu0 %v1825
        %v3495 = vpop.f32.mrf.mxu0
        %v3496 = vadd.f32 %v3095, %v3495
        %3497 = vmatmul.f32.gmra.mxu0 %v1827
        %v3498 = vpop.f32.mrf.mxu0
        %v3499 = vadd.f32 %v3098, %v3498
        %3500 = vmatmul.f32.gmra.mxu0 %v1829
        %v3501 = vpop.f32.mrf.mxu0
        %v3502 = vadd.f32 %v3101, %v3501
        %3503 = vmatmul.f32.gmra.mxu0 %v1831
        %v3504 = vpop.f32.mrf.mxu0
        %v3505 = vadd.f32 %v3104, %v3504
        %3506 = vmatmul.f32.gmra.mxu0 %v1833
        %v3507 = vpop.f32.mrf.mxu0
        %v3508 = vadd.f32 %v3107, %v3507
        %3509 = vmatmul.f32.gmra.mxu0 %v1835
        %v3510 = vpop.f32.mrf.mxu0
        %v3511 = vadd.f32 %v3110, %v3510
        %3512 = vmatmul.f32.gmra.mxu0 %v1837
        %v3513 = vpop.f32.mrf.mxu0
        %v3514 = vadd.f32 %v3113, %v3513
        %3515 = vmatmul.f32.gmra.mxu0 %v1839
        %v3516 = vpop.f32.mrf.mxu0
        %v3517 = vadd.f32 %v3116, %v3516
        %3518 = vmatmul.f32.gmra.mxu0 %v1841
        %v3519 = vpop.f32.mrf.mxu0
        %v3520 = vadd.f32 %v3119, %v3519
        %3521 = vmatmul.f32.gmra.mxu0 %v1843
        %v3522 = vpop.f32.mrf.mxu0
        %v3523 = vadd.f32 %v3122, %v3522
        %3524 = vmatmul.f32.gmra.mxu0 %v1845
        %v3525 = vpop.f32.mrf.mxu0
        %v3526 = vadd.f32 %v3125, %v3525
        %3527 = vmatmul.f32.gmra.mxu0 %v1847
        %v3528 = vpop.f32.mrf.mxu0
        %v3529 = vadd.f32 %v3128, %v3528
        %3530 = vmatmul.f32.gmra.mxu0 %v1849
        %v3531 = vpop.f32.mrf.mxu0
        %v3532 = vadd.f32 %v3131, %v3531
        %3533 = vmatmul.f32.gmra.mxu0 %v1851
        %v3534 = vpop.f32.mrf.mxu0
        %v3535 = vadd.f32 %v3134, %v3534
        %3536 = vmatmul.f32.gmra.mxu0 %v1853
        %v3537 = vpop.f32.mrf.mxu0
        %v3538 = vadd.f32 %v3137, %v3537
        %3539 = vmatmul.f32.gmra.mxu0 %v1855
        %v3540 = vpop.f32.mrf.mxu0
        %v3541 = vadd.f32 %v3140, %v3540
        %3542 = vmatmul.f32.gmra.mxu0 %v1857
        %v3543 = vpop.f32.mrf.mxu0
        %v3544 = vadd.f32 %v3143, %v3543
        %3545 = vmatmul.f32.gmra.mxu0 %v1859
        %v3546 = vpop.f32.mrf.mxu0
        %v3547 = vadd.f32 %v3146, %v3546
        %3548 = vmatmul.f32.gmra.mxu0 %v1861
        %v3549 = vpop.f32.mrf.mxu0
        %v3550 = vadd.f32 %v3149, %v3549
        %3551 = vmatmul.f32.gmra.mxu0 %v1863
        %v3552 = vpop.f32.mrf.mxu0
        %v3553 = vadd.f32 %v3152, %v3552
        %3554 = vmatmul.f32.gmra.mxu0 %v1865
        %v3555 = vpop.f32.mrf.mxu0
        %v3556 = vadd.f32 %v3155, %v3555
        %3557 = vmatmul.f32.gmra.mxu0 %v1867
        %v3558 = vpop.f32.mrf.mxu0
        %v3559 = vadd.f32 %v3158, %v3558
        %3560 = vmatmul.f32.gmra.mxu0 %v1869
        %v3561 = vpop.f32.mrf.mxu0
        %v3562 = vadd.f32 %v3161, %v3561
        %3563 = vmatmul.f32.gmra.mxu0 %v1871
        %v3564 = vpop.f32.mrf.mxu0
        %v3565 = vadd.f32 %v3164, %v3564
        %3566 = vmatmul.f32.gmra.mxu0 %v1873
        %v3567 = vpop.f32.mrf.mxu0
        %v3568 = vadd.f32 %v3167, %v3567
        %3569 = vmatmul.f32.gmra.mxu0 %v1875
        %v3570 = vpop.f32.mrf.mxu0
        %v3571 = vadd.f32 %v3170, %v3570
        %3572 = vmatmul.f32.gmra.mxu0 %v1877
        %v3573 = vpop.f32.mrf.mxu0
        %v3574 = vadd.f32 %v3173, %v3573
        %3575 = vmatmul.f32.gmra.mxu0 %v1879
        %v3576 = vpop.f32.mrf.mxu0
        %v3577 = vadd.f32 %v3176, %v3576
        %3578 = vmatmul.f32.gmra.mxu0 %v1881
        %v3579 = vpop.f32.mrf.mxu0
        %v3580 = vadd.f32 %v3179, %v3579
        %3581 = vmatmul.f32.gmra.mxu0 %v1883
        %v3582 = vpop.f32.mrf.mxu0
        %v3583 = vadd.f32 %v3182, %v3582
        %3584 = vmatmul.f32.gmra.mxu0 %v1885
        %v3585 = vpop.f32.mrf.mxu0
        %v3586 = vadd.f32 %v3185, %v3585
        %3587 = vmatmul.f32.gmra.mxu0 %v1887
        %v3588 = vpop.f32.mrf.mxu0
        %v3589 = vadd.f32 %v3188, %v3588
        %3590 = vmatmul.f32.gmra.mxu0 %v1889
        %v3591 = vpop.f32.mrf.mxu0
        %v3592 = vadd.f32 %v3191, %v3591
        %3593 = vmatmul.f32.gmra.mxu0 %v1891
        %v3594 = vpop.f32.mrf.mxu0
        %v3595 = vadd.f32 %v3194, %v3594
        %3596 = vmatmul.f32.gmra.mxu0 %v1893
        %v3597 = vpop.f32.mrf.mxu0
        %v3598 = vadd.f32 %v3197, %v3597
        %3599 = vmatmul.f32.gmra.mxu0 %v1895
        %v3600 = vpop.f32.mrf.mxu0
        %v3601 = vadd.f32 %v3200, %v3600
        %3602 = vmatmul.f32.gmra.mxu0 %v1897
        %v3603 = vpop.f32.mrf.mxu0
        %v3604 = vadd.f32 %v3203, %v3603
        %3605 = vmatmul.f32.gmra.mxu0 %v1899
        %v3606 = vpop.f32.mrf.mxu0
        %v3607 = vadd.f32 %v3206, %v3606
        %3608 = vdwg.mxu0
        %3609 = vmatpush.msra.mxu0 %v1947
        %3610 = vmatpush.msra.mxu0 %v1944
        %3611 = vmatpush.msra.mxu0 %v1941
        %3612 = vmatpush.msra.mxu0 %v1938
        %3613 = vmatpush.msra.mxu0 %v1935
        %3614 = vmatpush.msra.mxu0 %v1932
        %3615 = vmatpush.msra.mxu0 %v1929
        %3616 = vmatpush.msra.mxu0 %v1926
        %3617 = vmatpush.msra.mxu0 %v1923
        %3618 = vmatpush.msra.mxu0 %v1920
        %3619 = vmatpush.msra.mxu0 %v1917
        %3620 = vmatpush.msra.mxu0 %v1914
        %3621 = vmatpush.msra.mxu0 %v1911
        %3622 = vmatpush.msra.mxu0 %v1908
        %3623 = vmatpush.msra.mxu0 %v1905
        %3624 = vmatpush.msra.mxu0 %v1902
        %3625 = vmatmul.f32.gmra.mxu0 %v1644
        %v3626 = vpop.f32.mrf.mxu0
        %v3627 = vadd.f32 %v2001, %v3626
        %3628 = vmatmul.f32.gmra.mxu0 %v1646
        %v3629 = vpop.f32.mrf.mxu0
        %v3630 = vadd.f32 %v2001, %v3629
        %3631 = vmatmul.f32.gmra.mxu0 %v1648
        %v3632 = vpop.f32.mrf.mxu0
        %v3633 = vadd.f32 %v2001, %v3632
        %3634 = vmatmul.f32.gmra.mxu0 %v1650
        %v3635 = vpop.f32.mrf.mxu0
        %v3636 = vadd.f32 %v2001, %v3635
        %3637 = vmatmul.f32.gmra.mxu0 %v1652
        %v3638 = vpop.f32.mrf.mxu0
        %v3639 = vadd.f32 %v2001, %v3638
        %3640 = vmatmul.f32.gmra.mxu0 %v1654
        %v3641 = vpop.f32.mrf.mxu0
        %v3642 = vadd.f32 %v2001, %v3641
        %3643 = vmatmul.f32.gmra.mxu0 %v1656
        %v3644 = vpop.f32.mrf.mxu0
        %v3645 = vadd.f32 %v2001, %v3644
        %3646 = vmatmul.f32.gmra.mxu0 %v1658
        %v3647 = vpop.f32.mrf.mxu0
        %v3648 = vadd.f32 %v2001, %v3647
        %3649 = vmatmul.f32.gmra.mxu0 %v1660
        %v3650 = vpop.f32.mrf.mxu0
        %v3651 = vadd.f32 %v2001, %v3650
        %3652 = vmatmul.f32.gmra.mxu0 %v1662
        %v3653 = vpop.f32.mrf.mxu0
        %v3654 = vadd.f32 %v2001, %v3653
        %3655 = vmatmul.f32.gmra.mxu0 %v1664
        %v3656 = vpop.f32.mrf.mxu0
        %v3657 = vadd.f32 %v2001, %v3656
        %3658 = vmatmul.f32.gmra.mxu0 %v1666
        %v3659 = vpop.f32.mrf.mxu0
        %v3660 = vadd.f32 %v2001, %v3659
        %3661 = vmatmul.f32.gmra.mxu0 %v1668
        %v3662 = vpop.f32.mrf.mxu0
        %v3663 = vadd.f32 %v2001, %v3662
        %3664 = vmatmul.f32.gmra.mxu0 %v1670
        %v3665 = vpop.f32.mrf.mxu0
        %v3666 = vadd.f32 %v2001, %v3665
        %3667 = vmatmul.f32.gmra.mxu0 %v1672
        %v3668 = vpop.f32.mrf.mxu0
        %v3669 = vadd.f32 %v2001, %v3668
        %3670 = vmatmul.f32.gmra.mxu0 %v1674
        %v3671 = vpop.f32.mrf.mxu0
        %v3672 = vadd.f32 %v2001, %v3671
        %3673 = vmatmul.f32.gmra.mxu0 %v1676
        %v3674 = vpop.f32.mrf.mxu0
        %v3675 = vadd.f32 %v2001, %v3674
        %3676 = vmatmul.f32.gmra.mxu0 %v1678
        %v3677 = vpop.f32.mrf.mxu0
        %v3678 = vadd.f32 %v2001, %v3677
        %3679 = vmatmul.f32.gmra.mxu0 %v1680
        %v3680 = vpop.f32.mrf.mxu0
        %v3681 = vadd.f32 %v2001, %v3680
        %3682 = vmatmul.f32.gmra.mxu0 %v1682
        %v3683 = vpop.f32.mrf.mxu0
        %v3684 = vadd.f32 %v2001, %v3683
        %3685 = vmatmul.f32.gmra.mxu0 %v1684
        %v3686 = vpop.f32.mrf.mxu0
        %v3687 = vadd.f32 %v2001, %v3686
        %3688 = vmatmul.f32.gmra.mxu0 %v1686
        %v3689 = vpop.f32.mrf.mxu0
        %v3690 = vadd.f32 %v2001, %v3689
        %3691 = vmatmul.f32.gmra.mxu0 %v1688
        %v3692 = vpop.f32.mrf.mxu0
        %v3693 = vadd.f32 %v2001, %v3692
        %3694 = vmatmul.f32.gmra.mxu0 %v1690
        %v3695 = vpop.f32.mrf.mxu0
        %v3696 = vadd.f32 %v2001, %v3695
        %3697 = vmatmul.f32.gmra.mxu0 %v1692
        %v3698 = vpop.f32.mrf.mxu0
        %v3699 = vadd.f32 %v2001, %v3698
        %3700 = vmatmul.f32.gmra.mxu0 %v1694
        %v3701 = vpop.f32.mrf.mxu0
        %v3702 = vadd.f32 %v2001, %v3701
        %3703 = vmatmul.f32.gmra.mxu0 %v1696
        %v3704 = vpop.f32.mrf.mxu0
        %v3705 = vadd.f32 %v2001, %v3704
        %3706 = vmatmul.f32.gmra.mxu0 %v1698
        %v3707 = vpop.f32.mrf.mxu0
        %v3708 = vadd.f32 %v2001, %v3707
        %3709 = vmatmul.f32.gmra.mxu0 %v1700
        %v3710 = vpop.f32.mrf.mxu0
        %v3711 = vadd.f32 %v2001, %v3710
        %3712 = vmatmul.f32.gmra.mxu0 %v1702
        %v3713 = vpop.f32.mrf.mxu0
        %v3714 = vadd.f32 %v2001, %v3713
        %3715 = vmatmul.f32.gmra.mxu0 %v1704
        %v3716 = vpop.f32.mrf.mxu0
        %v3717 = vadd.f32 %v2001, %v3716
        %3718 = vmatmul.f32.gmra.mxu0 %v1706
        %v3719 = vpop.f32.mrf.mxu0
        %v3720 = vadd.f32 %v2001, %v3719
        %3721 = vmatmul.f32.gmra.mxu0 %v1708
        %v3722 = vpop.f32.mrf.mxu0
        %v3723 = vadd.f32 %v2001, %v3722
        %3724 = vmatmul.f32.gmra.mxu0 %v1710
        %v3725 = vpop.f32.mrf.mxu0
        %v3726 = vadd.f32 %v2001, %v3725
        %3727 = vmatmul.f32.gmra.mxu0 %v1712
        %v3728 = vpop.f32.mrf.mxu0
        %v3729 = vadd.f32 %v2001, %v3728
        %3730 = vmatmul.f32.gmra.mxu0 %v1714
        %v3731 = vpop.f32.mrf.mxu0
        %v3732 = vadd.f32 %v2001, %v3731
        %3733 = vmatmul.f32.gmra.mxu0 %v1716
        %v3734 = vpop.f32.mrf.mxu0
        %v3735 = vadd.f32 %v2001, %v3734
        %3736 = vmatmul.f32.gmra.mxu0 %v1718
        %v3737 = vpop.f32.mrf.mxu0
        %v3738 = vadd.f32 %v2001, %v3737
        %3739 = vmatmul.f32.gmra.mxu0 %v1720
        %v3740 = vpop.f32.mrf.mxu0
        %v3741 = vadd.f32 %v2001, %v3740
        %3742 = vmatmul.f32.gmra.mxu0 %v1722
        %v3743 = vpop.f32.mrf.mxu0
        %v3744 = vadd.f32 %v2001, %v3743
        %3745 = vmatmul.f32.gmra.mxu0 %v1724
        %v3746 = vpop.f32.mrf.mxu0
        %v3747 = vadd.f32 %v2001, %v3746
        %3748 = vmatmul.f32.gmra.mxu0 %v1726
        %v3749 = vpop.f32.mrf.mxu0
        %v3750 = vadd.f32 %v2001, %v3749
        %3751 = vmatmul.f32.gmra.mxu0 %v1728
        %v3752 = vpop.f32.mrf.mxu0
        %v3753 = vadd.f32 %v2001, %v3752
        %3754 = vmatmul.f32.gmra.mxu0 %v1730
        %v3755 = vpop.f32.mrf.mxu0
        %v3756 = vadd.f32 %v2001, %v3755
        %3757 = vmatmul.f32.gmra.mxu0 %v1732
        %v3758 = vpop.f32.mrf.mxu0
        %v3759 = vadd.f32 %v2001, %v3758
        %3760 = vmatmul.f32.gmra.mxu0 %v1734
        %v3761 = vpop.f32.mrf.mxu0
        %v3762 = vadd.f32 %v2001, %v3761
        %3763 = vmatmul.f32.gmra.mxu0 %v1736
        %v3764 = vpop.f32.mrf.mxu0
        %v3765 = vadd.f32 %v2001, %v3764
        %3766 = vmatmul.f32.gmra.mxu0 %v1738
        %v3767 = vpop.f32.mrf.mxu0
        %v3768 = vadd.f32 %v2001, %v3767
        %3769 = vmatmul.f32.gmra.mxu0 %v1740
        %v3770 = vpop.f32.mrf.mxu0
        %v3771 = vadd.f32 %v2001, %v3770
        %3772 = vmatmul.f32.gmra.mxu0 %v1742
        %v3773 = vpop.f32.mrf.mxu0
        %v3774 = vadd.f32 %v2001, %v3773
        %3775 = vmatmul.f32.gmra.mxu0 %v1744
        %v3776 = vpop.f32.mrf.mxu0
        %v3777 = vadd.f32 %v2001, %v3776
        %3778 = vmatmul.f32.gmra.mxu0 %v1746
        %v3779 = vpop.f32.mrf.mxu0
        %v3780 = vadd.f32 %v2001, %v3779
        %3781 = vmatmul.f32.gmra.mxu0 %v1748
        %v3782 = vpop.f32.mrf.mxu0
        %v3783 = vadd.f32 %v2001, %v3782
        %3784 = vmatmul.f32.gmra.mxu0 %v1750
        %v3785 = vpop.f32.mrf.mxu0
        %v3786 = vadd.f32 %v2001, %v3785
        %3787 = vmatmul.f32.gmra.mxu0 %v1752
        %v3788 = vpop.f32.mrf.mxu0
        %v3789 = vadd.f32 %v2001, %v3788
        %3790 = vmatmul.f32.gmra.mxu0 %v1754
        %v3791 = vpop.f32.mrf.mxu0
        %v3792 = vadd.f32 %v2001, %v3791
        %3793 = vmatmul.f32.gmra.mxu0 %v1756
        %v3794 = vpop.f32.mrf.mxu0
        %v3795 = vadd.f32 %v2001, %v3794
        %3796 = vmatmul.f32.gmra.mxu0 %v1758
        %v3797 = vpop.f32.mrf.mxu0
        %v3798 = vadd.f32 %v2001, %v3797
        %3799 = vmatmul.f32.gmra.mxu0 %v1760
        %v3800 = vpop.f32.mrf.mxu0
        %v3801 = vadd.f32 %v2001, %v3800
        %3802 = vmatmul.f32.gmra.mxu0 %v1762
        %v3803 = vpop.f32.mrf.mxu0
        %v3804 = vadd.f32 %v2001, %v3803
        %3805 = vmatmul.f32.gmra.mxu0 %v1764
        %v3806 = vpop.f32.mrf.mxu0
        %v3807 = vadd.f32 %v2001, %v3806
        %3808 = vmatmul.f32.gmra.mxu0 %v1766
        %v3809 = vpop.f32.mrf.mxu0
        %v3810 = vadd.f32 %v2001, %v3809
        %3811 = vmatmul.f32.gmra.mxu0 %v1768
        %v3812 = vpop.f32.mrf.mxu0
        %v3813 = vadd.f32 %v2001, %v3812
        %3814 = vmatmul.f32.gmra.mxu0 %v1770
        %v3815 = vpop.f32.mrf.mxu0
        %v3816 = vadd.f32 %v2001, %v3815
        %3817 = vmatmul.f32.gmra.mxu0 %v1772
        %v3818 = vpop.f32.mrf.mxu0
        %v3819 = vadd.f32 %v2001, %v3818
        %3820 = vmatmul.f32.gmra.mxu0 %v1774
        %v3821 = vpop.f32.mrf.mxu0
        %v3822 = vadd.f32 %v2001, %v3821
        %3823 = vmatmul.f32.gmra.mxu0 %v1776
        %v3824 = vpop.f32.mrf.mxu0
        %v3825 = vadd.f32 %v2001, %v3824
        %3826 = vmatmul.f32.gmra.mxu0 %v1778
        %v3827 = vpop.f32.mrf.mxu0
        %v3828 = vadd.f32 %v2001, %v3827
        %3829 = vmatmul.f32.gmra.mxu0 %v1780
        %v3830 = vpop.f32.mrf.mxu0
        %v3831 = vadd.f32 %v2001, %v3830
        %3832 = vmatmul.f32.gmra.mxu0 %v1782
        %v3833 = vpop.f32.mrf.mxu0
        %v3834 = vadd.f32 %v2001, %v3833
        %3835 = vmatmul.f32.gmra.mxu0 %v1784
        %v3836 = vpop.f32.mrf.mxu0
        %v3837 = vadd.f32 %v2001, %v3836
        %3838 = vmatmul.f32.gmra.mxu0 %v1786
        %v3839 = vpop.f32.mrf.mxu0
        %v3840 = vadd.f32 %v2001, %v3839
        %3841 = vmatmul.f32.gmra.mxu0 %v1788
        %v3842 = vpop.f32.mrf.mxu0
        %v3843 = vadd.f32 %v2001, %v3842
        %3844 = vmatmul.f32.gmra.mxu0 %v1790
        %v3845 = vpop.f32.mrf.mxu0
        %v3846 = vadd.f32 %v2001, %v3845
        %3847 = vmatmul.f32.gmra.mxu0 %v1792
        %v3848 = vpop.f32.mrf.mxu0
        %v3849 = vadd.f32 %v2001, %v3848
        %3850 = vmatmul.f32.gmra.mxu0 %v1794
        %v3851 = vpop.f32.mrf.mxu0
        %v3852 = vadd.f32 %v2001, %v3851
        %3853 = vmatmul.f32.gmra.mxu0 %v1796
        %v3854 = vpop.f32.mrf.mxu0
        %v3855 = vadd.f32 %v2001, %v3854
        %3856 = vmatmul.f32.gmra.mxu0 %v1798
        %v3857 = vpop.f32.mrf.mxu0
        %v3858 = vadd.f32 %v2001, %v3857
        %3859 = vmatmul.f32.gmra.mxu0 %v1800
        %v3860 = vpop.f32.mrf.mxu0
        %v3861 = vadd.f32 %v2001, %v3860
        %3862 = vmatmul.f32.gmra.mxu0 %v1802
        %v3863 = vpop.f32.mrf.mxu0
        %v3864 = vadd.f32 %v2001, %v3863
        %3865 = vmatmul.f32.gmra.mxu0 %v1804
        %v3866 = vpop.f32.mrf.mxu0
        %v3867 = vadd.f32 %v2001, %v3866
        %3868 = vmatmul.f32.gmra.mxu0 %v1806
        %v3869 = vpop.f32.mrf.mxu0
        %v3870 = vadd.f32 %v2001, %v3869
        %3871 = vmatmul.f32.gmra.mxu0 %v1808
        %v3872 = vpop.f32.mrf.mxu0
        %v3873 = vadd.f32 %v2001, %v3872
        %3874 = vmatmul.f32.gmra.mxu0 %v1810
        %v3875 = vpop.f32.mrf.mxu0
        %v3876 = vadd.f32 %v2001, %v3875
        %3877 = vmatmul.f32.gmra.mxu0 %v1812
        %v3878 = vpop.f32.mrf.mxu0
        %v3879 = vadd.f32 %v2001, %v3878
        %3880 = vmatmul.f32.gmra.mxu0 %v1814
        %v3881 = vpop.f32.mrf.mxu0
        %v3882 = vadd.f32 %v2001, %v3881
        %3883 = vmatmul.f32.gmra.mxu0 %v1816
        %v3884 = vpop.f32.mrf.mxu0
        %v3885 = vadd.f32 %v2001, %v3884
        %3886 = vmatmul.f32.gmra.mxu0 %v1818
        %v3887 = vpop.f32.mrf.mxu0
        %v3888 = vadd.f32 %v2001, %v3887
        %3889 = vmatmul.f32.gmra.mxu0 %v1820
        %v3890 = vpop.f32.mrf.mxu0
        %v3891 = vadd.f32 %v2001, %v3890
        %3892 = vmatmul.f32.gmra.mxu0 %v1822
        %v3893 = vpop.f32.mrf.mxu0
        %v3894 = vadd.f32 %v2001, %v3893
        %3895 = vmatmul.f32.gmra.mxu0 %v1824
        %v3896 = vpop.f32.mrf.mxu0
        %v3897 = vadd.f32 %v2001, %v3896
        %3898 = vmatmul.f32.gmra.mxu0 %v1826
        %v3899 = vpop.f32.mrf.mxu0
        %v3900 = vadd.f32 %v2001, %v3899
        %3901 = vmatmul.f32.gmra.mxu0 %v1828
        %v3902 = vpop.f32.mrf.mxu0
        %v3903 = vadd.f32 %v2001, %v3902
        %3904 = vmatmul.f32.gmra.mxu0 %v1830
        %v3905 = vpop.f32.mrf.mxu0
        %v3906 = vadd.f32 %v2001, %v3905
        %3907 = vmatmul.f32.gmra.mxu0 %v1832
        %v3908 = vpop.f32.mrf.mxu0
        %v3909 = vadd.f32 %v2001, %v3908
        %3910 = vmatmul.f32.gmra.mxu0 %v1834
        %v3911 = vpop.f32.mrf.mxu0
        %v3912 = vadd.f32 %v2001, %v3911
        %3913 = vmatmul.f32.gmra.mxu0 %v1836
        %v3914 = vpop.f32.mrf.mxu0
        %v3915 = vadd.f32 %v2001, %v3914
        %3916 = vmatmul.f32.gmra.mxu0 %v1838
        %v3917 = vpop.f32.mrf.mxu0
        %v3918 = vadd.f32 %v2001, %v3917
        %3919 = vmatmul.f32.gmra.mxu0 %v1840
        %v3920 = vpop.f32.mrf.mxu0
        %v3921 = vadd.f32 %v2001, %v3920
        %3922 = vmatmul.f32.gmra.mxu0 %v1842
        %v3923 = vpop.f32.mrf.mxu0
        %v3924 = vadd.f32 %v2001, %v3923
        %3925 = vmatmul.f32.gmra.mxu0 %v1844
        %v3926 = vpop.f32.mrf.mxu0
        %v3927 = vadd.f32 %v2001, %v3926
        %3928 = vmatmul.f32.gmra.mxu0 %v1846
        %v3929 = vpop.f32.mrf.mxu0
        %v3930 = vadd.f32 %v2001, %v3929
        %3931 = vmatmul.f32.gmra.mxu0 %v1848
        %v3932 = vpop.f32.mrf.mxu0
        %v3933 = vadd.f32 %v2001, %v3932
        %3934 = vmatmul.f32.gmra.mxu0 %v1850
        %v3935 = vpop.f32.mrf.mxu0
        %v3936 = vadd.f32 %v2001, %v3935
        %3937 = vmatmul.f32.gmra.mxu0 %v1852
        %v3938 = vpop.f32.mrf.mxu0
        %v3939 = vadd.f32 %v2001, %v3938
        %3940 = vmatmul.f32.gmra.mxu0 %v1854
        %v3941 = vpop.f32.mrf.mxu0
        %v3942 = vadd.f32 %v2001, %v3941
        %3943 = vmatmul.f32.gmra.mxu0 %v1856
        %v3944 = vpop.f32.mrf.mxu0
        %v3945 = vadd.f32 %v2001, %v3944
        %3946 = vmatmul.f32.gmra.mxu0 %v1858
        %v3947 = vpop.f32.mrf.mxu0
        %v3948 = vadd.f32 %v2001, %v3947
        %3949 = vmatmul.f32.gmra.mxu0 %v1860
        %v3950 = vpop.f32.mrf.mxu0
        %v3951 = vadd.f32 %v2001, %v3950
        %3952 = vmatmul.f32.gmra.mxu0 %v1862
        %v3953 = vpop.f32.mrf.mxu0
        %v3954 = vadd.f32 %v2001, %v3953
        %3955 = vmatmul.f32.gmra.mxu0 %v1864
        %v3956 = vpop.f32.mrf.mxu0
        %v3957 = vadd.f32 %v2001, %v3956
        %3958 = vmatmul.f32.gmra.mxu0 %v1866
        %v3959 = vpop.f32.mrf.mxu0
        %v3960 = vadd.f32 %v2001, %v3959
        %3961 = vmatmul.f32.gmra.mxu0 %v1868
        %v3962 = vpop.f32.mrf.mxu0
        %v3963 = vadd.f32 %v2001, %v3962
        %3964 = vmatmul.f32.gmra.mxu0 %v1870
        %v3965 = vpop.f32.mrf.mxu0
        %v3966 = vadd.f32 %v2001, %v3965
        %3967 = vmatmul.f32.gmra.mxu0 %v1872
        %v3968 = vpop.f32.mrf.mxu0
        %v3969 = vadd.f32 %v2001, %v3968
        %3970 = vmatmul.f32.gmra.mxu0 %v1874
        %v3971 = vpop.f32.mrf.mxu0
        %v3972 = vadd.f32 %v2001, %v3971
        %3973 = vmatmul.f32.gmra.mxu0 %v1876
        %v3974 = vpop.f32.mrf.mxu0
        %v3975 = vadd.f32 %v2001, %v3974
        %3976 = vmatmul.f32.gmra.mxu0 %v1878
        %v3977 = vpop.f32.mrf.mxu0
        %v3978 = vadd.f32 %v2001, %v3977
        %3979 = vmatmul.f32.gmra.mxu0 %v1880
        %v3980 = vpop.f32.mrf.mxu0
        %v3981 = vadd.f32 %v2001, %v3980
        %3982 = vmatmul.f32.gmra.mxu0 %v1882
        %v3983 = vpop.f32.mrf.mxu0
        %v3984 = vadd.f32 %v2001, %v3983
        %3985 = vmatmul.f32.gmra.mxu0 %v1884
        %v3986 = vpop.f32.mrf.mxu0
        %v3987 = vadd.f32 %v2001, %v3986
        %3988 = vmatmul.f32.gmra.mxu0 %v1886
        %v3989 = vpop.f32.mrf.mxu0
        %v3990 = vadd.f32 %v2001, %v3989
        %3991 = vmatmul.f32.gmra.mxu0 %v1888
        %v3992 = vpop.f32.mrf.mxu0
        %v3993 = vadd.f32 %v2001, %v3992
        %3994 = vmatmul.f32.gmra.mxu0 %v1890
        %v3995 = vpop.f32.mrf.mxu0
        %v3996 = vadd.f32 %v2001, %v3995
        %3997 = vmatmul.f32.gmra.mxu0 %v1892
        %v3998 = vpop.f32.mrf.mxu0
        %v3999 = vadd.f32 %v2001, %v3998
        %4000 = vmatmul.f32.gmra.mxu0 %v1894
        %v4001 = vpop.f32.mrf.mxu0
        %v4002 = vadd.f32 %v2001, %v4001
        %4003 = vmatmul.f32.gmra.mxu0 %v1896
        %v4004 = vpop.f32.mrf.mxu0
        %v4005 = vadd.f32 %v2001, %v4004
        %4006 = vmatmul.f32.gmra.mxu0 %v1898
        %v4007 = vpop.f32.mrf.mxu0
        %v4008 = vadd.f32 %v2001, %v4007
        %4009 = vdwg.mxu0
        %4010 = vmatpush.msra.mxu0 %v1995
        %4011 = vmatpush.msra.mxu0 %v1992
        %4012 = vmatpush.msra.mxu0 %v1989
        %4013 = vmatpush.msra.mxu0 %v1986
        %4014 = vmatpush.msra.mxu0 %v1983
        %4015 = vmatpush.msra.mxu0 %v1980
        %4016 = vmatpush.msra.mxu0 %v1977
        %4017 = vmatpush.msra.mxu0 %v1974
        %4018 = vmatpush.msra.mxu0 %v1971
        %4019 = vmatpush.msra.mxu0 %v1968
        %4020 = vmatpush.msra.mxu0 %v1965
        %4021 = vmatpush.msra.mxu0 %v1962
        %4022 = vmatpush.msra.mxu0 %v1959
        %4023 = vmatpush.msra.mxu0 %v1956
        %4024 = vmatpush.msra.mxu0 %v1953
        %4025 = vmatpush.msra.mxu0 %v1950
        %4026 = vmatmul.f32.gmra.mxu0 %v1645
        %v4027 = vpop.f32.mrf.mxu0
        %v4028 = vadd.f32 %v3627, %v4027
        %4029 = vmatmul.f32.gmra.mxu0 %v1647
        %v4030 = vpop.f32.mrf.mxu0
        %v4031 = vadd.f32 %v3630, %v4030
        %4032 = vmatmul.f32.gmra.mxu0 %v1649
        %v4033 = vpop.f32.mrf.mxu0
        %v4034 = vadd.f32 %v3633, %v4033
        %4035 = vmatmul.f32.gmra.mxu0 %v1651
        %v4036 = vpop.f32.mrf.mxu0
        %v4037 = vadd.f32 %v3636, %v4036
        %4038 = vmatmul.f32.gmra.mxu0 %v1653
        %v4039 = vpop.f32.mrf.mxu0
        %v4040 = vadd.f32 %v3639, %v4039
        %4041 = vmatmul.f32.gmra.mxu0 %v1655
        %v4042 = vpop.f32.mrf.mxu0
        %v4043 = vadd.f32 %v3642, %v4042
        %4044 = vmatmul.f32.gmra.mxu0 %v1657
        %v4045 = vpop.f32.mrf.mxu0
        %v4046 = vadd.f32 %v3645, %v4045
        %4047 = vmatmul.f32.gmra.mxu0 %v1659
        %v4048 = vpop.f32.mrf.mxu0
        %v4049 = vadd.f32 %v3648, %v4048
        %4050 = vmatmul.f32.gmra.mxu0 %v1661
        %v4051 = vpop.f32.mrf.mxu0
        %v4052 = vadd.f32 %v3651, %v4051
        %4053 = vmatmul.f32.gmra.mxu0 %v1663
        %v4054 = vpop.f32.mrf.mxu0
        %v4055 = vadd.f32 %v3654, %v4054
        %4056 = vmatmul.f32.gmra.mxu0 %v1665
        %v4057 = vpop.f32.mrf.mxu0
        %v4058 = vadd.f32 %v3657, %v4057
        %4059 = vmatmul.f32.gmra.mxu0 %v1667
        %v4060 = vpop.f32.mrf.mxu0
        %v4061 = vadd.f32 %v3660, %v4060
        %4062 = vmatmul.f32.gmra.mxu0 %v1669
        %v4063 = vpop.f32.mrf.mxu0
        %v4064 = vadd.f32 %v3663, %v4063
        %4065 = vmatmul.f32.gmra.mxu0 %v1671
        %v4066 = vpop.f32.mrf.mxu0
        %v4067 = vadd.f32 %v3666, %v4066
        %4068 = vmatmul.f32.gmra.mxu0 %v1673
        %v4069 = vpop.f32.mrf.mxu0
        %v4070 = vadd.f32 %v3669, %v4069
        %4071 = vmatmul.f32.gmra.mxu0 %v1675
        %v4072 = vpop.f32.mrf.mxu0
        %v4073 = vadd.f32 %v3672, %v4072
        %4074 = vmatmul.f32.gmra.mxu0 %v1677
        %v4075 = vpop.f32.mrf.mxu0
        %v4076 = vadd.f32 %v3675, %v4075
        %4077 = vmatmul.f32.gmra.mxu0 %v1679
        %v4078 = vpop.f32.mrf.mxu0
        %v4079 = vadd.f32 %v3678, %v4078
        %4080 = vmatmul.f32.gmra.mxu0 %v1681
        %v4081 = vpop.f32.mrf.mxu0
        %v4082 = vadd.f32 %v3681, %v4081
        %4083 = vmatmul.f32.gmra.mxu0 %v1683
        %v4084 = vpop.f32.mrf.mxu0
        %v4085 = vadd.f32 %v3684, %v4084
        %4086 = vmatmul.f32.gmra.mxu0 %v1685
        %v4087 = vpop.f32.mrf.mxu0
        %v4088 = vadd.f32 %v3687, %v4087
        %4089 = vmatmul.f32.gmra.mxu0 %v1687
        %v4090 = vpop.f32.mrf.mxu0
        %v4091 = vadd.f32 %v3690, %v4090
        %4092 = vmatmul.f32.gmra.mxu0 %v1689
        %v4093 = vpop.f32.mrf.mxu0
        %v4094 = vadd.f32 %v3693, %v4093
        %4095 = vmatmul.f32.gmra.mxu0 %v1691
        %v4096 = vpop.f32.mrf.mxu0
        %v4097 = vadd.f32 %v3696, %v4096
        %4098 = vmatmul.f32.gmra.mxu0 %v1693
        %v4099 = vpop.f32.mrf.mxu0
        %v4100 = vadd.f32 %v3699, %v4099
        %4101 = vmatmul.f32.gmra.mxu0 %v1695
        %v4102 = vpop.f32.mrf.mxu0
        %v4103 = vadd.f32 %v3702, %v4102
        %4104 = vmatmul.f32.gmra.mxu0 %v1697
        %v4105 = vpop.f32.mrf.mxu0
        %v4106 = vadd.f32 %v3705, %v4105
        %4107 = vmatmul.f32.gmra.mxu0 %v1699
        %v4108 = vpop.f32.mrf.mxu0
        %v4109 = vadd.f32 %v3708, %v4108
        %4110 = vmatmul.f32.gmra.mxu0 %v1701
        %v4111 = vpop.f32.mrf.mxu0
        %v4112 = vadd.f32 %v3711, %v4111
        %4113 = vmatmul.f32.gmra.mxu0 %v1703
        %v4114 = vpop.f32.mrf.mxu0
        %v4115 = vadd.f32 %v3714, %v4114
        %4116 = vmatmul.f32.gmra.mxu0 %v1705
        %v4117 = vpop.f32.mrf.mxu0
        %v4118 = vadd.f32 %v3717, %v4117
        %4119 = vmatmul.f32.gmra.mxu0 %v1707
        %v4120 = vpop.f32.mrf.mxu0
        %v4121 = vadd.f32 %v3720, %v4120
        %4122 = vmatmul.f32.gmra.mxu0 %v1709
        %v4123 = vpop.f32.mrf.mxu0
        %v4124 = vadd.f32 %v3723, %v4123
        %4125 = vmatmul.f32.gmra.mxu0 %v1711
        %v4126 = vpop.f32.mrf.mxu0
        %v4127 = vadd.f32 %v3726, %v4126
        %4128 = vmatmul.f32.gmra.mxu0 %v1713
        %v4129 = vpop.f32.mrf.mxu0
        %v4130 = vadd.f32 %v3729, %v4129
        %4131 = vmatmul.f32.gmra.mxu0 %v1715
        %v4132 = vpop.f32.mrf.mxu0
        %v4133 = vadd.f32 %v3732, %v4132
        %4134 = vmatmul.f32.gmra.mxu0 %v1717
        %v4135 = vpop.f32.mrf.mxu0
        %v4136 = vadd.f32 %v3735, %v4135
        %4137 = vmatmul.f32.gmra.mxu0 %v1719
        %v4138 = vpop.f32.mrf.mxu0
        %v4139 = vadd.f32 %v3738, %v4138
        %4140 = vmatmul.f32.gmra.mxu0 %v1721
        %v4141 = vpop.f32.mrf.mxu0
        %v4142 = vadd.f32 %v3741, %v4141
        %4143 = vmatmul.f32.gmra.mxu0 %v1723
        %v4144 = vpop.f32.mrf.mxu0
        %v4145 = vadd.f32 %v3744, %v4144
        %4146 = vmatmul.f32.gmra.mxu0 %v1725
        %v4147 = vpop.f32.mrf.mxu0
        %v4148 = vadd.f32 %v3747, %v4147
        %4149 = vmatmul.f32.gmra.mxu0 %v1727
        %v4150 = vpop.f32.mrf.mxu0
        %v4151 = vadd.f32 %v3750, %v4150
        %4152 = vmatmul.f32.gmra.mxu0 %v1729
        %v4153 = vpop.f32.mrf.mxu0
        %v4154 = vadd.f32 %v3753, %v4153
        %4155 = vmatmul.f32.gmra.mxu0 %v1731
        %v4156 = vpop.f32.mrf.mxu0
        %v4157 = vadd.f32 %v3756, %v4156
        %4158 = vmatmul.f32.gmra.mxu0 %v1733
        %v4159 = vpop.f32.mrf.mxu0
        %v4160 = vadd.f32 %v3759, %v4159
        %4161 = vmatmul.f32.gmra.mxu0 %v1735
        %v4162 = vpop.f32.mrf.mxu0
        %v4163 = vadd.f32 %v3762, %v4162
        %4164 = vmatmul.f32.gmra.mxu0 %v1737
        %v4165 = vpop.f32.mrf.mxu0
        %v4166 = vadd.f32 %v3765, %v4165
        %4167 = vmatmul.f32.gmra.mxu0 %v1739
        %v4168 = vpop.f32.mrf.mxu0
        %v4169 = vadd.f32 %v3768, %v4168
        %4170 = vmatmul.f32.gmra.mxu0 %v1741
        %v4171 = vpop.f32.mrf.mxu0
        %v4172 = vadd.f32 %v3771, %v4171
        %4173 = vmatmul.f32.gmra.mxu0 %v1743
        %v4174 = vpop.f32.mrf.mxu0
        %v4175 = vadd.f32 %v3774, %v4174
        %4176 = vmatmul.f32.gmra.mxu0 %v1745
        %v4177 = vpop.f32.mrf.mxu0
        %v4178 = vadd.f32 %v3777, %v4177
        %4179 = vmatmul.f32.gmra.mxu0 %v1747
        %v4180 = vpop.f32.mrf.mxu0
        %v4181 = vadd.f32 %v3780, %v4180
        %4182 = vmatmul.f32.gmra.mxu0 %v1749
        %v4183 = vpop.f32.mrf.mxu0
        %v4184 = vadd.f32 %v3783, %v4183
        %4185 = vmatmul.f32.gmra.mxu0 %v1751
        %v4186 = vpop.f32.mrf.mxu0
        %v4187 = vadd.f32 %v3786, %v4186
        %4188 = vmatmul.f32.gmra.mxu0 %v1753
        %v4189 = vpop.f32.mrf.mxu0
        %v4190 = vadd.f32 %v3789, %v4189
        %4191 = vmatmul.f32.gmra.mxu0 %v1755
        %v4192 = vpop.f32.mrf.mxu0
        %v4193 = vadd.f32 %v3792, %v4192
        %4194 = vmatmul.f32.gmra.mxu0 %v1757
        %v4195 = vpop.f32.mrf.mxu0
        %v4196 = vadd.f32 %v3795, %v4195
        %4197 = vmatmul.f32.gmra.mxu0 %v1759
        %v4198 = vpop.f32.mrf.mxu0
        %v4199 = vadd.f32 %v3798, %v4198
        %4200 = vmatmul.f32.gmra.mxu0 %v1761
        %v4201 = vpop.f32.mrf.mxu0
        %v4202 = vadd.f32 %v3801, %v4201
        %4203 = vmatmul.f32.gmra.mxu0 %v1763
        %v4204 = vpop.f32.mrf.mxu0
        %v4205 = vadd.f32 %v3804, %v4204
        %4206 = vmatmul.f32.gmra.mxu0 %v1765
        %v4207 = vpop.f32.mrf.mxu0
        %v4208 = vadd.f32 %v3807, %v4207
        %4209 = vmatmul.f32.gmra.mxu0 %v1767
        %v4210 = vpop.f32.mrf.mxu0
        %v4211 = vadd.f32 %v3810, %v4210
        %4212 = vmatmul.f32.gmra.mxu0 %v1769
        %v4213 = vpop.f32.mrf.mxu0
        %v4214 = vadd.f32 %v3813, %v4213
        %4215 = vmatmul.f32.gmra.mxu0 %v1771
        %v4216 = vpop.f32.mrf.mxu0
        %v4217 = vadd.f32 %v3816, %v4216
        %4218 = vmatmul.f32.gmra.mxu0 %v1773
        %v4219 = vpop.f32.mrf.mxu0
        %v4220 = vadd.f32 %v3819, %v4219
        %4221 = vmatmul.f32.gmra.mxu0 %v1775
        %v4222 = vpop.f32.mrf.mxu0
        %v4223 = vadd.f32 %v3822, %v4222
        %4224 = vmatmul.f32.gmra.mxu0 %v1777
        %v4225 = vpop.f32.mrf.mxu0
        %v4226 = vadd.f32 %v3825, %v4225
        %4227 = vmatmul.f32.gmra.mxu0 %v1779
        %v4228 = vpop.f32.mrf.mxu0
        %v4229 = vadd.f32 %v3828, %v4228
        %4230 = vmatmul.f32.gmra.mxu0 %v1781
        %v4231 = vpop.f32.mrf.mxu0
        %v4232 = vadd.f32 %v3831, %v4231
        %4233 = vmatmul.f32.gmra.mxu0 %v1783
        %v4234 = vpop.f32.mrf.mxu0
        %v4235 = vadd.f32 %v3834, %v4234
        %4236 = vmatmul.f32.gmra.mxu0 %v1785
        %v4237 = vpop.f32.mrf.mxu0
        %v4238 = vadd.f32 %v3837, %v4237
        %4239 = vmatmul.f32.gmra.mxu0 %v1787
        %v4240 = vpop.f32.mrf.mxu0
        %v4241 = vadd.f32 %v3840, %v4240
        %4242 = vmatmul.f32.gmra.mxu0 %v1789
        %v4243 = vpop.f32.mrf.mxu0
        %v4244 = vadd.f32 %v3843, %v4243
        %4245 = vmatmul.f32.gmra.mxu0 %v1791
        %v4246 = vpop.f32.mrf.mxu0
        %v4247 = vadd.f32 %v3846, %v4246
        %4248 = vmatmul.f32.gmra.mxu0 %v1793
        %v4249 = vpop.f32.mrf.mxu0
        %v4250 = vadd.f32 %v3849, %v4249
        %4251 = vmatmul.f32.gmra.mxu0 %v1795
        %v4252 = vpop.f32.mrf.mxu0
        %v4253 = vadd.f32 %v3852, %v4252
        %4254 = vmatmul.f32.gmra.mxu0 %v1797
        %v4255 = vpop.f32.mrf.mxu0
        %v4256 = vadd.f32 %v3855, %v4255
        %4257 = vmatmul.f32.gmra.mxu0 %v1799
        %v4258 = vpop.f32.mrf.mxu0
        %v4259 = vadd.f32 %v3858, %v4258
        %4260 = vmatmul.f32.gmra.mxu0 %v1801
        %v4261 = vpop.f32.mrf.mxu0
        %v4262 = vadd.f32 %v3861, %v4261
        %4263 = vmatmul.f32.gmra.mxu0 %v1803
        %v4264 = vpop.f32.mrf.mxu0
        %v4265 = vadd.f32 %v3864, %v4264
        %4266 = vmatmul.f32.gmra.mxu0 %v1805
        %v4267 = vpop.f32.mrf.mxu0
        %v4268 = vadd.f32 %v3867, %v4267
        %4269 = vmatmul.f32.gmra.mxu0 %v1807
        %v4270 = vpop.f32.mrf.mxu0
        %v4271 = vadd.f32 %v3870, %v4270
        %4272 = vmatmul.f32.gmra.mxu0 %v1809
        %v4273 = vpop.f32.mrf.mxu0
        %v4274 = vadd.f32 %v3873, %v4273
        %4275 = vmatmul.f32.gmra.mxu0 %v1811
        %v4276 = vpop.f32.mrf.mxu0
        %v4277 = vadd.f32 %v3876, %v4276
        %4278 = vmatmul.f32.gmra.mxu0 %v1813
        %v4279 = vpop.f32.mrf.mxu0
        %v4280 = vadd.f32 %v3879, %v4279
        %4281 = vmatmul.f32.gmra.mxu0 %v1815
        %v4282 = vpop.f32.mrf.mxu0
        %v4283 = vadd.f32 %v3882, %v4282
        %4284 = vmatmul.f32.gmra.mxu0 %v1817
        %v4285 = vpop.f32.mrf.mxu0
        %v4286 = vadd.f32 %v3885, %v4285
        %4287 = vmatmul.f32.gmra.mxu0 %v1819
        %v4288 = vpop.f32.mrf.mxu0
        %v4289 = vadd.f32 %v3888, %v4288
        %4290 = vmatmul.f32.gmra.mxu0 %v1821
        %v4291 = vpop.f32.mrf.mxu0
        %v4292 = vadd.f32 %v3891, %v4291
        %4293 = vmatmul.f32.gmra.mxu0 %v1823
        %v4294 = vpop.f32.mrf.mxu0
        %v4295 = vadd.f32 %v3894, %v4294
        %4296 = vmatmul.f32.gmra.mxu0 %v1825
        %v4297 = vpop.f32.mrf.mxu0
        %v4298 = vadd.f32 %v3897, %v4297
        %4299 = vmatmul.f32.gmra.mxu0 %v1827
        %v4300 = vpop.f32.mrf.mxu0
        %v4301 = vadd.f32 %v3900, %v4300
        %4302 = vmatmul.f32.gmra.mxu0 %v1829
        %v4303 = vpop.f32.mrf.mxu0
        %v4304 = vadd.f32 %v3903, %v4303
        %4305 = vmatmul.f32.gmra.mxu0 %v1831
        %v4306 = vpop.f32.mrf.mxu0
        %v4307 = vadd.f32 %v3906, %v4306
        %4308 = vmatmul.f32.gmra.mxu0 %v1833
        %v4309 = vpop.f32.mrf.mxu0
        %v4310 = vadd.f32 %v3909, %v4309
        %4311 = vmatmul.f32.gmra.mxu0 %v1835
        %v4312 = vpop.f32.mrf.mxu0
        %v4313 = vadd.f32 %v3912, %v4312
        %4314 = vmatmul.f32.gmra.mxu0 %v1837
        %v4315 = vpop.f32.mrf.mxu0
        %v4316 = vadd.f32 %v3915, %v4315
        %4317 = vmatmul.f32.gmra.mxu0 %v1839
        %v4318 = vpop.f32.mrf.mxu0
        %v4319 = vadd.f32 %v3918, %v4318
        %4320 = vmatmul.f32.gmra.mxu0 %v1841
        %v4321 = vpop.f32.mrf.mxu0
        %v4322 = vadd.f32 %v3921, %v4321
        %4323 = vmatmul.f32.gmra.mxu0 %v1843
        %v4324 = vpop.f32.mrf.mxu0
        %v4325 = vadd.f32 %v3924, %v4324
        %4326 = vmatmul.f32.gmra.mxu0 %v1845
        %v4327 = vpop.f32.mrf.mxu0
        %v4328 = vadd.f32 %v3927, %v4327
        %4329 = vmatmul.f32.gmra.mxu0 %v1847
        %v4330 = vpop.f32.mrf.mxu0
        %v4331 = vadd.f32 %v3930, %v4330
        %4332 = vmatmul.f32.gmra.mxu0 %v1849
        %v4333 = vpop.f32.mrf.mxu0
        %v4334 = vadd.f32 %v3933, %v4333
        %4335 = vmatmul.f32.gmra.mxu0 %v1851
        %v4336 = vpop.f32.mrf.mxu0
        %v4337 = vadd.f32 %v3936, %v4336
        %4338 = vmatmul.f32.gmra.mxu0 %v1853
        %v4339 = vpop.f32.mrf.mxu0
        %v4340 = vadd.f32 %v3939, %v4339
        %4341 = vmatmul.f32.gmra.mxu0 %v1855
        %v4342 = vpop.f32.mrf.mxu0
        %v4343 = vadd.f32 %v3942, %v4342
        %4344 = vmatmul.f32.gmra.mxu0 %v1857
        %v4345 = vpop.f32.mrf.mxu0
        %v4346 = vadd.f32 %v3945, %v4345
        %4347 = vmatmul.f32.gmra.mxu0 %v1859
        %v4348 = vpop.f32.mrf.mxu0
        %v4349 = vadd.f32 %v3948, %v4348
        %4350 = vmatmul.f32.gmra.mxu0 %v1861
        %v4351 = vpop.f32.mrf.mxu0
        %v4352 = vadd.f32 %v3951, %v4351
        %4353 = vmatmul.f32.gmra.mxu0 %v1863
        %v4354 = vpop.f32.mrf.mxu0
        %v4355 = vadd.f32 %v3954, %v4354
        %4356 = vmatmul.f32.gmra.mxu0 %v1865
        %v4357 = vpop.f32.mrf.mxu0
        %v4358 = vadd.f32 %v3957, %v4357
        %4359 = vmatmul.f32.gmra.mxu0 %v1867
        %v4360 = vpop.f32.mrf.mxu0
        %v4361 = vadd.f32 %v3960, %v4360
        %4362 = vmatmul.f32.gmra.mxu0 %v1869
        %v4363 = vpop.f32.mrf.mxu0
        %v4364 = vadd.f32 %v3963, %v4363
        %4365 = vmatmul.f32.gmra.mxu0 %v1871
        %v4366 = vpop.f32.mrf.mxu0
        %v4367 = vadd.f32 %v3966, %v4366
        %4368 = vmatmul.f32.gmra.mxu0 %v1873
        %v4369 = vpop.f32.mrf.mxu0
        %v4370 = vadd.f32 %v3969, %v4369
        %4371 = vmatmul.f32.gmra.mxu0 %v1875
        %v4372 = vpop.f32.mrf.mxu0
        %v4373 = vadd.f32 %v3972, %v4372
        %4374 = vmatmul.f32.gmra.mxu0 %v1877
        %v4375 = vpop.f32.mrf.mxu0
        %v4376 = vadd.f32 %v3975, %v4375
        %4377 = vmatmul.f32.gmra.mxu0 %v1879
        %v4378 = vpop.f32.mrf.mxu0
        %v4379 = vadd.f32 %v3978, %v4378
        %4380 = vmatmul.f32.gmra.mxu0 %v1881
        %v4381 = vpop.f32.mrf.mxu0
        %v4382 = vadd.f32 %v3981, %v4381
        %4383 = vmatmul.f32.gmra.mxu0 %v1883
        %v4384 = vpop.f32.mrf.mxu0
        %v4385 = vadd.f32 %v3984, %v4384
        %4386 = vmatmul.f32.gmra.mxu0 %v1885
        %v4387 = vpop.f32.mrf.mxu0
        %v4388 = vadd.f32 %v3987, %v4387
        %4389 = vmatmul.f32.gmra.mxu0 %v1887
        %v4390 = vpop.f32.mrf.mxu0
        %v4391 = vadd.f32 %v3990, %v4390
        %4392 = vmatmul.f32.gmra.mxu0 %v1889
        %v4393 = vpop.f32.mrf.mxu0
        %v4394 = vadd.f32 %v3993, %v4393
        %4395 = vmatmul.f32.gmra.mxu0 %v1891
        %v4396 = vpop.f32.mrf.mxu0
        %v4397 = vadd.f32 %v3996, %v4396
        %4398 = vmatmul.f32.gmra.mxu0 %v1893
        %v4399 = vpop.f32.mrf.mxu0
        %v4400 = vadd.f32 %v3999, %v4399
        %4401 = vmatmul.f32.gmra.mxu0 %v1895
        %v4402 = vpop.f32.mrf.mxu0
        %v4403 = vadd.f32 %v4002, %v4402
        %4404 = vmatmul.f32.gmra.mxu0 %v1897
        %v4405 = vpop.f32.mrf.mxu0
        %v4406 = vadd.f32 %v4005, %v4405
        %4407 = vmatmul.f32.gmra.mxu0 %v1899
        %v4408 = vpop.f32.mrf.mxu0
        %v4409 = vadd.f32 %v4008, %v4408
        %4410 = vdwg.mxu0
        %v4411 = vmax.f32 %v2424, 0.0
        %v4412 = vmax.f32 %v3226, 0.0
        %v4413 = vmax.f32 %v4028, 0.0
        %v4414 = vmax.f32 %v2427, 0.0
        %v4415 = vmax.f32 %v3229, 0.0
        %v4416 = vmax.f32 %v4031, 0.0
        %v4417 = vmax.f32 %v2430, 0.0
        %v4418 = vmax.f32 %v3232, 0.0
        %v4419 = vmax.f32 %v4034, 0.0
        %v4420 = vmax.f32 %v2433, 0.0
        %v4421 = vmax.f32 %v3235, 0.0
        %v4422 = vmax.f32 %v4037, 0.0
        %v4423 = vmax.f32 %v2436, 0.0
        %v4424 = vmax.f32 %v3238, 0.0
        %v4425 = vmax.f32 %v4040, 0.0
        %v4426 = vmax.f32 %v2439, 0.0
        %v4427 = vmax.f32 %v3241, 0.0
        %v4428 = vmax.f32 %v4043, 0.0
        %v4429 = vmax.f32 %v2442, 0.0
        %v4430 = vmax.f32 %v3244, 0.0
        %v4431 = vmax.f32 %v4046, 0.0
        %v4432 = vmax.f32 %v2445, 0.0
        %v4433 = vmax.f32 %v3247, 0.0
        %v4434 = vmax.f32 %v4049, 0.0
        %v4435 = vmax.f32 %v2448, 0.0
        %v4436 = vmax.f32 %v3250, 0.0
        %v4437 = vmax.f32 %v4052, 0.0
        %v4438 = vmax.f32 %v2451, 0.0
        %v4439 = vmax.f32 %v3253, 0.0
        %v4440 = vmax.f32 %v4055, 0.0
        %v4441 = vmax.f32 %v2454, 0.0
        %v4442 = vmax.f32 %v3256, 0.0
        %v4443 = vmax.f32 %v4058, 0.0
        %v4444 = vmax.f32 %v2457, 0.0
        %v4445 = vmax.f32 %v3259, 0.0
        %v4446 = vmax.f32 %v4061, 0.0
        %v4447 = vmax.f32 %v2460, 0.0
        %v4448 = vmax.f32 %v3262, 0.0
        %v4449 = vmax.f32 %v4064, 0.0
        %v4450 = vmax.f32 %v2463, 0.0
        %v4451 = vmax.f32 %v3265, 0.0
        %v4452 = vmax.f32 %v4067, 0.0
        %v4453 = vmax.f32 %v2466, 0.0
        %v4454 = vmax.f32 %v3268, 0.0
        %v4455 = vmax.f32 %v4070, 0.0
        %v4456 = vmax.f32 %v2469, 0.0
        %v4457 = vmax.f32 %v3271, 0.0
        %v4458 = vmax.f32 %v4073, 0.0
        %v4459 = vmax.f32 %v2472, 0.0
        %v4460 = vmax.f32 %v3274, 0.0
        %v4461 = vmax.f32 %v4076, 0.0
        %v4462 = vmax.f32 %v2475, 0.0
        %v4463 = vmax.f32 %v3277, 0.0
        %v4464 = vmax.f32 %v4079, 0.0
        %v4465 = vmax.f32 %v2478, 0.0
        %v4466 = vmax.f32 %v3280, 0.0
        %v4467 = vmax.f32 %v4082, 0.0
        %v4468 = vmax.f32 %v2481, 0.0
        %v4469 = vmax.f32 %v3283, 0.0
        %v4470 = vmax.f32 %v4085, 0.0
        %v4471 = vmax.f32 %v2484, 0.0
        %v4472 = vmax.f32 %v3286, 0.0
        %v4473 = vmax.f32 %v4088, 0.0
        %v4474 = vmax.f32 %v2487, 0.0
        %v4475 = vmax.f32 %v3289, 0.0
        %v4476 = vmax.f32 %v4091, 0.0
        %v4477 = vmax.f32 %v2490, 0.0
        %v4478 = vmax.f32 %v3292, 0.0
        %v4479 = vmax.f32 %v4094, 0.0
        %v4480 = vmax.f32 %v2493, 0.0
        %v4481 = vmax.f32 %v3295, 0.0
        %v4482 = vmax.f32 %v4097, 0.0
        %v4483 = vmax.f32 %v2496, 0.0
        %v4484 = vmax.f32 %v3298, 0.0
        %v4485 = vmax.f32 %v4100, 0.0
        %v4486 = vmax.f32 %v2499, 0.0
        %v4487 = vmax.f32 %v3301, 0.0
        %v4488 = vmax.f32 %v4103, 0.0
        %v4489 = vmax.f32 %v2502, 0.0
        %v4490 = vmax.f32 %v3304, 0.0
        %v4491 = vmax.f32 %v4106, 0.0
        %v4492 = vmax.f32 %v2505, 0.0
        %v4493 = vmax.f32 %v3307, 0.0
        %v4494 = vmax.f32 %v4109, 0.0
        %v4495 = vmax.f32 %v2508, 0.0
        %v4496 = vmax.f32 %v3310, 0.0
        %v4497 = vmax.f32 %v4112, 0.0
        %v4498 = vmax.f32 %v2511, 0.0
        %v4499 = vmax.f32 %v3313, 0.0
        %v4500 = vmax.f32 %v4115, 0.0
        %v4501 = vmax.f32 %v2514, 0.0
        %v4502 = vmax.f32 %v3316, 0.0
        %v4503 = vmax.f32 %v4118, 0.0
        %v4504 = vmax.f32 %v2517, 0.0
        %v4505 = vmax.f32 %v3319, 0.0
        %v4506 = vmax.f32 %v4121, 0.0
        %v4507 = vmax.f32 %v2520, 0.0
        %v4508 = vmax.f32 %v3322, 0.0
        %v4509 = vmax.f32 %v4124, 0.0
        %v4510 = vmax.f32 %v2523, 0.0
        %v4511 = vmax.f32 %v3325, 0.0
        %v4512 = vmax.f32 %v4127, 0.0
        %v4513 = vmax.f32 %v2526, 0.0
        %v4514 = vmax.f32 %v3328, 0.0
        %v4515 = vmax.f32 %v4130, 0.0
        %v4516 = vmax.f32 %v2529, 0.0
        %v4517 = vmax.f32 %v3331, 0.0
        %v4518 = vmax.f32 %v4133, 0.0
        %v4519 = vmax.f32 %v2532, 0.0
        %v4520 = vmax.f32 %v3334, 0.0
        %v4521 = vmax.f32 %v4136, 0.0
        %v4522 = vmax.f32 %v2535, 0.0
        %v4523 = vmax.f32 %v3337, 0.0
        %v4524 = vmax.f32 %v4139, 0.0
        %v4525 = vmax.f32 %v2538, 0.0
        %v4526 = vmax.f32 %v3340, 0.0
        %v4527 = vmax.f32 %v4142, 0.0
        %v4528 = vmax.f32 %v2541, 0.0
        %v4529 = vmax.f32 %v3343, 0.0
        %v4530 = vmax.f32 %v4145, 0.0
        %v4531 = vmax.f32 %v2544, 0.0
        %v4532 = vmax.f32 %v3346, 0.0
        %v4533 = vmax.f32 %v4148, 0.0
        %v4534 = vmax.f32 %v2547, 0.0
        %v4535 = vmax.f32 %v3349, 0.0
        %v4536 = vmax.f32 %v4151, 0.0
        %v4537 = vmax.f32 %v2550, 0.0
        %v4538 = vmax.f32 %v3352, 0.0
        %v4539 = vmax.f32 %v4154, 0.0
        %v4540 = vmax.f32 %v2553, 0.0
        %v4541 = vmax.f32 %v3355, 0.0
        %v4542 = vmax.f32 %v4157, 0.0
        %v4543 = vmax.f32 %v2556, 0.0
        %v4544 = vmax.f32 %v3358, 0.0
        %v4545 = vmax.f32 %v4160, 0.0
        %v4546 = vmax.f32 %v2559, 0.0
        %v4547 = vmax.f32 %v3361, 0.0
        %v4548 = vmax.f32 %v4163, 0.0
        %v4549 = vmax.f32 %v2562, 0.0
        %v4550 = vmax.f32 %v3364, 0.0
        %v4551 = vmax.f32 %v4166, 0.0
        %v4552 = vmax.f32 %v2565, 0.0
        %v4553 = vmax.f32 %v3367, 0.0
        %v4554 = vmax.f32 %v4169, 0.0
        %v4555 = vmax.f32 %v2568, 0.0
        %v4556 = vmax.f32 %v3370, 0.0
        %v4557 = vmax.f32 %v4172, 0.0
        %v4558 = vmax.f32 %v2571, 0.0
        %v4559 = vmax.f32 %v3373, 0.0
        %v4560 = vmax.f32 %v4175, 0.0
        %v4561 = vmax.f32 %v2574, 0.0
        %v4562 = vmax.f32 %v3376, 0.0
        %v4563 = vmax.f32 %v4178, 0.0
        %v4564 = vmax.f32 %v2577, 0.0
        %v4565 = vmax.f32 %v3379, 0.0
        %v4566 = vmax.f32 %v4181, 0.0
        %v4567 = vmax.f32 %v2580, 0.0
        %v4568 = vmax.f32 %v3382, 0.0
        %v4569 = vmax.f32 %v4184, 0.0
        %v4570 = vmax.f32 %v2583, 0.0
        %v4571 = vmax.f32 %v3385, 0.0
        %v4572 = vmax.f32 %v4187, 0.0
        %v4573 = vmax.f32 %v2586, 0.0
        %v4574 = vmax.f32 %v3388, 0.0
        %v4575 = vmax.f32 %v4190, 0.0
        %v4576 = vmax.f32 %v2589, 0.0
        %v4577 = vmax.f32 %v3391, 0.0
        %v4578 = vmax.f32 %v4193, 0.0
        %v4579 = vmax.f32 %v2592, 0.0
        %v4580 = vmax.f32 %v3394, 0.0
        %v4581 = vmax.f32 %v4196, 0.0
        %v4582 = vmax.f32 %v2595, 0.0
        %v4583 = vmax.f32 %v3397, 0.0
        %v4584 = vmax.f32 %v4199, 0.0
        %v4585 = vmax.f32 %v2598, 0.0
        %v4586 = vmax.f32 %v3400, 0.0
        %v4587 = vmax.f32 %v4202, 0.0
        %v4588 = vmax.f32 %v2601, 0.0
        %v4589 = vmax.f32 %v3403, 0.0
        %v4590 = vmax.f32 %v4205, 0.0
        %v4591 = vmax.f32 %v2604, 0.0
        %v4592 = vmax.f32 %v3406, 0.0
        %v4593 = vmax.f32 %v4208, 0.0
        %v4594 = vmax.f32 %v2607, 0.0
        %v4595 = vmax.f32 %v3409, 0.0
        %v4596 = vmax.f32 %v4211, 0.0
        %v4597 = vmax.f32 %v2610, 0.0
        %v4598 = vmax.f32 %v3412, 0.0
        %v4599 = vmax.f32 %v4214, 0.0
        %v4600 = vmax.f32 %v2613, 0.0
        %v4601 = vmax.f32 %v3415, 0.0
        %v4602 = vmax.f32 %v4217, 0.0
        %v4603 = vmax.f32 %v2616, 0.0
        %v4604 = vmax.f32 %v3418, 0.0
        %v4605 = vmax.f32 %v4220, 0.0
        %v4606 = vmax.f32 %v2619, 0.0
        %v4607 = vmax.f32 %v3421, 0.0
        %v4608 = vmax.f32 %v4223, 0.0
        %v4609 = vmax.f32 %v2622, 0.0
        %v4610 = vmax.f32 %v3424, 0.0
        %v4611 = vmax.f32 %v4226, 0.0
        %v4612 = vmax.f32 %v2625, 0.0
        %v4613 = vmax.f32 %v3427, 0.0
        %v4614 = vmax.f32 %v4229, 0.0
        %v4615 = vmax.f32 %v2628, 0.0
        %v4616 = vmax.f32 %v3430, 0.0
        %v4617 = vmax.f32 %v4232, 0.0
        %v4618 = vmax.f32 %v2631, 0.0
        %v4619 = vmax.f32 %v3433, 0.0
        %v4620 = vmax.f32 %v4235, 0.0
        %v4621 = vmax.f32 %v2634, 0.0
        %v4622 = vmax.f32 %v3436, 0.0
        %v4623 = vmax.f32 %v4238, 0.0
        %v4624 = vmax.f32 %v2637, 0.0
        %v4625 = vmax.f32 %v3439, 0.0
        %v4626 = vmax.f32 %v4241, 0.0
        %v4627 = vmax.f32 %v2640, 0.0
        %v4628 = vmax.f32 %v3442, 0.0
        %v4629 = vmax.f32 %v4244, 0.0
        %v4630 = vmax.f32 %v2643, 0.0
        %v4631 = vmax.f32 %v3445, 0.0
        %v4632 = vmax.f32 %v4247, 0.0
        %v4633 = vmax.f32 %v2646, 0.0
        %v4634 = vmax.f32 %v3448, 0.0
        %v4635 = vmax.f32 %v4250, 0.0
        %v4636 = vmax.f32 %v2649, 0.0
        %v4637 = vmax.f32 %v3451, 0.0
        %v4638 = vmax.f32 %v4253, 0.0
        %v4639 = vmax.f32 %v2652, 0.0
        %v4640 = vmax.f32 %v3454, 0.0
        %v4641 = vmax.f32 %v4256, 0.0
        %v4642 = vmax.f32 %v2655, 0.0
        %v4643 = vmax.f32 %v3457, 0.0
        %v4644 = vmax.f32 %v4259, 0.0
        %v4645 = vmax.f32 %v2658, 0.0
        %v4646 = vmax.f32 %v3460, 0.0
        %v4647 = vmax.f32 %v4262, 0.0
        %v4648 = vmax.f32 %v2661, 0.0
        %v4649 = vmax.f32 %v3463, 0.0
        %v4650 = vmax.f32 %v4265, 0.0
        %v4651 = vmax.f32 %v2664, 0.0
        %v4652 = vmax.f32 %v3466, 0.0
        %v4653 = vmax.f32 %v4268, 0.0
        %v4654 = vmax.f32 %v2667, 0.0
        %v4655 = vmax.f32 %v3469, 0.0
        %v4656 = vmax.f32 %v4271, 0.0
        %v4657 = vmax.f32 %v2670, 0.0
        %v4658 = vmax.f32 %v3472, 0.0
        %v4659 = vmax.f32 %v4274, 0.0
        %v4660 = vmax.f32 %v2673, 0.0
        %v4661 = vmax.f32 %v3475, 0.0
        %v4662 = vmax.f32 %v4277, 0.0
        %v4663 = vmax.f32 %v2676, 0.0
        %v4664 = vmax.f32 %v3478, 0.0
        %v4665 = vmax.f32 %v4280, 0.0
        %v4666 = vmax.f32 %v2679, 0.0
        %v4667 = vmax.f32 %v3481, 0.0
        %v4668 = vmax.f32 %v4283, 0.0
        %v4669 = vmax.f32 %v2682, 0.0
        %v4670 = vmax.f32 %v3484, 0.0
        %v4671 = vmax.f32 %v4286, 0.0
        %v4672 = vmax.f32 %v2685, 0.0
        %v4673 = vmax.f32 %v3487, 0.0
        %v4674 = vmax.f32 %v4289, 0.0
        %v4675 = vmax.f32 %v2688, 0.0
        %v4676 = vmax.f32 %v3490, 0.0
        %v4677 = vmax.f32 %v4292, 0.0
        %v4678 = vmax.f32 %v2691, 0.0
        %v4679 = vmax.f32 %v3493, 0.0
        %v4680 = vmax.f32 %v4295, 0.0
        %v4681 = vmax.f32 %v2694, 0.0
        %v4682 = vmax.f32 %v3496, 0.0
        %v4683 = vmax.f32 %v4298, 0.0
        %v4684 = vmax.f32 %v2697, 0.0
        %v4685 = vmax.f32 %v3499, 0.0
        %v4686 = vmax.f32 %v4301, 0.0
        %v4687 = vmax.f32 %v2700, 0.0
        %v4688 = vmax.f32 %v3502, 0.0
        %v4689 = vmax.f32 %v4304, 0.0
        %v4690 = vmax.f32 %v2703, 0.0
        %v4691 = vmax.f32 %v3505, 0.0
        %v4692 = vmax.f32 %v4307, 0.0
        %v4693 = vmax.f32 %v2706, 0.0
        %v4694 = vmax.f32 %v3508, 0.0
        %v4695 = vmax.f32 %v4310, 0.0
        %v4696 = vmax.f32 %v2709, 0.0
        %v4697 = vmax.f32 %v3511, 0.0
        %v4698 = vmax.f32 %v4313, 0.0
        %v4699 = vmax.f32 %v2712, 0.0
        %v4700 = vmax.f32 %v3514, 0.0
        %v4701 = vmax.f32 %v4316, 0.0
        %v4702 = vmax.f32 %v2715, 0.0
        %v4703 = vmax.f32 %v3517, 0.0
        %v4704 = vmax.f32 %v4319, 0.0
        %v4705 = vmax.f32 %v2718, 0.0
        %v4706 = vmax.f32 %v3520, 0.0
        %v4707 = vmax.f32 %v4322, 0.0
        %v4708 = vmax.f32 %v2721, 0.0
        %v4709 = vmax.f32 %v3523, 0.0
        %v4710 = vmax.f32 %v4325, 0.0
        %v4711 = vmax.f32 %v2724, 0.0
        %v4712 = vmax.f32 %v3526, 0.0
        %v4713 = vmax.f32 %v4328, 0.0
        %v4714 = vmax.f32 %v2727, 0.0
        %v4715 = vmax.f32 %v3529, 0.0
        %v4716 = vmax.f32 %v4331, 0.0
        %v4717 = vmax.f32 %v2730, 0.0
        %v4718 = vmax.f32 %v3532, 0.0
        %v4719 = vmax.f32 %v4334, 0.0
        %v4720 = vmax.f32 %v2733, 0.0
        %v4721 = vmax.f32 %v3535, 0.0
        %v4722 = vmax.f32 %v4337, 0.0
        %v4723 = vmax.f32 %v2736, 0.0
        %v4724 = vmax.f32 %v3538, 0.0
        %v4725 = vmax.f32 %v4340, 0.0
        %v4726 = vmax.f32 %v2739, 0.0
        %v4727 = vmax.f32 %v3541, 0.0
        %v4728 = vmax.f32 %v4343, 0.0
        %v4729 = vmax.f32 %v2742, 0.0
        %v4730 = vmax.f32 %v3544, 0.0
        %v4731 = vmax.f32 %v4346, 0.0
        %v4732 = vmax.f32 %v2745, 0.0
        %v4733 = vmax.f32 %v3547, 0.0
        %v4734 = vmax.f32 %v4349, 0.0
        %v4735 = vmax.f32 %v2748, 0.0
        %v4736 = vmax.f32 %v3550, 0.0
        %v4737 = vmax.f32 %v4352, 0.0
        %v4738 = vmax.f32 %v2751, 0.0
        %v4739 = vmax.f32 %v3553, 0.0
        %v4740 = vmax.f32 %v4355, 0.0
        %v4741 = vmax.f32 %v2754, 0.0
        %v4742 = vmax.f32 %v3556, 0.0
        %v4743 = vmax.f32 %v4358, 0.0
        %v4744 = vmax.f32 %v2757, 0.0
        %v4745 = vmax.f32 %v3559, 0.0
        %v4746 = vmax.f32 %v4361, 0.0
        %v4747 = vmax.f32 %v2760, 0.0
        %v4748 = vmax.f32 %v3562, 0.0
        %v4749 = vmax.f32 %v4364, 0.0
        %v4750 = vmax.f32 %v2763, 0.0
        %v4751 = vmax.f32 %v3565, 0.0
        %v4752 = vmax.f32 %v4367, 0.0
        %v4753 = vmax.f32 %v2766, 0.0
        %v4754 = vmax.f32 %v3568, 0.0
        %v4755 = vmax.f32 %v4370, 0.0
        %v4756 = vmax.f32 %v2769, 0.0
        %v4757 = vmax.f32 %v3571, 0.0
        %v4758 = vmax.f32 %v4373, 0.0
        %v4759 = vmax.f32 %v2772, 0.0
        %v4760 = vmax.f32 %v3574, 0.0
        %v4761 = vmax.f32 %v4376, 0.0
        %v4762 = vmax.f32 %v2775, 0.0
        %v4763 = vmax.f32 %v3577, 0.0
        %v4764 = vmax.f32 %v4379, 0.0
        %v4765 = vmax.f32 %v2778, 0.0
        %v4766 = vmax.f32 %v3580, 0.0
        %v4767 = vmax.f32 %v4382, 0.0
        %v4768 = vmax.f32 %v2781, 0.0
        %v4769 = vmax.f32 %v3583, 0.0
        %v4770 = vmax.f32 %v4385, 0.0
        %v4771 = vmax.f32 %v2784, 0.0
        %v4772 = vmax.f32 %v3586, 0.0
        %v4773 = vmax.f32 %v4388, 0.0
        %v4774 = vmax.f32 %v2787, 0.0
        %v4775 = vmax.f32 %v3589, 0.0
        %v4776 = vmax.f32 %v4391, 0.0
        %v4777 = vmax.f32 %v2790, 0.0
        %v4778 = vmax.f32 %v3592, 0.0
        %v4779 = vmax.f32 %v4394, 0.0
        %v4780 = vmax.f32 %v2793, 0.0
        %v4781 = vmax.f32 %v3595, 0.0
        %v4782 = vmax.f32 %v4397, 0.0
        %v4783 = vmax.f32 %v2796, 0.0
        %v4784 = vmax.f32 %v3598, 0.0
        %v4785 = vmax.f32 %v4400, 0.0
        %v4786 = vmax.f32 %v2799, 0.0
        %v4787 = vmax.f32 %v3601, 0.0
        %v4788 = vmax.f32 %v4403, 0.0
        %v4789 = vmax.f32 %v2802, 0.0
        %v4790 = vmax.f32 %v3604, 0.0
        %v4791 = vmax.f32 %v4406, 0.0
        %v4792 = vmax.f32 %v2805, 0.0
        %v4793 = vmax.f32 %v3607, 0.0
        %v4794 = vmax.f32 %v4409, 0.0
        %4795 = vst [vmem:[%s301] sm:$0xff] %v4411
        %4796 = vst [vmem:[%s301 + $0x8] sm:$0xff] %v4412
        %4797 = vst [vmem:[%s301 + $0x10] sm:$0xff] %v4413
        %4798 = vst [vmem:[%s301 + $0x18] sm:$0xff] %v4414
        %4799 = vst [vmem:[%s301 + $0x20] sm:$0xff] %v4415
        %4800 = vst [vmem:[%s301 + $0x28] sm:$0xff] %v4416
        %4801 = vst [vmem:[%s301 + $0x30] sm:$0xff] %v4417
        %4802 = vst [vmem:[%s301 + $0x38] sm:$0xff] %v4418
        %4803 = vst [vmem:[%s301 + $0x40] sm:$0xff] %v4419
        %4804 = vst [vmem:[%s301 + $0x48] sm:$0xff] %v4420
        %4805 = vst [vmem:[%s301 + $0x50] sm:$0xff] %v4421
        %4806 = vst [vmem:[%s301 + $0x58] sm:$0xff] %v4422
        %4807 = vst [vmem:[%s301 + $0x60] sm:$0xff] %v4423
        %4808 = vst [vmem:[%s301 + $0x68] sm:$0xff] %v4424
        %4809 = vst [vmem:[%s301 + $0x70] sm:$0xff] %v4425
        %4810 = vst [vmem:[%s301 + $0x78] sm:$0xff] %v4426
        %4811 = vst [vmem:[%s301 + $0x80] sm:$0xff] %v4427
        %4812 = vst [vmem:[%s301 + $0x88] sm:$0xff] %v4428
        %4813 = vst [vmem:[%s301 + $0x90] sm:$0xff] %v4429
        %4814 = vst [vmem:[%s301 + $0x98] sm:$0xff] %v4430
        %4815 = vst [vmem:[%s301 + $0xa0] sm:$0xff] %v4431
        %4816 = vst [vmem:[%s301 + $0xa8] sm:$0xff] %v4432
        %4817 = vst [vmem:[%s301 + $0xb0] sm:$0xff] %v4433
        %4818 = vst [vmem:[%s301 + $0xb8] sm:$0xff] %v4434
        %4819 = vst [vmem:[%s301 + $0xc0] sm:$0xff] %v4435
        %4820 = vst [vmem:[%s301 + $0xc8] sm:$0xff] %v4436
        %4821 = vst [vmem:[%s301 + $0xd0] sm:$0xff] %v4437
        %4822 = vst [vmem:[%s301 + $0xd8] sm:$0xff] %v4438
        %4823 = vst [vmem:[%s301 + $0xe0] sm:$0xff] %v4439
        %4824 = vst [vmem:[%s301 + $0xe8] sm:$0xff] %v4440
        %4825 = vst [vmem:[%s301 + $0xf0] sm:$0xff] %v4441
        %4826 = vst [vmem:[%s301 + $0xf8] sm:$0xff] %v4442
        %4827 = vst [vmem:[%s301 + $0x100] sm:$0xff] %v4443
        %4828 = vst [vmem:[%s301 + $0x108] sm:$0xff] %v4444
        %4829 = vst [vmem:[%s301 + $0x110] sm:$0xff] %v4445
        %4830 = vst [vmem:[%s301 + $0x118] sm:$0xff] %v4446
        %4831 = vst [vmem:[%s301 + $0x120] sm:$0xff] %v4447
        %4832 = vst [vmem:[%s301 + $0x128] sm:$0xff] %v4448
        %4833 = vst [vmem:[%s301 + $0x130] sm:$0xff] %v4449
        %4834 = vst [vmem:[%s301 + $0x138] sm:$0xff] %v4450
        %4835 = vst [vmem:[%s301 + $0x140] sm:$0xff] %v4451
        %4836 = vst [vmem:[%s301 + $0x148] sm:$0xff] %v4452
        %4837 = vst [vmem:[%s301 + $0x150] sm:$0xff] %v4453
        %4838 = vst [vmem:[%s301 + $0x158] sm:$0xff] %v4454
        %4839 = vst [vmem:[%s301 + $0x160] sm:$0xff] %v4455
        %4840 = vst [vmem:[%s301 + $0x168] sm:$0xff] %v4456
        %4841 = vst [vmem:[%s301 + $0x170] sm:$0xff] %v4457
        %4842 = vst [vmem:[%s301 + $0x178] sm:$0xff] %v4458
        %4843 = vst [vmem:[%s301 + $0x180] sm:$0xff] %v4459
        %4844 = vst [vmem:[%s301 + $0x188] sm:$0xff] %v4460
        %4845 = vst [vmem:[%s301 + $0x190] sm:$0xff] %v4461
        %4846 = vst [vmem:[%s301 + $0x198] sm:$0xff] %v4462
        %4847 = vst [vmem:[%s301 + $0x1a0] sm:$0xff] %v4463
        %4848 = vst [vmem:[%s301 + $0x1a8] sm:$0xff] %v4464
        %4849 = vst [vmem:[%s301 + $0x1b0] sm:$0xff] %v4465
        %4850 = vst [vmem:[%s301 + $0x1b8] sm:$0xff] %v4466
        %4851 = vst [vmem:[%s301 + $0x1c0] sm:$0xff] %v4467
        %4852 = vst [vmem:[%s301 + $0x1c8] sm:$0xff] %v4468
        %4853 = vst [vmem:[%s301 + $0x1d0] sm:$0xff] %v4469
        %4854 = vst [vmem:[%s301 + $0x1d8] sm:$0xff] %v4470
        %4855 = vst [vmem:[%s301 + $0x1e0] sm:$0xff] %v4471
        %4856 = vst [vmem:[%s301 + $0x1e8] sm:$0xff] %v4472
        %4857 = vst [vmem:[%s301 + $0x1f0] sm:$0xff] %v4473
        %4858 = vst [vmem:[%s301 + $0x1f8] sm:$0xff] %v4474
        %4859 = vst [vmem:[%s301 + $0x200] sm:$0xff] %v4475
        %4860 = vst [vmem:[%s301 + $0x208] sm:$0xff] %v4476
        %4861 = vst [vmem:[%s301 + $0x210] sm:$0xff] %v4477
        %4862 = vst [vmem:[%s301 + $0x218] sm:$0xff] %v4478
        %4863 = vst [vmem:[%s301 + $0x220] sm:$0xff] %v4479
        %4864 = vst [vmem:[%s301 + $0x228] sm:$0xff] %v4480
        %4865 = vst [vmem:[%s301 + $0x230] sm:$0xff] %v4481
        %4866 = vst [vmem:[%s301 + $0x238] sm:$0xff] %v4482
        %4867 = vst [vmem:[%s301 + $0x240] sm:$0xff] %v4483
        %4868 = vst [vmem:[%s301 + $0x248] sm:$0xff] %v4484
        %4869 = vst [vmem:[%s301 + $0x250] sm:$0xff] %v4485
        %4870 = vst [vmem:[%s301 + $0x258] sm:$0xff] %v4486
        %4871 = vst [vmem:[%s301 + $0x260] sm:$0xff] %v4487
        %4872 = vst [vmem:[%s301 + $0x268] sm:$0xff] %v4488
        %4873 = vst [vmem:[%s301 + $0x270] sm:$0xff] %v4489
        %4874 = vst [vmem:[%s301 + $0x278] sm:$0xff] %v4490
        %4875 = vst [vmem:[%s301 + $0x280] sm:$0xff] %v4491
        %4876 = vst [vmem:[%s301 + $0x288] sm:$0xff] %v4492
        %4877 = vst [vmem:[%s301 + $0x290] sm:$0xff] %v4493
        %4878 = vst [vmem:[%s301 + $0x298] sm:$0xff] %v4494
        %4879 = vst [vmem:[%s301 + $0x2a0] sm:$0xff] %v4495
        %4880 = vst [vmem:[%s301 + $0x2a8] sm:$0xff] %v4496
        %4881 = vst [vmem:[%s301 + $0x2b0] sm:$0xff] %v4497
        %4882 = vst [vmem:[%s301 + $0x2b8] sm:$0xff] %v4498
        %4883 = vst [vmem:[%s301 + $0x2c0] sm:$0xff] %v4499
        %4884 = vst [vmem:[%s301 + $0x2c8] sm:$0xff] %v4500
        %4885 = vst [vmem:[%s301 + $0x2d0] sm:$0xff] %v4501
        %4886 = vst [vmem:[%s301 + $0x2d8] sm:$0xff] %v4502
        %4887 = vst [vmem:[%s301 + $0x2e0] sm:$0xff] %v4503
        %4888 = vst [vmem:[%s301 + $0x2e8] sm:$0xff] %v4504
        %4889 = vst [vmem:[%s301 + $0x2f0] sm:$0xff] %v4505
        %4890 = vst [vmem:[%s301 + $0x2f8] sm:$0xff] %v4506
        %4891 = vst [vmem:[%s301 + $0x300] sm:$0xff] %v4507
        %4892 = vst [vmem:[%s301 + $0x308] sm:$0xff] %v4508
        %4893 = vst [vmem:[%s301 + $0x310] sm:$0xff] %v4509
        %4894 = vst [vmem:[%s301 + $0x318] sm:$0xff] %v4510
        %4895 = vst [vmem:[%s301 + $0x320] sm:$0xff] %v4511
        %4896 = vst [vmem:[%s301 + $0x328] sm:$0xff] %v4512
        %4897 = vst [vmem:[%s301 + $0x330] sm:$0xff] %v4513
        %4898 = vst [vmem:[%s301 + $0x338] sm:$0xff] %v4514
        %4899 = vst [vmem:[%s301 + $0x340] sm:$0xff] %v4515
        %4900 = vst [vmem:[%s301 + $0x348] sm:$0xff] %v4516
        %4901 = vst [vmem:[%s301 + $0x350] sm:$0xff] %v4517
        %4902 = vst [vmem:[%s301 + $0x358] sm:$0xff] %v4518
        %4903 = vst [vmem:[%s301 + $0x360] sm:$0xff] %v4519
        %4904 = vst [vmem:[%s301 + $0x368] sm:$0xff] %v4520
        %4905 = vst [vmem:[%s301 + $0x370] sm:$0xff] %v4521
        %4906 = vst [vmem:[%s301 + $0x378] sm:$0xff] %v4522
        %4907 = vst [vmem:[%s301 + $0x380] sm:$0xff] %v4523
        %4908 = vst [vmem:[%s301 + $0x388] sm:$0xff] %v4524
        %4909 = vst [vmem:[%s301 + $0x390] sm:$0xff] %v4525
        %4910 = vst [vmem:[%s301 + $0x398] sm:$0xff] %v4526
        %4911 = vst [vmem:[%s301 + $0x3a0] sm:$0xff] %v4527
        %4912 = vst [vmem:[%s301 + $0x3a8] sm:$0xff] %v4528
        %4913 = vst [vmem:[%s301 + $0x3b0] sm:$0xff] %v4529
        %4914 = vst [vmem:[%s301 + $0x3b8] sm:$0xff] %v4530
        %4915 = vst [vmem:[%s301 + $0x3c0] sm:$0xff] %v4531
        %4916 = vst [vmem:[%s301 + $0x3c8] sm:$0xff] %v4532
        %4917 = vst [vmem:[%s301 + $0x3d0] sm:$0xff] %v4533
        %4918 = vst [vmem:[%s301 + $0x3d8] sm:$0xff] %v4534
        %4919 = vst [vmem:[%s301 + $0x3e0] sm:$0xff] %v4535
        %4920 = vst [vmem:[%s301 + $0x3e8] sm:$0xff] %v4536
        %4921 = vst [vmem:[%s301 + $0x3f0] sm:$0xff] %v4537
        %4922 = vst [vmem:[%s301 + $0x3f8] sm:$0xff] %v4538
        %4923 = vst [vmem:[%s301 + $0x400] sm:$0xff] %v4539
        %4924 = vst [vmem:[%s301 + $0x408] sm:$0xff] %v4540
        %4925 = vst [vmem:[%s301 + $0x410] sm:$0xff] %v4541
        %4926 = vst [vmem:[%s301 + $0x418] sm:$0xff] %v4542
        %4927 = vst [vmem:[%s301 + $0x420] sm:$0xff] %v4543
        %4928 = vst [vmem:[%s301 + $0x428] sm:$0xff] %v4544
        %4929 = vst [vmem:[%s301 + $0x430] sm:$0xff] %v4545
        %4930 = vst [vmem:[%s301 + $0x438] sm:$0xff] %v4546
        %4931 = vst [vmem:[%s301 + $0x440] sm:$0xff] %v4547
        %4932 = vst [vmem:[%s301 + $0x448] sm:$0xff] %v4548
        %4933 = vst [vmem:[%s301 + $0x450] sm:$0xff] %v4549
        %4934 = vst [vmem:[%s301 + $0x458] sm:$0xff] %v4550
        %4935 = vst [vmem:[%s301 + $0x460] sm:$0xff] %v4551
        %4936 = vst [vmem:[%s301 + $0x468] sm:$0xff] %v4552
        %4937 = vst [vmem:[%s301 + $0x470] sm:$0xff] %v4553
        %4938 = vst [vmem:[%s301 + $0x478] sm:$0xff] %v4554
        %4939 = vst [vmem:[%s301 + $0x480] sm:$0xff] %v4555
        %4940 = vst [vmem:[%s301 + $0x488] sm:$0xff] %v4556
        %4941 = vst [vmem:[%s301 + $0x490] sm:$0xff] %v4557
        %4942 = vst [vmem:[%s301 + $0x498] sm:$0xff] %v4558
        %4943 = vst [vmem:[%s301 + $0x4a0] sm:$0xff] %v4559
        %4944 = vst [vmem:[%s301 + $0x4a8] sm:$0xff] %v4560
        %4945 = vst [vmem:[%s301 + $0x4b0] sm:$0xff] %v4561
        %4946 = vst [vmem:[%s301 + $0x4b8] sm:$0xff] %v4562
        %4947 = vst [vmem:[%s301 + $0x4c0] sm:$0xff] %v4563
        %4948 = vst [vmem:[%s301 + $0x4c8] sm:$0xff] %v4564
        %4949 = vst [vmem:[%s301 + $0x4d0] sm:$0xff] %v4565
        %4950 = vst [vmem:[%s301 + $0x4d8] sm:$0xff] %v4566
        %4951 = vst [vmem:[%s301 + $0x4e0] sm:$0xff] %v4567
        %4952 = vst [vmem:[%s301 + $0x4e8] sm:$0xff] %v4568
        %4953 = vst [vmem:[%s301 + $0x4f0] sm:$0xff] %v4569
        %4954 = vst [vmem:[%s301 + $0x4f8] sm:$0xff] %v4570
        %4955 = vst [vmem:[%s301 + $0x500] sm:$0xff] %v4571
        %4956 = vst [vmem:[%s301 + $0x508] sm:$0xff] %v4572
        %4957 = vst [vmem:[%s301 + $0x510] sm:$0xff] %v4573
        %4958 = vst [vmem:[%s301 + $0x518] sm:$0xff] %v4574
        %4959 = vst [vmem:[%s301 + $0x520] sm:$0xff] %v4575
        %4960 = vst [vmem:[%s301 + $0x528] sm:$0xff] %v4576
        %4961 = vst [vmem:[%s301 + $0x530] sm:$0xff] %v4577
        %4962 = vst [vmem:[%s301 + $0x538] sm:$0xff] %v4578
        %4963 = vst [vmem:[%s301 + $0x540] sm:$0xff] %v4579
        %4964 = vst [vmem:[%s301 + $0x548] sm:$0xff] %v4580
        %4965 = vst [vmem:[%s301 + $0x550] sm:$0xff] %v4581
        %4966 = vst [vmem:[%s301 + $0x558] sm:$0xff] %v4582
        %4967 = vst [vmem:[%s301 + $0x560] sm:$0xff] %v4583
        %4968 = vst [vmem:[%s301 + $0x568] sm:$0xff] %v4584
        %4969 = vst [vmem:[%s301 + $0x570] sm:$0xff] %v4585
        %4970 = vst [vmem:[%s301 + $0x578] sm:$0xff] %v4586
        %4971 = vst [vmem:[%s301 + $0x580] sm:$0xff] %v4587
        %4972 = vst [vmem:[%s301 + $0x588] sm:$0xff] %v4588
        %4973 = vst [vmem:[%s301 + $0x590] sm:$0xff] %v4589
        %4974 = vst [vmem:[%s301 + $0x598] sm:$0xff] %v4590
        %4975 = vst [vmem:[%s301 + $0x5a0] sm:$0xff] %v4591
        %4976 = vst [vmem:[%s301 + $0x5a8] sm:$0xff] %v4592
        %4977 = vst [vmem:[%s301 + $0x5b0] sm:$0xff] %v4593
        %4978 = vst [vmem:[%s301 + $0x5b8] sm:$0xff] %v4594
        %4979 = vst [vmem:[%s301 + $0x5c0] sm:$0xff] %v4595
        %4980 = vst [vmem:[%s301 + $0x5c8] sm:$0xff] %v4596
        %4981 = vst [vmem:[%s301 + $0x5d0] sm:$0xff] %v4597
        %4982 = vst [vmem:[%s301 + $0x5d8] sm:$0xff] %v4598
        %4983 = vst [vmem:[%s301 + $0x5e0] sm:$0xff] %v4599
        %4984 = vst [vmem:[%s301 + $0x5e8] sm:$0xff] %v4600
        %4985 = vst [vmem:[%s301 + $0x5f0] sm:$0xff] %v4601
        %4986 = vst [vmem:[%s301 + $0x5f8] sm:$0xff] %v4602
        %4987 = vst [vmem:[%s301 + $0x600] sm:$0xff] %v4603
        %4988 = vst [vmem:[%s301 + $0x608] sm:$0xff] %v4604
        %4989 = vst [vmem:[%s301 + $0x610] sm:$0xff] %v4605
        %4990 = vst [vmem:[%s301 + $0x618] sm:$0xff] %v4606
        %4991 = vst [vmem:[%s301 + $0x620] sm:$0xff] %v4607
        %4992 = vst [vmem:[%s301 + $0x628] sm:$0xff] %v4608
        %4993 = vst [vmem:[%s301 + $0x630] sm:$0xff] %v4609
        %4994 = vst [vmem:[%s301 + $0x638] sm:$0xff] %v4610
        %4995 = vst [vmem:[%s301 + $0x640] sm:$0xff] %v4611
        %4996 = vst [vmem:[%s301 + $0x648] sm:$0xff] %v4612
        %4997 = vst [vmem:[%s301 + $0x650] sm:$0xff] %v4613
        %4998 = vst [vmem:[%s301 + $0x658] sm:$0xff] %v4614
        %4999 = vst [vmem:[%s301 + $0x660] sm:$0xff] %v4615
        %5000 = vst [vmem:[%s301 + $0x668] sm:$0xff] %v4616
        %5001 = vst [vmem:[%s301 + $0x670] sm:$0xff] %v4617
        %5002 = vst [vmem:[%s301 + $0x678] sm:$0xff] %v4618
        %5003 = vst [vmem:[%s301 + $0x680] sm:$0xff] %v4619
        %5004 = vst [vmem:[%s301 + $0x688] sm:$0xff] %v4620
        %5005 = vst [vmem:[%s301 + $0x690] sm:$0xff] %v4621
        %5006 = vst [vmem:[%s301 + $0x698] sm:$0xff] %v4622
        %5007 = vst [vmem:[%s301 + $0x6a0] sm:$0xff] %v4623
        %5008 = vst [vmem:[%s301 + $0x6a8] sm:$0xff] %v4624
        %5009 = vst [vmem:[%s301 + $0x6b0] sm:$0xff] %v4625
        %5010 = vst [vmem:[%s301 + $0x6b8] sm:$0xff] %v4626
        %5011 = vst [vmem:[%s301 + $0x6c0] sm:$0xff] %v4627
        %5012 = vst [vmem:[%s301 + $0x6c8] sm:$0xff] %v4628
        %5013 = vst [vmem:[%s301 + $0x6d0] sm:$0xff] %v4629
        %5014 = vst [vmem:[%s301 + $0x6d8] sm:$0xff] %v4630
        %5015 = vst [vmem:[%s301 + $0x6e0] sm:$0xff] %v4631
        %5016 = vst [vmem:[%s301 + $0x6e8] sm:$0xff] %v4632
        %5017 = vst [vmem:[%s301 + $0x6f0] sm:$0xff] %v4633
        %5018 = vst [vmem:[%s301 + $0x6f8] sm:$0xff] %v4634
        %5019 = vst [vmem:[%s301 + $0x700] sm:$0xff] %v4635
        %5020 = vst [vmem:[%s301 + $0x708] sm:$0xff] %v4636
        %5021 = vst [vmem:[%s301 + $0x710] sm:$0xff] %v4637
        %5022 = vst [vmem:[%s301 + $0x718] sm:$0xff] %v4638
        %5023 = vst [vmem:[%s301 + $0x720] sm:$0xff] %v4639
        %5024 = vst [vmem:[%s301 + $0x728] sm:$0xff] %v4640
        %5025 = vst [vmem:[%s301 + $0x730] sm:$0xff] %v4641
        %5026 = vst [vmem:[%s301 + $0x738] sm:$0xff] %v4642
        %5027 = vst [vmem:[%s301 + $0x740] sm:$0xff] %v4643
        %5028 = vst [vmem:[%s301 + $0x748] sm:$0xff] %v4644
        %5029 = vst [vmem:[%s301 + $0x750] sm:$0xff] %v4645
        %5030 = vst [vmem:[%s301 + $0x758] sm:$0xff] %v4646
        %5031 = vst [vmem:[%s301 + $0x760] sm:$0xff] %v4647
        %5032 = vst [vmem:[%s301 + $0x768] sm:$0xff] %v4648
        %5033 = vst [vmem:[%s301 + $0x770] sm:$0xff] %v4649
        %5034 = vst [vmem:[%s301 + $0x778] sm:$0xff] %v4650
        %5035 = vst [vmem:[%s301 + $0x780] sm:$0xff] %v4651
        %5036 = vst [vmem:[%s301 + $0x788] sm:$0xff] %v4652
        %5037 = vst [vmem:[%s301 + $0x790] sm:$0xff] %v4653
        %5038 = vst [vmem:[%s301 + $0x798] sm:$0xff] %v4654
        %5039 = vst [vmem:[%s301 + $0x7a0] sm:$0xff] %v4655
        %5040 = vst [vmem:[%s301 + $0x7a8] sm:$0xff] %v4656
        %5041 = vst [vmem:[%s301 + $0x7b0] sm:$0xff] %v4657
        %5042 = vst [vmem:[%s301 + $0x7b8] sm:$0xff] %v4658
        %5043 = vst [vmem:[%s301 + $0x7c0] sm:$0xff] %v4659
        %5044 = vst [vmem:[%s301 + $0x7c8] sm:$0xff] %v4660
        %5045 = vst [vmem:[%s301 + $0x7d0] sm:$0xff] %v4661
        %5046 = vst [vmem:[%s301 + $0x7d8] sm:$0xff] %v4662
        %5047 = vst [vmem:[%s301 + $0x7e0] sm:$0xff] %v4663
        %5048 = vst [vmem:[%s301 + $0x7e8] sm:$0xff] %v4664
        %5049 = vst [vmem:[%s301 + $0x7f0] sm:$0xff] %v4665
        %5050 = vst [vmem:[%s301 + $0x7f8] sm:$0xff] %v4666
        %5051 = vst [vmem:[%s301 + $0x800] sm:$0xff] %v4667
        %5052 = vst [vmem:[%s301 + $0x808] sm:$0xff] %v4668
        %5053 = vst [vmem:[%s301 + $0x810] sm:$0xff] %v4669
        %5054 = vst [vmem:[%s301 + $0x818] sm:$0xff] %v4670
        %5055 = vst [vmem:[%s301 + $0x820] sm:$0xff] %v4671
        %5056 = vst [vmem:[%s301 + $0x828] sm:$0xff] %v4672
        %5057 = vst [vmem:[%s301 + $0x830] sm:$0xff] %v4673
        %5058 = vst [vmem:[%s301 + $0x838] sm:$0xff] %v4674
        %5059 = vst [vmem:[%s301 + $0x840] sm:$0xff] %v4675
        %5060 = vst [vmem:[%s301 + $0x848] sm:$0xff] %v4676
        %5061 = vst [vmem:[%s301 + $0x850] sm:$0xff] %v4677
        %5062 = vst [vmem:[%s301 + $0x858] sm:$0xff] %v4678
        %5063 = vst [vmem:[%s301 + $0x860] sm:$0xff] %v4679
        %5064 = vst [vmem:[%s301 + $0x868] sm:$0xff] %v4680
        %5065 = vst [vmem:[%s301 + $0x870] sm:$0xff] %v4681
        %5066 = vst [vmem:[%s301 + $0x878] sm:$0xff] %v4682
        %5067 = vst [vmem:[%s301 + $0x880] sm:$0xff] %v4683
        %5068 = vst [vmem:[%s301 + $0x888] sm:$0xff] %v4684
        %5069 = vst [vmem:[%s301 + $0x890] sm:$0xff] %v4685
        %5070 = vst [vmem:[%s301 + $0x898] sm:$0xff] %v4686
        %5071 = vst [vmem:[%s301 + $0x8a0] sm:$0xff] %v4687
        %5072 = vst [vmem:[%s301 + $0x8a8] sm:$0xff] %v4688
        %5073 = vst [vmem:[%s301 + $0x8b0] sm:$0xff] %v4689
        %5074 = vst [vmem:[%s301 + $0x8b8] sm:$0xff] %v4690
        %5075 = vst [vmem:[%s301 + $0x8c0] sm:$0xff] %v4691
        %5076 = vst [vmem:[%s301 + $0x8c8] sm:$0xff] %v4692
        %5077 = vst [vmem:[%s301 + $0x8d0] sm:$0xff] %v4693
        %5078 = vst [vmem:[%s301 + $0x8d8] sm:$0xff] %v4694
        %5079 = vst [vmem:[%s301 + $0x8e0] sm:$0xff] %v4695
        %5080 = vst [vmem:[%s301 + $0x8e8] sm:$0xff] %v4696
        %5081 = vst [vmem:[%s301 + $0x8f0] sm:$0xff] %v4697
        %5082 = vst [vmem:[%s301 + $0x8f8] sm:$0xff] %v4698
        %5083 = vst [vmem:[%s301 + $0x900] sm:$0xff] %v4699
        %5084 = vst [vmem:[%s301 + $0x908] sm:$0xff] %v4700
        %5085 = vst [vmem:[%s301 + $0x910] sm:$0xff] %v4701
        %5086 = vst [vmem:[%s301 + $0x918] sm:$0xff] %v4702
        %5087 = vst [vmem:[%s301 + $0x920] sm:$0xff] %v4703
        %5088 = vst [vmem:[%s301 + $0x928] sm:$0xff] %v4704
        %5089 = vst [vmem:[%s301 + $0x930] sm:$0xff] %v4705
        %5090 = vst [vmem:[%s301 + $0x938] sm:$0xff] %v4706
        %5091 = vst [vmem:[%s301 + $0x940] sm:$0xff] %v4707
        %5092 = vst [vmem:[%s301 + $0x948] sm:$0xff] %v4708
        %5093 = vst [vmem:[%s301 + $0x950] sm:$0xff] %v4709
        %5094 = vst [vmem:[%s301 + $0x958] sm:$0xff] %v4710
        %5095 = vst [vmem:[%s301 + $0x960] sm:$0xff] %v4711
        %5096 = vst [vmem:[%s301 + $0x968] sm:$0xff] %v4712
        %5097 = vst [vmem:[%s301 + $0x970] sm:$0xff] %v4713
        %5098 = vst [vmem:[%s301 + $0x978] sm:$0xff] %v4714
        %5099 = vst [vmem:[%s301 + $0x980] sm:$0xff] %v4715
        %5100 = vst [vmem:[%s301 + $0x988] sm:$0xff] %v4716
        %5101 = vst [vmem:[%s301 + $0x990] sm:$0xff] %v4717
        %5102 = vst [vmem:[%s301 + $0x998] sm:$0xff] %v4718
        %5103 = vst [vmem:[%s301 + $0x9a0] sm:$0xff] %v4719
        %5104 = vst [vmem:[%s301 + $0x9a8] sm:$0xff] %v4720
        %5105 = vst [vmem:[%s301 + $0x9b0] sm:$0xff] %v4721
        %5106 = vst [vmem:[%s301 + $0x9b8] sm:$0xff] %v4722
        %5107 = vst [vmem:[%s301 + $0x9c0] sm:$0xff] %v4723
        %5108 = vst [vmem:[%s301 + $0x9c8] sm:$0xff] %v4724
        %5109 = vst [vmem:[%s301 + $0x9d0] sm:$0xff] %v4725
        %5110 = vst [vmem:[%s301 + $0x9d8] sm:$0xff] %v4726
        %5111 = vst [vmem:[%s301 + $0x9e0] sm:$0xff] %v4727
        %5112 = vst [vmem:[%s301 + $0x9e8] sm:$0xff] %v4728
        %5113 = vst [vmem:[%s301 + $0x9f0] sm:$0xff] %v4729
        %5114 = vst [vmem:[%s301 + $0x9f8] sm:$0xff] %v4730
        %5115 = vst [vmem:[%s301 + $0xa00] sm:$0xff] %v4731
        %5116 = vst [vmem:[%s301 + $0xa08] sm:$0xff] %v4732
        %5117 = vst [vmem:[%s301 + $0xa10] sm:$0xff] %v4733
        %5118 = vst [vmem:[%s301 + $0xa18] sm:$0xff] %v4734
        %5119 = vst [vmem:[%s301 + $0xa20] sm:$0xff] %v4735
        %5120 = vst [vmem:[%s301 + $0xa28] sm:$0xff] %v4736
        %5121 = vst [vmem:[%s301 + $0xa30] sm:$0xff] %v4737
        %5122 = vst [vmem:[%s301 + $0xa38] sm:$0xff] %v4738
        %5123 = vst [vmem:[%s301 + $0xa40] sm:$0xff] %v4739
        %5124 = vst [vmem:[%s301 + $0xa48] sm:$0xff] %v4740
        %5125 = vst [vmem:[%s301 + $0xa50] sm:$0xff] %v4741
        %5126 = vst [vmem:[%s301 + $0xa58] sm:$0xff] %v4742
        %5127 = vst [vmem:[%s301 + $0xa60] sm:$0xff] %v4743
        %5128 = vst [vmem:[%s301 + $0xa68] sm:$0xff] %v4744
        %5129 = vst [vmem:[%s301 + $0xa70] sm:$0xff] %v4745
        %5130 = vst [vmem:[%s301 + $0xa78] sm:$0xff] %v4746
        %5131 = vst [vmem:[%s301 + $0xa80] sm:$0xff] %v4747
        %5132 = vst [vmem:[%s301 + $0xa88] sm:$0xff] %v4748
        %5133 = vst [vmem:[%s301 + $0xa90] sm:$0xff] %v4749
        %5134 = vst [vmem:[%s301 + $0xa98] sm:$0xff] %v4750
        %5135 = vst [vmem:[%s301 + $0xaa0] sm:$0xff] %v4751
        %5136 = vst [vmem:[%s301 + $0xaa8] sm:$0xff] %v4752
        %5137 = vst [vmem:[%s301 + $0xab0] sm:$0xff] %v4753
        %5138 = vst [vmem:[%s301 + $0xab8] sm:$0xff] %v4754
        %5139 = vst [vmem:[%s301 + $0xac0] sm:$0xff] %v4755
        %5140 = vst [vmem:[%s301 + $0xac8] sm:$0xff] %v4756
        %5141 = vst [vmem:[%s301 + $0xad0] sm:$0xff] %v4757
        %5142 = vst [vmem:[%s301 + $0xad8] sm:$0xff] %v4758
        %5143 = vst [vmem:[%s301 + $0xae0] sm:$0xff] %v4759
        %5144 = vst [vmem:[%s301 + $0xae8] sm:$0xff] %v4760
        %5145 = vst [vmem:[%s301 + $0xaf0] sm:$0xff] %v4761
        %5146 = vst [vmem:[%s301 + $0xaf8] sm:$0xff] %v4762
        %5147 = vst [vmem:[%s301 + $0xb00] sm:$0xff] %v4763
        %5148 = vst [vmem:[%s301 + $0xb08] sm:$0xff] %v4764
        %5149 = vst [vmem:[%s301 + $0xb10] sm:$0xff] %v4765
        %5150 = vst [vmem:[%s301 + $0xb18] sm:$0xff] %v4766
        %5151 = vst [vmem:[%s301 + $0xb20] sm:$0xff] %v4767
        %5152 = vst [vmem:[%s301 + $0xb28] sm:$0xff] %v4768
        %5153 = vst [vmem:[%s301 + $0xb30] sm:$0xff] %v4769
        %5154 = vst [vmem:[%s301 + $0xb38] sm:$0xff] %v4770
        %5155 = vst [vmem:[%s301 + $0xb40] sm:$0xff] %v4771
        %5156 = vst [vmem:[%s301 + $0xb48] sm:$0xff] %v4772
        %5157 = vst [vmem:[%s301 + $0xb50] sm:$0xff] %v4773
        %5158 = vst [vmem:[%s301 + $0xb58] sm:$0xff] %v4774
        %5159 = vst [vmem:[%s301 + $0xb60] sm:$0xff] %v4775
        %5160 = vst [vmem:[%s301 + $0xb68] sm:$0xff] %v4776
        %5161 = vst [vmem:[%s301 + $0xb70] sm:$0xff] %v4777
        %5162 = vst [vmem:[%s301 + $0xb78] sm:$0xff] %v4778
        %5163 = vst [vmem:[%s301 + $0xb80] sm:$0xff] %v4779
        %5164 = vst [vmem:[%s301 + $0xb88] sm:$0xff] %v4780
        %5165 = vst [vmem:[%s301 + $0xb90] sm:$0xff] %v4781
        %5166 = vst [vmem:[%s301 + $0xb98] sm:$0xff] %v4782
        %5167 = vst [vmem:[%s301 + $0xba0] sm:$0xff] %v4783
        %5168 = vst [vmem:[%s301 + $0xba8] sm:$0xff] %v4784
        %5169 = vst [vmem:[%s301 + $0xbb0] sm:$0xff] %v4785
        %5170 = vst [vmem:[%s301 + $0xbb8] sm:$0xff] %v4786
        %5171 = vst [vmem:[%s301 + $0xbc0] sm:$0xff] %v4787
        %5172 = vst [vmem:[%s301 + $0xbc8] sm:$0xff] %v4788
        %5173 = vst [vmem:[%s301 + $0xbd0] sm:$0xff] %v4789
        %5174 = vst [vmem:[%s301 + $0xbd8] sm:$0xff] %v4790
        %5175 = vst [vmem:[%s301 + $0xbe0] sm:$0xff] %v4791
        %5176 = vst [vmem:[%s301 + $0xbe8] sm:$0xff] %v4792
        %5177 = vst [vmem:[%s301 + $0xbf0] sm:$0xff] %v4793
        %5178 = vst [vmem:[%s301 + $0xbf8] sm:$0xff] %v4794
        %v5179 = vld [vmem:[%s3] sm:$0xff]
        %v5180 = vld [vmem:[%s3 + $0x8] sm:$0xff]
        %v5181 = vld [vmem:[%s3 + $0x10] sm:$0xff]
        %v5182 = vld [vmem:[%s3 + $0x18] sm:$0xff]
        %v5183 = vld [vmem:[%s3 + $0x20] sm:$0xff]
        %v5184 = vld [vmem:[%s3 + $0x28] sm:$0xff]
        %v5185 = vld [vmem:[%s3 + $0x30] sm:$0xff]
        %v5186 = vld [vmem:[%s3 + $0x38] sm:$0xff]
        %v5187 = vld [vmem:[%s3 + $0x40] sm:$0xff]
        %v5188 = vld [vmem:[%s3 + $0x48] sm:$0xff]
        %v5189 = vld [vmem:[%s3 + $0x50] sm:$0xff]
        %v5190 = vld [vmem:[%s3 + $0x58] sm:$0xff]
        %v5191 = vld [vmem:[%s3 + $0x60] sm:$0xff]
        %v5192 = vld [vmem:[%s3 + $0x68] sm:$0xff]
        %v5193 = vld [vmem:[%s3 + $0x70] sm:$0xff]
        %v5194 = vld [vmem:[%s3 + $0x78] sm:$0xff]
        %v5195 = vld [vmem:[%s3 + $0x80] sm:$0xff]
        %v5196 = vld [vmem:[%s3 + $0x88] sm:$0xff]
        %v5197 = vld [vmem:[%s3 + $0x90] sm:$0xff]
        %v5198 = vld [vmem:[%s3 + $0x98] sm:$0xff]
        %v5199 = vld [vmem:[%s3 + $0xa0] sm:$0xff]
        %v5200 = vld [vmem:[%s3 + $0xa8] sm:$0xff]
        %v5201 = vld [vmem:[%s3 + $0xb0] sm:$0xff]
        %v5202 = vld [vmem:[%s3 + $0xb8] sm:$0xff]
        %v5203 = vld [vmem:[%s3 + $0xc0] sm:$0xff]
        %v5204 = vld [vmem:[%s3 + $0xc8] sm:$0xff]
        %v5205 = vld [vmem:[%s3 + $0xd0] sm:$0xff]
        %v5206 = vld [vmem:[%s3 + $0xd8] sm:$0xff]
        %v5207 = vld [vmem:[%s3 + $0xe0] sm:$0xff]
        %v5208 = vld [vmem:[%s3 + $0xe8] sm:$0xff]
        %v5209 = vld [vmem:[%s3 + $0xf0] sm:$0xff]
        %v5210 = vld [vmem:[%s3 + $0xf8] sm:$0xff]
        %v5211 = vld [vmem:[%s3 + $0x100] sm:$0xff]
        %v5212 = vld [vmem:[%s3 + $0x108] sm:$0xff]
        %v5213 = vld [vmem:[%s3 + $0x110] sm:$0xff]
        %v5214 = vld [vmem:[%s3 + $0x118] sm:$0xff]
        %v5215 = vld [vmem:[%s3 + $0x120] sm:$0xff]
        %v5216 = vld [vmem:[%s3 + $0x128] sm:$0xff]
        %v5217 = vld [vmem:[%s3 + $0x130] sm:$0xff]
        %v5218 = vld [vmem:[%s3 + $0x138] sm:$0xff]
        %v5219 = vld [vmem:[%s3 + $0x140] sm:$0xff]
        %v5220 = vld [vmem:[%s3 + $0x148] sm:$0xff]
        %v5221 = vld [vmem:[%s3 + $0x150] sm:$0xff]
        %v5222 = vld [vmem:[%s3 + $0x158] sm:$0xff]
        %v5223 = vld [vmem:[%s3 + $0x160] sm:$0xff]
        %v5224 = vld [vmem:[%s3 + $0x168] sm:$0xff]
        %v5225 = vld [vmem:[%s3 + $0x170] sm:$0xff]
        %v5226 = vld [vmem:[%s3 + $0x178] sm:$0xff]
        %v5227 = vld [vmem:[#allocation7 + $0x2] sm:$0x1]
        %v5228 = vperm.slane %v5227, 0
        %5229 = vmatpush.msra.mxu0 %v5194
        %5230 = vmatpush.msra.mxu0 %v5193
        %5231 = vmatpush.msra.mxu0 %v5192
        %5232 = vmatpush.msra.mxu0 %v5191
        %5233 = vmatpush.msra.mxu0 %v5190
        %5234 = vmatpush.msra.mxu0 %v5189
        %5235 = vmatpush.msra.mxu0 %v5188
        %5236 = vmatpush.msra.mxu0 %v5187
        %5237 = vmatpush.msra.mxu0 %v5186
        %5238 = vmatpush.msra.mxu0 %v5185
        %5239 = vmatpush.msra.mxu0 %v5184
        %5240 = vmatpush.msra.mxu0 %v5183
        %5241 = vmatpush.msra.mxu0 %v5182
        %5242 = vmatpush.msra.mxu0 %v5181
        %5243 = vmatpush.msra.mxu0 %v5180
        %5244 = vmatpush.msra.mxu0 %v5179
        %5245 = vmatmul.f32.gmra.mxu0 %v4411
        %v5246 = vpop.f32.mrf.mxu0
        %v5247 = vadd.f32 %v5228, %v5246
        %5248 = vmatmul.f32.gmra.mxu0 %v4414
        %v5249 = vpop.f32.mrf.mxu0
        %v5250 = vadd.f32 %v5228, %v5249
        %5251 = vmatmul.f32.gmra.mxu0 %v4417
        %v5252 = vpop.f32.mrf.mxu0
        %v5253 = vadd.f32 %v5228, %v5252
        %5254 = vmatmul.f32.gmra.mxu0 %v4420
        %v5255 = vpop.f32.mrf.mxu0
        %v5256 = vadd.f32 %v5228, %v5255
        %5257 = vmatmul.f32.gmra.mxu0 %v4423
        %v5258 = vpop.f32.mrf.mxu0
        %v5259 = vadd.f32 %v5228, %v5258
        %5260 = vmatmul.f32.gmra.mxu0 %v4426
        %v5261 = vpop.f32.mrf.mxu0
        %v5262 = vadd.f32 %v5228, %v5261
        %5263 = vmatmul.f32.gmra.mxu0 %v4429
        %v5264 = vpop.f32.mrf.mxu0
        %v5265 = vadd.f32 %v5228, %v5264
        %5266 = vmatmul.f32.gmra.mxu0 %v4432
        %v5267 = vpop.f32.mrf.mxu0
        %v5268 = vadd.f32 %v5228, %v5267
        %5269 = vmatmul.f32.gmra.mxu0 %v4435
        %v5270 = vpop.f32.mrf.mxu0
        %v5271 = vadd.f32 %v5228, %v5270
        %5272 = vmatmul.f32.gmra.mxu0 %v4438
        %v5273 = vpop.f32.mrf.mxu0
        %v5274 = vadd.f32 %v5228, %v5273
        %5275 = vmatmul.f32.gmra.mxu0 %v4441
        %v5276 = vpop.f32.mrf.mxu0
        %v5277 = vadd.f32 %v5228, %v5276
        %5278 = vmatmul.f32.gmra.mxu0 %v4444
        %v5279 = vpop.f32.mrf.mxu0
        %v5280 = vadd.f32 %v5228, %v5279
        %5281 = vmatmul.f32.gmra.mxu0 %v4447
        %v5282 = vpop.f32.mrf.mxu0
        %v5283 = vadd.f32 %v5228, %v5282
        %5284 = vmatmul.f32.gmra.mxu0 %v4450
        %v5285 = vpop.f32.mrf.mxu0
        %v5286 = vadd.f32 %v5228, %v5285
        %5287 = vmatmul.f32.gmra.mxu0 %v4453
        %v5288 = vpop.f32.mrf.mxu0
        %v5289 = vadd.f32 %v5228, %v5288
        %5290 = vmatmul.f32.gmra.mxu0 %v4456
        %v5291 = vpop.f32.mrf.mxu0
        %v5292 = vadd.f32 %v5228, %v5291
        %5293 = vmatmul.f32.gmra.mxu0 %v4459
        %v5294 = vpop.f32.mrf.mxu0
        %v5295 = vadd.f32 %v5228, %v5294
        %5296 = vmatmul.f32.gmra.mxu0 %v4462
        %v5297 = vpop.f32.mrf.mxu0
        %v5298 = vadd.f32 %v5228, %v5297
        %5299 = vmatmul.f32.gmra.mxu0 %v4465
        %v5300 = vpop.f32.mrf.mxu0
        %v5301 = vadd.f32 %v5228, %v5300
        %5302 = vmatmul.f32.gmra.mxu0 %v4468
        %v5303 = vpop.f32.mrf.mxu0
        %v5304 = vadd.f32 %v5228, %v5303
        %5305 = vmatmul.f32.gmra.mxu0 %v4471
        %v5306 = vpop.f32.mrf.mxu0
        %v5307 = vadd.f32 %v5228, %v5306
        %5308 = vmatmul.f32.gmra.mxu0 %v4474
        %v5309 = vpop.f32.mrf.mxu0
        %v5310 = vadd.f32 %v5228, %v5309
        %5311 = vmatmul.f32.gmra.mxu0 %v4477
        %v5312 = vpop.f32.mrf.mxu0
        %v5313 = vadd.f32 %v5228, %v5312
        %5314 = vmatmul.f32.gmra.mxu0 %v4480
        %v5315 = vpop.f32.mrf.mxu0
        %v5316 = vadd.f32 %v5228, %v5315
        %5317 = vmatmul.f32.gmra.mxu0 %v4483
        %v5318 = vpop.f32.mrf.mxu0
        %v5319 = vadd.f32 %v5228, %v5318
        %5320 = vmatmul.f32.gmra.mxu0 %v4486
        %v5321 = vpop.f32.mrf.mxu0
        %v5322 = vadd.f32 %v5228, %v5321
        %5323 = vmatmul.f32.gmra.mxu0 %v4489
        %v5324 = vpop.f32.mrf.mxu0
        %v5325 = vadd.f32 %v5228, %v5324
        %5326 = vmatmul.f32.gmra.mxu0 %v4492
        %v5327 = vpop.f32.mrf.mxu0
        %v5328 = vadd.f32 %v5228, %v5327
        %5329 = vmatmul.f32.gmra.mxu0 %v4495
        %v5330 = vpop.f32.mrf.mxu0
        %v5331 = vadd.f32 %v5228, %v5330
        %5332 = vmatmul.f32.gmra.mxu0 %v4498
        %v5333 = vpop.f32.mrf.mxu0
        %v5334 = vadd.f32 %v5228, %v5333
        %5335 = vmatmul.f32.gmra.mxu0 %v4501
        %v5336 = vpop.f32.mrf.mxu0
        %v5337 = vadd.f32 %v5228, %v5336
        %5338 = vmatmul.f32.gmra.mxu0 %v4504
        %v5339 = vpop.f32.mrf.mxu0
        %v5340 = vadd.f32 %v5228, %v5339
        %5341 = vmatmul.f32.gmra.mxu0 %v4507
        %v5342 = vpop.f32.mrf.mxu0
        %v5343 = vadd.f32 %v5228, %v5342
        %5344 = vmatmul.f32.gmra.mxu0 %v4510
        %v5345 = vpop.f32.mrf.mxu0
        %v5346 = vadd.f32 %v5228, %v5345
        %5347 = vmatmul.f32.gmra.mxu0 %v4513
        %v5348 = vpop.f32.mrf.mxu0
        %v5349 = vadd.f32 %v5228, %v5348
        %5350 = vmatmul.f32.gmra.mxu0 %v4516
        %v5351 = vpop.f32.mrf.mxu0
        %v5352 = vadd.f32 %v5228, %v5351
        %5353 = vmatmul.f32.gmra.mxu0 %v4519
        %v5354 = vpop.f32.mrf.mxu0
        %v5355 = vadd.f32 %v5228, %v5354
        %5356 = vmatmul.f32.gmra.mxu0 %v4522
        %v5357 = vpop.f32.mrf.mxu0
        %v5358 = vadd.f32 %v5228, %v5357
        %5359 = vmatmul.f32.gmra.mxu0 %v4525
        %v5360 = vpop.f32.mrf.mxu0
        %v5361 = vadd.f32 %v5228, %v5360
        %5362 = vmatmul.f32.gmra.mxu0 %v4528
        %v5363 = vpop.f32.mrf.mxu0
        %v5364 = vadd.f32 %v5228, %v5363
        %5365 = vmatmul.f32.gmra.mxu0 %v4531
        %v5366 = vpop.f32.mrf.mxu0
        %v5367 = vadd.f32 %v5228, %v5366
        %5368 = vmatmul.f32.gmra.mxu0 %v4534
        %v5369 = vpop.f32.mrf.mxu0
        %v5370 = vadd.f32 %v5228, %v5369
        %5371 = vmatmul.f32.gmra.mxu0 %v4537
        %v5372 = vpop.f32.mrf.mxu0
        %v5373 = vadd.f32 %v5228, %v5372
        %5374 = vmatmul.f32.gmra.mxu0 %v4540
        %v5375 = vpop.f32.mrf.mxu0
        %v5376 = vadd.f32 %v5228, %v5375
        %5377 = vmatmul.f32.gmra.mxu0 %v4543
        %v5378 = vpop.f32.mrf.mxu0
        %v5379 = vadd.f32 %v5228, %v5378
        %5380 = vmatmul.f32.gmra.mxu0 %v4546
        %v5381 = vpop.f32.mrf.mxu0
        %v5382 = vadd.f32 %v5228, %v5381
        %5383 = vmatmul.f32.gmra.mxu0 %v4549
        %v5384 = vpop.f32.mrf.mxu0
        %v5385 = vadd.f32 %v5228, %v5384
        %5386 = vmatmul.f32.gmra.mxu0 %v4552
        %v5387 = vpop.f32.mrf.mxu0
        %v5388 = vadd.f32 %v5228, %v5387
        %5389 = vmatmul.f32.gmra.mxu0 %v4555
        %v5390 = vpop.f32.mrf.mxu0
        %v5391 = vadd.f32 %v5228, %v5390
        %5392 = vmatmul.f32.gmra.mxu0 %v4558
        %v5393 = vpop.f32.mrf.mxu0
        %v5394 = vadd.f32 %v5228, %v5393
        %5395 = vmatmul.f32.gmra.mxu0 %v4561
        %v5396 = vpop.f32.mrf.mxu0
        %v5397 = vadd.f32 %v5228, %v5396
        %5398 = vmatmul.f32.gmra.mxu0 %v4564
        %v5399 = vpop.f32.mrf.mxu0
        %v5400 = vadd.f32 %v5228, %v5399
        %5401 = vmatmul.f32.gmra.mxu0 %v4567
        %v5402 = vpop.f32.mrf.mxu0
        %v5403 = vadd.f32 %v5228, %v5402
        %5404 = vmatmul.f32.gmra.mxu0 %v4570
        %v5405 = vpop.f32.mrf.mxu0
        %v5406 = vadd.f32 %v5228, %v5405
        %5407 = vmatmul.f32.gmra.mxu0 %v4573
        %v5408 = vpop.f32.mrf.mxu0
        %v5409 = vadd.f32 %v5228, %v5408
        %5410 = vmatmul.f32.gmra.mxu0 %v4576
        %v5411 = vpop.f32.mrf.mxu0
        %v5412 = vadd.f32 %v5228, %v5411
        %5413 = vmatmul.f32.gmra.mxu0 %v4579
        %v5414 = vpop.f32.mrf.mxu0
        %v5415 = vadd.f32 %v5228, %v5414
        %5416 = vmatmul.f32.gmra.mxu0 %v4582
        %v5417 = vpop.f32.mrf.mxu0
        %v5418 = vadd.f32 %v5228, %v5417
        %5419 = vmatmul.f32.gmra.mxu0 %v4585
        %v5420 = vpop.f32.mrf.mxu0
        %v5421 = vadd.f32 %v5228, %v5420
        %5422 = vmatmul.f32.gmra.mxu0 %v4588
        %v5423 = vpop.f32.mrf.mxu0
        %v5424 = vadd.f32 %v5228, %v5423
        %5425 = vmatmul.f32.gmra.mxu0 %v4591
        %v5426 = vpop.f32.mrf.mxu0
        %v5427 = vadd.f32 %v5228, %v5426
        %5428 = vmatmul.f32.gmra.mxu0 %v4594
        %v5429 = vpop.f32.mrf.mxu0
        %v5430 = vadd.f32 %v5228, %v5429
        %5431 = vmatmul.f32.gmra.mxu0 %v4597
        %v5432 = vpop.f32.mrf.mxu0
        %v5433 = vadd.f32 %v5228, %v5432
        %5434 = vmatmul.f32.gmra.mxu0 %v4600
        %v5435 = vpop.f32.mrf.mxu0
        %v5436 = vadd.f32 %v5228, %v5435
        %5437 = vmatmul.f32.gmra.mxu0 %v4603
        %v5438 = vpop.f32.mrf.mxu0
        %v5439 = vadd.f32 %v5228, %v5438
        %5440 = vmatmul.f32.gmra.mxu0 %v4606
        %v5441 = vpop.f32.mrf.mxu0
        %v5442 = vadd.f32 %v5228, %v5441
        %5443 = vmatmul.f32.gmra.mxu0 %v4609
        %v5444 = vpop.f32.mrf.mxu0
        %v5445 = vadd.f32 %v5228, %v5444
        %5446 = vmatmul.f32.gmra.mxu0 %v4612
        %v5447 = vpop.f32.mrf.mxu0
        %v5448 = vadd.f32 %v5228, %v5447
        %5449 = vmatmul.f32.gmra.mxu0 %v4615
        %v5450 = vpop.f32.mrf.mxu0
        %v5451 = vadd.f32 %v5228, %v5450
        %5452 = vmatmul.f32.gmra.mxu0 %v4618
        %v5453 = vpop.f32.mrf.mxu0
        %v5454 = vadd.f32 %v5228, %v5453
        %5455 = vmatmul.f32.gmra.mxu0 %v4621
        %v5456 = vpop.f32.mrf.mxu0
        %v5457 = vadd.f32 %v5228, %v5456
        %5458 = vmatmul.f32.gmra.mxu0 %v4624
        %v5459 = vpop.f32.mrf.mxu0
        %v5460 = vadd.f32 %v5228, %v5459
        %5461 = vmatmul.f32.gmra.mxu0 %v4627
        %v5462 = vpop.f32.mrf.mxu0
        %v5463 = vadd.f32 %v5228, %v5462
        %5464 = vmatmul.f32.gmra.mxu0 %v4630
        %v5465 = vpop.f32.mrf.mxu0
        %v5466 = vadd.f32 %v5228, %v5465
        %5467 = vmatmul.f32.gmra.mxu0 %v4633
        %v5468 = vpop.f32.mrf.mxu0
        %v5469 = vadd.f32 %v5228, %v5468
        %5470 = vmatmul.f32.gmra.mxu0 %v4636
        %v5471 = vpop.f32.mrf.mxu0
        %v5472 = vadd.f32 %v5228, %v5471
        %5473 = vmatmul.f32.gmra.mxu0 %v4639
        %v5474 = vpop.f32.mrf.mxu0
        %v5475 = vadd.f32 %v5228, %v5474
        %5476 = vmatmul.f32.gmra.mxu0 %v4642
        %v5477 = vpop.f32.mrf.mxu0
        %v5478 = vadd.f32 %v5228, %v5477
        %5479 = vmatmul.f32.gmra.mxu0 %v4645
        %v5480 = vpop.f32.mrf.mxu0
        %v5481 = vadd.f32 %v5228, %v5480
        %5482 = vmatmul.f32.gmra.mxu0 %v4648
        %v5483 = vpop.f32.mrf.mxu0
        %v5484 = vadd.f32 %v5228, %v5483
        %5485 = vmatmul.f32.gmra.mxu0 %v4651
        %v5486 = vpop.f32.mrf.mxu0
        %v5487 = vadd.f32 %v5228, %v5486
        %5488 = vmatmul.f32.gmra.mxu0 %v4654
        %v5489 = vpop.f32.mrf.mxu0
        %v5490 = vadd.f32 %v5228, %v5489
        %5491 = vmatmul.f32.gmra.mxu0 %v4657
        %v5492 = vpop.f32.mrf.mxu0
        %v5493 = vadd.f32 %v5228, %v5492
        %5494 = vmatmul.f32.gmra.mxu0 %v4660
        %v5495 = vpop.f32.mrf.mxu0
        %v5496 = vadd.f32 %v5228, %v5495
        %5497 = vmatmul.f32.gmra.mxu0 %v4663
        %v5498 = vpop.f32.mrf.mxu0
        %v5499 = vadd.f32 %v5228, %v5498
        %5500 = vmatmul.f32.gmra.mxu0 %v4666
        %v5501 = vpop.f32.mrf.mxu0
        %v5502 = vadd.f32 %v5228, %v5501
        %5503 = vmatmul.f32.gmra.mxu0 %v4669
        %v5504 = vpop.f32.mrf.mxu0
        %v5505 = vadd.f32 %v5228, %v5504
        %5506 = vmatmul.f32.gmra.mxu0 %v4672
        %v5507 = vpop.f32.mrf.mxu0
        %v5508 = vadd.f32 %v5228, %v5507
        %5509 = vmatmul.f32.gmra.mxu0 %v4675
        %v5510 = vpop.f32.mrf.mxu0
        %v5511 = vadd.f32 %v5228, %v5510
        %5512 = vmatmul.f32.gmra.mxu0 %v4678
        %v5513 = vpop.f32.mrf.mxu0
        %v5514 = vadd.f32 %v5228, %v5513
        %5515 = vmatmul.f32.gmra.mxu0 %v4681
        %v5516 = vpop.f32.mrf.mxu0
        %v5517 = vadd.f32 %v5228, %v5516
        %5518 = vmatmul.f32.gmra.mxu0 %v4684
        %v5519 = vpop.f32.mrf.mxu0
        %v5520 = vadd.f32 %v5228, %v5519
        %5521 = vmatmul.f32.gmra.mxu0 %v4687
        %v5522 = vpop.f32.mrf.mxu0
        %v5523 = vadd.f32 %v5228, %v5522
        %5524 = vmatmul.f32.gmra.mxu0 %v4690
        %v5525 = vpop.f32.mrf.mxu0
        %v5526 = vadd.f32 %v5228, %v5525
        %5527 = vmatmul.f32.gmra.mxu0 %v4693
        %v5528 = vpop.f32.mrf.mxu0
        %v5529 = vadd.f32 %v5228, %v5528
        %5530 = vmatmul.f32.gmra.mxu0 %v4696
        %v5531 = vpop.f32.mrf.mxu0
        %v5532 = vadd.f32 %v5228, %v5531
        %5533 = vmatmul.f32.gmra.mxu0 %v4699
        %v5534 = vpop.f32.mrf.mxu0
        %v5535 = vadd.f32 %v5228, %v5534
        %5536 = vmatmul.f32.gmra.mxu0 %v4702
        %v5537 = vpop.f32.mrf.mxu0
        %v5538 = vadd.f32 %v5228, %v5537
        %5539 = vmatmul.f32.gmra.mxu0 %v4705
        %v5540 = vpop.f32.mrf.mxu0
        %v5541 = vadd.f32 %v5228, %v5540
        %5542 = vmatmul.f32.gmra.mxu0 %v4708
        %v5543 = vpop.f32.mrf.mxu0
        %v5544 = vadd.f32 %v5228, %v5543
        %5545 = vmatmul.f32.gmra.mxu0 %v4711
        %v5546 = vpop.f32.mrf.mxu0
        %v5547 = vadd.f32 %v5228, %v5546
        %5548 = vmatmul.f32.gmra.mxu0 %v4714
        %v5549 = vpop.f32.mrf.mxu0
        %v5550 = vadd.f32 %v5228, %v5549
        %5551 = vmatmul.f32.gmra.mxu0 %v4717
        %v5552 = vpop.f32.mrf.mxu0
        %v5553 = vadd.f32 %v5228, %v5552
        %5554 = vmatmul.f32.gmra.mxu0 %v4720
        %v5555 = vpop.f32.mrf.mxu0
        %v5556 = vadd.f32 %v5228, %v5555
        %5557 = vmatmul.f32.gmra.mxu0 %v4723
        %v5558 = vpop.f32.mrf.mxu0
        %v5559 = vadd.f32 %v5228, %v5558
        %5560 = vmatmul.f32.gmra.mxu0 %v4726
        %v5561 = vpop.f32.mrf.mxu0
        %v5562 = vadd.f32 %v5228, %v5561
        %5563 = vmatmul.f32.gmra.mxu0 %v4729
        %v5564 = vpop.f32.mrf.mxu0
        %v5565 = vadd.f32 %v5228, %v5564
        %5566 = vmatmul.f32.gmra.mxu0 %v4732
        %v5567 = vpop.f32.mrf.mxu0
        %v5568 = vadd.f32 %v5228, %v5567
        %5569 = vmatmul.f32.gmra.mxu0 %v4735
        %v5570 = vpop.f32.mrf.mxu0
        %v5571 = vadd.f32 %v5228, %v5570
        %5572 = vmatmul.f32.gmra.mxu0 %v4738
        %v5573 = vpop.f32.mrf.mxu0
        %v5574 = vadd.f32 %v5228, %v5573
        %5575 = vmatmul.f32.gmra.mxu0 %v4741
        %v5576 = vpop.f32.mrf.mxu0
        %v5577 = vadd.f32 %v5228, %v5576
        %5578 = vmatmul.f32.gmra.mxu0 %v4744
        %v5579 = vpop.f32.mrf.mxu0
        %v5580 = vadd.f32 %v5228, %v5579
        %5581 = vmatmul.f32.gmra.mxu0 %v4747
        %v5582 = vpop.f32.mrf.mxu0
        %v5583 = vadd.f32 %v5228, %v5582
        %5584 = vmatmul.f32.gmra.mxu0 %v4750
        %v5585 = vpop.f32.mrf.mxu0
        %v5586 = vadd.f32 %v5228, %v5585
        %5587 = vmatmul.f32.gmra.mxu0 %v4753
        %v5588 = vpop.f32.mrf.mxu0
        %v5589 = vadd.f32 %v5228, %v5588
        %5590 = vmatmul.f32.gmra.mxu0 %v4756
        %v5591 = vpop.f32.mrf.mxu0
        %v5592 = vadd.f32 %v5228, %v5591
        %5593 = vmatmul.f32.gmra.mxu0 %v4759
        %v5594 = vpop.f32.mrf.mxu0
        %v5595 = vadd.f32 %v5228, %v5594
        %5596 = vmatmul.f32.gmra.mxu0 %v4762
        %v5597 = vpop.f32.mrf.mxu0
        %v5598 = vadd.f32 %v5228, %v5597
        %5599 = vmatmul.f32.gmra.mxu0 %v4765
        %v5600 = vpop.f32.mrf.mxu0
        %v5601 = vadd.f32 %v5228, %v5600
        %5602 = vmatmul.f32.gmra.mxu0 %v4768
        %v5603 = vpop.f32.mrf.mxu0
        %v5604 = vadd.f32 %v5228, %v5603
        %5605 = vmatmul.f32.gmra.mxu0 %v4771
        %v5606 = vpop.f32.mrf.mxu0
        %v5607 = vadd.f32 %v5228, %v5606
        %5608 = vmatmul.f32.gmra.mxu0 %v4774
        %v5609 = vpop.f32.mrf.mxu0
        %v5610 = vadd.f32 %v5228, %v5609
        %5611 = vmatmul.f32.gmra.mxu0 %v4777
        %v5612 = vpop.f32.mrf.mxu0
        %v5613 = vadd.f32 %v5228, %v5612
        %5614 = vmatmul.f32.gmra.mxu0 %v4780
        %v5615 = vpop.f32.mrf.mxu0
        %v5616 = vadd.f32 %v5228, %v5615
        %5617 = vmatmul.f32.gmra.mxu0 %v4783
        %v5618 = vpop.f32.mrf.mxu0
        %v5619 = vadd.f32 %v5228, %v5618
        %5620 = vmatmul.f32.gmra.mxu0 %v4786
        %v5621 = vpop.f32.mrf.mxu0
        %v5622 = vadd.f32 %v5228, %v5621
        %5623 = vmatmul.f32.gmra.mxu0 %v4789
        %v5624 = vpop.f32.mrf.mxu0
        %v5625 = vadd.f32 %v5228, %v5624
        %5626 = vmatmul.f32.gmra.mxu0 %v4792
        %v5627 = vpop.f32.mrf.mxu0
        %v5628 = vadd.f32 %v5228, %v5627
        %5629 = vdwg.mxu0
        %5630 = vmatpush.msra.mxu0 %v5210
        %5631 = vmatpush.msra.mxu0 %v5209
        %5632 = vmatpush.msra.mxu0 %v5208
        %5633 = vmatpush.msra.mxu0 %v5207
        %5634 = vmatpush.msra.mxu0 %v5206
        %5635 = vmatpush.msra.mxu0 %v5205
        %5636 = vmatpush.msra.mxu0 %v5204
        %5637 = vmatpush.msra.mxu0 %v5203
        %5638 = vmatpush.msra.mxu0 %v5202
        %5639 = vmatpush.msra.mxu0 %v5201
        %5640 = vmatpush.msra.mxu0 %v5200
        %5641 = vmatpush.msra.mxu0 %v5199
        %5642 = vmatpush.msra.mxu0 %v5198
        %5643 = vmatpush.msra.mxu0 %v5197
        %5644 = vmatpush.msra.mxu0 %v5196
        %5645 = vmatpush.msra.mxu0 %v5195
        %5646 = vmatmul.f32.gmra.mxu0 %v4412
        %v5647 = vpop.f32.mrf.mxu0
        %v5648 = vadd.f32 %v5247, %v5647
        %5649 = vmatmul.f32.gmra.mxu0 %v4415
        %v5650 = vpop.f32.mrf.mxu0
        %v5651 = vadd.f32 %v5250, %v5650
        %5652 = vmatmul.f32.gmra.mxu0 %v4418
        %v5653 = vpop.f32.mrf.mxu0
        %v5654 = vadd.f32 %v5253, %v5653
        %5655 = vmatmul.f32.gmra.mxu0 %v4421
        %v5656 = vpop.f32.mrf.mxu0
        %v5657 = vadd.f32 %v5256, %v5656
        %5658 = vmatmul.f32.gmra.mxu0 %v4424
        %v5659 = vpop.f32.mrf.mxu0
        %v5660 = vadd.f32 %v5259, %v5659
        %5661 = vmatmul.f32.gmra.mxu0 %v4427
        %v5662 = vpop.f32.mrf.mxu0
        %v5663 = vadd.f32 %v5262, %v5662
        %5664 = vmatmul.f32.gmra.mxu0 %v4430
        %v5665 = vpop.f32.mrf.mxu0
        %v5666 = vadd.f32 %v5265, %v5665
        %5667 = vmatmul.f32.gmra.mxu0 %v4433
        %v5668 = vpop.f32.mrf.mxu0
        %v5669 = vadd.f32 %v5268, %v5668
        %5670 = vmatmul.f32.gmra.mxu0 %v4436
        %v5671 = vpop.f32.mrf.mxu0
        %v5672 = vadd.f32 %v5271, %v5671
        %5673 = vmatmul.f32.gmra.mxu0 %v4439
        %v5674 = vpop.f32.mrf.mxu0
        %v5675 = vadd.f32 %v5274, %v5674
        %5676 = vmatmul.f32.gmra.mxu0 %v4442
        %v5677 = vpop.f32.mrf.mxu0
        %v5678 = vadd.f32 %v5277, %v5677
        %5679 = vmatmul.f32.gmra.mxu0 %v4445
        %v5680 = vpop.f32.mrf.mxu0
        %v5681 = vadd.f32 %v5280, %v5680
        %5682 = vmatmul.f32.gmra.mxu0 %v4448
        %v5683 = vpop.f32.mrf.mxu0
        %v5684 = vadd.f32 %v5283, %v5683
        %5685 = vmatmul.f32.gmra.mxu0 %v4451
        %v5686 = vpop.f32.mrf.mxu0
        %v5687 = vadd.f32 %v5286, %v5686
        %5688 = vmatmul.f32.gmra.mxu0 %v4454
        %v5689 = vpop.f32.mrf.mxu0
        %v5690 = vadd.f32 %v5289, %v5689
        %5691 = vmatmul.f32.gmra.mxu0 %v4457
        %v5692 = vpop.f32.mrf.mxu0
        %v5693 = vadd.f32 %v5292, %v5692
        %5694 = vmatmul.f32.gmra.mxu0 %v4460
        %v5695 = vpop.f32.mrf.mxu0
        %v5696 = vadd.f32 %v5295, %v5695
        %5697 = vmatmul.f32.gmra.mxu0 %v4463
        %v5698 = vpop.f32.mrf.mxu0
        %v5699 = vadd.f32 %v5298, %v5698
        %5700 = vmatmul.f32.gmra.mxu0 %v4466
        %v5701 = vpop.f32.mrf.mxu0
        %v5702 = vadd.f32 %v5301, %v5701
        %5703 = vmatmul.f32.gmra.mxu0 %v4469
        %v5704 = vpop.f32.mrf.mxu0
        %v5705 = vadd.f32 %v5304, %v5704
        %5706 = vmatmul.f32.gmra.mxu0 %v4472
        %v5707 = vpop.f32.mrf.mxu0
        %v5708 = vadd.f32 %v5307, %v5707
        %5709 = vmatmul.f32.gmra.mxu0 %v4475
        %v5710 = vpop.f32.mrf.mxu0
        %v5711 = vadd.f32 %v5310, %v5710
        %5712 = vmatmul.f32.gmra.mxu0 %v4478
        %v5713 = vpop.f32.mrf.mxu0
        %v5714 = vadd.f32 %v5313, %v5713
        %5715 = vmatmul.f32.gmra.mxu0 %v4481
        %v5716 = vpop.f32.mrf.mxu0
        %v5717 = vadd.f32 %v5316, %v5716
        %5718 = vmatmul.f32.gmra.mxu0 %v4484
        %v5719 = vpop.f32.mrf.mxu0
        %v5720 = vadd.f32 %v5319, %v5719
        %5721 = vmatmul.f32.gmra.mxu0 %v4487
        %v5722 = vpop.f32.mrf.mxu0
        %v5723 = vadd.f32 %v5322, %v5722
        %5724 = vmatmul.f32.gmra.mxu0 %v4490
        %v5725 = vpop.f32.mrf.mxu0
        %v5726 = vadd.f32 %v5325, %v5725
        %5727 = vmatmul.f32.gmra.mxu0 %v4493
        %v5728 = vpop.f32.mrf.mxu0
        %v5729 = vadd.f32 %v5328, %v5728
        %5730 = vmatmul.f32.gmra.mxu0 %v4496
        %v5731 = vpop.f32.mrf.mxu0
        %v5732 = vadd.f32 %v5331, %v5731
        %5733 = vmatmul.f32.gmra.mxu0 %v4499
        %v5734 = vpop.f32.mrf.mxu0
        %v5735 = vadd.f32 %v5334, %v5734
        %5736 = vmatmul.f32.gmra.mxu0 %v4502
        %v5737 = vpop.f32.mrf.mxu0
        %v5738 = vadd.f32 %v5337, %v5737
        %5739 = vmatmul.f32.gmra.mxu0 %v4505
        %v5740 = vpop.f32.mrf.mxu0
        %v5741 = vadd.f32 %v5340, %v5740
        %5742 = vmatmul.f32.gmra.mxu0 %v4508
        %v5743 = vpop.f32.mrf.mxu0
        %v5744 = vadd.f32 %v5343, %v5743
        %5745 = vmatmul.f32.gmra.mxu0 %v4511
        %v5746 = vpop.f32.mrf.mxu0
        %v5747 = vadd.f32 %v5346, %v5746
        %5748 = vmatmul.f32.gmra.mxu0 %v4514
        %v5749 = vpop.f32.mrf.mxu0
        %v5750 = vadd.f32 %v5349, %v5749
        %5751 = vmatmul.f32.gmra.mxu0 %v4517
        %v5752 = vpop.f32.mrf.mxu0
        %v5753 = vadd.f32 %v5352, %v5752
        %5754 = vmatmul.f32.gmra.mxu0 %v4520
        %v5755 = vpop.f32.mrf.mxu0
        %v5756 = vadd.f32 %v5355, %v5755
        %5757 = vmatmul.f32.gmra.mxu0 %v4523
        %v5758 = vpop.f32.mrf.mxu0
        %v5759 = vadd.f32 %v5358, %v5758
        %5760 = vmatmul.f32.gmra.mxu0 %v4526
        %v5761 = vpop.f32.mrf.mxu0
        %v5762 = vadd.f32 %v5361, %v5761
        %5763 = vmatmul.f32.gmra.mxu0 %v4529
        %v5764 = vpop.f32.mrf.mxu0
        %v5765 = vadd.f32 %v5364, %v5764
        %5766 = vmatmul.f32.gmra.mxu0 %v4532
        %v5767 = vpop.f32.mrf.mxu0
        %v5768 = vadd.f32 %v5367, %v5767
        %5769 = vmatmul.f32.gmra.mxu0 %v4535
        %v5770 = vpop.f32.mrf.mxu0
        %v5771 = vadd.f32 %v5370, %v5770
        %5772 = vmatmul.f32.gmra.mxu0 %v4538
        %v5773 = vpop.f32.mrf.mxu0
        %v5774 = vadd.f32 %v5373, %v5773
        %5775 = vmatmul.f32.gmra.mxu0 %v4541
        %v5776 = vpop.f32.mrf.mxu0
        %v5777 = vadd.f32 %v5376, %v5776
        %5778 = vmatmul.f32.gmra.mxu0 %v4544
        %v5779 = vpop.f32.mrf.mxu0
        %v5780 = vadd.f32 %v5379, %v5779
        %5781 = vmatmul.f32.gmra.mxu0 %v4547
        %v5782 = vpop.f32.mrf.mxu0
        %v5783 = vadd.f32 %v5382, %v5782
        %5784 = vmatmul.f32.gmra.mxu0 %v4550
        %v5785 = vpop.f32.mrf.mxu0
        %v5786 = vadd.f32 %v5385, %v5785
        %5787 = vmatmul.f32.gmra.mxu0 %v4553
        %v5788 = vpop.f32.mrf.mxu0
        %v5789 = vadd.f32 %v5388, %v5788
        %5790 = vmatmul.f32.gmra.mxu0 %v4556
        %v5791 = vpop.f32.mrf.mxu0
        %v5792 = vadd.f32 %v5391, %v5791
        %5793 = vmatmul.f32.gmra.mxu0 %v4559
        %v5794 = vpop.f32.mrf.mxu0
        %v5795 = vadd.f32 %v5394, %v5794
        %5796 = vmatmul.f32.gmra.mxu0 %v4562
        %v5797 = vpop.f32.mrf.mxu0
        %v5798 = vadd.f32 %v5397, %v5797
        %5799 = vmatmul.f32.gmra.mxu0 %v4565
        %v5800 = vpop.f32.mrf.mxu0
        %v5801 = vadd.f32 %v5400, %v5800
        %5802 = vmatmul.f32.gmra.mxu0 %v4568
        %v5803 = vpop.f32.mrf.mxu0
        %v5804 = vadd.f32 %v5403, %v5803
        %5805 = vmatmul.f32.gmra.mxu0 %v4571
        %v5806 = vpop.f32.mrf.mxu0
        %v5807 = vadd.f32 %v5406, %v5806
        %5808 = vmatmul.f32.gmra.mxu0 %v4574
        %v5809 = vpop.f32.mrf.mxu0
        %v5810 = vadd.f32 %v5409, %v5809
        %5811 = vmatmul.f32.gmra.mxu0 %v4577
        %v5812 = vpop.f32.mrf.mxu0
        %v5813 = vadd.f32 %v5412, %v5812
        %5814 = vmatmul.f32.gmra.mxu0 %v4580
        %v5815 = vpop.f32.mrf.mxu0
        %v5816 = vadd.f32 %v5415, %v5815
        %5817 = vmatmul.f32.gmra.mxu0 %v4583
        %v5818 = vpop.f32.mrf.mxu0
        %v5819 = vadd.f32 %v5418, %v5818
        %5820 = vmatmul.f32.gmra.mxu0 %v4586
        %v5821 = vpop.f32.mrf.mxu0
        %v5822 = vadd.f32 %v5421, %v5821
        %5823 = vmatmul.f32.gmra.mxu0 %v4589
        %v5824 = vpop.f32.mrf.mxu0
        %v5825 = vadd.f32 %v5424, %v5824
        %5826 = vmatmul.f32.gmra.mxu0 %v4592
        %v5827 = vpop.f32.mrf.mxu0
        %v5828 = vadd.f32 %v5427, %v5827
        %5829 = vmatmul.f32.gmra.mxu0 %v4595
        %v5830 = vpop.f32.mrf.mxu0
        %v5831 = vadd.f32 %v5430, %v5830
        %5832 = vmatmul.f32.gmra.mxu0 %v4598
        %v5833 = vpop.f32.mrf.mxu0
        %v5834 = vadd.f32 %v5433, %v5833
        %5835 = vmatmul.f32.gmra.mxu0 %v4601
        %v5836 = vpop.f32.mrf.mxu0
        %v5837 = vadd.f32 %v5436, %v5836
        %5838 = vmatmul.f32.gmra.mxu0 %v4604
        %v5839 = vpop.f32.mrf.mxu0
        %v5840 = vadd.f32 %v5439, %v5839
        %5841 = vmatmul.f32.gmra.mxu0 %v4607
        %v5842 = vpop.f32.mrf.mxu0
        %v5843 = vadd.f32 %v5442, %v5842
        %5844 = vmatmul.f32.gmra.mxu0 %v4610
        %v5845 = vpop.f32.mrf.mxu0
        %v5846 = vadd.f32 %v5445, %v5845
        %5847 = vmatmul.f32.gmra.mxu0 %v4613
        %v5848 = vpop.f32.mrf.mxu0
        %v5849 = vadd.f32 %v5448, %v5848
        %5850 = vmatmul.f32.gmra.mxu0 %v4616
        %v5851 = vpop.f32.mrf.mxu0
        %v5852 = vadd.f32 %v5451, %v5851
        %5853 = vmatmul.f32.gmra.mxu0 %v4619
        %v5854 = vpop.f32.mrf.mxu0
        %v5855 = vadd.f32 %v5454, %v5854
        %5856 = vmatmul.f32.gmra.mxu0 %v4622
        %v5857 = vpop.f32.mrf.mxu0
        %v5858 = vadd.f32 %v5457, %v5857
        %5859 = vmatmul.f32.gmra.mxu0 %v4625
        %v5860 = vpop.f32.mrf.mxu0
        %v5861 = vadd.f32 %v5460, %v5860
        %5862 = vmatmul.f32.gmra.mxu0 %v4628
        %v5863 = vpop.f32.mrf.mxu0
        %v5864 = vadd.f32 %v5463, %v5863
        %5865 = vmatmul.f32.gmra.mxu0 %v4631
        %v5866 = vpop.f32.mrf.mxu0
        %v5867 = vadd.f32 %v5466, %v5866
        %5868 = vmatmul.f32.gmra.mxu0 %v4634
        %v5869 = vpop.f32.mrf.mxu0
        %v5870 = vadd.f32 %v5469, %v5869
        %5871 = vmatmul.f32.gmra.mxu0 %v4637
        %v5872 = vpop.f32.mrf.mxu0
        %v5873 = vadd.f32 %v5472, %v5872
        %5874 = vmatmul.f32.gmra.mxu0 %v4640
        %v5875 = vpop.f32.mrf.mxu0
        %v5876 = vadd.f32 %v5475, %v5875
        %5877 = vmatmul.f32.gmra.mxu0 %v4643
        %v5878 = vpop.f32.mrf.mxu0
        %v5879 = vadd.f32 %v5478, %v5878
        %5880 = vmatmul.f32.gmra.mxu0 %v4646
        %v5881 = vpop.f32.mrf.mxu0
        %v5882 = vadd.f32 %v5481, %v5881
        %5883 = vmatmul.f32.gmra.mxu0 %v4649
        %v5884 = vpop.f32.mrf.mxu0
        %v5885 = vadd.f32 %v5484, %v5884
        %5886 = vmatmul.f32.gmra.mxu0 %v4652
        %v5887 = vpop.f32.mrf.mxu0
        %v5888 = vadd.f32 %v5487, %v5887
        %5889 = vmatmul.f32.gmra.mxu0 %v4655
        %v5890 = vpop.f32.mrf.mxu0
        %v5891 = vadd.f32 %v5490, %v5890
        %5892 = vmatmul.f32.gmra.mxu0 %v4658
        %v5893 = vpop.f32.mrf.mxu0
        %v5894 = vadd.f32 %v5493, %v5893
        %5895 = vmatmul.f32.gmra.mxu0 %v4661
        %v5896 = vpop.f32.mrf.mxu0
        %v5897 = vadd.f32 %v5496, %v5896
        %5898 = vmatmul.f32.gmra.mxu0 %v4664
        %v5899 = vpop.f32.mrf.mxu0
        %v5900 = vadd.f32 %v5499, %v5899
        %5901 = vmatmul.f32.gmra.mxu0 %v4667
        %v5902 = vpop.f32.mrf.mxu0
        %v5903 = vadd.f32 %v5502, %v5902
        %5904 = vmatmul.f32.gmra.mxu0 %v4670
        %v5905 = vpop.f32.mrf.mxu0
        %v5906 = vadd.f32 %v5505, %v5905
        %5907 = vmatmul.f32.gmra.mxu0 %v4673
        %v5908 = vpop.f32.mrf.mxu0
        %v5909 = vadd.f32 %v5508, %v5908
        %5910 = vmatmul.f32.gmra.mxu0 %v4676
        %v5911 = vpop.f32.mrf.mxu0
        %v5912 = vadd.f32 %v5511, %v5911
        %5913 = vmatmul.f32.gmra.mxu0 %v4679
        %v5914 = vpop.f32.mrf.mxu0
        %v5915 = vadd.f32 %v5514, %v5914
        %5916 = vmatmul.f32.gmra.mxu0 %v4682
        %v5917 = vpop.f32.mrf.mxu0
        %v5918 = vadd.f32 %v5517, %v5917
        %5919 = vmatmul.f32.gmra.mxu0 %v4685
        %v5920 = vpop.f32.mrf.mxu0
        %v5921 = vadd.f32 %v5520, %v5920
        %5922 = vmatmul.f32.gmra.mxu0 %v4688
        %v5923 = vpop.f32.mrf.mxu0
        %v5924 = vadd.f32 %v5523, %v5923
        %5925 = vmatmul.f32.gmra.mxu0 %v4691
        %v5926 = vpop.f32.mrf.mxu0
        %v5927 = vadd.f32 %v5526, %v5926
        %5928 = vmatmul.f32.gmra.mxu0 %v4694
        %v5929 = vpop.f32.mrf.mxu0
        %v5930 = vadd.f32 %v5529, %v5929
        %5931 = vmatmul.f32.gmra.mxu0 %v4697
        %v5932 = vpop.f32.mrf.mxu0
        %v5933 = vadd.f32 %v5532, %v5932
        %5934 = vmatmul.f32.gmra.mxu0 %v4700
        %v5935 = vpop.f32.mrf.mxu0
        %v5936 = vadd.f32 %v5535, %v5935
        %5937 = vmatmul.f32.gmra.mxu0 %v4703
        %v5938 = vpop.f32.mrf.mxu0
        %v5939 = vadd.f32 %v5538, %v5938
        %5940 = vmatmul.f32.gmra.mxu0 %v4706
        %v5941 = vpop.f32.mrf.mxu0
        %v5942 = vadd.f32 %v5541, %v5941
        %5943 = vmatmul.f32.gmra.mxu0 %v4709
        %v5944 = vpop.f32.mrf.mxu0
        %v5945 = vadd.f32 %v5544, %v5944
        %5946 = vmatmul.f32.gmra.mxu0 %v4712
        %v5947 = vpop.f32.mrf.mxu0
        %v5948 = vadd.f32 %v5547, %v5947
        %5949 = vmatmul.f32.gmra.mxu0 %v4715
        %v5950 = vpop.f32.mrf.mxu0
        %v5951 = vadd.f32 %v5550, %v5950
        %5952 = vmatmul.f32.gmra.mxu0 %v4718
        %v5953 = vpop.f32.mrf.mxu0
        %v5954 = vadd.f32 %v5553, %v5953
        %5955 = vmatmul.f32.gmra.mxu0 %v4721
        %v5956 = vpop.f32.mrf.mxu0
        %v5957 = vadd.f32 %v5556, %v5956
        %5958 = vmatmul.f32.gmra.mxu0 %v4724
        %v5959 = vpop.f32.mrf.mxu0
        %v5960 = vadd.f32 %v5559, %v5959
        %5961 = vmatmul.f32.gmra.mxu0 %v4727
        %v5962 = vpop.f32.mrf.mxu0
        %v5963 = vadd.f32 %v5562, %v5962
        %5964 = vmatmul.f32.gmra.mxu0 %v4730
        %v5965 = vpop.f32.mrf.mxu0
        %v5966 = vadd.f32 %v5565, %v5965
        %5967 = vmatmul.f32.gmra.mxu0 %v4733
        %v5968 = vpop.f32.mrf.mxu0
        %v5969 = vadd.f32 %v5568, %v5968
        %5970 = vmatmul.f32.gmra.mxu0 %v4736
        %v5971 = vpop.f32.mrf.mxu0
        %v5972 = vadd.f32 %v5571, %v5971
        %5973 = vmatmul.f32.gmra.mxu0 %v4739
        %v5974 = vpop.f32.mrf.mxu0
        %v5975 = vadd.f32 %v5574, %v5974
        %5976 = vmatmul.f32.gmra.mxu0 %v4742
        %v5977 = vpop.f32.mrf.mxu0
        %v5978 = vadd.f32 %v5577, %v5977
        %5979 = vmatmul.f32.gmra.mxu0 %v4745
        %v5980 = vpop.f32.mrf.mxu0
        %v5981 = vadd.f32 %v5580, %v5980
        %5982 = vmatmul.f32.gmra.mxu0 %v4748
        %v5983 = vpop.f32.mrf.mxu0
        %v5984 = vadd.f32 %v5583, %v5983
        %5985 = vmatmul.f32.gmra.mxu0 %v4751
        %v5986 = vpop.f32.mrf.mxu0
        %v5987 = vadd.f32 %v5586, %v5986
        %5988 = vmatmul.f32.gmra.mxu0 %v4754
        %v5989 = vpop.f32.mrf.mxu0
        %v5990 = vadd.f32 %v5589, %v5989
        %5991 = vmatmul.f32.gmra.mxu0 %v4757
        %v5992 = vpop.f32.mrf.mxu0
        %v5993 = vadd.f32 %v5592, %v5992
        %5994 = vmatmul.f32.gmra.mxu0 %v4760
        %v5995 = vpop.f32.mrf.mxu0
        %v5996 = vadd.f32 %v5595, %v5995
        %5997 = vmatmul.f32.gmra.mxu0 %v4763
        %v5998 = vpop.f32.mrf.mxu0
        %v5999 = vadd.f32 %v5598, %v5998
        %6000 = vmatmul.f32.gmra.mxu0 %v4766
        %v6001 = vpop.f32.mrf.mxu0
        %v6002 = vadd.f32 %v5601, %v6001
        %6003 = vmatmul.f32.gmra.mxu0 %v4769
        %v6004 = vpop.f32.mrf.mxu0
        %v6005 = vadd.f32 %v5604, %v6004
        %6006 = vmatmul.f32.gmra.mxu0 %v4772
        %v6007 = vpop.f32.mrf.mxu0
        %v6008 = vadd.f32 %v5607, %v6007
        %6009 = vmatmul.f32.gmra.mxu0 %v4775
        %v6010 = vpop.f32.mrf.mxu0
        %v6011 = vadd.f32 %v5610, %v6010
        %6012 = vmatmul.f32.gmra.mxu0 %v4778
        %v6013 = vpop.f32.mrf.mxu0
        %v6014 = vadd.f32 %v5613, %v6013
        %6015 = vmatmul.f32.gmra.mxu0 %v4781
        %v6016 = vpop.f32.mrf.mxu0
        %v6017 = vadd.f32 %v5616, %v6016
        %6018 = vmatmul.f32.gmra.mxu0 %v4784
        %v6019 = vpop.f32.mrf.mxu0
        %v6020 = vadd.f32 %v5619, %v6019
        %6021 = vmatmul.f32.gmra.mxu0 %v4787
        %v6022 = vpop.f32.mrf.mxu0
        %v6023 = vadd.f32 %v5622, %v6022
        %6024 = vmatmul.f32.gmra.mxu0 %v4790
        %v6025 = vpop.f32.mrf.mxu0
        %v6026 = vadd.f32 %v5625, %v6025
        %6027 = vmatmul.f32.gmra.mxu0 %v4793
        %v6028 = vpop.f32.mrf.mxu0
        %v6029 = vadd.f32 %v5628, %v6028
        %6030 = vdwg.mxu0
        %6031 = vmatpush.msra.mxu0 %v5226
        %6032 = vmatpush.msra.mxu0 %v5225
        %6033 = vmatpush.msra.mxu0 %v5224
        %6034 = vmatpush.msra.mxu0 %v5223
        %6035 = vmatpush.msra.mxu0 %v5222
        %6036 = vmatpush.msra.mxu0 %v5221
        %6037 = vmatpush.msra.mxu0 %v5220
        %6038 = vmatpush.msra.mxu0 %v5219
        %6039 = vmatpush.msra.mxu0 %v5218
        %6040 = vmatpush.msra.mxu0 %v5217
        %6041 = vmatpush.msra.mxu0 %v5216
        %6042 = vmatpush.msra.mxu0 %v5215
        %6043 = vmatpush.msra.mxu0 %v5214
        %6044 = vmatpush.msra.mxu0 %v5213
        %6045 = vmatpush.msra.mxu0 %v5212
        %6046 = vmatpush.msra.mxu0 %v5211
        %6047 = vmatmul.f32.gmra.mxu0 %v4413
        %v6048 = vpop.f32.mrf.mxu0
        %v6049 = vadd.f32 %v5648, %v6048
        %6050 = vmatmul.f32.gmra.mxu0 %v4416
        %v6051 = vpop.f32.mrf.mxu0
        %v6052 = vadd.f32 %v5651, %v6051
        %6053 = vmatmul.f32.gmra.mxu0 %v4419
        %v6054 = vpop.f32.mrf.mxu0
        %v6055 = vadd.f32 %v5654, %v6054
        %6056 = vmatmul.f32.gmra.mxu0 %v4422
        %v6057 = vpop.f32.mrf.mxu0
        %v6058 = vadd.f32 %v5657, %v6057
        %6059 = vmatmul.f32.gmra.mxu0 %v4425
        %v6060 = vpop.f32.mrf.mxu0
        %v6061 = vadd.f32 %v5660, %v6060
        %6062 = vmatmul.f32.gmra.mxu0 %v4428
        %v6063 = vpop.f32.mrf.mxu0
        %v6064 = vadd.f32 %v5663, %v6063
        %6065 = vmatmul.f32.gmra.mxu0 %v4431
        %v6066 = vpop.f32.mrf.mxu0
        %v6067 = vadd.f32 %v5666, %v6066
        %6068 = vmatmul.f32.gmra.mxu0 %v4434
        %v6069 = vpop.f32.mrf.mxu0
        %v6070 = vadd.f32 %v5669, %v6069
        %6071 = vmatmul.f32.gmra.mxu0 %v4437
        %v6072 = vpop.f32.mrf.mxu0
        %v6073 = vadd.f32 %v5672, %v6072
        %6074 = vmatmul.f32.gmra.mxu0 %v4440
        %v6075 = vpop.f32.mrf.mxu0
        %v6076 = vadd.f32 %v5675, %v6075
        %6077 = vmatmul.f32.gmra.mxu0 %v4443
        %v6078 = vpop.f32.mrf.mxu0
        %v6079 = vadd.f32 %v5678, %v6078
        %6080 = vmatmul.f32.gmra.mxu0 %v4446
        %v6081 = vpop.f32.mrf.mxu0
        %v6082 = vadd.f32 %v5681, %v6081
        %6083 = vmatmul.f32.gmra.mxu0 %v4449
        %v6084 = vpop.f32.mrf.mxu0
        %v6085 = vadd.f32 %v5684, %v6084
        %6086 = vmatmul.f32.gmra.mxu0 %v4452
        %v6087 = vpop.f32.mrf.mxu0
        %v6088 = vadd.f32 %v5687, %v6087
        %6089 = vmatmul.f32.gmra.mxu0 %v4455
        %v6090 = vpop.f32.mrf.mxu0
        %v6091 = vadd.f32 %v5690, %v6090
        %6092 = vmatmul.f32.gmra.mxu0 %v4458
        %v6093 = vpop.f32.mrf.mxu0
        %v6094 = vadd.f32 %v5693, %v6093
        %6095 = vmatmul.f32.gmra.mxu0 %v4461
        %v6096 = vpop.f32.mrf.mxu0
        %v6097 = vadd.f32 %v5696, %v6096
        %6098 = vmatmul.f32.gmra.mxu0 %v4464
        %v6099 = vpop.f32.mrf.mxu0
        %v6100 = vadd.f32 %v5699, %v6099
        %6101 = vmatmul.f32.gmra.mxu0 %v4467
        %v6102 = vpop.f32.mrf.mxu0
        %v6103 = vadd.f32 %v5702, %v6102
        %6104 = vmatmul.f32.gmra.mxu0 %v4470
        %v6105 = vpop.f32.mrf.mxu0
        %v6106 = vadd.f32 %v5705, %v6105
        %6107 = vmatmul.f32.gmra.mxu0 %v4473
        %v6108 = vpop.f32.mrf.mxu0
        %v6109 = vadd.f32 %v5708, %v6108
        %6110 = vmatmul.f32.gmra.mxu0 %v4476
        %v6111 = vpop.f32.mrf.mxu0
        %v6112 = vadd.f32 %v5711, %v6111
        %6113 = vmatmul.f32.gmra.mxu0 %v4479
        %v6114 = vpop.f32.mrf.mxu0
        %v6115 = vadd.f32 %v5714, %v6114
        %6116 = vmatmul.f32.gmra.mxu0 %v4482
        %v6117 = vpop.f32.mrf.mxu0
        %v6118 = vadd.f32 %v5717, %v6117
        %6119 = vmatmul.f32.gmra.mxu0 %v4485
        %v6120 = vpop.f32.mrf.mxu0
        %v6121 = vadd.f32 %v5720, %v6120
        %6122 = vmatmul.f32.gmra.mxu0 %v4488
        %v6123 = vpop.f32.mrf.mxu0
        %v6124 = vadd.f32 %v5723, %v6123
        %6125 = vmatmul.f32.gmra.mxu0 %v4491
        %v6126 = vpop.f32.mrf.mxu0
        %v6127 = vadd.f32 %v5726, %v6126
        %6128 = vmatmul.f32.gmra.mxu0 %v4494
        %v6129 = vpop.f32.mrf.mxu0
        %v6130 = vadd.f32 %v5729, %v6129
        %6131 = vmatmul.f32.gmra.mxu0 %v4497
        %v6132 = vpop.f32.mrf.mxu0
        %v6133 = vadd.f32 %v5732, %v6132
        %6134 = vmatmul.f32.gmra.mxu0 %v4500
        %v6135 = vpop.f32.mrf.mxu0
        %v6136 = vadd.f32 %v5735, %v6135
        %6137 = vmatmul.f32.gmra.mxu0 %v4503
        %v6138 = vpop.f32.mrf.mxu0
        %v6139 = vadd.f32 %v5738, %v6138
        %6140 = vmatmul.f32.gmra.mxu0 %v4506
        %v6141 = vpop.f32.mrf.mxu0
        %v6142 = vadd.f32 %v5741, %v6141
        %6143 = vmatmul.f32.gmra.mxu0 %v4509
        %v6144 = vpop.f32.mrf.mxu0
        %v6145 = vadd.f32 %v5744, %v6144
        %6146 = vmatmul.f32.gmra.mxu0 %v4512
        %v6147 = vpop.f32.mrf.mxu0
        %v6148 = vadd.f32 %v5747, %v6147
        %6149 = vmatmul.f32.gmra.mxu0 %v4515
        %v6150 = vpop.f32.mrf.mxu0
        %v6151 = vadd.f32 %v5750, %v6150
        %6152 = vmatmul.f32.gmra.mxu0 %v4518
        %v6153 = vpop.f32.mrf.mxu0
        %v6154 = vadd.f32 %v5753, %v6153
        %6155 = vmatmul.f32.gmra.mxu0 %v4521
        %v6156 = vpop.f32.mrf.mxu0
        %v6157 = vadd.f32 %v5756, %v6156
        %6158 = vmatmul.f32.gmra.mxu0 %v4524
        %v6159 = vpop.f32.mrf.mxu0
        %v6160 = vadd.f32 %v5759, %v6159
        %6161 = vmatmul.f32.gmra.mxu0 %v4527
        %v6162 = vpop.f32.mrf.mxu0
        %v6163 = vadd.f32 %v5762, %v6162
        %6164 = vmatmul.f32.gmra.mxu0 %v4530
        %v6165 = vpop.f32.mrf.mxu0
        %v6166 = vadd.f32 %v5765, %v6165
        %6167 = vmatmul.f32.gmra.mxu0 %v4533
        %v6168 = vpop.f32.mrf.mxu0
        %v6169 = vadd.f32 %v5768, %v6168
        %6170 = vmatmul.f32.gmra.mxu0 %v4536
        %v6171 = vpop.f32.mrf.mxu0
        %v6172 = vadd.f32 %v5771, %v6171
        %6173 = vmatmul.f32.gmra.mxu0 %v4539
        %v6174 = vpop.f32.mrf.mxu0
        %v6175 = vadd.f32 %v5774, %v6174
        %6176 = vmatmul.f32.gmra.mxu0 %v4542
        %v6177 = vpop.f32.mrf.mxu0
        %v6178 = vadd.f32 %v5777, %v6177
        %6179 = vmatmul.f32.gmra.mxu0 %v4545
        %v6180 = vpop.f32.mrf.mxu0
        %v6181 = vadd.f32 %v5780, %v6180
        %6182 = vmatmul.f32.gmra.mxu0 %v4548
        %v6183 = vpop.f32.mrf.mxu0
        %v6184 = vadd.f32 %v5783, %v6183
        %6185 = vmatmul.f32.gmra.mxu0 %v4551
        %v6186 = vpop.f32.mrf.mxu0
        %v6187 = vadd.f32 %v5786, %v6186
        %6188 = vmatmul.f32.gmra.mxu0 %v4554
        %v6189 = vpop.f32.mrf.mxu0
        %v6190 = vadd.f32 %v5789, %v6189
        %6191 = vmatmul.f32.gmra.mxu0 %v4557
        %v6192 = vpop.f32.mrf.mxu0
        %v6193 = vadd.f32 %v5792, %v6192
        %6194 = vmatmul.f32.gmra.mxu0 %v4560
        %v6195 = vpop.f32.mrf.mxu0
        %v6196 = vadd.f32 %v5795, %v6195
        %6197 = vmatmul.f32.gmra.mxu0 %v4563
        %v6198 = vpop.f32.mrf.mxu0
        %v6199 = vadd.f32 %v5798, %v6198
        %6200 = vmatmul.f32.gmra.mxu0 %v4566
        %v6201 = vpop.f32.mrf.mxu0
        %v6202 = vadd.f32 %v5801, %v6201
        %6203 = vmatmul.f32.gmra.mxu0 %v4569
        %v6204 = vpop.f32.mrf.mxu0
        %v6205 = vadd.f32 %v5804, %v6204
        %6206 = vmatmul.f32.gmra.mxu0 %v4572
        %v6207 = vpop.f32.mrf.mxu0
        %v6208 = vadd.f32 %v5807, %v6207
        %6209 = vmatmul.f32.gmra.mxu0 %v4575
        %v6210 = vpop.f32.mrf.mxu0
        %v6211 = vadd.f32 %v5810, %v6210
        %6212 = vmatmul.f32.gmra.mxu0 %v4578
        %v6213 = vpop.f32.mrf.mxu0
        %v6214 = vadd.f32 %v5813, %v6213
        %6215 = vmatmul.f32.gmra.mxu0 %v4581
        %v6216 = vpop.f32.mrf.mxu0
        %v6217 = vadd.f32 %v5816, %v6216
        %6218 = vmatmul.f32.gmra.mxu0 %v4584
        %v6219 = vpop.f32.mrf.mxu0
        %v6220 = vadd.f32 %v5819, %v6219
        %6221 = vmatmul.f32.gmra.mxu0 %v4587
        %v6222 = vpop.f32.mrf.mxu0
        %v6223 = vadd.f32 %v5822, %v6222
        %6224 = vmatmul.f32.gmra.mxu0 %v4590
        %v6225 = vpop.f32.mrf.mxu0
        %v6226 = vadd.f32 %v5825, %v6225
        %6227 = vmatmul.f32.gmra.mxu0 %v4593
        %v6228 = vpop.f32.mrf.mxu0
        %v6229 = vadd.f32 %v5828, %v6228
        %6230 = vmatmul.f32.gmra.mxu0 %v4596
        %v6231 = vpop.f32.mrf.mxu0
        %v6232 = vadd.f32 %v5831, %v6231
        %6233 = vmatmul.f32.gmra.mxu0 %v4599
        %v6234 = vpop.f32.mrf.mxu0
        %v6235 = vadd.f32 %v5834, %v6234
        %6236 = vmatmul.f32.gmra.mxu0 %v4602
        %v6237 = vpop.f32.mrf.mxu0
        %v6238 = vadd.f32 %v5837, %v6237
        %6239 = vmatmul.f32.gmra.mxu0 %v4605
        %v6240 = vpop.f32.mrf.mxu0
        %v6241 = vadd.f32 %v5840, %v6240
        %6242 = vmatmul.f32.gmra.mxu0 %v4608
        %v6243 = vpop.f32.mrf.mxu0
        %v6244 = vadd.f32 %v5843, %v6243
        %6245 = vmatmul.f32.gmra.mxu0 %v4611
        %v6246 = vpop.f32.mrf.mxu0
        %v6247 = vadd.f32 %v5846, %v6246
        %6248 = vmatmul.f32.gmra.mxu0 %v4614
        %v6249 = vpop.f32.mrf.mxu0
        %v6250 = vadd.f32 %v5849, %v6249
        %6251 = vmatmul.f32.gmra.mxu0 %v4617
        %v6252 = vpop.f32.mrf.mxu0
        %v6253 = vadd.f32 %v5852, %v6252
        %6254 = vmatmul.f32.gmra.mxu0 %v4620
        %v6255 = vpop.f32.mrf.mxu0
        %v6256 = vadd.f32 %v5855, %v6255
        %6257 = vmatmul.f32.gmra.mxu0 %v4623
        %v6258 = vpop.f32.mrf.mxu0
        %v6259 = vadd.f32 %v5858, %v6258
        %6260 = vmatmul.f32.gmra.mxu0 %v4626
        %v6261 = vpop.f32.mrf.mxu0
        %v6262 = vadd.f32 %v5861, %v6261
        %6263 = vmatmul.f32.gmra.mxu0 %v4629
        %v6264 = vpop.f32.mrf.mxu0
        %v6265 = vadd.f32 %v5864, %v6264
        %6266 = vmatmul.f32.gmra.mxu0 %v4632
        %v6267 = vpop.f32.mrf.mxu0
        %v6268 = vadd.f32 %v5867, %v6267
        %6269 = vmatmul.f32.gmra.mxu0 %v4635
        %v6270 = vpop.f32.mrf.mxu0
        %v6271 = vadd.f32 %v5870, %v6270
        %6272 = vmatmul.f32.gmra.mxu0 %v4638
        %v6273 = vpop.f32.mrf.mxu0
        %v6274 = vadd.f32 %v5873, %v6273
        %6275 = vmatmul.f32.gmra.mxu0 %v4641
        %v6276 = vpop.f32.mrf.mxu0
        %v6277 = vadd.f32 %v5876, %v6276
        %6278 = vmatmul.f32.gmra.mxu0 %v4644
        %v6279 = vpop.f32.mrf.mxu0
        %v6280 = vadd.f32 %v5879, %v6279
        %6281 = vmatmul.f32.gmra.mxu0 %v4647
        %v6282 = vpop.f32.mrf.mxu0
        %v6283 = vadd.f32 %v5882, %v6282
        %6284 = vmatmul.f32.gmra.mxu0 %v4650
        %v6285 = vpop.f32.mrf.mxu0
        %v6286 = vadd.f32 %v5885, %v6285
        %6287 = vmatmul.f32.gmra.mxu0 %v4653
        %v6288 = vpop.f32.mrf.mxu0
        %v6289 = vadd.f32 %v5888, %v6288
        %6290 = vmatmul.f32.gmra.mxu0 %v4656
        %v6291 = vpop.f32.mrf.mxu0
        %v6292 = vadd.f32 %v5891, %v6291
        %6293 = vmatmul.f32.gmra.mxu0 %v4659
        %v6294 = vpop.f32.mrf.mxu0
        %v6295 = vadd.f32 %v5894, %v6294
        %6296 = vmatmul.f32.gmra.mxu0 %v4662
        %v6297 = vpop.f32.mrf.mxu0
        %v6298 = vadd.f32 %v5897, %v6297
        %6299 = vmatmul.f32.gmra.mxu0 %v4665
        %v6300 = vpop.f32.mrf.mxu0
        %v6301 = vadd.f32 %v5900, %v6300
        %6302 = vmatmul.f32.gmra.mxu0 %v4668
        %v6303 = vpop.f32.mrf.mxu0
        %v6304 = vadd.f32 %v5903, %v6303
        %6305 = vmatmul.f32.gmra.mxu0 %v4671
        %v6306 = vpop.f32.mrf.mxu0
        %v6307 = vadd.f32 %v5906, %v6306
        %6308 = vmatmul.f32.gmra.mxu0 %v4674
        %v6309 = vpop.f32.mrf.mxu0
        %v6310 = vadd.f32 %v5909, %v6309
        %6311 = vmatmul.f32.gmra.mxu0 %v4677
        %v6312 = vpop.f32.mrf.mxu0
        %v6313 = vadd.f32 %v5912, %v6312
        %6314 = vmatmul.f32.gmra.mxu0 %v4680
        %v6315 = vpop.f32.mrf.mxu0
        %v6316 = vadd.f32 %v5915, %v6315
        %6317 = vmatmul.f32.gmra.mxu0 %v4683
        %v6318 = vpop.f32.mrf.mxu0
        %v6319 = vadd.f32 %v5918, %v6318
        %6320 = vmatmul.f32.gmra.mxu0 %v4686
        %v6321 = vpop.f32.mrf.mxu0
        %v6322 = vadd.f32 %v5921, %v6321
        %6323 = vmatmul.f32.gmra.mxu0 %v4689
        %v6324 = vpop.f32.mrf.mxu0
        %v6325 = vadd.f32 %v5924, %v6324
        %6326 = vmatmul.f32.gmra.mxu0 %v4692
        %v6327 = vpop.f32.mrf.mxu0
        %v6328 = vadd.f32 %v5927, %v6327
        %6329 = vmatmul.f32.gmra.mxu0 %v4695
        %v6330 = vpop.f32.mrf.mxu0
        %v6331 = vadd.f32 %v5930, %v6330
        %6332 = vmatmul.f32.gmra.mxu0 %v4698
        %v6333 = vpop.f32.mrf.mxu0
        %v6334 = vadd.f32 %v5933, %v6333
        %6335 = vmatmul.f32.gmra.mxu0 %v4701
        %v6336 = vpop.f32.mrf.mxu0
        %v6337 = vadd.f32 %v5936, %v6336
        %6338 = vmatmul.f32.gmra.mxu0 %v4704
        %v6339 = vpop.f32.mrf.mxu0
        %v6340 = vadd.f32 %v5939, %v6339
        %6341 = vmatmul.f32.gmra.mxu0 %v4707
        %v6342 = vpop.f32.mrf.mxu0
        %v6343 = vadd.f32 %v5942, %v6342
        %6344 = vmatmul.f32.gmra.mxu0 %v4710
        %v6345 = vpop.f32.mrf.mxu0
        %v6346 = vadd.f32 %v5945, %v6345
        %6347 = vmatmul.f32.gmra.mxu0 %v4713
        %v6348 = vpop.f32.mrf.mxu0
        %v6349 = vadd.f32 %v5948, %v6348
        %6350 = vmatmul.f32.gmra.mxu0 %v4716
        %v6351 = vpop.f32.mrf.mxu0
        %v6352 = vadd.f32 %v5951, %v6351
        %6353 = vmatmul.f32.gmra.mxu0 %v4719
        %v6354 = vpop.f32.mrf.mxu0
        %v6355 = vadd.f32 %v5954, %v6354
        %6356 = vmatmul.f32.gmra.mxu0 %v4722
        %v6357 = vpop.f32.mrf.mxu0
        %v6358 = vadd.f32 %v5957, %v6357
        %6359 = vmatmul.f32.gmra.mxu0 %v4725
        %v6360 = vpop.f32.mrf.mxu0
        %v6361 = vadd.f32 %v5960, %v6360
        %6362 = vmatmul.f32.gmra.mxu0 %v4728
        %v6363 = vpop.f32.mrf.mxu0
        %v6364 = vadd.f32 %v5963, %v6363
        %6365 = vmatmul.f32.gmra.mxu0 %v4731
        %v6366 = vpop.f32.mrf.mxu0
        %v6367 = vadd.f32 %v5966, %v6366
        %6368 = vmatmul.f32.gmra.mxu0 %v4734
        %v6369 = vpop.f32.mrf.mxu0
        %v6370 = vadd.f32 %v5969, %v6369
        %6371 = vmatmul.f32.gmra.mxu0 %v4737
        %v6372 = vpop.f32.mrf.mxu0
        %v6373 = vadd.f32 %v5972, %v6372
        %6374 = vmatmul.f32.gmra.mxu0 %v4740
        %v6375 = vpop.f32.mrf.mxu0
        %v6376 = vadd.f32 %v5975, %v6375
        %6377 = vmatmul.f32.gmra.mxu0 %v4743
        %v6378 = vpop.f32.mrf.mxu0
        %v6379 = vadd.f32 %v5978, %v6378
        %6380 = vmatmul.f32.gmra.mxu0 %v4746
        %v6381 = vpop.f32.mrf.mxu0
        %v6382 = vadd.f32 %v5981, %v6381
        %6383 = vmatmul.f32.gmra.mxu0 %v4749
        %v6384 = vpop.f32.mrf.mxu0
        %v6385 = vadd.f32 %v5984, %v6384
        %6386 = vmatmul.f32.gmra.mxu0 %v4752
        %v6387 = vpop.f32.mrf.mxu0
        %v6388 = vadd.f32 %v5987, %v6387
        %6389 = vmatmul.f32.gmra.mxu0 %v4755
        %v6390 = vpop.f32.mrf.mxu0
        %v6391 = vadd.f32 %v5990, %v6390
        %6392 = vmatmul.f32.gmra.mxu0 %v4758
        %v6393 = vpop.f32.mrf.mxu0
        %v6394 = vadd.f32 %v5993, %v6393
        %6395 = vmatmul.f32.gmra.mxu0 %v4761
        %v6396 = vpop.f32.mrf.mxu0
        %v6397 = vadd.f32 %v5996, %v6396
        %6398 = vmatmul.f32.gmra.mxu0 %v4764
        %v6399 = vpop.f32.mrf.mxu0
        %v6400 = vadd.f32 %v5999, %v6399
        %6401 = vmatmul.f32.gmra.mxu0 %v4767
        %v6402 = vpop.f32.mrf.mxu0
        %v6403 = vadd.f32 %v6002, %v6402
        %6404 = vmatmul.f32.gmra.mxu0 %v4770
        %v6405 = vpop.f32.mrf.mxu0
        %v6406 = vadd.f32 %v6005, %v6405
        %6407 = vmatmul.f32.gmra.mxu0 %v4773
        %v6408 = vpop.f32.mrf.mxu0
        %v6409 = vadd.f32 %v6008, %v6408
        %6410 = vmatmul.f32.gmra.mxu0 %v4776
        %v6411 = vpop.f32.mrf.mxu0
        %v6412 = vadd.f32 %v6011, %v6411
        %6413 = vmatmul.f32.gmra.mxu0 %v4779
        %v6414 = vpop.f32.mrf.mxu0
        %v6415 = vadd.f32 %v6014, %v6414
        %6416 = vmatmul.f32.gmra.mxu0 %v4782
        %v6417 = vpop.f32.mrf.mxu0
        %v6418 = vadd.f32 %v6017, %v6417
        %6419 = vmatmul.f32.gmra.mxu0 %v4785
        %v6420 = vpop.f32.mrf.mxu0
        %v6421 = vadd.f32 %v6020, %v6420
        %6422 = vmatmul.f32.gmra.mxu0 %v4788
        %v6423 = vpop.f32.mrf.mxu0
        %v6424 = vadd.f32 %v6023, %v6423
        %6425 = vmatmul.f32.gmra.mxu0 %v4791
        %v6426 = vpop.f32.mrf.mxu0
        %v6427 = vadd.f32 %v6026, %v6426
        %6428 = vmatmul.f32.gmra.mxu0 %v4794
        %v6429 = vpop.f32.mrf.mxu0
        %v6430 = vadd.f32 %v6029, %v6429
        %6431 = vdwg.mxu0
        %6432 = vst.msk [vmem:[%s312] sm:$0xff] %vm457, %v6049
        %6433 = vst.msk [vmem:[%s312 + $0x8] sm:$0xff] %vm457, %v6052
        %6434 = vst.msk [vmem:[%s312 + $0x10] sm:$0xff] %vm457, %v6055
        %6435 = vst.msk [vmem:[%s312 + $0x18] sm:$0xff] %vm457, %v6058
        %6436 = vst.msk [vmem:[%s312 + $0x20] sm:$0xff] %vm457, %v6061
        %6437 = vst.msk [vmem:[%s312 + $0x28] sm:$0xff] %vm457, %v6064
        %6438 = vst.msk [vmem:[%s312 + $0x30] sm:$0xff] %vm457, %v6067
        %6439 = vst.msk [vmem:[%s312 + $0x38] sm:$0xff] %vm457, %v6070
        %6440 = vst.msk [vmem:[%s312 + $0x40] sm:$0xff] %vm457, %v6073
        %6441 = vst.msk [vmem:[%s312 + $0x48] sm:$0xff] %vm457, %v6076
        %6442 = vst.msk [vmem:[%s312 + $0x50] sm:$0xff] %vm457, %v6079
        %6443 = vst.msk [vmem:[%s312 + $0x58] sm:$0xff] %vm457, %v6082
        %6444 = vst.msk [vmem:[%s312 + $0x60] sm:$0xff] %vm457, %v6085
        %6445 = vst.msk [vmem:[%s312 + $0x68] sm:$0xff] %vm457, %v6088
        %6446 = vst.msk [vmem:[%s312 + $0x70] sm:$0xff] %vm457, %v6091
        %6447 = vst.msk [vmem:[%s312 + $0x78] sm:$0xff] %vm457, %v6094
        %6448 = vst.msk [vmem:[%s312 + $0x80] sm:$0xff] %vm457, %v6097
        %6449 = vst.msk [vmem:[%s312 + $0x88] sm:$0xff] %vm457, %v6100
        %6450 = vst.msk [vmem:[%s312 + $0x90] sm:$0xff] %vm457, %v6103
        %6451 = vst.msk [vmem:[%s312 + $0x98] sm:$0xff] %vm457, %v6106
        %6452 = vst.msk [vmem:[%s312 + $0xa0] sm:$0xff] %vm457, %v6109
        %6453 = vst.msk [vmem:[%s312 + $0xa8] sm:$0xff] %vm457, %v6112
        %6454 = vst.msk [vmem:[%s312 + $0xb0] sm:$0xff] %vm457, %v6115
        %6455 = vst.msk [vmem:[%s312 + $0xb8] sm:$0xff] %vm457, %v6118
        %6456 = vst.msk [vmem:[%s312 + $0xc0] sm:$0xff] %vm457, %v6121
        %6457 = vst.msk [vmem:[%s312 + $0xc8] sm:$0xff] %vm457, %v6124
        %6458 = vst.msk [vmem:[%s312 + $0xd0] sm:$0xff] %vm457, %v6127
        %6459 = vst.msk [vmem:[%s312 + $0xd8] sm:$0xff] %vm457, %v6130
        %6460 = vst.msk [vmem:[%s312 + $0xe0] sm:$0xff] %vm457, %v6133
        %6461 = vst.msk [vmem:[%s312 + $0xe8] sm:$0xff] %vm457, %v6136
        %6462 = vst.msk [vmem:[%s312 + $0xf0] sm:$0xff] %vm457, %v6139
        %6463 = vst.msk [vmem:[%s312 + $0xf8] sm:$0xff] %vm457, %v6142
        %6464 = vst.msk [vmem:[%s312 + $0x100] sm:$0xff] %vm457, %v6145
        %6465 = vst.msk [vmem:[%s312 + $0x108] sm:$0xff] %vm457, %v6148
        %6466 = vst.msk [vmem:[%s312 + $0x110] sm:$0xff] %vm457, %v6151
        %6467 = vst.msk [vmem:[%s312 + $0x118] sm:$0xff] %vm457, %v6154
        %6468 = vst.msk [vmem:[%s312 + $0x120] sm:$0xff] %vm457, %v6157
        %6469 = vst.msk [vmem:[%s312 + $0x128] sm:$0xff] %vm457, %v6160
        %6470 = vst.msk [vmem:[%s312 + $0x130] sm:$0xff] %vm457, %v6163
        %6471 = vst.msk [vmem:[%s312 + $0x138] sm:$0xff] %vm457, %v6166
        %6472 = vst.msk [vmem:[%s312 + $0x140] sm:$0xff] %vm457, %v6169
        %6473 = vst.msk [vmem:[%s312 + $0x148] sm:$0xff] %vm457, %v6172
        %6474 = vst.msk [vmem:[%s312 + $0x150] sm:$0xff] %vm457, %v6175
        %6475 = vst.msk [vmem:[%s312 + $0x158] sm:$0xff] %vm457, %v6178
        %6476 = vst.msk [vmem:[%s312 + $0x160] sm:$0xff] %vm457, %v6181
        %6477 = vst.msk [vmem:[%s312 + $0x168] sm:$0xff] %vm457, %v6184
        %6478 = vst.msk [vmem:[%s312 + $0x170] sm:$0xff] %vm457, %v6187
        %6479 = vst.msk [vmem:[%s312 + $0x178] sm:$0xff] %vm457, %v6190
        %6480 = vst.msk [vmem:[%s312 + $0x180] sm:$0xff] %vm457, %v6193
        %6481 = vst.msk [vmem:[%s312 + $0x188] sm:$0xff] %vm457, %v6196
        %6482 = vst.msk [vmem:[%s312 + $0x190] sm:$0xff] %vm457, %v6199
        %6483 = vst.msk [vmem:[%s312 + $0x198] sm:$0xff] %vm457, %v6202
        %6484 = vst.msk [vmem:[%s312 + $0x1a0] sm:$0xff] %vm457, %v6205
        %6485 = vst.msk [vmem:[%s312 + $0x1a8] sm:$0xff] %vm457, %v6208
        %6486 = vst.msk [vmem:[%s312 + $0x1b0] sm:$0xff] %vm457, %v6211
        %6487 = vst.msk [vmem:[%s312 + $0x1b8] sm:$0xff] %vm457, %v6214
        %6488 = vst.msk [vmem:[%s312 + $0x1c0] sm:$0xff] %vm457, %v6217
        %6489 = vst.msk [vmem:[%s312 + $0x1c8] sm:$0xff] %vm457, %v6220
        %6490 = vst.msk [vmem:[%s312 + $0x1d0] sm:$0xff] %vm457, %v6223
        %6491 = vst.msk [vmem:[%s312 + $0x1d8] sm:$0xff] %vm457, %v6226
        %6492 = vst.msk [vmem:[%s312 + $0x1e0] sm:$0xff] %vm457, %v6229
        %6493 = vst.msk [vmem:[%s312 + $0x1e8] sm:$0xff] %vm457, %v6232
        %6494 = vst.msk [vmem:[%s312 + $0x1f0] sm:$0xff] %vm457, %v6235
        %6495 = vst.msk [vmem:[%s312 + $0x1f8] sm:$0xff] %vm457, %v6238
        %6496 = vst.msk [vmem:[%s312 + $0x200] sm:$0xff] %vm457, %v6241
        %6497 = vst.msk [vmem:[%s312 + $0x208] sm:$0xff] %vm457, %v6244
        %6498 = vst.msk [vmem:[%s312 + $0x210] sm:$0xff] %vm457, %v6247
        %6499 = vst.msk [vmem:[%s312 + $0x218] sm:$0xff] %vm457, %v6250
        %6500 = vst.msk [vmem:[%s312 + $0x220] sm:$0xff] %vm457, %v6253
        %6501 = vst.msk [vmem:[%s312 + $0x228] sm:$0xff] %vm457, %v6256
        %6502 = vst.msk [vmem:[%s312 + $0x230] sm:$0xff] %vm457, %v6259
        %6503 = vst.msk [vmem:[%s312 + $0x238] sm:$0xff] %vm457, %v6262
        %6504 = vst.msk [vmem:[%s312 + $0x240] sm:$0xff] %vm457, %v6265
        %6505 = vst.msk [vmem:[%s312 + $0x248] sm:$0xff] %vm457, %v6268
        %6506 = vst.msk [vmem:[%s312 + $0x250] sm:$0xff] %vm457, %v6271
        %6507 = vst.msk [vmem:[%s312 + $0x258] sm:$0xff] %vm457, %v6274
        %6508 = vst.msk [vmem:[%s312 + $0x260] sm:$0xff] %vm457, %v6277
        %6509 = vst.msk [vmem:[%s312 + $0x268] sm:$0xff] %vm457, %v6280
        %6510 = vst.msk [vmem:[%s312 + $0x270] sm:$0xff] %vm457, %v6283
        %6511 = vst.msk [vmem:[%s312 + $0x278] sm:$0xff] %vm457, %v6286
        %6512 = vst.msk [vmem:[%s312 + $0x280] sm:$0xff] %vm457, %v6289
        %6513 = vst.msk [vmem:[%s312 + $0x288] sm:$0xff] %vm457, %v6292
        %6514 = vst.msk [vmem:[%s312 + $0x290] sm:$0xff] %vm457, %v6295
        %6515 = vst.msk [vmem:[%s312 + $0x298] sm:$0xff] %vm457, %v6298
        %6516 = vst.msk [vmem:[%s312 + $0x2a0] sm:$0xff] %vm457, %v6301
        %6517 = vst.msk [vmem:[%s312 + $0x2a8] sm:$0xff] %vm457, %v6304
        %6518 = vst.msk [vmem:[%s312 + $0x2b0] sm:$0xff] %vm457, %v6307
        %6519 = vst.msk [vmem:[%s312 + $0x2b8] sm:$0xff] %vm457, %v6310
        %6520 = vst.msk [vmem:[%s312 + $0x2c0] sm:$0xff] %vm457, %v6313
        %6521 = vst.msk [vmem:[%s312 + $0x2c8] sm:$0xff] %vm457, %v6316
        %6522 = vst.msk [vmem:[%s312 + $0x2d0] sm:$0xff] %vm457, %v6319
        %6523 = vst.msk [vmem:[%s312 + $0x2d8] sm:$0xff] %vm457, %v6322
        %6524 = vst.msk [vmem:[%s312 + $0x2e0] sm:$0xff] %vm457, %v6325
        %6525 = vst.msk [vmem:[%s312 + $0x2e8] sm:$0xff] %vm457, %v6328
        %6526 = vst.msk [vmem:[%s312 + $0x2f0] sm:$0xff] %vm457, %v6331
        %6527 = vst.msk [vmem:[%s312 + $0x2f8] sm:$0xff] %vm457, %v6334
        %6528 = vst.msk [vmem:[%s312 + $0x300] sm:$0xff] %vm457, %v6337
        %6529 = vst.msk [vmem:[%s312 + $0x308] sm:$0xff] %vm457, %v6340
        %6530 = vst.msk [vmem:[%s312 + $0x310] sm:$0xff] %vm457, %v6343
        %6531 = vst.msk [vmem:[%s312 + $0x318] sm:$0xff] %vm457, %v6346
        %6532 = vst.msk [vmem:[%s312 + $0x320] sm:$0xff] %vm457, %v6349
        %6533 = vst.msk [vmem:[%s312 + $0x328] sm:$0xff] %vm457, %v6352
        %6534 = vst.msk [vmem:[%s312 + $0x330] sm:$0xff] %vm457, %v6355
        %6535 = vst.msk [vmem:[%s312 + $0x338] sm:$0xff] %vm457, %v6358
        %6536 = vst.msk [vmem:[%s312 + $0x340] sm:$0xff] %vm457, %v6361
        %6537 = vst.msk [vmem:[%s312 + $0x348] sm:$0xff] %vm457, %v6364
        %6538 = vst.msk [vmem:[%s312 + $0x350] sm:$0xff] %vm457, %v6367
        %6539 = vst.msk [vmem:[%s312 + $0x358] sm:$0xff] %vm457, %v6370
        %6540 = vst.msk [vmem:[%s312 + $0x360] sm:$0xff] %vm457, %v6373
        %6541 = vst.msk [vmem:[%s312 + $0x368] sm:$0xff] %vm457, %v6376
        %6542 = vst.msk [vmem:[%s312 + $0x370] sm:$0xff] %vm457, %v6379
        %6543 = vst.msk [vmem:[%s312 + $0x378] sm:$0xff] %vm457, %v6382
        %6544 = vst.msk [vmem:[%s312 + $0x380] sm:$0xff] %vm457, %v6385
        %6545 = vst.msk [vmem:[%s312 + $0x388] sm:$0xff] %vm457, %v6388
        %6546 = vst.msk [vmem:[%s312 + $0x390] sm:$0xff] %vm457, %v6391
        %6547 = vst.msk [vmem:[%s312 + $0x398] sm:$0xff] %vm457, %v6394
        %6548 = vst.msk [vmem:[%s312 + $0x3a0] sm:$0xff] %vm457, %v6397
        %6549 = vst.msk [vmem:[%s312 + $0x3a8] sm:$0xff] %vm457, %v6400
        %6550 = vst.msk [vmem:[%s312 + $0x3b0] sm:$0xff] %vm457, %v6403
        %6551 = vst.msk [vmem:[%s312 + $0x3b8] sm:$0xff] %vm457, %v6406
        %6552 = vst.msk [vmem:[%s312 + $0x3c0] sm:$0xff] %vm457, %v6409
        %6553 = vst.msk [vmem:[%s312 + $0x3c8] sm:$0xff] %vm457, %v6412
        %6554 = vst.msk [vmem:[%s312 + $0x3d0] sm:$0xff] %vm457, %v6415
        %6555 = vst.msk [vmem:[%s312 + $0x3d8] sm:$0xff] %vm457, %v6418
        %6556 = vst.msk [vmem:[%s312 + $0x3e0] sm:$0xff] %vm457, %v6421
        %6557 = vst.msk [vmem:[%s312 + $0x3e8] sm:$0xff] %vm457, %v6424
        %6558 = vst.msk [vmem:[%s312 + $0x3f0] sm:$0xff] %vm457, %v6427
        %6559 = vst.msk [vmem:[%s312 + $0x3f8] sm:$0xff] %vm457, %v6430
        %s6560 = smul.u32 128, %s23
        %p6561 = scmp.lt.s32.totalorder %s6560, 255
        %s6562 = scalar_select %p6561, %s6560, 255
        %s6563 = smul.addr %s6562, 8
        %s6564 = scalar_lea.vmem %s5, %s6563
        %s6565 = sand.u32 %s167, 1
        %s6566 = scalar_lea.sflag [#allocation4], %s6565
        %s6567 = sand.u32 %s167, 1
        %s6568 = smul.addr %s6567, 3072
        %s6569 = scalar_lea.vmem [#allocation8], %s6568
        // Predicated region
        $region53: #{tpu_custom_call.1} parent=39 // pred_check
          %p6570 = pneg %p151
        $region54: #{tpu_custom_call.1} parent=39 // pred_check_branch
          %6572 = sbr.rel (%p6570) target = $region56
        $region55: #{tpu_custom_call.1} parent=39 // pred_region
          %s6573 = smul.u32 128, %s23
        $region56: #{tpu_custom_call.1} parent=39 // pred_fallthru
          _
        // Predicated region
        $region57: #{tpu_custom_call.1} parent=39 // pred_check
          %p6574 = pneg %p177
        $region58: #{tpu_custom_call.1} parent=39 // pred_check_branch
          %6576 = sbr.rel (%p6574) target = $region60
        $region59: #{tpu_custom_call.1} parent=39 // pred_region
          %s6577 = smul.u32 128, %s23
          %6579 = vsyncadd %s6566, 0
          %s6580 = smul.addr %s6577, 3
          %s6581 = smul.addr %s6580, 8
          %s6582 = scalar_lea.hbm %s6, %s6581
          %s6583 = sshll.u32 %s6569, 4
          %s6584 = int_to_ptr.vmem [resolvable:$true] %s6583
          %s6585 = sshll.u32 %s6582, 4
          %s6586 = int_to_ptr.hbm [resolvable:$true] %s6585
          %6591 = dma.vmem_to_hbm [thread:$0]  %s6584, 49152, %s6586, %s6566, 384, 384, 24
        $region60: #{tpu_custom_call.1} parent=39 // pred_fallthru
          _
      $region40: #{tpu_custom_call.1} parent=5 // pred_fallthru
        _
      %p6592 = scmp.le.s32.totalorder 2, %s18
      // Predicated region
      $region61: #{tpu_custom_call.1} parent=5 // pred_check
        %p6593 = pneg %p6592
      $region62: #{tpu_custom_call.1} parent=5 // pred_check_branch
        %6595 = sbr.rel (%p6593) target = $region64
      $region63: #{tpu_custom_call.1} parent=5 // pred_region
        %s6596 = ssub.s32 %s18, 2
        // Predicated region
        $region65: #{tpu_custom_call.1} parent=63 // pred_check
          %p6597 = pneg %p157
        $region66: #{tpu_custom_call.1} parent=63 // pred_check_branch
          %6599 = sbr.rel (%p6597) target = $region68
        $region67: #{tpu_custom_call.1} parent=63 // pred_region
          %s6600 = smul.u32 128, %s24
          %p6601 = scmp.lt.s32.totalorder %s6600, 255
          %s6602 = scalar_select %p6601, %s6600, 255
          %s6603 = smul.addr %s6602, 8
          %s6604 = scalar_lea.vmem %s5, %s6603
        $region68: #{tpu_custom_call.1} parent=63 // pred_fallthru
          _
        // Predicated region
        $region69: #{tpu_custom_call.1} parent=63 // pred_check
          %p6605 = pneg %p183
        $region70: #{tpu_custom_call.1} parent=63 // pred_check_branch
          %6607 = sbr.rel (%p6605) target = $region72
        $region71: #{tpu_custom_call.1} parent=63 // pred_region
          %s6608 = sand.u32 %s168, 1
          %s6609 = scalar_lea.sflag [#allocation4], %s6608
          %s6610 = sand.u32 %s168, 1
          %s6611 = smul.addr %s6610, 3072
          %s6612 = scalar_lea.vmem [#allocation8], %s6611
          %6614 = dma.done %s6609, 49152
        $region72: #{tpu_custom_call.1} parent=63 // pred_fallthru
          _
      $region64: #{tpu_custom_call.1} parent=5 // pred_fallthru
        _
    $region6: #{tpu_custom_call.1} parent=1 // loop_footer
      %s22 = sadd.s32 1, %s18
    $region7: #{tpu_custom_call.1} parent=1 // loop_footer_branch
      %17 = sbr.rel target = $region3
    $region8: #{tpu_custom_call.1} parent=1 // loop_exit
      _
    %6615 = vsyncpa [#allocation3], 1
    %s6616 = scalar_lea.sflag [#allocation3], 1
    %6617 = vsyncpa %s6616, 1
    %6618 = vsyncpa [#allocation6], 1
    %6619 = vsyncpa [#allocation4], 1
    %s6620 = scalar_lea.sflag [#allocation4], 1
    %6621 = vsyncpa %s6620, 1

</llo_original>
